<compile_context>
chip_gen: v7x
topology: tpu7x:2x2x1
jax: 0.10.0
libtpu: 0.0.40
codegen_flags: <defaults>
</compile_context>

<pallas_src>
import functools

import numpy as np
import jax
import jax.numpy as jnp
from jax.experimental import pallas as pl
from jax.experimental.pallas import tpu as pltpu


def _allreduce_over_sublanes(t, d):
    """Sum a (d, lanes) array over its sublane axis, result replicated on all sublanes.

    For power-of-two d this is a pltpu.roll butterfly (XLU slot, no VALU broadcasts);
    otherwise fall back to a plain reduce + broadcast.
    """
    if d >= 2 and (d & (d - 1)) == 0:
        shift = d // 2
        while shift >= 1:
            t = t + pltpu.roll(t, shift, axis=0)
            shift //= 2
        return t
    if d == 1:
        return t
    s = jnp.sum(t, axis=0, keepdims=True)
    return jnp.broadcast_to(s, t.shape)


# ----------------------------------------------------------------------------
# Pallas kernel: batched windowed cross attention in a lane-dense layout.
#   x_ref   : (1, C, P*block_n)  bf16   windows; lane index = p*block_n + n
#   w_ref   : (3D, C)            bf16   fused [Wq; Wk; Wv]
#   bpos_ref: (3D, P*chunk)      f32    per-position fused bias (PE folded in),
#                                       lane p*chunk + t holds B_pos[:, p]
#   o_ref   : (1, D, P*block_n)  f32    output, same lane layout as x_ref
# ----------------------------------------------------------------------------
def _window_attention_kernel(x_ref, w_ref, bpos_ref, o_ref, *,
                             block_n, num_pos, d_out, chunk):
    bn, P, D, CH = block_n, num_pos, d_out, chunk
    w = w_ref[...]                                                    # (3D, C) bf16

    for c in range(bn // CH):
        off = c * CH
        # --- per-chunk biased q/k/v strips; each (D, CH) == 1 vreg at CH=128 -------
        qc, kc, vc = [], [], []
        for p in range(P):
            lane0 = p * bn + off
            xs = x_ref[0, :, lane0:lane0 + CH]                        # (C, CH) bf16
            qkv = jnp.dot(w, xs, preferred_element_type=jnp.float32)  # (3D, CH) f32
            qc.append(qkv[0:D, :]         + bpos_ref[0:D,         p * CH:(p + 1) * CH])
            kc.append(qkv[D:2 * D, :]     + bpos_ref[D:2 * D,     p * CH:(p + 1) * CH])
            vc.append(qkv[2 * D:3 * D, :] + bpos_ref[2 * D:3 * D, p * CH:(p + 1) * CH])

        # --- attention over window positions for this chunk -----------------------
        for p in range(P):
            # Scores replicated across all D sublanes (roll butterfly -> no sublane
            # broadcasts needed when multiplying with v below).
            s = [_allreduce_over_sublanes(qc[p] * kc[qq], D) for qq in range(P)]
            m = s[0]
            for qq in range(1, P):
                m = jnp.maximum(m, s[qq])
            e = jnp.exp(s[0] - m)
            denom = e
            acc = e * vc[0]
            for qq in range(1, P):
                e = jnp.exp(s[qq] - m)
                denom = denom + e
                acc = acc + e * vc[qq]
            inv = pl.reciprocal(denom, approx=False)                  # EUP slot
            lane0 = p * bn + off
            o_ref[0, :, lane0:lane0 + CH] = (acc * inv).astype(o_ref.dtype)


def _pick_block_n(num_windows, max_bn=512, min_bn=128):
    """Largest useful block (multiple of 128), capped at 512 (register-pressure cap),
    chosen so the grid has >= 2 steps whenever N > 128 (both v7x TensorCores busy)."""
    if num_windows <= min_bn:
        return min_bn
    half = -(-num_windows // 2)
    bn = -(-half // 128) * 128
    return max(min_bn, min(bn, max_bn))


def window_attention_pallas(x_cpn, pe, wq, wk, wv, bq, bk, bv,
                            block_n=None, chunk=128):
    """x_cpn: (C, P, N) float32 window batch -> (D, P, N) float32 attention output."""
    C, P, N = x_cpn.shape
    D = wq.shape[1]
    bn = _pick_block_n(N) if block_n is None else block_n
    chunk = min(chunk, bn)
    assert bn % chunk == 0 and bn % 128 == 0 and chunk % 128 == 0
    Npad = ((N + bn - 1) // bn) * bn
    G = Npad // bn
    L = P * bn

    # bf16 for the MXU operands / x-block DMA; everything downstream stays f32.
    x = x_cpn.astype(jnp.bfloat16)
    if Npad != N:
        x = jnp.pad(x, ((0, 0), (0, 0), (0, Npad - N)))
    # Lane-dense layout: (G, C, P*bn) with lane index p*bn + n.
    x_t = x.reshape(C, P, G, bn).transpose(2, 0, 1, 3).reshape(G, C, L)

    w_f32 = jnp.concatenate([wq, wk, wv], axis=1).T.astype(jnp.float32)   # (3D, C)
    b_f32 = jnp.concatenate([bq, bk, bv]).astype(jnp.float32).reshape(3 * D, 1)
    # Fold the positional encoding into a per-position fused bias (exact, f32).
    bpos = jnp.dot(w_f32, pe.T.astype(jnp.float32),
                   precision='highest') + b_f32                           # (3D, P)
    bpos_lane = jnp.repeat(bpos, chunk, axis=1)                           # (3D, P*chunk)
    w_bf16 = w_f32.astype(jnp.bfloat16)

    kernel = functools.partial(_window_attention_kernel,
                               block_n=bn, num_pos=P, d_out=D, chunk=chunk)
    out = pl.pallas_call(
        kernel,
        out_shape=jax.ShapeDtypeStruct((G, D, L), jnp.float32),
        grid=(G,),
        in_specs=[
            pl.BlockSpec((1, C, L), lambda g: (g, 0, 0)),
            pl.BlockSpec((3 * D, C), lambda g: (0, 0)),
            pl.BlockSpec((3 * D, P * chunk), lambda g: (0, 0)),
        ],
        out_specs=pl.BlockSpec((1, D, L), lambda g: (g, 0, 0)),
        compiler_params=pltpu.CompilerParams(
            dimension_semantics=("parallel",)),
    )(x_t, w_bf16, bpos_lane)

    # (G, D, P*bn) -> (D, P, Npad); the per-shift fold slices windows off the last axis.
    out = out.reshape(G, D, P, bn).transpose(1, 2, 0, 3).reshape(D, P, Npad)
    return out[:, :, :N]


def window_attention_ref(x_cpn, pe, wq, wk, wv, bq, bk, bv):
    """Pure-JAX reference of the same window attention (for checking)."""
    x = jnp.transpose(x_cpn, (2, 1, 0)).astype(jnp.float32) + pe[None]   # (N, P, C)
    q = jnp.einsum('npc,cd->npd', x, wq, precision='highest') + bq
    k = jnp.einsum('npc,cd->npd', x, wk, precision='highest') + bk
    v = jnp.einsum('npc,cd->npd', x, wv, precision='highest') + bv
    s = jnp.einsum('npd,nqd->npq', q, k, precision='highest')
    p = jax.nn.softmax(s, axis=-1)
    o = jnp.einsum('npq,nqd->npd', p, v, precision='highest')
    return jnp.transpose(o, (2, 1, 0))                                   # (D, P, N)


# ----------------------------------------------------------------------------
# Module glue (parameter setup + forward pass)
# ----------------------------------------------------------------------------
def sinusoidal_positional_encoding(kernel_size, num_pillar_features):
    positions = jnp.arange(kernel_size ** 2, dtype=jnp.float32)[:, None]
    dims = jnp.arange(0, num_pillar_features, 2, dtype=jnp.float32)
    angles = positions / jnp.power(10000.0, 2.0 * dims / num_pillar_features)
    pe = jnp.zeros((kernel_size ** 2, num_pillar_features), jnp.float32)
    pe = pe.at[:, 0::2].set(jnp.sin(angles))
    pe = pe.at[:, 1::2].set(jnp.cos(angles))
    return pe


def overlap_count_map(H, W, ks):
    """Exact equivalent of fold(unfold(ones(H, W))): per-pixel count of the
    stride-1 ks x ks sliding windows covering it (assumes H >= ks and W >= ks,
    same as the original module)."""
    ys = jnp.arange(H)
    xs = jnp.arange(W)
    cy = (jnp.minimum(ys, H - ks) - jnp.maximum(0, ys - ks + 1) + 1).astype(jnp.float32)
    cx = (jnp.minimum(xs, W - ks) - jnp.maximum(0, xs - ks + 1) + 1).astype(jnp.float32)
    return cy[:, None] * cx[None, :]


def pillar_cross_attention_forward(pseudo_image, params, kernel_size,
                                   num_output_CA_features,
                                   attention_fn=window_attention_pallas):
    B, C, H, W = pseudo_image.shape
    ks = kernel_size
    P = ks * ks
    D = num_output_CA_features
    pe = params['positional_encoding']

    # Reproduce the module's (stateful, once-only) quotient-reduction logic while
    # gathering every shifted window set into one channel-major batch for a single
    # kernel launch.  Windows are built directly in (C, P, n) order from the NCHW
    # image (no NHWC copy, no (N, P, C) intermediate).
    length_quotient = H // ks
    length_remainder = H % ks
    is_reduce_length = False
    width_quotient = W // ks
    width_remainder = W % ks
    is_reduce_width = False

    shift_meta = []      # (i, j, lq, wq, n_windows)
    window_sets = []
    for i in range(ks):
        for j in range(ks):
            if i > length_remainder and not is_reduce_length:
                length_quotient -= 1
                is_reduce_length = True
            if j > width_remainder and not is_reduce_width:
                width_quotient -= 1
                is_reduce_width = True
            lq, wq = length_quotient, width_quotient
            if lq <= 0 or wq <= 0:
                continue
            hh, ww = ks * lq, ks * wq
            patch = pseudo_image[:, :, i:i + hh, j:j + ww]               # (B, C, hh, ww)
            # 'b c (l k1) (w k2) -> c (k1 k2) (b l w)'
            win = patch.reshape(B, C, lq, ks, wq, ks)
            win = jnp.transpose(win, (1, 3, 5, 0, 2, 4)).reshape(C, P, B * lq * wq)
            window_sets.append(win)
            shift_meta.append((i, j, lq, wq, B * lq * wq))

    x_all = jnp.concatenate(window_sets, axis=2)                         # (C, P, N_total)

    attn_all = attention_fn(x_all, pe,
                            params['wq'], params['wk'], params['wv'],
                            params['bq'], params['bk'], params['bv'])    # (D, P, N_total)

    # Fold the windows back (NCHW throughout) with the module's 9 shifted scatter-adds.
    cross = jnp.zeros((B, D, H, W), jnp.float32)
    off = 0
    for (i, j, lq, wq, n) in shift_meta:
        hh, ww = ks * lq, ks * wq
        # 'd (k1 k2) (b l w) -> b d (l k1) (w k2)'
        a = attn_all[:, :, off:off + n].reshape(D, ks, ks, B, lq, wq)
        a = jnp.transpose(a, (3, 0, 4, 1, 5, 2)).reshape(B, D, hh, ww)
        cross = cross.at[:, :, i:i + hh, j:j + ww].add(a)
        off += n

    count = overlap_count_map(H, W, ks)                                  # (H, W)
    cross = cross / count[None, None, :, :]
    return jnp.concatenate([pseudo_image, cross], axis=1)                # (B, C+D, H, W)


# ----------------------------------------------------------------------------
if __name__ == "__main__":
    # Config (model_cfg = {'num_output_CA_features': 8, 'kernel_size': 3})
    B, C, H, W = 2, 8, 16, 16          # num_pillar_features = 8 (even, as PE requires)
    kernel_size = 3
    num_output_CA_features = 8

    key = jax.random.PRNGKey(0)
    k1, k2, k3, k4, k5, k6, k7 = jax.random.split(key, 7)
    pseudo_image = jax.random.normal(k1, (B, C, H, W), jnp.float32)

    scale = float(1.0 / (C ** 0.5))
    params = dict(
        wq=jax.random.uniform(k2, (C, num_output_CA_features), jnp.float32, -scale, scale),
        wk=jax.random.uniform(k3, (C, num_output_CA_features), jnp.float32, -scale, scale),
        wv=jax.random.uniform(k4, (C, num_output_CA_features), jnp.float32, -scale, scale),
        bq=jax.random.uniform(k5, (num_output_CA_features,), jnp.float32, -scale, scale),
        bk=jax.random.uniform(k6, (num_output_CA_features,), jnp.float32, -scale, scale),
        bv=jax.random.uniform(k7, (num_output_CA_features,), jnp.float32, -scale, scale),
        positional_encoding=sinusoidal_positional_encoding(kernel_size, C),
    )

    fwd_pallas = jax.jit(functools.partial(
        pillar_cross_attention_forward,
        kernel_size=kernel_size,
        num_output_CA_features=num_output_CA_features,
        attention_fn=window_attention_pallas))
    fwd_ref = jax.jit(functools.partial(
        pillar_cross_attention_forward,
        kernel_size=kernel_size,
        num_output_CA_features=num_output_CA_features,
        attention_fn=window_attention_ref))

    out = jax.block_until_ready(fwd_pallas(pseudo_image, params))
    assert out.shape == (B, C + num_output_CA_features, H, W), out.shape

    # Cross-check the Pallas hot-path against a pure-JAX 'highest'-precision reference.
    # Tolerance covers the bf16 MXU operands (weights/activations); all accumulation,
    # softmax and normalization run in f32 with an exact reciprocal.
    ref = jax.block_until_ready(fwd_ref(pseudo_image, params))
    np.testing.assert_allclose(np.asarray(out), np.asarray(ref),
                               rtol=2e-2, atol=2e-2)

    print("KERNEL_OK")
</pallas_src>

<mosaic_0001>
module attributes {stable_mosaic.version = 11 : i64} {
  func.func @_window_attention_kernel(%arg0: i32, %arg1: memref<1x8x2304xbf16, #tpu.memory_space<vmem>>, %arg2: memref<24x8xbf16, #tpu.memory_space<vmem>>, %arg3: memref<24x1152xf32, #tpu.memory_space<vmem>>, %arg4: memref<1x8x2304xf32, #tpu.memory_space<vmem>>) attributes {dimension_semantics = [#tpu.dimension_semantics<parallel>], iteration_bounds = array<i64: 2>, scalar_prefetch = 0 : i64, scratch_operands = 0 : i64, tpu.core_type = #tpu.core_type<tc>, window_params = [{transform_indices = @transform_0, window_bounds = array<i64: 1, 8, 2304>}, {pipeline_mode = #tpu.pipeline_mode<synchronous>, transform_indices = @transform_1, window_bounds = array<i64: 24, 8>}, {pipeline_mode = #tpu.pipeline_mode<synchronous>, transform_indices = @transform_2, window_bounds = array<i64: 24, 1152>}, {transform_indices = @transform_3, window_bounds = array<i64: 1, 8, 2304>}]} {
    %c0 = arith.constant 0 : index
    %c0_0 = arith.constant 0 : index
    %0 = vector.load %arg2[%c0, %c0_0] : memref<24x8xbf16, #tpu.memory_space<vmem>>, vector<24x8xbf16>
    %c0_1 = arith.constant 0 : index
    %c0_2 = arith.constant 0 : index
    %c0_3 = arith.constant 0 : index
    %1 = vector.load %arg1[%c0_1, %c0_2, %c0_3] : memref<1x8x2304xbf16, #tpu.memory_space<vmem>>, vector<1x8x128xbf16>
    %2 = vector.shape_cast %1 : vector<1x8x128xbf16> to vector<8x128xbf16>
    %cst = arith.constant dense<0.000000e+00> : vector<24x128xf32>
    %3 = tpu.matmul %0, %2, %cst {dimension_numbers = #tpu.dot_dimension_numbers<[1], [0], [0], [1], [0, 0, 1, 1], [], []>} : vector<24x8xbf16>, vector<8x128xbf16>, vector<24x128xf32> -> vector<24x128xf32>
    %4 = vector.extract_strided_slice %3 {offsets = [0, 0], sizes = [8, 128], strides = [1, 1]} : vector<24x128xf32> to vector<8x128xf32>
    %c0_4 = arith.constant 0 : index
    %c0_5 = arith.constant 0 : index
    %5 = vector.load %arg3[%c0_4, %c0_5] : memref<24x1152xf32, #tpu.memory_space<vmem>>, vector<8x128xf32>
    %6 = arith.addf %4, %5 : vector<8x128xf32>
    %7 = vector.extract_strided_slice %3 {offsets = [8, 0], sizes = [8, 128], strides = [1, 1]} : vector<24x128xf32> to vector<8x128xf32>
    %c8 = arith.constant 8 : index
    %c0_6 = arith.constant 0 : index
    %8 = vector.load %arg3[%c8, %c0_6] : memref<24x1152xf32, #tpu.memory_space<vmem>>, vector<8x128xf32>
    %9 = arith.addf %7, %8 : vector<8x128xf32>
    %10 = vector.extract_strided_slice %3 {offsets = [16, 0], sizes = [8, 128], strides = [1, 1]} : vector<24x128xf32> to vector<8x128xf32>
    %c16 = arith.constant 16 : index
    %c0_7 = arith.constant 0 : index
    %11 = vector.load %arg3[%c16, %c0_7] : memref<24x1152xf32, #tpu.memory_space<vmem>>, vector<8x128xf32>
    %12 = arith.addf %10, %11 : vector<8x128xf32>
    %c0_8 = arith.constant 0 : index
    %c0_9 = arith.constant 0 : index
    %c256 = arith.constant 256 : index
    %13 = vector.load %arg1[%c0_8, %c0_9, %c256] : memref<1x8x2304xbf16, #tpu.memory_space<vmem>>, vector<1x8x128xbf16>
    %14 = vector.shape_cast %13 : vector<1x8x128xbf16> to vector<8x128xbf16>
    %cst_10 = arith.constant dense<0.000000e+00> : vector<24x128xf32>
    %15 = tpu.matmul %0, %14, %cst_10 {dimension_numbers = #tpu.dot_dimension_numbers<[1], [0], [0], [1], [0, 0, 1, 1], [], []>} : vector<24x8xbf16>, vector<8x128xbf16>, vector<24x128xf32> -> vector<24x128xf32>
    %16 = vector.extract_strided_slice %15 {offsets = [0, 0], sizes = [8, 128], strides = [1, 1]} : vector<24x128xf32> to vector<8x128xf32>
    %c0_11 = arith.constant 0 : index
    %c128 = arith.constant 128 : index
    %17 = vector.load %arg3[%c0_11, %c128] : memref<24x1152xf32, #tpu.memory_space<vmem>>, vector<8x128xf32>
    %18 = arith.addf %16, %17 : vector<8x128xf32>
    %19 = vector.extract_strided_slice %15 {offsets = [8, 0], sizes = [8, 128], strides = [1, 1]} : vector<24x128xf32> to vector<8x128xf32>
    %c8_12 = arith.constant 8 : index
    %c128_13 = arith.constant 128 : index
    %20 = vector.load %arg3[%c8_12, %c128_13] : memref<24x1152xf32, #tpu.memory_space<vmem>>, vector<8x128xf32>
    %21 = arith.addf %19, %20 : vector<8x128xf32>
    %22 = vector.extract_strided_slice %15 {offsets = [16, 0], sizes = [8, 128], strides = [1, 1]} : vector<24x128xf32> to vector<8x128xf32>
    %c16_14 = arith.constant 16 : index
    %c128_15 = arith.constant 128 : index
    %23 = vector.load %arg3[%c16_14, %c128_15] : memref<24x1152xf32, #tpu.memory_space<vmem>>, vector<8x128xf32>
    %24 = arith.addf %22, %23 : vector<8x128xf32>
    %c0_16 = arith.constant 0 : index
    %c0_17 = arith.constant 0 : index
    %c512 = arith.constant 512 : index
    %25 = vector.load %arg1[%c0_16, %c0_17, %c512] : memref<1x8x2304xbf16, #tpu.memory_space<vmem>>, vector<1x8x128xbf16>
    %26 = vector.shape_cast %25 : vector<1x8x128xbf16> to vector<8x128xbf16>
    %cst_18 = arith.constant dense<0.000000e+00> : vector<24x128xf32>
    %27 = tpu.matmul %0, %26, %cst_18 {dimension_numbers = #tpu.dot_dimension_numbers<[1], [0], [0], [1], [0, 0, 1, 1], [], []>} : vector<24x8xbf16>, vector<8x128xbf16>, vector<24x128xf32> -> vector<24x128xf32>
    %28 = vector.extract_strided_slice %27 {offsets = [0, 0], sizes = [8, 128], strides = [1, 1]} : vector<24x128xf32> to vector<8x128xf32>
    %c0_19 = arith.constant 0 : index
    %c256_20 = arith.constant 256 : index
    %29 = vector.load %arg3[%c0_19, %c256_20] : memref<24x1152xf32, #tpu.memory_space<vmem>>, vector<8x128xf32>
    %30 = arith.addf %28, %29 : vector<8x128xf32>
    %31 = vector.extract_strided_slice %27 {offsets = [8, 0], sizes = [8, 128], strides = [1, 1]} : vector<24x128xf32> to vector<8x128xf32>
    %c8_21 = arith.constant 8 : index
    %c256_22 = arith.constant 256 : index
    %32 = vector.load %arg3[%c8_21, %c256_22] : memref<24x1152xf32, #tpu.memory_space<vmem>>, vector<8x128xf32>
    %33 = arith.addf %31, %32 : vector<8x128xf32>
    %34 = vector.extract_strided_slice %27 {offsets = [16, 0], sizes = [8, 128], strides = [1, 1]} : vector<24x128xf32> to vector<8x128xf32>
    %c16_23 = arith.constant 16 : index
    %c256_24 = arith.constant 256 : index
    %35 = vector.load %arg3[%c16_23, %c256_24] : memref<24x1152xf32, #tpu.memory_space<vmem>>, vector<8x128xf32>
    %36 = arith.addf %34, %35 : vector<8x128xf32>
    %c0_25 = arith.constant 0 : index
    %c0_26 = arith.constant 0 : index
    %c768 = arith.constant 768 : index
    %37 = vector.load %arg1[%c0_25, %c0_26, %c768] : memref<1x8x2304xbf16, #tpu.memory_space<vmem>>, vector<1x8x128xbf16>
    %38 = vector.shape_cast %37 : vector<1x8x128xbf16> to vector<8x128xbf16>
    %cst_27 = arith.constant dense<0.000000e+00> : vector<24x128xf32>
    %39 = tpu.matmul %0, %38, %cst_27 {dimension_numbers = #tpu.dot_dimension_numbers<[1], [0], [0], [1], [0, 0, 1, 1], [], []>} : vector<24x8xbf16>, vector<8x128xbf16>, vector<24x128xf32> -> vector<24x128xf32>
    %40 = vector.extract_strided_slice %39 {offsets = [0, 0], sizes = [8, 128], strides = [1, 1]} : vector<24x128xf32> to vector<8x128xf32>
    %c0_28 = arith.constant 0 : index
    %c384 = arith.constant 384 : index
    %41 = vector.load %arg3[%c0_28, %c384] : memref<24x1152xf32, #tpu.memory_space<vmem>>, vector<8x128xf32>
    %42 = arith.addf %40, %41 : vector<8x128xf32>
    %43 = vector.extract_strided_slice %39 {offsets = [8, 0], sizes = [8, 128], strides = [1, 1]} : vector<24x128xf32> to vector<8x128xf32>
    %c8_29 = arith.constant 8 : index
    %c384_30 = arith.constant 384 : index
    %44 = vector.load %arg3[%c8_29, %c384_30] : memref<24x1152xf32, #tpu.memory_space<vmem>>, vector<8x128xf32>
    %45 = arith.addf %43, %44 : vector<8x128xf32>
    %46 = vector.extract_strided_slice %39 {offsets = [16, 0], sizes = [8, 128], strides = [1, 1]} : vector<24x128xf32> to vector<8x128xf32>
    %c16_31 = arith.constant 16 : index
    %c384_32 = arith.constant 384 : index
    %47 = vector.load %arg3[%c16_31, %c384_32] : memref<24x1152xf32, #tpu.memory_space<vmem>>, vector<8x128xf32>
    %48 = arith.addf %46, %47 : vector<8x128xf32>
    %c0_33 = arith.constant 0 : index
    %c0_34 = arith.constant 0 : index
    %c1024 = arith.constant 1024 : index
    %49 = vector.load %arg1[%c0_33, %c0_34, %c1024] : memref<1x8x2304xbf16, #tpu.memory_space<vmem>>, vector<1x8x128xbf16>
    %50 = vector.shape_cast %49 : vector<1x8x128xbf16> to vector<8x128xbf16>
    %cst_35 = arith.constant dense<0.000000e+00> : vector<24x128xf32>
    %51 = tpu.matmul %0, %50, %cst_35 {dimension_numbers = #tpu.dot_dimension_numbers<[1], [0], [0], [1], [0, 0, 1, 1], [], []>} : vector<24x8xbf16>, vector<8x128xbf16>, vector<24x128xf32> -> vector<24x128xf32>
    %52 = vector.extract_strided_slice %51 {offsets = [0, 0], sizes = [8, 128], strides = [1, 1]} : vector<24x128xf32> to vector<8x128xf32>
    %c0_36 = arith.constant 0 : index
    %c512_37 = arith.constant 512 : index
    %53 = vector.load %arg3[%c0_36, %c512_37] : memref<24x1152xf32, #tpu.memory_space<vmem>>, vector<8x128xf32>
    %54 = arith.addf %52, %53 : vector<8x128xf32>
    %55 = vector.extract_strided_slice %51 {offsets = [8, 0], sizes = [8, 128], strides = [1, 1]} : vector<24x128xf32> to vector<8x128xf32>
    %c8_38 = arith.constant 8 : index
    %c512_39 = arith.constant 512 : index
    %56 = vector.load %arg3[%c8_38, %c512_39] : memref<24x1152xf32, #tpu.memory_space<vmem>>, vector<8x128xf32>
    %57 = arith.addf %55, %56 : vector<8x128xf32>
    %58 = vector.extract_strided_slice %51 {offsets = [16, 0], sizes = [8, 128], strides = [1, 1]} : vector<24x128xf32> to vector<8x128xf32>
    %c16_40 = arith.constant 16 : index
    %c512_41 = arith.constant 512 : index
    %59 = vector.load %arg3[%c16_40, %c512_41] : memref<24x1152xf32, #tpu.memory_space<vmem>>, vector<8x128xf32>
    %60 = arith.addf %58, %59 : vector<8x128xf32>
    %c0_42 = arith.constant 0 : index
    %c0_43 = arith.constant 0 : index
    %c1280 = arith.constant 1280 : index
    %61 = vector.load %arg1[%c0_42, %c0_43, %c1280] : memref<1x8x2304xbf16, #tpu.memory_space<vmem>>, vector<1x8x128xbf16>
    %62 = vector.shape_cast %61 : vector<1x8x128xbf16> to vector<8x128xbf16>
    %cst_44 = arith.constant dense<0.000000e+00> : vector<24x128xf32>
    %63 = tpu.matmul %0, %62, %cst_44 {dimension_numbers = #tpu.dot_dimension_numbers<[1], [0], [0], [1], [0, 0, 1, 1], [], []>} : vector<24x8xbf16>, vector<8x128xbf16>, vector<24x128xf32> -> vector<24x128xf32>
    %64 = vector.extract_strided_slice %63 {offsets = [0, 0], sizes = [8, 128], strides = [1, 1]} : vector<24x128xf32> to vector<8x128xf32>
    %c0_45 = arith.constant 0 : index
    %c640 = arith.constant 640 : index
    %65 = vector.load %arg3[%c0_45, %c640] : memref<24x1152xf32, #tpu.memory_space<vmem>>, vector<8x128xf32>
    %66 = arith.addf %64, %65 : vector<8x128xf32>
    %67 = vector.extract_strided_slice %63 {offsets = [8, 0], sizes = [8, 128], strides = [1, 1]} : vector<24x128xf32> to vector<8x128xf32>
    %c8_46 = arith.constant 8 : index
    %c640_47 = arith.constant 640 : index
    %68 = vector.load %arg3[%c8_46, %c640_47] : memref<24x1152xf32, #tpu.memory_space<vmem>>, vector<8x128xf32>
    %69 = arith.addf %67, %68 : vector<8x128xf32>
    %70 = vector.extract_strided_slice %63 {offsets = [16, 0], sizes = [8, 128], strides = [1, 1]} : vector<24x128xf32> to vector<8x128xf32>
    %c16_48 = arith.constant 16 : index
    %c640_49 = arith.constant 640 : index
    %71 = vector.load %arg3[%c16_48, %c640_49] : memref<24x1152xf32, #tpu.memory_space<vmem>>, vector<8x128xf32>
    %72 = arith.addf %70, %71 : vector<8x128xf32>
    %c0_50 = arith.constant 0 : index
    %c0_51 = arith.constant 0 : index
    %c1536 = arith.constant 1536 : index
    %73 = vector.load %arg1[%c0_50, %c0_51, %c1536] : memref<1x8x2304xbf16, #tpu.memory_space<vmem>>, vector<1x8x128xbf16>
    %74 = vector.shape_cast %73 : vector<1x8x128xbf16> to vector<8x128xbf16>
    %cst_52 = arith.constant dense<0.000000e+00> : vector<24x128xf32>
    %75 = tpu.matmul %0, %74, %cst_52 {dimension_numbers = #tpu.dot_dimension_numbers<[1], [0], [0], [1], [0, 0, 1, 1], [], []>} : vector<24x8xbf16>, vector<8x128xbf16>, vector<24x128xf32> -> vector<24x128xf32>
    %76 = vector.extract_strided_slice %75 {offsets = [0, 0], sizes = [8, 128], strides = [1, 1]} : vector<24x128xf32> to vector<8x128xf32>
    %c0_53 = arith.constant 0 : index
    %c768_54 = arith.constant 768 : index
    %77 = vector.load %arg3[%c0_53, %c768_54] : memref<24x1152xf32, #tpu.memory_space<vmem>>, vector<8x128xf32>
    %78 = arith.addf %76, %77 : vector<8x128xf32>
    %79 = vector.extract_strided_slice %75 {offsets = [8, 0], sizes = [8, 128], strides = [1, 1]} : vector<24x128xf32> to vector<8x128xf32>
    %c8_55 = arith.constant 8 : index
    %c768_56 = arith.constant 768 : index
    %80 = vector.load %arg3[%c8_55, %c768_56] : memref<24x1152xf32, #tpu.memory_space<vmem>>, vector<8x128xf32>
    %81 = arith.addf %79, %80 : vector<8x128xf32>
    %82 = vector.extract_strided_slice %75 {offsets = [16, 0], sizes = [8, 128], strides = [1, 1]} : vector<24x128xf32> to vector<8x128xf32>
    %c16_57 = arith.constant 16 : index
    %c768_58 = arith.constant 768 : index
    %83 = vector.load %arg3[%c16_57, %c768_58] : memref<24x1152xf32, #tpu.memory_space<vmem>>, vector<8x128xf32>
    %84 = arith.addf %82, %83 : vector<8x128xf32>
    %c0_59 = arith.constant 0 : index
    %c0_60 = arith.constant 0 : index
    %c1792 = arith.constant 1792 : index
    %85 = vector.load %arg1[%c0_59, %c0_60, %c1792] : memref<1x8x2304xbf16, #tpu.memory_space<vmem>>, vector<1x8x128xbf16>
    %86 = vector.shape_cast %85 : vector<1x8x128xbf16> to vector<8x128xbf16>
    %cst_61 = arith.constant dense<0.000000e+00> : vector<24x128xf32>
    %87 = tpu.matmul %0, %86, %cst_61 {dimension_numbers = #tpu.dot_dimension_numbers<[1], [0], [0], [1], [0, 0, 1, 1], [], []>} : vector<24x8xbf16>, vector<8x128xbf16>, vector<24x128xf32> -> vector<24x128xf32>
    %88 = vector.extract_strided_slice %87 {offsets = [0, 0], sizes = [8, 128], strides = [1, 1]} : vector<24x128xf32> to vector<8x128xf32>
    %c0_62 = arith.constant 0 : index
    %c896 = arith.constant 896 : index
    %89 = vector.load %arg3[%c0_62, %c896] : memref<24x1152xf32, #tpu.memory_space<vmem>>, vector<8x128xf32>
    %90 = arith.addf %88, %89 : vector<8x128xf32>
    %91 = vector.extract_strided_slice %87 {offsets = [8, 0], sizes = [8, 128], strides = [1, 1]} : vector<24x128xf32> to vector<8x128xf32>
    %c8_63 = arith.constant 8 : index
    %c896_64 = arith.constant 896 : index
    %92 = vector.load %arg3[%c8_63, %c896_64] : memref<24x1152xf32, #tpu.memory_space<vmem>>, vector<8x128xf32>
    %93 = arith.addf %91, %92 : vector<8x128xf32>
    %94 = vector.extract_strided_slice %87 {offsets = [16, 0], sizes = [8, 128], strides = [1, 1]} : vector<24x128xf32> to vector<8x128xf32>
    %c16_65 = arith.constant 16 : index
    %c896_66 = arith.constant 896 : index
    %95 = vector.load %arg3[%c16_65, %c896_66] : memref<24x1152xf32, #tpu.memory_space<vmem>>, vector<8x128xf32>
    %96 = arith.addf %94, %95 : vector<8x128xf32>
    %c0_67 = arith.constant 0 : index
    %c0_68 = arith.constant 0 : index
    %c2048 = arith.constant 2048 : index
    %97 = vector.load %arg1[%c0_67, %c0_68, %c2048] : memref<1x8x2304xbf16, #tpu.memory_space<vmem>>, vector<1x8x128xbf16>
    %98 = vector.shape_cast %97 : vector<1x8x128xbf16> to vector<8x128xbf16>
    %cst_69 = arith.constant dense<0.000000e+00> : vector<24x128xf32>
    %99 = tpu.matmul %0, %98, %cst_69 {dimension_numbers = #tpu.dot_dimension_numbers<[1], [0], [0], [1], [0, 0, 1, 1], [], []>} : vector<24x8xbf16>, vector<8x128xbf16>, vector<24x128xf32> -> vector<24x128xf32>
    %100 = vector.extract_strided_slice %99 {offsets = [0, 0], sizes = [8, 128], strides = [1, 1]} : vector<24x128xf32> to vector<8x128xf32>
    %c0_70 = arith.constant 0 : index
    %c1024_71 = arith.constant 1024 : index
    %101 = vector.load %arg3[%c0_70, %c1024_71] : memref<24x1152xf32, #tpu.memory_space<vmem>>, vector<8x128xf32>
    %102 = arith.addf %100, %101 : vector<8x128xf32>
    %103 = vector.extract_strided_slice %99 {offsets = [8, 0], sizes = [8, 128], strides = [1, 1]} : vector<24x128xf32> to vector<8x128xf32>
    %c8_72 = arith.constant 8 : index
    %c1024_73 = arith.constant 1024 : index
    %104 = vector.load %arg3[%c8_72, %c1024_73] : memref<24x1152xf32, #tpu.memory_space<vmem>>, vector<8x128xf32>
    %105 = arith.addf %103, %104 : vector<8x128xf32>
    %106 = vector.extract_strided_slice %99 {offsets = [16, 0], sizes = [8, 128], strides = [1, 1]} : vector<24x128xf32> to vector<8x128xf32>
    %c16_74 = arith.constant 16 : index
    %c1024_75 = arith.constant 1024 : index
    %107 = vector.load %arg3[%c16_74, %c1024_75] : memref<24x1152xf32, #tpu.memory_space<vmem>>, vector<8x128xf32>
    %108 = arith.addf %106, %107 : vector<8x128xf32>
    %109 = arith.mulf %6, %9 : vector<8x128xf32>
    %c4_i32 = arith.constant 4 : i32
    %110 = tpu.dynamic_rotate %109 by %c4_i32 dim 0 : vector<8x128xf32>, i32 -> vector<8x128xf32>
    %111 = arith.addf %109, %110 : vector<8x128xf32>
    %c2_i32 = arith.constant 2 : i32
    %112 = tpu.dynamic_rotate %111 by %c2_i32 dim 0 : vector<8x128xf32>, i32 -> vector<8x128xf32>
    %113 = arith.addf %111, %112 : vector<8x128xf32>
    %c1_i32 = arith.constant 1 : i32
    %114 = tpu.dynamic_rotate %113 by %c1_i32 dim 0 : vector<8x128xf32>, i32 -> vector<8x128xf32>
    %115 = arith.addf %113, %114 : vector<8x128xf32>
    %116 = arith.mulf %6, %21 : vector<8x128xf32>
    %c4_i32_76 = arith.constant 4 : i32
    %117 = tpu.dynamic_rotate %116 by %c4_i32_76 dim 0 : vector<8x128xf32>, i32 -> vector<8x128xf32>
    %118 = arith.addf %116, %117 : vector<8x128xf32>
    %c2_i32_77 = arith.constant 2 : i32
    %119 = tpu.dynamic_rotate %118 by %c2_i32_77 dim 0 : vector<8x128xf32>, i32 -> vector<8x128xf32>
    %120 = arith.addf %118, %119 : vector<8x128xf32>
    %c1_i32_78 = arith.constant 1 : i32
    %121 = tpu.dynamic_rotate %120 by %c1_i32_78 dim 0 : vector<8x128xf32>, i32 -> vector<8x128xf32>
    %122 = arith.addf %120, %121 : vector<8x128xf32>
    %123 = arith.mulf %6, %33 : vector<8x128xf32>
    %c4_i32_79 = arith.constant 4 : i32
    %124 = tpu.dynamic_rotate %123 by %c4_i32_79 dim 0 : vector<8x128xf32>, i32 -> vector<8x128xf32>
    %125 = arith.addf %123, %124 : vector<8x128xf32>
    %c2_i32_80 = arith.constant 2 : i32
    %126 = tpu.dynamic_rotate %125 by %c2_i32_80 dim 0 : vector<8x128xf32>, i32 -> vector<8x128xf32>
    %127 = arith.addf %125, %126 : vector<8x128xf32>
    %c1_i32_81 = arith.constant 1 : i32
    %128 = tpu.dynamic_rotate %127 by %c1_i32_81 dim 0 : vector<8x128xf32>, i32 -> vector<8x128xf32>
    %129 = arith.addf %127, %128 : vector<8x128xf32>
    %130 = arith.mulf %6, %45 : vector<8x128xf32>
    %c4_i32_82 = arith.constant 4 : i32
    %131 = tpu.dynamic_rotate %130 by %c4_i32_82 dim 0 : vector<8x128xf32>, i32 -> vector<8x128xf32>
    %132 = arith.addf %130, %131 : vector<8x128xf32>
    %c2_i32_83 = arith.constant 2 : i32
    %133 = tpu.dynamic_rotate %132 by %c2_i32_83 dim 0 : vector<8x128xf32>, i32 -> vector<8x128xf32>
    %134 = arith.addf %132, %133 : vector<8x128xf32>
    %c1_i32_84 = arith.constant 1 : i32
    %135 = tpu.dynamic_rotate %134 by %c1_i32_84 dim 0 : vector<8x128xf32>, i32 -> vector<8x128xf32>
    %136 = arith.addf %134, %135 : vector<8x128xf32>
    %137 = arith.mulf %6, %57 : vector<8x128xf32>
    %c4_i32_85 = arith.constant 4 : i32
    %138 = tpu.dynamic_rotate %137 by %c4_i32_85 dim 0 : vector<8x128xf32>, i32 -> vector<8x128xf32>
    %139 = arith.addf %137, %138 : vector<8x128xf32>
    %c2_i32_86 = arith.constant 2 : i32
    %140 = tpu.dynamic_rotate %139 by %c2_i32_86 dim 0 : vector<8x128xf32>, i32 -> vector<8x128xf32>
    %141 = arith.addf %139, %140 : vector<8x128xf32>
    %c1_i32_87 = arith.constant 1 : i32
    %142 = tpu.dynamic_rotate %141 by %c1_i32_87 dim 0 : vector<8x128xf32>, i32 -> vector<8x128xf32>
    %143 = arith.addf %141, %142 : vector<8x128xf32>
    %144 = arith.mulf %6, %69 : vector<8x128xf32>
    %c4_i32_88 = arith.constant 4 : i32
    %145 = tpu.dynamic_rotate %144 by %c4_i32_88 dim 0 : vector<8x128xf32>, i32 -> vector<8x128xf32>
    %146 = arith.addf %144, %145 : vector<8x128xf32>
    %c2_i32_89 = arith.constant 2 : i32
    %147 = tpu.dynamic_rotate %146 by %c2_i32_89 dim 0 : vector<8x128xf32>, i32 -> vector<8x128xf32>
    %148 = arith.addf %146, %147 : vector<8x128xf32>
    %c1_i32_90 = arith.constant 1 : i32
    %149 = tpu.dynamic_rotate %148 by %c1_i32_90 dim 0 : vector<8x128xf32>, i32 -> vector<8x128xf32>
    %150 = arith.addf %148, %149 : vector<8x128xf32>
    %151 = arith.mulf %6, %81 : vector<8x128xf32>
    %c4_i32_91 = arith.constant 4 : i32
    %152 = tpu.dynamic_rotate %151 by %c4_i32_91 dim 0 : vector<8x128xf32>, i32 -> vector<8x128xf32>
    %153 = arith.addf %151, %152 : vector<8x128xf32>
    %c2_i32_92 = arith.constant 2 : i32
    %154 = tpu.dynamic_rotate %153 by %c2_i32_92 dim 0 : vector<8x128xf32>, i32 -> vector<8x128xf32>
    %155 = arith.addf %153, %154 : vector<8x128xf32>
    %c1_i32_93 = arith.constant 1 : i32
    %156 = tpu.dynamic_rotate %155 by %c1_i32_93 dim 0 : vector<8x128xf32>, i32 -> vector<8x128xf32>
    %157 = arith.addf %155, %156 : vector<8x128xf32>
    %158 = arith.mulf %6, %93 : vector<8x128xf32>
    %c4_i32_94 = arith.constant 4 : i32
    %159 = tpu.dynamic_rotate %158 by %c4_i32_94 dim 0 : vector<8x128xf32>, i32 -> vector<8x128xf32>
    %160 = arith.addf %158, %159 : vector<8x128xf32>
    %c2_i32_95 = arith.constant 2 : i32
    %161 = tpu.dynamic_rotate %160 by %c2_i32_95 dim 0 : vector<8x128xf32>, i32 -> vector<8x128xf32>
    %162 = arith.addf %160, %161 : vector<8x128xf32>
    %c1_i32_96 = arith.constant 1 : i32
    %163 = tpu.dynamic_rotate %162 by %c1_i32_96 dim 0 : vector<8x128xf32>, i32 -> vector<8x128xf32>
    %164 = arith.addf %162, %163 : vector<8x128xf32>
    %165 = arith.mulf %6, %105 : vector<8x128xf32>
    %c4_i32_97 = arith.constant 4 : i32
    %166 = tpu.dynamic_rotate %165 by %c4_i32_97 dim 0 : vector<8x128xf32>, i32 -> vector<8x128xf32>
    %167 = arith.addf %165, %166 : vector<8x128xf32>
    %c2_i32_98 = arith.constant 2 : i32
    %168 = tpu.dynamic_rotate %167 by %c2_i32_98 dim 0 : vector<8x128xf32>, i32 -> vector<8x128xf32>
    %169 = arith.addf %167, %168 : vector<8x128xf32>
    %c1_i32_99 = arith.constant 1 : i32
    %170 = tpu.dynamic_rotate %169 by %c1_i32_99 dim 0 : vector<8x128xf32>, i32 -> vector<8x128xf32>
    %171 = arith.addf %169, %170 : vector<8x128xf32>
    %172 = arith.maximumf %115, %122 : vector<8x128xf32>
    %173 = arith.maximumf %172, %129 : vector<8x128xf32>
    %174 = arith.maximumf %173, %136 : vector<8x128xf32>
    %175 = arith.maximumf %174, %143 : vector<8x128xf32>
    %176 = arith.maximumf %175, %150 : vector<8x128xf32>
    %177 = arith.maximumf %176, %157 : vector<8x128xf32>
    %178 = arith.maximumf %177, %164 : vector<8x128xf32>
    %179 = arith.maximumf %178, %171 : vector<8x128xf32>
    %180 = arith.subf %115, %179 : vector<8x128xf32>
    %181 = math.exp %180 : vector<8x128xf32>
    %182 = arith.mulf %181, %12 : vector<8x128xf32>
    %183 = arith.subf %122, %179 : vector<8x128xf32>
    %184 = math.exp %183 : vector<8x128xf32>
    %185 = arith.addf %181, %184 : vector<8x128xf32>
    %186 = arith.mulf %184, %24 : vector<8x128xf32>
    %187 = arith.addf %182, %186 : vector<8x128xf32>
    %188 = arith.subf %129, %179 : vector<8x128xf32>
    %189 = math.exp %188 : vector<8x128xf32>
    %190 = arith.addf %185, %189 : vector<8x128xf32>
    %191 = arith.mulf %189, %36 : vector<8x128xf32>
    %192 = arith.addf %187, %191 : vector<8x128xf32>
    %193 = arith.subf %136, %179 : vector<8x128xf32>
    %194 = math.exp %193 : vector<8x128xf32>
    %195 = arith.addf %190, %194 : vector<8x128xf32>
    %196 = arith.mulf %194, %48 : vector<8x128xf32>
    %197 = arith.addf %192, %196 : vector<8x128xf32>
    %198 = arith.subf %143, %179 : vector<8x128xf32>
    %199 = math.exp %198 : vector<8x128xf32>
    %200 = arith.addf %195, %199 : vector<8x128xf32>
    %201 = arith.mulf %199, %60 : vector<8x128xf32>
    %202 = arith.addf %197, %201 : vector<8x128xf32>
    %203 = arith.subf %150, %179 : vector<8x128xf32>
    %204 = math.exp %203 : vector<8x128xf32>
    %205 = arith.addf %200, %204 : vector<8x128xf32>
    %206 = arith.mulf %204, %72 : vector<8x128xf32>
    %207 = arith.addf %202, %206 : vector<8x128xf32>
    %208 = arith.subf %157, %179 : vector<8x128xf32>
    %209 = math.exp %208 : vector<8x128xf32>
    %210 = arith.addf %205, %209 : vector<8x128xf32>
    %211 = arith.mulf %209, %84 : vector<8x128xf32>
    %212 = arith.addf %207, %211 : vector<8x128xf32>
    %213 = arith.subf %164, %179 : vector<8x128xf32>
    %214 = math.exp %213 : vector<8x128xf32>
    %215 = arith.addf %210, %214 : vector<8x128xf32>
    %216 = arith.mulf %214, %96 : vector<8x128xf32>
    %217 = arith.addf %212, %216 : vector<8x128xf32>
    %218 = arith.subf %171, %179 : vector<8x128xf32>
    %219 = math.exp %218 : vector<8x128xf32>
    %220 = arith.addf %215, %219 : vector<8x128xf32>
    %221 = arith.mulf %219, %108 : vector<8x128xf32>
    %222 = arith.addf %217, %221 : vector<8x128xf32>
    %223 = tpu.reciprocal %220 : vector<8x128xf32> -> vector<8x128xf32>
    %224 = arith.mulf %222, %223 : vector<8x128xf32>
    %c0_100 = arith.constant 0 : index
    %c0_101 = arith.constant 0 : index
    %c0_102 = arith.constant 0 : index
    %225 = vector.load %arg4[%c0_100, %c0_101, %c0_102] : memref<1x8x2304xf32, #tpu.memory_space<vmem>>, vector<1x8x128xf32>
    %226 = vector.shape_cast %225 : vector<1x8x128xf32> to vector<8x128xf32>
    %227 = vector.shape_cast %224 : vector<8x128xf32> to vector<1x8x128xf32>
    tpu.vector_store %arg4[%c0_100, %c0_101, %c0_102], %227 {strides = array<i32>} : memref<1x8x2304xf32, #tpu.memory_space<vmem>>, vector<1x8x128xf32>,
    %228 = arith.mulf %18, %9 : vector<8x128xf32>
    %c4_i32_103 = arith.constant 4 : i32
    %229 = tpu.dynamic_rotate %228 by %c4_i32_103 dim 0 : vector<8x128xf32>, i32 -> vector<8x128xf32>
    %230 = arith.addf %228, %229 : vector<8x128xf32>
    %c2_i32_104 = arith.constant 2 : i32
    %231 = tpu.dynamic_rotate %230 by %c2_i32_104 dim 0 : vector<8x128xf32>, i32 -> vector<8x128xf32>
    %232 = arith.addf %230, %231 : vector<8x128xf32>
    %c1_i32_105 = arith.constant 1 : i32
    %233 = tpu.dynamic_rotate %232 by %c1_i32_105 dim 0 : vector<8x128xf32>, i32 -> vector<8x128xf32>
    %234 = arith.addf %232, %233 : vector<8x128xf32>
    %235 = arith.mulf %18, %21 : vector<8x128xf32>
    %c4_i32_106 = arith.constant 4 : i32
    %236 = tpu.dynamic_rotate %235 by %c4_i32_106 dim 0 : vector<8x128xf32>, i32 -> vector<8x128xf32>
    %237 = arith.addf %235, %236 : vector<8x128xf32>
    %c2_i32_107 = arith.constant 2 : i32
    %238 = tpu.dynamic_rotate %237 by %c2_i32_107 dim 0 : vector<8x128xf32>, i32 -> vector<8x128xf32>
    %239 = arith.addf %237, %238 : vector<8x128xf32>
    %c1_i32_108 = arith.constant 1 : i32
    %240 = tpu.dynamic_rotate %239 by %c1_i32_108 dim 0 : vector<8x128xf32>, i32 -> vector<8x128xf32>
    %241 = arith.addf %239, %240 : vector<8x128xf32>
    %242 = arith.mulf %18, %33 : vector<8x128xf32>
    %c4_i32_109 = arith.constant 4 : i32
    %243 = tpu.dynamic_rotate %242 by %c4_i32_109 dim 0 : vector<8x128xf32>, i32 -> vector<8x128xf32>
    %244 = arith.addf %242, %243 : vector<8x128xf32>
    %c2_i32_110 = arith.constant 2 : i32
    %245 = tpu.dynamic_rotate %244 by %c2_i32_110 dim 0 : vector<8x128xf32>, i32 -> vector<8x128xf32>
    %246 = arith.addf %244, %245 : vector<8x128xf32>
    %c1_i32_111 = arith.constant 1 : i32
    %247 = tpu.dynamic_rotate %246 by %c1_i32_111 dim 0 : vector<8x128xf32>, i32 -> vector<8x128xf32>
    %248 = arith.addf %246, %247 : vector<8x128xf32>
    %249 = arith.mulf %18, %45 : vector<8x128xf32>
    %c4_i32_112 = arith.constant 4 : i32
    %250 = tpu.dynamic_rotate %249 by %c4_i32_112 dim 0 : vector<8x128xf32>, i32 -> vector<8x128xf32>
    %251 = arith.addf %249, %250 : vector<8x128xf32>
    %c2_i32_113 = arith.constant 2 : i32
    %252 = tpu.dynamic_rotate %251 by %c2_i32_113 dim 0 : vector<8x128xf32>, i32 -> vector<8x128xf32>
    %253 = arith.addf %251, %252 : vector<8x128xf32>
    %c1_i32_114 = arith.constant 1 : i32
    %254 = tpu.dynamic_rotate %253 by %c1_i32_114 dim 0 : vector<8x128xf32>, i32 -> vector<8x128xf32>
    %255 = arith.addf %253, %254 : vector<8x128xf32>
    %256 = arith.mulf %18, %57 : vector<8x128xf32>
    %c4_i32_115 = arith.constant 4 : i32
    %257 = tpu.dynamic_rotate %256 by %c4_i32_115 dim 0 : vector<8x128xf32>, i32 -> vector<8x128xf32>
    %258 = arith.addf %256, %257 : vector<8x128xf32>
    %c2_i32_116 = arith.constant 2 : i32
    %259 = tpu.dynamic_rotate %258 by %c2_i32_116 dim 0 : vector<8x128xf32>, i32 -> vector<8x128xf32>
    %260 = arith.addf %258, %259 : vector<8x128xf32>
    %c1_i32_117 = arith.constant 1 : i32
    %261 = tpu.dynamic_rotate %260 by %c1_i32_117 dim 0 : vector<8x128xf32>, i32 -> vector<8x128xf32>
    %262 = arith.addf %260, %261 : vector<8x128xf32>
    %263 = arith.mulf %18, %69 : vector<8x128xf32>
    %c4_i32_118 = arith.constant 4 : i32
    %264 = tpu.dynamic_rotate %263 by %c4_i32_118 dim 0 : vector<8x128xf32>, i32 -> vector<8x128xf32>
    %265 = arith.addf %263, %264 : vector<8x128xf32>
    %c2_i32_119 = arith.constant 2 : i32
    %266 = tpu.dynamic_rotate %265 by %c2_i32_119 dim 0 : vector<8x128xf32>, i32 -> vector<8x128xf32>
    %267 = arith.addf %265, %266 : vector<8x128xf32>
    %c1_i32_120 = arith.constant 1 : i32
    %268 = tpu.dynamic_rotate %267 by %c1_i32_120 dim 0 : vector<8x128xf32>, i32 -> vector<8x128xf32>
    %269 = arith.addf %267, %268 : vector<8x128xf32>
    %270 = arith.mulf %18, %81 : vector<8x128xf32>
    %c4_i32_121 = arith.constant 4 : i32
    %271 = tpu.dynamic_rotate %270 by %c4_i32_121 dim 0 : vector<8x128xf32>, i32 -> vector<8x128xf32>
    %272 = arith.addf %270, %271 : vector<8x128xf32>
    %c2_i32_122 = arith.constant 2 : i32
    %273 = tpu.dynamic_rotate %272 by %c2_i32_122 dim 0 : vector<8x128xf32>, i32 -> vector<8x128xf32>
    %274 = arith.addf %272, %273 : vector<8x128xf32>
    %c1_i32_123 = arith.constant 1 : i32
    %275 = tpu.dynamic_rotate %274 by %c1_i32_123 dim 0 : vector<8x128xf32>, i32 -> vector<8x128xf32>
    %276 = arith.addf %274, %275 : vector<8x128xf32>
    %277 = arith.mulf %18, %93 : vector<8x128xf32>
    %c4_i32_124 = arith.constant 4 : i32
    %278 = tpu.dynamic_rotate %277 by %c4_i32_124 dim 0 : vector<8x128xf32>, i32 -> vector<8x128xf32>
    %279 = arith.addf %277, %278 : vector<8x128xf32>
    %c2_i32_125 = arith.constant 2 : i32
    %280 = tpu.dynamic_rotate %279 by %c2_i32_125 dim 0 : vector<8x128xf32>, i32 -> vector<8x128xf32>
    %281 = arith.addf %279, %280 : vector<8x128xf32>
    %c1_i32_126 = arith.constant 1 : i32
    %282 = tpu.dynamic_rotate %281 by %c1_i32_126 dim 0 : vector<8x128xf32>, i32 -> vector<8x128xf32>
    %283 = arith.addf %281, %282 : vector<8x128xf32>
    %284 = arith.mulf %18, %105 : vector<8x128xf32>
    %c4_i32_127 = arith.constant 4 : i32
    %285 = tpu.dynamic_rotate %284 by %c4_i32_127 dim 0 : vector<8x128xf32>, i32 -> vector<8x128xf32>
    %286 = arith.addf %284, %285 : vector<8x128xf32>
    %c2_i32_128 = arith.constant 2 : i32
    %287 = tpu.dynamic_rotate %286 by %c2_i32_128 dim 0 : vector<8x128xf32>, i32 -> vector<8x128xf32>
    %288 = arith.addf %286, %287 : vector<8x128xf32>
    %c1_i32_129 = arith.constant 1 : i32
    %289 = tpu.dynamic_rotate %288 by %c1_i32_129 dim 0 : vector<8x128xf32>, i32 -> vector<8x128xf32>
    %290 = arith.addf %288, %289 : vector<8x128xf32>
    %291 = arith.maximumf %234, %241 : vector<8x128xf32>
    %292 = arith.maximumf %291, %248 : vector<8x128xf32>
    %293 = arith.maximumf %292, %255 : vector<8x128xf32>
    %294 = arith.maximumf %293, %262 : vector<8x128xf32>
    %295 = arith.maximumf %294, %269 : vector<8x128xf32>
    %296 = arith.maximumf %295, %276 : vector<8x128xf32>
    %297 = arith.maximumf %296, %283 : vector<8x128xf32>
    %298 = arith.maximumf %297, %290 : vector<8x128xf32>
    %299 = arith.subf %234, %298 : vector<8x128xf32>
    %300 = math.exp %299 : vector<8x128xf32>
    %301 = arith.mulf %300, %12 : vector<8x128xf32>
    %302 = arith.subf %241, %298 : vector<8x128xf32>
    %303 = math.exp %302 : vector<8x128xf32>
    %304 = arith.addf %300, %303 : vector<8x128xf32>
    %305 = arith.mulf %303, %24 : vector<8x128xf32>
    %306 = arith.addf %301, %305 : vector<8x128xf32>
    %307 = arith.subf %248, %298 : vector<8x128xf32>
    %308 = math.exp %307 : vector<8x128xf32>
    %309 = arith.addf %304, %308 : vector<8x128xf32>
    %310 = arith.mulf %308, %36 : vector<8x128xf32>
    %311 = arith.addf %306, %310 : vector<8x128xf32>
    %312 = arith.subf %255, %298 : vector<8x128xf32>
    %313 = math.exp %312 : vector<8x128xf32>
    %314 = arith.addf %309, %313 : vector<8x128xf32>
    %315 = arith.mulf %313, %48 : vector<8x128xf32>
    %316 = arith.addf %311, %315 : vector<8x128xf32>
    %317 = arith.subf %262, %298 : vector<8x128xf32>
    %318 = math.exp %317 : vector<8x128xf32>
    %319 = arith.addf %314, %318 : vector<8x128xf32>
    %320 = arith.mulf %318, %60 : vector<8x128xf32>
    %321 = arith.addf %316, %320 : vector<8x128xf32>
    %322 = arith.subf %269, %298 : vector<8x128xf32>
    %323 = math.exp %322 : vector<8x128xf32>
    %324 = arith.addf %319, %323 : vector<8x128xf32>
    %325 = arith.mulf %323, %72 : vector<8x128xf32>
    %326 = arith.addf %321, %325 : vector<8x128xf32>
    %327 = arith.subf %276, %298 : vector<8x128xf32>
    %328 = math.exp %327 : vector<8x128xf32>
    %329 = arith.addf %324, %328 : vector<8x128xf32>
    %330 = arith.mulf %328, %84 : vector<8x128xf32>
    %331 = arith.addf %326, %330 : vector<8x128xf32>
    %332 = arith.subf %283, %298 : vector<8x128xf32>
    %333 = math.exp %332 : vector<8x128xf32>
    %334 = arith.addf %329, %333 : vector<8x128xf32>
    %335 = arith.mulf %333, %96 : vector<8x128xf32>
    %336 = arith.addf %331, %335 : vector<8x128xf32>
    %337 = arith.subf %290, %298 : vector<8x128xf32>
    %338 = math.exp %337 : vector<8x128xf32>
    %339 = arith.addf %334, %338 : vector<8x128xf32>
    %340 = arith.mulf %338, %108 : vector<8x128xf32>
    %341 = arith.addf %336, %340 : vector<8x128xf32>
    %342 = tpu.reciprocal %339 : vector<8x128xf32> -> vector<8x128xf32>
    %343 = arith.mulf %341, %342 : vector<8x128xf32>
    %c0_130 = arith.constant 0 : index
    %c0_131 = arith.constant 0 : index
    %c256_132 = arith.constant 256 : index
    %344 = vector.load %arg4[%c0_130, %c0_131, %c256_132] : memref<1x8x2304xf32, #tpu.memory_space<vmem>>, vector<1x8x128xf32>
    %345 = vector.shape_cast %344 : vector<1x8x128xf32> to vector<8x128xf32>
    %346 = vector.shape_cast %343 : vector<8x128xf32> to vector<1x8x128xf32>
    tpu.vector_store %arg4[%c0_130, %c0_131, %c256_132], %346 {strides = array<i32>} : memref<1x8x2304xf32, #tpu.memory_space<vmem>>, vector<1x8x128xf32>,
    %347 = arith.mulf %30, %9 : vector<8x128xf32>
    %c4_i32_133 = arith.constant 4 : i32
    %348 = tpu.dynamic_rotate %347 by %c4_i32_133 dim 0 : vector<8x128xf32>, i32 -> vector<8x128xf32>
    %349 = arith.addf %347, %348 : vector<8x128xf32>
    %c2_i32_134 = arith.constant 2 : i32
    %350 = tpu.dynamic_rotate %349 by %c2_i32_134 dim 0 : vector<8x128xf32>, i32 -> vector<8x128xf32>
    %351 = arith.addf %349, %350 : vector<8x128xf32>
    %c1_i32_135 = arith.constant 1 : i32
    %352 = tpu.dynamic_rotate %351 by %c1_i32_135 dim 0 : vector<8x128xf32>, i32 -> vector<8x128xf32>
    %353 = arith.addf %351, %352 : vector<8x128xf32>
    %354 = arith.mulf %30, %21 : vector<8x128xf32>
    %c4_i32_136 = arith.constant 4 : i32
    %355 = tpu.dynamic_rotate %354 by %c4_i32_136 dim 0 : vector<8x128xf32>, i32 -> vector<8x128xf32>
    %356 = arith.addf %354, %355 : vector<8x128xf32>
    %c2_i32_137 = arith.constant 2 : i32
    %357 = tpu.dynamic_rotate %356 by %c2_i32_137 dim 0 : vector<8x128xf32>, i32 -> vector<8x128xf32>
    %358 = arith.addf %356, %357 : vector<8x128xf32>
    %c1_i32_138 = arith.constant 1 : i32
    %359 = tpu.dynamic_rotate %358 by %c1_i32_138 dim 0 : vector<8x128xf32>, i32 -> vector<8x128xf32>
    %360 = arith.addf %358, %359 : vector<8x128xf32>
    %361 = arith.mulf %30, %33 : vector<8x128xf32>
    %c4_i32_139 = arith.constant 4 : i32
    %362 = tpu.dynamic_rotate %361 by %c4_i32_139 dim 0 : vector<8x128xf32>, i32 -> vector<8x128xf32>
    %363 = arith.addf %361, %362 : vector<8x128xf32>
    %c2_i32_140 = arith.constant 2 : i32
    %364 = tpu.dynamic_rotate %363 by %c2_i32_140 dim 0 : vector<8x128xf32>, i32 -> vector<8x128xf32>
    %365 = arith.addf %363, %364 : vector<8x128xf32>
    %c1_i32_141 = arith.constant 1 : i32
    %366 = tpu.dynamic_rotate %365 by %c1_i32_141 dim 0 : vector<8x128xf32>, i32 -> vector<8x128xf32>
    %367 = arith.addf %365, %366 : vector<8x128xf32>
    %368 = arith.mulf %30, %45 : vector<8x128xf32>
    %c4_i32_142 = arith.constant 4 : i32
    %369 = tpu.dynamic_rotate %368 by %c4_i32_142 dim 0 : vector<8x128xf32>, i32 -> vector<8x128xf32>
    %370 = arith.addf %368, %369 : vector<8x128xf32>
    %c2_i32_143 = arith.constant 2 : i32
    %371 = tpu.dynamic_rotate %370 by %c2_i32_143 dim 0 : vector<8x128xf32>, i32 -> vector<8x128xf32>
    %372 = arith.addf %370, %371 : vector<8x128xf32>
    %c1_i32_144 = arith.constant 1 : i32
    %373 = tpu.dynamic_rotate %372 by %c1_i32_144 dim 0 : vector<8x128xf32>, i32 -> vector<8x128xf32>
    %374 = arith.addf %372, %373 : vector<8x128xf32>
    %375 = arith.mulf %30, %57 : vector<8x128xf32>
    %c4_i32_145 = arith.constant 4 : i32
    %376 = tpu.dynamic_rotate %375 by %c4_i32_145 dim 0 : vector<8x128xf32>, i32 -> vector<8x128xf32>
    %377 = arith.addf %375, %376 : vector<8x128xf32>
    %c2_i32_146 = arith.constant 2 : i32
    %378 = tpu.dynamic_rotate %377 by %c2_i32_146 dim 0 : vector<8x128xf32>, i32 -> vector<8x128xf32>
    %379 = arith.addf %377, %378 : vector<8x128xf32>
    %c1_i32_147 = arith.constant 1 : i32
    %380 = tpu.dynamic_rotate %379 by %c1_i32_147 dim 0 : vector<8x128xf32>, i32 -> vector<8x128xf32>
    %381 = arith.addf %379, %380 : vector<8x128xf32>
    %382 = arith.mulf %30, %69 : vector<8x128xf32>
    %c4_i32_148 = arith.constant 4 : i32
    %383 = tpu.dynamic_rotate %382 by %c4_i32_148 dim 0 : vector<8x128xf32>, i32 -> vector<8x128xf32>
    %384 = arith.addf %382, %383 : vector<8x128xf32>
    %c2_i32_149 = arith.constant 2 : i32
    %385 = tpu.dynamic_rotate %384 by %c2_i32_149 dim 0 : vector<8x128xf32>, i32 -> vector<8x128xf32>
    %386 = arith.addf %384, %385 : vector<8x128xf32>
    %c1_i32_150 = arith.constant 1 : i32
    %387 = tpu.dynamic_rotate %386 by %c1_i32_150 dim 0 : vector<8x128xf32>, i32 -> vector<8x128xf32>
    %388 = arith.addf %386, %387 : vector<8x128xf32>
    %389 = arith.mulf %30, %81 : vector<8x128xf32>
    %c4_i32_151 = arith.constant 4 : i32
    %390 = tpu.dynamic_rotate %389 by %c4_i32_151 dim 0 : vector<8x128xf32>, i32 -> vector<8x128xf32>
    %391 = arith.addf %389, %390 : vector<8x128xf32>
    %c2_i32_152 = arith.constant 2 : i32
    %392 = tpu.dynamic_rotate %391 by %c2_i32_152 dim 0 : vector<8x128xf32>, i32 -> vector<8x128xf32>
    %393 = arith.addf %391, %392 : vector<8x128xf32>
    %c1_i32_153 = arith.constant 1 : i32
    %394 = tpu.dynamic_rotate %393 by %c1_i32_153 dim 0 : vector<8x128xf32>, i32 -> vector<8x128xf32>
    %395 = arith.addf %393, %394 : vector<8x128xf32>
    %396 = arith.mulf %30, %93 : vector<8x128xf32>
    %c4_i32_154 = arith.constant 4 : i32
    %397 = tpu.dynamic_rotate %396 by %c4_i32_154 dim 0 : vector<8x128xf32>, i32 -> vector<8x128xf32>
    %398 = arith.addf %396, %397 : vector<8x128xf32>
    %c2_i32_155 = arith.constant 2 : i32
    %399 = tpu.dynamic_rotate %398 by %c2_i32_155 dim 0 : vector<8x128xf32>, i32 -> vector<8x128xf32>
    %400 = arith.addf %398, %399 : vector<8x128xf32>
    %c1_i32_156 = arith.constant 1 : i32
    %401 = tpu.dynamic_rotate %400 by %c1_i32_156 dim 0 : vector<8x128xf32>, i32 -> vector<8x128xf32>
    %402 = arith.addf %400, %401 : vector<8x128xf32>
    %403 = arith.mulf %30, %105 : vector<8x128xf32>
    %c4_i32_157 = arith.constant 4 : i32
    %404 = tpu.dynamic_rotate %403 by %c4_i32_157 dim 0 : vector<8x128xf32>, i32 -> vector<8x128xf32>
    %405 = arith.addf %403, %404 : vector<8x128xf32>
    %c2_i32_158 = arith.constant 2 : i32
    %406 = tpu.dynamic_rotate %405 by %c2_i32_158 dim 0 : vector<8x128xf32>, i32 -> vector<8x128xf32>
    %407 = arith.addf %405, %406 : vector<8x128xf32>
    %c1_i32_159 = arith.constant 1 : i32
    %408 = tpu.dynamic_rotate %407 by %c1_i32_159 dim 0 : vector<8x128xf32>, i32 -> vector<8x128xf32>
    %409 = arith.addf %407, %408 : vector<8x128xf32>
    %410 = arith.maximumf %353, %360 : vector<8x128xf32>
    %411 = arith.maximumf %410, %367 : vector<8x128xf32>
    %412 = arith.maximumf %411, %374 : vector<8x128xf32>
    %413 = arith.maximumf %412, %381 : vector<8x128xf32>
    %414 = arith.maximumf %413, %388 : vector<8x128xf32>
    %415 = arith.maximumf %414, %395 : vector<8x128xf32>
    %416 = arith.maximumf %415, %402 : vector<8x128xf32>
    %417 = arith.maximumf %416, %409 : vector<8x128xf32>
    %418 = arith.subf %353, %417 : vector<8x128xf32>
    %419 = math.exp %418 : vector<8x128xf32>
    %420 = arith.mulf %419, %12 : vector<8x128xf32>
    %421 = arith.subf %360, %417 : vector<8x128xf32>
    %422 = math.exp %421 : vector<8x128xf32>
    %423 = arith.addf %419, %422 : vector<8x128xf32>
    %424 = arith.mulf %422, %24 : vector<8x128xf32>
    %425 = arith.addf %420, %424 : vector<8x128xf32>
    %426 = arith.subf %367, %417 : vector<8x128xf32>
    %427 = math.exp %426 : vector<8x128xf32>
    %428 = arith.addf %423, %427 : vector<8x128xf32>
    %429 = arith.mulf %427, %36 : vector<8x128xf32>
    %430 = arith.addf %425, %429 : vector<8x128xf32>
    %431 = arith.subf %374, %417 : vector<8x128xf32>
    %432 = math.exp %431 : vector<8x128xf32>
    %433 = arith.addf %428, %432 : vector<8x128xf32>
    %434 = arith.mulf %432, %48 : vector<8x128xf32>
    %435 = arith.addf %430, %434 : vector<8x128xf32>
    %436 = arith.subf %381, %417 : vector<8x128xf32>
    %437 = math.exp %436 : vector<8x128xf32>
    %438 = arith.addf %433, %437 : vector<8x128xf32>
    %439 = arith.mulf %437, %60 : vector<8x128xf32>
    %440 = arith.addf %435, %439 : vector<8x128xf32>
    %441 = arith.subf %388, %417 : vector<8x128xf32>
    %442 = math.exp %441 : vector<8x128xf32>
    %443 = arith.addf %438, %442 : vector<8x128xf32>
    %444 = arith.mulf %442, %72 : vector<8x128xf32>
    %445 = arith.addf %440, %444 : vector<8x128xf32>
    %446 = arith.subf %395, %417 : vector<8x128xf32>
    %447 = math.exp %446 : vector<8x128xf32>
    %448 = arith.addf %443, %447 : vector<8x128xf32>
    %449 = arith.mulf %447, %84 : vector<8x128xf32>
    %450 = arith.addf %445, %449 : vector<8x128xf32>
    %451 = arith.subf %402, %417 : vector<8x128xf32>
    %452 = math.exp %451 : vector<8x128xf32>
    %453 = arith.addf %448, %452 : vector<8x128xf32>
    %454 = arith.mulf %452, %96 : vector<8x128xf32>
    %455 = arith.addf %450, %454 : vector<8x128xf32>
    %456 = arith.subf %409, %417 : vector<8x128xf32>
    %457 = math.exp %456 : vector<8x128xf32>
    %458 = arith.addf %453, %457 : vector<8x128xf32>
    %459 = arith.mulf %457, %108 : vector<8x128xf32>
    %460 = arith.addf %455, %459 : vector<8x128xf32>
    %461 = tpu.reciprocal %458 : vector<8x128xf32> -> vector<8x128xf32>
    %462 = arith.mulf %460, %461 : vector<8x128xf32>
    %c0_160 = arith.constant 0 : index
    %c0_161 = arith.constant 0 : index
    %c512_162 = arith.constant 512 : index
    %463 = vector.load %arg4[%c0_160, %c0_161, %c512_162] : memref<1x8x2304xf32, #tpu.memory_space<vmem>>, vector<1x8x128xf32>
    %464 = vector.shape_cast %463 : vector<1x8x128xf32> to vector<8x128xf32>
    %465 = vector.shape_cast %462 : vector<8x128xf32> to vector<1x8x128xf32>
    tpu.vector_store %arg4[%c0_160, %c0_161, %c512_162], %465 {strides = array<i32>} : memref<1x8x2304xf32, #tpu.memory_space<vmem>>, vector<1x8x128xf32>,
    %466 = arith.mulf %42, %9 : vector<8x128xf32>
    %c4_i32_163 = arith.constant 4 : i32
    %467 = tpu.dynamic_rotate %466 by %c4_i32_163 dim 0 : vector<8x128xf32>, i32 -> vector<8x128xf32>
    %468 = arith.addf %466, %467 : vector<8x128xf32>
    %c2_i32_164 = arith.constant 2 : i32
    %469 = tpu.dynamic_rotate %468 by %c2_i32_164 dim 0 : vector<8x128xf32>, i32 -> vector<8x128xf32>
    %470 = arith.addf %468, %469 : vector<8x128xf32>
    %c1_i32_165 = arith.constant 1 : i32
    %471 = tpu.dynamic_rotate %470 by %c1_i32_165 dim 0 : vector<8x128xf32>, i32 -> vector<8x128xf32>
    %472 = arith.addf %470, %471 : vector<8x128xf32>
    %473 = arith.mulf %42, %21 : vector<8x128xf32>
    %c4_i32_166 = arith.constant 4 : i32
    %474 = tpu.dynamic_rotate %473 by %c4_i32_166 dim 0 : vector<8x128xf32>, i32 -> vector<8x128xf32>
    %475 = arith.addf %473, %474 : vector<8x128xf32>
    %c2_i32_167 = arith.constant 2 : i32
    %476 = tpu.dynamic_rotate %475 by %c2_i32_167 dim 0 : vector<8x128xf32>, i32 -> vector<8x128xf32>
    %477 = arith.addf %475, %476 : vector<8x128xf32>
    %c1_i32_168 = arith.constant 1 : i32
    %478 = tpu.dynamic_rotate %477 by %c1_i32_168 dim 0 : vector<8x128xf32>, i32 -> vector<8x128xf32>
    %479 = arith.addf %477, %478 : vector<8x128xf32>
    %480 = arith.mulf %42, %33 : vector<8x128xf32>
    %c4_i32_169 = arith.constant 4 : i32
    %481 = tpu.dynamic_rotate %480 by %c4_i32_169 dim 0 : vector<8x128xf32>, i32 -> vector<8x128xf32>
    %482 = arith.addf %480, %481 : vector<8x128xf32>
    %c2_i32_170 = arith.constant 2 : i32
    %483 = tpu.dynamic_rotate %482 by %c2_i32_170 dim 0 : vector<8x128xf32>, i32 -> vector<8x128xf32>
    %484 = arith.addf %482, %483 : vector<8x128xf32>
    %c1_i32_171 = arith.constant 1 : i32
    %485 = tpu.dynamic_rotate %484 by %c1_i32_171 dim 0 : vector<8x128xf32>, i32 -> vector<8x128xf32>
    %486 = arith.addf %484, %485 : vector<8x128xf32>
    %487 = arith.mulf %42, %45 : vector<8x128xf32>
    %c4_i32_172 = arith.constant 4 : i32
    %488 = tpu.dynamic_rotate %487 by %c4_i32_172 dim 0 : vector<8x128xf32>, i32 -> vector<8x128xf32>
    %489 = arith.addf %487, %488 : vector<8x128xf32>
    %c2_i32_173 = arith.constant 2 : i32
    %490 = tpu.dynamic_rotate %489 by %c2_i32_173 dim 0 : vector<8x128xf32>, i32 -> vector<8x128xf32>
    %491 = arith.addf %489, %490 : vector<8x128xf32>
    %c1_i32_174 = arith.constant 1 : i32
    %492 = tpu.dynamic_rotate %491 by %c1_i32_174 dim 0 : vector<8x128xf32>, i32 -> vector<8x128xf32>
    %493 = arith.addf %491, %492 : vector<8x128xf32>
    %494 = arith.mulf %42, %57 : vector<8x128xf32>
    %c4_i32_175 = arith.constant 4 : i32
    %495 = tpu.dynamic_rotate %494 by %c4_i32_175 dim 0 : vector<8x128xf32>, i32 -> vector<8x128xf32>
    %496 = arith.addf %494, %495 : vector<8x128xf32>
    %c2_i32_176 = arith.constant 2 : i32
    %497 = tpu.dynamic_rotate %496 by %c2_i32_176 dim 0 : vector<8x128xf32>, i32 -> vector<8x128xf32>
    %498 = arith.addf %496, %497 : vector<8x128xf32>
    %c1_i32_177 = arith.constant 1 : i32
    %499 = tpu.dynamic_rotate %498 by %c1_i32_177 dim 0 : vector<8x128xf32>, i32 -> vector<8x128xf32>
    %500 = arith.addf %498, %499 : vector<8x128xf32>
    %501 = arith.mulf %42, %69 : vector<8x128xf32>
    %c4_i32_178 = arith.constant 4 : i32
    %502 = tpu.dynamic_rotate %501 by %c4_i32_178 dim 0 : vector<8x128xf32>, i32 -> vector<8x128xf32>
    %503 = arith.addf %501, %502 : vector<8x128xf32>
    %c2_i32_179 = arith.constant 2 : i32
    %504 = tpu.dynamic_rotate %503 by %c2_i32_179 dim 0 : vector<8x128xf32>, i32 -> vector<8x128xf32>
    %505 = arith.addf %503, %504 : vector<8x128xf32>
    %c1_i32_180 = arith.constant 1 : i32
    %506 = tpu.dynamic_rotate %505 by %c1_i32_180 dim 0 : vector<8x128xf32>, i32 -> vector<8x128xf32>
    %507 = arith.addf %505, %506 : vector<8x128xf32>
    %508 = arith.mulf %42, %81 : vector<8x128xf32>
    %c4_i32_181 = arith.constant 4 : i32
    %509 = tpu.dynamic_rotate %508 by %c4_i32_181 dim 0 : vector<8x128xf32>, i32 -> vector<8x128xf32>
    %510 = arith.addf %508, %509 : vector<8x128xf32>
    %c2_i32_182 = arith.constant 2 : i32
    %511 = tpu.dynamic_rotate %510 by %c2_i32_182 dim 0 : vector<8x128xf32>, i32 -> vector<8x128xf32>
    %512 = arith.addf %510, %511 : vector<8x128xf32>
    %c1_i32_183 = arith.constant 1 : i32
    %513 = tpu.dynamic_rotate %512 by %c1_i32_183 dim 0 : vector<8x128xf32>, i32 -> vector<8x128xf32>
    %514 = arith.addf %512, %513 : vector<8x128xf32>
    %515 = arith.mulf %42, %93 : vector<8x128xf32>
    %c4_i32_184 = arith.constant 4 : i32
    %516 = tpu.dynamic_rotate %515 by %c4_i32_184 dim 0 : vector<8x128xf32>, i32 -> vector<8x128xf32>
    %517 = arith.addf %515, %516 : vector<8x128xf32>
    %c2_i32_185 = arith.constant 2 : i32
    %518 = tpu.dynamic_rotate %517 by %c2_i32_185 dim 0 : vector<8x128xf32>, i32 -> vector<8x128xf32>
    %519 = arith.addf %517, %518 : vector<8x128xf32>
    %c1_i32_186 = arith.constant 1 : i32
    %520 = tpu.dynamic_rotate %519 by %c1_i32_186 dim 0 : vector<8x128xf32>, i32 -> vector<8x128xf32>
    %521 = arith.addf %519, %520 : vector<8x128xf32>
    %522 = arith.mulf %42, %105 : vector<8x128xf32>
    %c4_i32_187 = arith.constant 4 : i32
    %523 = tpu.dynamic_rotate %522 by %c4_i32_187 dim 0 : vector<8x128xf32>, i32 -> vector<8x128xf32>
    %524 = arith.addf %522, %523 : vector<8x128xf32>
    %c2_i32_188 = arith.constant 2 : i32
    %525 = tpu.dynamic_rotate %524 by %c2_i32_188 dim 0 : vector<8x128xf32>, i32 -> vector<8x128xf32>
    %526 = arith.addf %524, %525 : vector<8x128xf32>
    %c1_i32_189 = arith.constant 1 : i32
    %527 = tpu.dynamic_rotate %526 by %c1_i32_189 dim 0 : vector<8x128xf32>, i32 -> vector<8x128xf32>
    %528 = arith.addf %526, %527 : vector<8x128xf32>
    %529 = arith.maximumf %472, %479 : vector<8x128xf32>
    %530 = arith.maximumf %529, %486 : vector<8x128xf32>
    %531 = arith.maximumf %530, %493 : vector<8x128xf32>
    %532 = arith.maximumf %531, %500 : vector<8x128xf32>
    %533 = arith.maximumf %532, %507 : vector<8x128xf32>
    %534 = arith.maximumf %533, %514 : vector<8x128xf32>
    %535 = arith.maximumf %534, %521 : vector<8x128xf32>
    %536 = arith.maximumf %535, %528 : vector<8x128xf32>
    %537 = arith.subf %472, %536 : vector<8x128xf32>
    %538 = math.exp %537 : vector<8x128xf32>
    %539 = arith.mulf %538, %12 : vector<8x128xf32>
    %540 = arith.subf %479, %536 : vector<8x128xf32>
    %541 = math.exp %540 : vector<8x128xf32>
    %542 = arith.addf %538, %541 : vector<8x128xf32>
    %543 = arith.mulf %541, %24 : vector<8x128xf32>
    %544 = arith.addf %539, %543 : vector<8x128xf32>
    %545 = arith.subf %486, %536 : vector<8x128xf32>
    %546 = math.exp %545 : vector<8x128xf32>
    %547 = arith.addf %542, %546 : vector<8x128xf32>
    %548 = arith.mulf %546, %36 : vector<8x128xf32>
    %549 = arith.addf %544, %548 : vector<8x128xf32>
    %550 = arith.subf %493, %536 : vector<8x128xf32>
    %551 = math.exp %550 : vector<8x128xf32>
    %552 = arith.addf %547, %551 : vector<8x128xf32>
    %553 = arith.mulf %551, %48 : vector<8x128xf32>
    %554 = arith.addf %549, %553 : vector<8x128xf32>
    %555 = arith.subf %500, %536 : vector<8x128xf32>
    %556 = math.exp %555 : vector<8x128xf32>
    %557 = arith.addf %552, %556 : vector<8x128xf32>
    %558 = arith.mulf %556, %60 : vector<8x128xf32>
    %559 = arith.addf %554, %558 : vector<8x128xf32>
    %560 = arith.subf %507, %536 : vector<8x128xf32>
    %561 = math.exp %560 : vector<8x128xf32>
    %562 = arith.addf %557, %561 : vector<8x128xf32>
    %563 = arith.mulf %561, %72 : vector<8x128xf32>
    %564 = arith.addf %559, %563 : vector<8x128xf32>
    %565 = arith.subf %514, %536 : vector<8x128xf32>
    %566 = math.exp %565 : vector<8x128xf32>
    %567 = arith.addf %562, %566 : vector<8x128xf32>
    %568 = arith.mulf %566, %84 : vector<8x128xf32>
    %569 = arith.addf %564, %568 : vector<8x128xf32>
    %570 = arith.subf %521, %536 : vector<8x128xf32>
    %571 = math.exp %570 : vector<8x128xf32>
    %572 = arith.addf %567, %571 : vector<8x128xf32>
    %573 = arith.mulf %571, %96 : vector<8x128xf32>
    %574 = arith.addf %569, %573 : vector<8x128xf32>
    %575 = arith.subf %528, %536 : vector<8x128xf32>
    %576 = math.exp %575 : vector<8x128xf32>
    %577 = arith.addf %572, %576 : vector<8x128xf32>
    %578 = arith.mulf %576, %108 : vector<8x128xf32>
    %579 = arith.addf %574, %578 : vector<8x128xf32>
    %580 = tpu.reciprocal %577 : vector<8x128xf32> -> vector<8x128xf32>
    %581 = arith.mulf %579, %580 : vector<8x128xf32>
    %c0_190 = arith.constant 0 : index
    %c0_191 = arith.constant 0 : index
    %c768_192 = arith.constant 768 : index
    %582 = vector.load %arg4[%c0_190, %c0_191, %c768_192] : memref<1x8x2304xf32, #tpu.memory_space<vmem>>, vector<1x8x128xf32>
    %583 = vector.shape_cast %582 : vector<1x8x128xf32> to vector<8x128xf32>
    %584 = vector.shape_cast %581 : vector<8x128xf32> to vector<1x8x128xf32>
    tpu.vector_store %arg4[%c0_190, %c0_191, %c768_192], %584 {strides = array<i32>} : memref<1x8x2304xf32, #tpu.memory_space<vmem>>, vector<1x8x128xf32>,
    %585 = arith.mulf %54, %9 : vector<8x128xf32>
    %c4_i32_193 = arith.constant 4 : i32
    %586 = tpu.dynamic_rotate %585 by %c4_i32_193 dim 0 : vector<8x128xf32>, i32 -> vector<8x128xf32>
    %587 = arith.addf %585, %586 : vector<8x128xf32>
    %c2_i32_194 = arith.constant 2 : i32
    %588 = tpu.dynamic_rotate %587 by %c2_i32_194 dim 0 : vector<8x128xf32>, i32 -> vector<8x128xf32>
    %589 = arith.addf %587, %588 : vector<8x128xf32>
    %c1_i32_195 = arith.constant 1 : i32
    %590 = tpu.dynamic_rotate %589 by %c1_i32_195 dim 0 : vector<8x128xf32>, i32 -> vector<8x128xf32>
    %591 = arith.addf %589, %590 : vector<8x128xf32>
    %592 = arith.mulf %54, %21 : vector<8x128xf32>
    %c4_i32_196 = arith.constant 4 : i32
    %593 = tpu.dynamic_rotate %592 by %c4_i32_196 dim 0 : vector<8x128xf32>, i32 -> vector<8x128xf32>
    %594 = arith.addf %592, %593 : vector<8x128xf32>
    %c2_i32_197 = arith.constant 2 : i32
    %595 = tpu.dynamic_rotate %594 by %c2_i32_197 dim 0 : vector<8x128xf32>, i32 -> vector<8x128xf32>
    %596 = arith.addf %594, %595 : vector<8x128xf32>
    %c1_i32_198 = arith.constant 1 : i32
    %597 = tpu.dynamic_rotate %596 by %c1_i32_198 dim 0 : vector<8x128xf32>, i32 -> vector<8x128xf32>
    %598 = arith.addf %596, %597 : vector<8x128xf32>
    %599 = arith.mulf %54, %33 : vector<8x128xf32>
    %c4_i32_199 = arith.constant 4 : i32
    %600 = tpu.dynamic_rotate %599 by %c4_i32_199 dim 0 : vector<8x128xf32>, i32 -> vector<8x128xf32>
    %601 = arith.addf %599, %600 : vector<8x128xf32>
    %c2_i32_200 = arith.constant 2 : i32
    %602 = tpu.dynamic_rotate %601 by %c2_i32_200 dim 0 : vector<8x128xf32>, i32 -> vector<8x128xf32>
    %603 = arith.addf %601, %602 : vector<8x128xf32>
    %c1_i32_201 = arith.constant 1 : i32
    %604 = tpu.dynamic_rotate %603 by %c1_i32_201 dim 0 : vector<8x128xf32>, i32 -> vector<8x128xf32>
    %605 = arith.addf %603, %604 : vector<8x128xf32>
    %606 = arith.mulf %54, %45 : vector<8x128xf32>
    %c4_i32_202 = arith.constant 4 : i32
    %607 = tpu.dynamic_rotate %606 by %c4_i32_202 dim 0 : vector<8x128xf32>, i32 -> vector<8x128xf32>
    %608 = arith.addf %606, %607 : vector<8x128xf32>
    %c2_i32_203 = arith.constant 2 : i32
    %609 = tpu.dynamic_rotate %608 by %c2_i32_203 dim 0 : vector<8x128xf32>, i32 -> vector<8x128xf32>
    %610 = arith.addf %608, %609 : vector<8x128xf32>
    %c1_i32_204 = arith.constant 1 : i32
    %611 = tpu.dynamic_rotate %610 by %c1_i32_204 dim 0 : vector<8x128xf32>, i32 -> vector<8x128xf32>
    %612 = arith.addf %610, %611 : vector<8x128xf32>
    %613 = arith.mulf %54, %57 : vector<8x128xf32>
    %c4_i32_205 = arith.constant 4 : i32
    %614 = tpu.dynamic_rotate %613 by %c4_i32_205 dim 0 : vector<8x128xf32>, i32 -> vector<8x128xf32>
    %615 = arith.addf %613, %614 : vector<8x128xf32>
    %c2_i32_206 = arith.constant 2 : i32
    %616 = tpu.dynamic_rotate %615 by %c2_i32_206 dim 0 : vector<8x128xf32>, i32 -> vector<8x128xf32>
    %617 = arith.addf %615, %616 : vector<8x128xf32>
    %c1_i32_207 = arith.constant 1 : i32
    %618 = tpu.dynamic_rotate %617 by %c1_i32_207 dim 0 : vector<8x128xf32>, i32 -> vector<8x128xf32>
    %619 = arith.addf %617, %618 : vector<8x128xf32>
    %620 = arith.mulf %54, %69 : vector<8x128xf32>
    %c4_i32_208 = arith.constant 4 : i32
    %621 = tpu.dynamic_rotate %620 by %c4_i32_208 dim 0 : vector<8x128xf32>, i32 -> vector<8x128xf32>
    %622 = arith.addf %620, %621 : vector<8x128xf32>
    %c2_i32_209 = arith.constant 2 : i32
    %623 = tpu.dynamic_rotate %622 by %c2_i32_209 dim 0 : vector<8x128xf32>, i32 -> vector<8x128xf32>
    %624 = arith.addf %622, %623 : vector<8x128xf32>
    %c1_i32_210 = arith.constant 1 : i32
    %625 = tpu.dynamic_rotate %624 by %c1_i32_210 dim 0 : vector<8x128xf32>, i32 -> vector<8x128xf32>
    %626 = arith.addf %624, %625 : vector<8x128xf32>
    %627 = arith.mulf %54, %81 : vector<8x128xf32>
    %c4_i32_211 = arith.constant 4 : i32
    %628 = tpu.dynamic_rotate %627 by %c4_i32_211 dim 0 : vector<8x128xf32>, i32 -> vector<8x128xf32>
    %629 = arith.addf %627, %628 : vector<8x128xf32>
    %c2_i32_212 = arith.constant 2 : i32
    %630 = tpu.dynamic_rotate %629 by %c2_i32_212 dim 0 : vector<8x128xf32>, i32 -> vector<8x128xf32>
    %631 = arith.addf %629, %630 : vector<8x128xf32>
    %c1_i32_213 = arith.constant 1 : i32
    %632 = tpu.dynamic_rotate %631 by %c1_i32_213 dim 0 : vector<8x128xf32>, i32 -> vector<8x128xf32>
    %633 = arith.addf %631, %632 : vector<8x128xf32>
    %634 = arith.mulf %54, %93 : vector<8x128xf32>
    %c4_i32_214 = arith.constant 4 : i32
    %635 = tpu.dynamic_rotate %634 by %c4_i32_214 dim 0 : vector<8x128xf32>, i32 -> vector<8x128xf32>
    %636 = arith.addf %634, %635 : vector<8x128xf32>
    %c2_i32_215 = arith.constant 2 : i32
    %637 = tpu.dynamic_rotate %636 by %c2_i32_215 dim 0 : vector<8x128xf32>, i32 -> vector<8x128xf32>
    %638 = arith.addf %636, %637 : vector<8x128xf32>
    %c1_i32_216 = arith.constant 1 : i32
    %639 = tpu.dynamic_rotate %638 by %c1_i32_216 dim 0 : vector<8x128xf32>, i32 -> vector<8x128xf32>
    %640 = arith.addf %638, %639 : vector<8x128xf32>
    %641 = arith.mulf %54, %105 : vector<8x128xf32>
    %c4_i32_217 = arith.constant 4 : i32
    %642 = tpu.dynamic_rotate %641 by %c4_i32_217 dim 0 : vector<8x128xf32>, i32 -> vector<8x128xf32>
    %643 = arith.addf %641, %642 : vector<8x128xf32>
    %c2_i32_218 = arith.constant 2 : i32
    %644 = tpu.dynamic_rotate %643 by %c2_i32_218 dim 0 : vector<8x128xf32>, i32 -> vector<8x128xf32>
    %645 = arith.addf %643, %644 : vector<8x128xf32>
    %c1_i32_219 = arith.constant 1 : i32
    %646 = tpu.dynamic_rotate %645 by %c1_i32_219 dim 0 : vector<8x128xf32>, i32 -> vector<8x128xf32>
    %647 = arith.addf %645, %646 : vector<8x128xf32>
    %648 = arith.maximumf %591, %598 : vector<8x128xf32>
    %649 = arith.maximumf %648, %605 : vector<8x128xf32>
    %650 = arith.maximumf %649, %612 : vector<8x128xf32>
    %651 = arith.maximumf %650, %619 : vector<8x128xf32>
    %652 = arith.maximumf %651, %626 : vector<8x128xf32>
    %653 = arith.maximumf %652, %633 : vector<8x128xf32>
    %654 = arith.maximumf %653, %640 : vector<8x128xf32>
    %655 = arith.maximumf %654, %647 : vector<8x128xf32>
    %656 = arith.subf %591, %655 : vector<8x128xf32>
    %657 = math.exp %656 : vector<8x128xf32>
    %658 = arith.mulf %657, %12 : vector<8x128xf32>
    %659 = arith.subf %598, %655 : vector<8x128xf32>
    %660 = math.exp %659 : vector<8x128xf32>
    %661 = arith.addf %657, %660 : vector<8x128xf32>
    %662 = arith.mulf %660, %24 : vector<8x128xf32>
    %663 = arith.addf %658, %662 : vector<8x128xf32>
    %664 = arith.subf %605, %655 : vector<8x128xf32>
    %665 = math.exp %664 : vector<8x128xf32>
    %666 = arith.addf %661, %665 : vector<8x128xf32>
    %667 = arith.mulf %665, %36 : vector<8x128xf32>
    %668 = arith.addf %663, %667 : vector<8x128xf32>
    %669 = arith.subf %612, %655 : vector<8x128xf32>
    %670 = math.exp %669 : vector<8x128xf32>
    %671 = arith.addf %666, %670 : vector<8x128xf32>
    %672 = arith.mulf %670, %48 : vector<8x128xf32>
    %673 = arith.addf %668, %672 : vector<8x128xf32>
    %674 = arith.subf %619, %655 : vector<8x128xf32>
    %675 = math.exp %674 : vector<8x128xf32>
    %676 = arith.addf %671, %675 : vector<8x128xf32>
    %677 = arith.mulf %675, %60 : vector<8x128xf32>
    %678 = arith.addf %673, %677 : vector<8x128xf32>
    %679 = arith.subf %626, %655 : vector<8x128xf32>
    %680 = math.exp %679 : vector<8x128xf32>
    %681 = arith.addf %676, %680 : vector<8x128xf32>
    %682 = arith.mulf %680, %72 : vector<8x128xf32>
    %683 = arith.addf %678, %682 : vector<8x128xf32>
    %684 = arith.subf %633, %655 : vector<8x128xf32>
    %685 = math.exp %684 : vector<8x128xf32>
    %686 = arith.addf %681, %685 : vector<8x128xf32>
    %687 = arith.mulf %685, %84 : vector<8x128xf32>
    %688 = arith.addf %683, %687 : vector<8x128xf32>
    %689 = arith.subf %640, %655 : vector<8x128xf32>
    %690 = math.exp %689 : vector<8x128xf32>
    %691 = arith.addf %686, %690 : vector<8x128xf32>
    %692 = arith.mulf %690, %96 : vector<8x128xf32>
    %693 = arith.addf %688, %692 : vector<8x128xf32>
    %694 = arith.subf %647, %655 : vector<8x128xf32>
    %695 = math.exp %694 : vector<8x128xf32>
    %696 = arith.addf %691, %695 : vector<8x128xf32>
    %697 = arith.mulf %695, %108 : vector<8x128xf32>
    %698 = arith.addf %693, %697 : vector<8x128xf32>
    %699 = tpu.reciprocal %696 : vector<8x128xf32> -> vector<8x128xf32>
    %700 = arith.mulf %698, %699 : vector<8x128xf32>
    %c0_220 = arith.constant 0 : index
    %c0_221 = arith.constant 0 : index
    %c1024_222 = arith.constant 1024 : index
    %701 = vector.load %arg4[%c0_220, %c0_221, %c1024_222] : memref<1x8x2304xf32, #tpu.memory_space<vmem>>, vector<1x8x128xf32>
    %702 = vector.shape_cast %701 : vector<1x8x128xf32> to vector<8x128xf32>
    %703 = vector.shape_cast %700 : vector<8x128xf32> to vector<1x8x128xf32>
    tpu.vector_store %arg4[%c0_220, %c0_221, %c1024_222], %703 {strides = array<i32>} : memref<1x8x2304xf32, #tpu.memory_space<vmem>>, vector<1x8x128xf32>,
    %704 = arith.mulf %66, %9 : vector<8x128xf32>
    %c4_i32_223 = arith.constant 4 : i32
    %705 = tpu.dynamic_rotate %704 by %c4_i32_223 dim 0 : vector<8x128xf32>, i32 -> vector<8x128xf32>
    %706 = arith.addf %704, %705 : vector<8x128xf32>
    %c2_i32_224 = arith.constant 2 : i32
    %707 = tpu.dynamic_rotate %706 by %c2_i32_224 dim 0 : vector<8x128xf32>, i32 -> vector<8x128xf32>
    %708 = arith.addf %706, %707 : vector<8x128xf32>
    %c1_i32_225 = arith.constant 1 : i32
    %709 = tpu.dynamic_rotate %708 by %c1_i32_225 dim 0 : vector<8x128xf32>, i32 -> vector<8x128xf32>
    %710 = arith.addf %708, %709 : vector<8x128xf32>
    %711 = arith.mulf %66, %21 : vector<8x128xf32>
    %c4_i32_226 = arith.constant 4 : i32
    %712 = tpu.dynamic_rotate %711 by %c4_i32_226 dim 0 : vector<8x128xf32>, i32 -> vector<8x128xf32>
    %713 = arith.addf %711, %712 : vector<8x128xf32>
    %c2_i32_227 = arith.constant 2 : i32
    %714 = tpu.dynamic_rotate %713 by %c2_i32_227 dim 0 : vector<8x128xf32>, i32 -> vector<8x128xf32>
    %715 = arith.addf %713, %714 : vector<8x128xf32>
    %c1_i32_228 = arith.constant 1 : i32
    %716 = tpu.dynamic_rotate %715 by %c1_i32_228 dim 0 : vector<8x128xf32>, i32 -> vector<8x128xf32>
    %717 = arith.addf %715, %716 : vector<8x128xf32>
    %718 = arith.mulf %66, %33 : vector<8x128xf32>
    %c4_i32_229 = arith.constant 4 : i32
    %719 = tpu.dynamic_rotate %718 by %c4_i32_229 dim 0 : vector<8x128xf32>, i32 -> vector<8x128xf32>
    %720 = arith.addf %718, %719 : vector<8x128xf32>
    %c2_i32_230 = arith.constant 2 : i32
    %721 = tpu.dynamic_rotate %720 by %c2_i32_230 dim 0 : vector<8x128xf32>, i32 -> vector<8x128xf32>
    %722 = arith.addf %720, %721 : vector<8x128xf32>
    %c1_i32_231 = arith.constant 1 : i32
    %723 = tpu.dynamic_rotate %722 by %c1_i32_231 dim 0 : vector<8x128xf32>, i32 -> vector<8x128xf32>
    %724 = arith.addf %722, %723 : vector<8x128xf32>
    %725 = arith.mulf %66, %45 : vector<8x128xf32>
    %c4_i32_232 = arith.constant 4 : i32
    %726 = tpu.dynamic_rotate %725 by %c4_i32_232 dim 0 : vector<8x128xf32>, i32 -> vector<8x128xf32>
    %727 = arith.addf %725, %726 : vector<8x128xf32>
    %c2_i32_233 = arith.constant 2 : i32
    %728 = tpu.dynamic_rotate %727 by %c2_i32_233 dim 0 : vector<8x128xf32>, i32 -> vector<8x128xf32>
    %729 = arith.addf %727, %728 : vector<8x128xf32>
    %c1_i32_234 = arith.constant 1 : i32
    %730 = tpu.dynamic_rotate %729 by %c1_i32_234 dim 0 : vector<8x128xf32>, i32 -> vector<8x128xf32>
    %731 = arith.addf %729, %730 : vector<8x128xf32>
    %732 = arith.mulf %66, %57 : vector<8x128xf32>
    %c4_i32_235 = arith.constant 4 : i32
    %733 = tpu.dynamic_rotate %732 by %c4_i32_235 dim 0 : vector<8x128xf32>, i32 -> vector<8x128xf32>
    %734 = arith.addf %732, %733 : vector<8x128xf32>
    %c2_i32_236 = arith.constant 2 : i32
    %735 = tpu.dynamic_rotate %734 by %c2_i32_236 dim 0 : vector<8x128xf32>, i32 -> vector<8x128xf32>
    %736 = arith.addf %734, %735 : vector<8x128xf32>
    %c1_i32_237 = arith.constant 1 : i32
    %737 = tpu.dynamic_rotate %736 by %c1_i32_237 dim 0 : vector<8x128xf32>, i32 -> vector<8x128xf32>
    %738 = arith.addf %736, %737 : vector<8x128xf32>
    %739 = arith.mulf %66, %69 : vector<8x128xf32>
    %c4_i32_238 = arith.constant 4 : i32
    %740 = tpu.dynamic_rotate %739 by %c4_i32_238 dim 0 : vector<8x128xf32>, i32 -> vector<8x128xf32>
    %741 = arith.addf %739, %740 : vector<8x128xf32>
    %c2_i32_239 = arith.constant 2 : i32
    %742 = tpu.dynamic_rotate %741 by %c2_i32_239 dim 0 : vector<8x128xf32>, i32 -> vector<8x128xf32>
    %743 = arith.addf %741, %742 : vector<8x128xf32>
    %c1_i32_240 = arith.constant 1 : i32
    %744 = tpu.dynamic_rotate %743 by %c1_i32_240 dim 0 : vector<8x128xf32>, i32 -> vector<8x128xf32>
    %745 = arith.addf %743, %744 : vector<8x128xf32>
    %746 = arith.mulf %66, %81 : vector<8x128xf32>
    %c4_i32_241 = arith.constant 4 : i32
    %747 = tpu.dynamic_rotate %746 by %c4_i32_241 dim 0 : vector<8x128xf32>, i32 -> vector<8x128xf32>
    %748 = arith.addf %746, %747 : vector<8x128xf32>
    %c2_i32_242 = arith.constant 2 : i32
    %749 = tpu.dynamic_rotate %748 by %c2_i32_242 dim 0 : vector<8x128xf32>, i32 -> vector<8x128xf32>
    %750 = arith.addf %748, %749 : vector<8x128xf32>
    %c1_i32_243 = arith.constant 1 : i32
    %751 = tpu.dynamic_rotate %750 by %c1_i32_243 dim 0 : vector<8x128xf32>, i32 -> vector<8x128xf32>
    %752 = arith.addf %750, %751 : vector<8x128xf32>
    %753 = arith.mulf %66, %93 : vector<8x128xf32>
    %c4_i32_244 = arith.constant 4 : i32
    %754 = tpu.dynamic_rotate %753 by %c4_i32_244 dim 0 : vector<8x128xf32>, i32 -> vector<8x128xf32>
    %755 = arith.addf %753, %754 : vector<8x128xf32>
    %c2_i32_245 = arith.constant 2 : i32
    %756 = tpu.dynamic_rotate %755 by %c2_i32_245 dim 0 : vector<8x128xf32>, i32 -> vector<8x128xf32>
    %757 = arith.addf %755, %756 : vector<8x128xf32>
    %c1_i32_246 = arith.constant 1 : i32
    %758 = tpu.dynamic_rotate %757 by %c1_i32_246 dim 0 : vector<8x128xf32>, i32 -> vector<8x128xf32>
    %759 = arith.addf %757, %758 : vector<8x128xf32>
    %760 = arith.mulf %66, %105 : vector<8x128xf32>
    %c4_i32_247 = arith.constant 4 : i32
    %761 = tpu.dynamic_rotate %760 by %c4_i32_247 dim 0 : vector<8x128xf32>, i32 -> vector<8x128xf32>
    %762 = arith.addf %760, %761 : vector<8x128xf32>
    %c2_i32_248 = arith.constant 2 : i32
    %763 = tpu.dynamic_rotate %762 by %c2_i32_248 dim 0 : vector<8x128xf32>, i32 -> vector<8x128xf32>
    %764 = arith.addf %762, %763 : vector<8x128xf32>
    %c1_i32_249 = arith.constant 1 : i32
    %765 = tpu.dynamic_rotate %764 by %c1_i32_249 dim 0 : vector<8x128xf32>, i32 -> vector<8x128xf32>
    %766 = arith.addf %764, %765 : vector<8x128xf32>
    %767 = arith.maximumf %710, %717 : vector<8x128xf32>
    %768 = arith.maximumf %767, %724 : vector<8x128xf32>
    %769 = arith.maximumf %768, %731 : vector<8x128xf32>
    %770 = arith.maximumf %769, %738 : vector<8x128xf32>
    %771 = arith.maximumf %770, %745 : vector<8x128xf32>
    %772 = arith.maximumf %771, %752 : vector<8x128xf32>
    %773 = arith.maximumf %772, %759 : vector<8x128xf32>
    %774 = arith.maximumf %773, %766 : vector<8x128xf32>
    %775 = arith.subf %710, %774 : vector<8x128xf32>
    %776 = math.exp %775 : vector<8x128xf32>
    %777 = arith.mulf %776, %12 : vector<8x128xf32>
    %778 = arith.subf %717, %774 : vector<8x128xf32>
    %779 = math.exp %778 : vector<8x128xf32>
    %780 = arith.addf %776, %779 : vector<8x128xf32>
    %781 = arith.mulf %779, %24 : vector<8x128xf32>
    %782 = arith.addf %777, %781 : vector<8x128xf32>
    %783 = arith.subf %724, %774 : vector<8x128xf32>
    %784 = math.exp %783 : vector<8x128xf32>
    %785 = arith.addf %780, %784 : vector<8x128xf32>
    %786 = arith.mulf %784, %36 : vector<8x128xf32>
    %787 = arith.addf %782, %786 : vector<8x128xf32>
    %788 = arith.subf %731, %774 : vector<8x128xf32>
    %789 = math.exp %788 : vector<8x128xf32>
    %790 = arith.addf %785, %789 : vector<8x128xf32>
    %791 = arith.mulf %789, %48 : vector<8x128xf32>
    %792 = arith.addf %787, %791 : vector<8x128xf32>
    %793 = arith.subf %738, %774 : vector<8x128xf32>
    %794 = math.exp %793 : vector<8x128xf32>
    %795 = arith.addf %790, %794 : vector<8x128xf32>
    %796 = arith.mulf %794, %60 : vector<8x128xf32>
    %797 = arith.addf %792, %796 : vector<8x128xf32>
    %798 = arith.subf %745, %774 : vector<8x128xf32>
    %799 = math.exp %798 : vector<8x128xf32>
    %800 = arith.addf %795, %799 : vector<8x128xf32>
    %801 = arith.mulf %799, %72 : vector<8x128xf32>
    %802 = arith.addf %797, %801 : vector<8x128xf32>
    %803 = arith.subf %752, %774 : vector<8x128xf32>
    %804 = math.exp %803 : vector<8x128xf32>
    %805 = arith.addf %800, %804 : vector<8x128xf32>
    %806 = arith.mulf %804, %84 : vector<8x128xf32>
    %807 = arith.addf %802, %806 : vector<8x128xf32>
    %808 = arith.subf %759, %774 : vector<8x128xf32>
    %809 = math.exp %808 : vector<8x128xf32>
    %810 = arith.addf %805, %809 : vector<8x128xf32>
    %811 = arith.mulf %809, %96 : vector<8x128xf32>
    %812 = arith.addf %807, %811 : vector<8x128xf32>
    %813 = arith.subf %766, %774 : vector<8x128xf32>
    %814 = math.exp %813 : vector<8x128xf32>
    %815 = arith.addf %810, %814 : vector<8x128xf32>
    %816 = arith.mulf %814, %108 : vector<8x128xf32>
    %817 = arith.addf %812, %816 : vector<8x128xf32>
    %818 = tpu.reciprocal %815 : vector<8x128xf32> -> vector<8x128xf32>
    %819 = arith.mulf %817, %818 : vector<8x128xf32>
    %c0_250 = arith.constant 0 : index
    %c0_251 = arith.constant 0 : index
    %c1280_252 = arith.constant 1280 : index
    %820 = vector.load %arg4[%c0_250, %c0_251, %c1280_252] : memref<1x8x2304xf32, #tpu.memory_space<vmem>>, vector<1x8x128xf32>
    %821 = vector.shape_cast %820 : vector<1x8x128xf32> to vector<8x128xf32>
    %822 = vector.shape_cast %819 : vector<8x128xf32> to vector<1x8x128xf32>
    tpu.vector_store %arg4[%c0_250, %c0_251, %c1280_252], %822 {strides = array<i32>} : memref<1x8x2304xf32, #tpu.memory_space<vmem>>, vector<1x8x128xf32>,
    %823 = arith.mulf %78, %9 : vector<8x128xf32>
    %c4_i32_253 = arith.constant 4 : i32
    %824 = tpu.dynamic_rotate %823 by %c4_i32_253 dim 0 : vector<8x128xf32>, i32 -> vector<8x128xf32>
    %825 = arith.addf %823, %824 : vector<8x128xf32>
    %c2_i32_254 = arith.constant 2 : i32
    %826 = tpu.dynamic_rotate %825 by %c2_i32_254 dim 0 : vector<8x128xf32>, i32 -> vector<8x128xf32>
    %827 = arith.addf %825, %826 : vector<8x128xf32>
    %c1_i32_255 = arith.constant 1 : i32
    %828 = tpu.dynamic_rotate %827 by %c1_i32_255 dim 0 : vector<8x128xf32>, i32 -> vector<8x128xf32>
    %829 = arith.addf %827, %828 : vector<8x128xf32>
    %830 = arith.mulf %78, %21 : vector<8x128xf32>
    %c4_i32_256 = arith.constant 4 : i32
    %831 = tpu.dynamic_rotate %830 by %c4_i32_256 dim 0 : vector<8x128xf32>, i32 -> vector<8x128xf32>
    %832 = arith.addf %830, %831 : vector<8x128xf32>
    %c2_i32_257 = arith.constant 2 : i32
    %833 = tpu.dynamic_rotate %832 by %c2_i32_257 dim 0 : vector<8x128xf32>, i32 -> vector<8x128xf32>
    %834 = arith.addf %832, %833 : vector<8x128xf32>
    %c1_i32_258 = arith.constant 1 : i32
    %835 = tpu.dynamic_rotate %834 by %c1_i32_258 dim 0 : vector<8x128xf32>, i32 -> vector<8x128xf32>
    %836 = arith.addf %834, %835 : vector<8x128xf32>
    %837 = arith.mulf %78, %33 : vector<8x128xf32>
    %c4_i32_259 = arith.constant 4 : i32
    %838 = tpu.dynamic_rotate %837 by %c4_i32_259 dim 0 : vector<8x128xf32>, i32 -> vector<8x128xf32>
    %839 = arith.addf %837, %838 : vector<8x128xf32>
    %c2_i32_260 = arith.constant 2 : i32
    %840 = tpu.dynamic_rotate %839 by %c2_i32_260 dim 0 : vector<8x128xf32>, i32 -> vector<8x128xf32>
    %841 = arith.addf %839, %840 : vector<8x128xf32>
    %c1_i32_261 = arith.constant 1 : i32
    %842 = tpu.dynamic_rotate %841 by %c1_i32_261 dim 0 : vector<8x128xf32>, i32 -> vector<8x128xf32>
    %843 = arith.addf %841, %842 : vector<8x128xf32>
    %844 = arith.mulf %78, %45 : vector<8x128xf32>
    %c4_i32_262 = arith.constant 4 : i32
    %845 = tpu.dynamic_rotate %844 by %c4_i32_262 dim 0 : vector<8x128xf32>, i32 -> vector<8x128xf32>
    %846 = arith.addf %844, %845 : vector<8x128xf32>
    %c2_i32_263 = arith.constant 2 : i32
    %847 = tpu.dynamic_rotate %846 by %c2_i32_263 dim 0 : vector<8x128xf32>, i32 -> vector<8x128xf32>
    %848 = arith.addf %846, %847 : vector<8x128xf32>
    %c1_i32_264 = arith.constant 1 : i32
    %849 = tpu.dynamic_rotate %848 by %c1_i32_264 dim 0 : vector<8x128xf32>, i32 -> vector<8x128xf32>
    %850 = arith.addf %848, %849 : vector<8x128xf32>
    %851 = arith.mulf %78, %57 : vector<8x128xf32>
    %c4_i32_265 = arith.constant 4 : i32
    %852 = tpu.dynamic_rotate %851 by %c4_i32_265 dim 0 : vector<8x128xf32>, i32 -> vector<8x128xf32>
    %853 = arith.addf %851, %852 : vector<8x128xf32>
    %c2_i32_266 = arith.constant 2 : i32
    %854 = tpu.dynamic_rotate %853 by %c2_i32_266 dim 0 : vector<8x128xf32>, i32 -> vector<8x128xf32>
    %855 = arith.addf %853, %854 : vector<8x128xf32>
    %c1_i32_267 = arith.constant 1 : i32
    %856 = tpu.dynamic_rotate %855 by %c1_i32_267 dim 0 : vector<8x128xf32>, i32 -> vector<8x128xf32>
    %857 = arith.addf %855, %856 : vector<8x128xf32>
    %858 = arith.mulf %78, %69 : vector<8x128xf32>
    %c4_i32_268 = arith.constant 4 : i32
    %859 = tpu.dynamic_rotate %858 by %c4_i32_268 dim 0 : vector<8x128xf32>, i32 -> vector<8x128xf32>
    %860 = arith.addf %858, %859 : vector<8x128xf32>
    %c2_i32_269 = arith.constant 2 : i32
    %861 = tpu.dynamic_rotate %860 by %c2_i32_269 dim 0 : vector<8x128xf32>, i32 -> vector<8x128xf32>
    %862 = arith.addf %860, %861 : vector<8x128xf32>
    %c1_i32_270 = arith.constant 1 : i32
    %863 = tpu.dynamic_rotate %862 by %c1_i32_270 dim 0 : vector<8x128xf32>, i32 -> vector<8x128xf32>
    %864 = arith.addf %862, %863 : vector<8x128xf32>
    %865 = arith.mulf %78, %81 : vector<8x128xf32>
    %c4_i32_271 = arith.constant 4 : i32
    %866 = tpu.dynamic_rotate %865 by %c4_i32_271 dim 0 : vector<8x128xf32>, i32 -> vector<8x128xf32>
    %867 = arith.addf %865, %866 : vector<8x128xf32>
    %c2_i32_272 = arith.constant 2 : i32
    %868 = tpu.dynamic_rotate %867 by %c2_i32_272 dim 0 : vector<8x128xf32>, i32 -> vector<8x128xf32>
    %869 = arith.addf %867, %868 : vector<8x128xf32>
    %c1_i32_273 = arith.constant 1 : i32
    %870 = tpu.dynamic_rotate %869 by %c1_i32_273 dim 0 : vector<8x128xf32>, i32 -> vector<8x128xf32>
    %871 = arith.addf %869, %870 : vector<8x128xf32>
    %872 = arith.mulf %78, %93 : vector<8x128xf32>
    %c4_i32_274 = arith.constant 4 : i32
    %873 = tpu.dynamic_rotate %872 by %c4_i32_274 dim 0 : vector<8x128xf32>, i32 -> vector<8x128xf32>
    %874 = arith.addf %872, %873 : vector<8x128xf32>
    %c2_i32_275 = arith.constant 2 : i32
    %875 = tpu.dynamic_rotate %874 by %c2_i32_275 dim 0 : vector<8x128xf32>, i32 -> vector<8x128xf32>
    %876 = arith.addf %874, %875 : vector<8x128xf32>
    %c1_i32_276 = arith.constant 1 : i32
    %877 = tpu.dynamic_rotate %876 by %c1_i32_276 dim 0 : vector<8x128xf32>, i32 -> vector<8x128xf32>
    %878 = arith.addf %876, %877 : vector<8x128xf32>
    %879 = arith.mulf %78, %105 : vector<8x128xf32>
    %c4_i32_277 = arith.constant 4 : i32
    %880 = tpu.dynamic_rotate %879 by %c4_i32_277 dim 0 : vector<8x128xf32>, i32 -> vector<8x128xf32>
    %881 = arith.addf %879, %880 : vector<8x128xf32>
    %c2_i32_278 = arith.constant 2 : i32
    %882 = tpu.dynamic_rotate %881 by %c2_i32_278 dim 0 : vector<8x128xf32>, i32 -> vector<8x128xf32>
    %883 = arith.addf %881, %882 : vector<8x128xf32>
    %c1_i32_279 = arith.constant 1 : i32
    %884 = tpu.dynamic_rotate %883 by %c1_i32_279 dim 0 : vector<8x128xf32>, i32 -> vector<8x128xf32>
    %885 = arith.addf %883, %884 : vector<8x128xf32>
    %886 = arith.maximumf %829, %836 : vector<8x128xf32>
    %887 = arith.maximumf %886, %843 : vector<8x128xf32>
    %888 = arith.maximumf %887, %850 : vector<8x128xf32>
    %889 = arith.maximumf %888, %857 : vector<8x128xf32>
    %890 = arith.maximumf %889, %864 : vector<8x128xf32>
    %891 = arith.maximumf %890, %871 : vector<8x128xf32>
    %892 = arith.maximumf %891, %878 : vector<8x128xf32>
    %893 = arith.maximumf %892, %885 : vector<8x128xf32>
    %894 = arith.subf %829, %893 : vector<8x128xf32>
    %895 = math.exp %894 : vector<8x128xf32>
    %896 = arith.mulf %895, %12 : vector<8x128xf32>
    %897 = arith.subf %836, %893 : vector<8x128xf32>
    %898 = math.exp %897 : vector<8x128xf32>
    %899 = arith.addf %895, %898 : vector<8x128xf32>
    %900 = arith.mulf %898, %24 : vector<8x128xf32>
    %901 = arith.addf %896, %900 : vector<8x128xf32>
    %902 = arith.subf %843, %893 : vector<8x128xf32>
    %903 = math.exp %902 : vector<8x128xf32>
    %904 = arith.addf %899, %903 : vector<8x128xf32>
    %905 = arith.mulf %903, %36 : vector<8x128xf32>
    %906 = arith.addf %901, %905 : vector<8x128xf32>
    %907 = arith.subf %850, %893 : vector<8x128xf32>
    %908 = math.exp %907 : vector<8x128xf32>
    %909 = arith.addf %904, %908 : vector<8x128xf32>
    %910 = arith.mulf %908, %48 : vector<8x128xf32>
    %911 = arith.addf %906, %910 : vector<8x128xf32>
    %912 = arith.subf %857, %893 : vector<8x128xf32>
    %913 = math.exp %912 : vector<8x128xf32>
    %914 = arith.addf %909, %913 : vector<8x128xf32>
    %915 = arith.mulf %913, %60 : vector<8x128xf32>
    %916 = arith.addf %911, %915 : vector<8x128xf32>
    %917 = arith.subf %864, %893 : vector<8x128xf32>
    %918 = math.exp %917 : vector<8x128xf32>
    %919 = arith.addf %914, %918 : vector<8x128xf32>
    %920 = arith.mulf %918, %72 : vector<8x128xf32>
    %921 = arith.addf %916, %920 : vector<8x128xf32>
    %922 = arith.subf %871, %893 : vector<8x128xf32>
    %923 = math.exp %922 : vector<8x128xf32>
    %924 = arith.addf %919, %923 : vector<8x128xf32>
    %925 = arith.mulf %923, %84 : vector<8x128xf32>
    %926 = arith.addf %921, %925 : vector<8x128xf32>
    %927 = arith.subf %878, %893 : vector<8x128xf32>
    %928 = math.exp %927 : vector<8x128xf32>
    %929 = arith.addf %924, %928 : vector<8x128xf32>
    %930 = arith.mulf %928, %96 : vector<8x128xf32>
    %931 = arith.addf %926, %930 : vector<8x128xf32>
    %932 = arith.subf %885, %893 : vector<8x128xf32>
    %933 = math.exp %932 : vector<8x128xf32>
    %934 = arith.addf %929, %933 : vector<8x128xf32>
    %935 = arith.mulf %933, %108 : vector<8x128xf32>
    %936 = arith.addf %931, %935 : vector<8x128xf32>
    %937 = tpu.reciprocal %934 : vector<8x128xf32> -> vector<8x128xf32>
    %938 = arith.mulf %936, %937 : vector<8x128xf32>
    %c0_280 = arith.constant 0 : index
    %c0_281 = arith.constant 0 : index
    %c1536_282 = arith.constant 1536 : index
    %939 = vector.load %arg4[%c0_280, %c0_281, %c1536_282] : memref<1x8x2304xf32, #tpu.memory_space<vmem>>, vector<1x8x128xf32>
    %940 = vector.shape_cast %939 : vector<1x8x128xf32> to vector<8x128xf32>
    %941 = vector.shape_cast %938 : vector<8x128xf32> to vector<1x8x128xf32>
    tpu.vector_store %arg4[%c0_280, %c0_281, %c1536_282], %941 {strides = array<i32>} : memref<1x8x2304xf32, #tpu.memory_space<vmem>>, vector<1x8x128xf32>,
    %942 = arith.mulf %90, %9 : vector<8x128xf32>
    %c4_i32_283 = arith.constant 4 : i32
    %943 = tpu.dynamic_rotate %942 by %c4_i32_283 dim 0 : vector<8x128xf32>, i32 -> vector<8x128xf32>
    %944 = arith.addf %942, %943 : vector<8x128xf32>
    %c2_i32_284 = arith.constant 2 : i32
    %945 = tpu.dynamic_rotate %944 by %c2_i32_284 dim 0 : vector<8x128xf32>, i32 -> vector<8x128xf32>
    %946 = arith.addf %944, %945 : vector<8x128xf32>
    %c1_i32_285 = arith.constant 1 : i32
    %947 = tpu.dynamic_rotate %946 by %c1_i32_285 dim 0 : vector<8x128xf32>, i32 -> vector<8x128xf32>
    %948 = arith.addf %946, %947 : vector<8x128xf32>
    %949 = arith.mulf %90, %21 : vector<8x128xf32>
    %c4_i32_286 = arith.constant 4 : i32
    %950 = tpu.dynamic_rotate %949 by %c4_i32_286 dim 0 : vector<8x128xf32>, i32 -> vector<8x128xf32>
    %951 = arith.addf %949, %950 : vector<8x128xf32>
    %c2_i32_287 = arith.constant 2 : i32
    %952 = tpu.dynamic_rotate %951 by %c2_i32_287 dim 0 : vector<8x128xf32>, i32 -> vector<8x128xf32>
    %953 = arith.addf %951, %952 : vector<8x128xf32>
    %c1_i32_288 = arith.constant 1 : i32
    %954 = tpu.dynamic_rotate %953 by %c1_i32_288 dim 0 : vector<8x128xf32>, i32 -> vector<8x128xf32>
    %955 = arith.addf %953, %954 : vector<8x128xf32>
    %956 = arith.mulf %90, %33 : vector<8x128xf32>
    %c4_i32_289 = arith.constant 4 : i32
    %957 = tpu.dynamic_rotate %956 by %c4_i32_289 dim 0 : vector<8x128xf32>, i32 -> vector<8x128xf32>
    %958 = arith.addf %956, %957 : vector<8x128xf32>
    %c2_i32_290 = arith.constant 2 : i32
    %959 = tpu.dynamic_rotate %958 by %c2_i32_290 dim 0 : vector<8x128xf32>, i32 -> vector<8x128xf32>
    %960 = arith.addf %958, %959 : vector<8x128xf32>
    %c1_i32_291 = arith.constant 1 : i32
    %961 = tpu.dynamic_rotate %960 by %c1_i32_291 dim 0 : vector<8x128xf32>, i32 -> vector<8x128xf32>
    %962 = arith.addf %960, %961 : vector<8x128xf32>
    %963 = arith.mulf %90, %45 : vector<8x128xf32>
    %c4_i32_292 = arith.constant 4 : i32
    %964 = tpu.dynamic_rotate %963 by %c4_i32_292 dim 0 : vector<8x128xf32>, i32 -> vector<8x128xf32>
    %965 = arith.addf %963, %964 : vector<8x128xf32>
    %c2_i32_293 = arith.constant 2 : i32
    %966 = tpu.dynamic_rotate %965 by %c2_i32_293 dim 0 : vector<8x128xf32>, i32 -> vector<8x128xf32>
    %967 = arith.addf %965, %966 : vector<8x128xf32>
    %c1_i32_294 = arith.constant 1 : i32
    %968 = tpu.dynamic_rotate %967 by %c1_i32_294 dim 0 : vector<8x128xf32>, i32 -> vector<8x128xf32>
    %969 = arith.addf %967, %968 : vector<8x128xf32>
    %970 = arith.mulf %90, %57 : vector<8x128xf32>
    %c4_i32_295 = arith.constant 4 : i32
    %971 = tpu.dynamic_rotate %970 by %c4_i32_295 dim 0 : vector<8x128xf32>, i32 -> vector<8x128xf32>
    %972 = arith.addf %970, %971 : vector<8x128xf32>
    %c2_i32_296 = arith.constant 2 : i32
    %973 = tpu.dynamic_rotate %972 by %c2_i32_296 dim 0 : vector<8x128xf32>, i32 -> vector<8x128xf32>
    %974 = arith.addf %972, %973 : vector<8x128xf32>
    %c1_i32_297 = arith.constant 1 : i32
    %975 = tpu.dynamic_rotate %974 by %c1_i32_297 dim 0 : vector<8x128xf32>, i32 -> vector<8x128xf32>
    %976 = arith.addf %974, %975 : vector<8x128xf32>
    %977 = arith.mulf %90, %69 : vector<8x128xf32>
    %c4_i32_298 = arith.constant 4 : i32
    %978 = tpu.dynamic_rotate %977 by %c4_i32_298 dim 0 : vector<8x128xf32>, i32 -> vector<8x128xf32>
    %979 = arith.addf %977, %978 : vector<8x128xf32>
    %c2_i32_299 = arith.constant 2 : i32
    %980 = tpu.dynamic_rotate %979 by %c2_i32_299 dim 0 : vector<8x128xf32>, i32 -> vector<8x128xf32>
    %981 = arith.addf %979, %980 : vector<8x128xf32>
    %c1_i32_300 = arith.constant 1 : i32
    %982 = tpu.dynamic_rotate %981 by %c1_i32_300 dim 0 : vector<8x128xf32>, i32 -> vector<8x128xf32>
    %983 = arith.addf %981, %982 : vector<8x128xf32>
    %984 = arith.mulf %90, %81 : vector<8x128xf32>
    %c4_i32_301 = arith.constant 4 : i32
    %985 = tpu.dynamic_rotate %984 by %c4_i32_301 dim 0 : vector<8x128xf32>, i32 -> vector<8x128xf32>
    %986 = arith.addf %984, %985 : vector<8x128xf32>
    %c2_i32_302 = arith.constant 2 : i32
    %987 = tpu.dynamic_rotate %986 by %c2_i32_302 dim 0 : vector<8x128xf32>, i32 -> vector<8x128xf32>
    %988 = arith.addf %986, %987 : vector<8x128xf32>
    %c1_i32_303 = arith.constant 1 : i32
    %989 = tpu.dynamic_rotate %988 by %c1_i32_303 dim 0 : vector<8x128xf32>, i32 -> vector<8x128xf32>
    %990 = arith.addf %988, %989 : vector<8x128xf32>
    %991 = arith.mulf %90, %93 : vector<8x128xf32>
    %c4_i32_304 = arith.constant 4 : i32
    %992 = tpu.dynamic_rotate %991 by %c4_i32_304 dim 0 : vector<8x128xf32>, i32 -> vector<8x128xf32>
    %993 = arith.addf %991, %992 : vector<8x128xf32>
    %c2_i32_305 = arith.constant 2 : i32
    %994 = tpu.dynamic_rotate %993 by %c2_i32_305 dim 0 : vector<8x128xf32>, i32 -> vector<8x128xf32>
    %995 = arith.addf %993, %994 : vector<8x128xf32>
    %c1_i32_306 = arith.constant 1 : i32
    %996 = tpu.dynamic_rotate %995 by %c1_i32_306 dim 0 : vector<8x128xf32>, i32 -> vector<8x128xf32>
    %997 = arith.addf %995, %996 : vector<8x128xf32>
    %998 = arith.mulf %90, %105 : vector<8x128xf32>
    %c4_i32_307 = arith.constant 4 : i32
    %999 = tpu.dynamic_rotate %998 by %c4_i32_307 dim 0 : vector<8x128xf32>, i32 -> vector<8x128xf32>
    %1000 = arith.addf %998, %999 : vector<8x128xf32>
    %c2_i32_308 = arith.constant 2 : i32
    %1001 = tpu.dynamic_rotate %1000 by %c2_i32_308 dim 0 : vector<8x128xf32>, i32 -> vector<8x128xf32>
    %1002 = arith.addf %1000, %1001 : vector<8x128xf32>
    %c1_i32_309 = arith.constant 1 : i32
    %1003 = tpu.dynamic_rotate %1002 by %c1_i32_309 dim 0 : vector<8x128xf32>, i32 -> vector<8x128xf32>
    %1004 = arith.addf %1002, %1003 : vector<8x128xf32>
    %1005 = arith.maximumf %948, %955 : vector<8x128xf32>
    %1006 = arith.maximumf %1005, %962 : vector<8x128xf32>
    %1007 = arith.maximumf %1006, %969 : vector<8x128xf32>
    %1008 = arith.maximumf %1007, %976 : vector<8x128xf32>
    %1009 = arith.maximumf %1008, %983 : vector<8x128xf32>
    %1010 = arith.maximumf %1009, %990 : vector<8x128xf32>
    %1011 = arith.maximumf %1010, %997 : vector<8x128xf32>
    %1012 = arith.maximumf %1011, %1004 : vector<8x128xf32>
    %1013 = arith.subf %948, %1012 : vector<8x128xf32>
    %1014 = math.exp %1013 : vector<8x128xf32>
    %1015 = arith.mulf %1014, %12 : vector<8x128xf32>
    %1016 = arith.subf %955, %1012 : vector<8x128xf32>
    %1017 = math.exp %1016 : vector<8x128xf32>
    %1018 = arith.addf %1014, %1017 : vector<8x128xf32>
    %1019 = arith.mulf %1017, %24 : vector<8x128xf32>
    %1020 = arith.addf %1015, %1019 : vector<8x128xf32>
    %1021 = arith.subf %962, %1012 : vector<8x128xf32>
    %1022 = math.exp %1021 : vector<8x128xf32>
    %1023 = arith.addf %1018, %1022 : vector<8x128xf32>
    %1024 = arith.mulf %1022, %36 : vector<8x128xf32>
    %1025 = arith.addf %1020, %1024 : vector<8x128xf32>
    %1026 = arith.subf %969, %1012 : vector<8x128xf32>
    %1027 = math.exp %1026 : vector<8x128xf32>
    %1028 = arith.addf %1023, %1027 : vector<8x128xf32>
    %1029 = arith.mulf %1027, %48 : vector<8x128xf32>
    %1030 = arith.addf %1025, %1029 : vector<8x128xf32>
    %1031 = arith.subf %976, %1012 : vector<8x128xf32>
    %1032 = math.exp %1031 : vector<8x128xf32>
    %1033 = arith.addf %1028, %1032 : vector<8x128xf32>
    %1034 = arith.mulf %1032, %60 : vector<8x128xf32>
    %1035 = arith.addf %1030, %1034 : vector<8x128xf32>
    %1036 = arith.subf %983, %1012 : vector<8x128xf32>
    %1037 = math.exp %1036 : vector<8x128xf32>
    %1038 = arith.addf %1033, %1037 : vector<8x128xf32>
    %1039 = arith.mulf %1037, %72 : vector<8x128xf32>
    %1040 = arith.addf %1035, %1039 : vector<8x128xf32>
    %1041 = arith.subf %990, %1012 : vector<8x128xf32>
    %1042 = math.exp %1041 : vector<8x128xf32>
    %1043 = arith.addf %1038, %1042 : vector<8x128xf32>
    %1044 = arith.mulf %1042, %84 : vector<8x128xf32>
    %1045 = arith.addf %1040, %1044 : vector<8x128xf32>
    %1046 = arith.subf %997, %1012 : vector<8x128xf32>
    %1047 = math.exp %1046 : vector<8x128xf32>
    %1048 = arith.addf %1043, %1047 : vector<8x128xf32>
    %1049 = arith.mulf %1047, %96 : vector<8x128xf32>
    %1050 = arith.addf %1045, %1049 : vector<8x128xf32>
    %1051 = arith.subf %1004, %1012 : vector<8x128xf32>
    %1052 = math.exp %1051 : vector<8x128xf32>
    %1053 = arith.addf %1048, %1052 : vector<8x128xf32>
    %1054 = arith.mulf %1052, %108 : vector<8x128xf32>
    %1055 = arith.addf %1050, %1054 : vector<8x128xf32>
    %1056 = tpu.reciprocal %1053 : vector<8x128xf32> -> vector<8x128xf32>
    %1057 = arith.mulf %1055, %1056 : vector<8x128xf32>
    %c0_310 = arith.constant 0 : index
    %c0_311 = arith.constant 0 : index
    %c1792_312 = arith.constant 1792 : index
    %1058 = vector.load %arg4[%c0_310, %c0_311, %c1792_312] : memref<1x8x2304xf32, #tpu.memory_space<vmem>>, vector<1x8x128xf32>
    %1059 = vector.shape_cast %1058 : vector<1x8x128xf32> to vector<8x128xf32>
    %1060 = vector.shape_cast %1057 : vector<8x128xf32> to vector<1x8x128xf32>
    tpu.vector_store %arg4[%c0_310, %c0_311, %c1792_312], %1060 {strides = array<i32>} : memref<1x8x2304xf32, #tpu.memory_space<vmem>>, vector<1x8x128xf32>,
    %1061 = arith.mulf %102, %9 : vector<8x128xf32>
    %c4_i32_313 = arith.constant 4 : i32
    %1062 = tpu.dynamic_rotate %1061 by %c4_i32_313 dim 0 : vector<8x128xf32>, i32 -> vector<8x128xf32>
    %1063 = arith.addf %1061, %1062 : vector<8x128xf32>
    %c2_i32_314 = arith.constant 2 : i32
    %1064 = tpu.dynamic_rotate %1063 by %c2_i32_314 dim 0 : vector<8x128xf32>, i32 -> vector<8x128xf32>
    %1065 = arith.addf %1063, %1064 : vector<8x128xf32>
    %c1_i32_315 = arith.constant 1 : i32
    %1066 = tpu.dynamic_rotate %1065 by %c1_i32_315 dim 0 : vector<8x128xf32>, i32 -> vector<8x128xf32>
    %1067 = arith.addf %1065, %1066 : vector<8x128xf32>
    %1068 = arith.mulf %102, %21 : vector<8x128xf32>
    %c4_i32_316 = arith.constant 4 : i32
    %1069 = tpu.dynamic_rotate %1068 by %c4_i32_316 dim 0 : vector<8x128xf32>, i32 -> vector<8x128xf32>
    %1070 = arith.addf %1068, %1069 : vector<8x128xf32>
    %c2_i32_317 = arith.constant 2 : i32
    %1071 = tpu.dynamic_rotate %1070 by %c2_i32_317 dim 0 : vector<8x128xf32>, i32 -> vector<8x128xf32>
    %1072 = arith.addf %1070, %1071 : vector<8x128xf32>
    %c1_i32_318 = arith.constant 1 : i32
    %1073 = tpu.dynamic_rotate %1072 by %c1_i32_318 dim 0 : vector<8x128xf32>, i32 -> vector<8x128xf32>
    %1074 = arith.addf %1072, %1073 : vector<8x128xf32>
    %1075 = arith.mulf %102, %33 : vector<8x128xf32>
    %c4_i32_319 = arith.constant 4 : i32
    %1076 = tpu.dynamic_rotate %1075 by %c4_i32_319 dim 0 : vector<8x128xf32>, i32 -> vector<8x128xf32>
    %1077 = arith.addf %1075, %1076 : vector<8x128xf32>
    %c2_i32_320 = arith.constant 2 : i32
    %1078 = tpu.dynamic_rotate %1077 by %c2_i32_320 dim 0 : vector<8x128xf32>, i32 -> vector<8x128xf32>
    %1079 = arith.addf %1077, %1078 : vector<8x128xf32>
    %c1_i32_321 = arith.constant 1 : i32
    %1080 = tpu.dynamic_rotate %1079 by %c1_i32_321 dim 0 : vector<8x128xf32>, i32 -> vector<8x128xf32>
    %1081 = arith.addf %1079, %1080 : vector<8x128xf32>
    %1082 = arith.mulf %102, %45 : vector<8x128xf32>
    %c4_i32_322 = arith.constant 4 : i32
    %1083 = tpu.dynamic_rotate %1082 by %c4_i32_322 dim 0 : vector<8x128xf32>, i32 -> vector<8x128xf32>
    %1084 = arith.addf %1082, %1083 : vector<8x128xf32>
    %c2_i32_323 = arith.constant 2 : i32
    %1085 = tpu.dynamic_rotate %1084 by %c2_i32_323 dim 0 : vector<8x128xf32>, i32 -> vector<8x128xf32>
    %1086 = arith.addf %1084, %1085 : vector<8x128xf32>
    %c1_i32_324 = arith.constant 1 : i32
    %1087 = tpu.dynamic_rotate %1086 by %c1_i32_324 dim 0 : vector<8x128xf32>, i32 -> vector<8x128xf32>
    %1088 = arith.addf %1086, %1087 : vector<8x128xf32>
    %1089 = arith.mulf %102, %57 : vector<8x128xf32>
    %c4_i32_325 = arith.constant 4 : i32
    %1090 = tpu.dynamic_rotate %1089 by %c4_i32_325 dim 0 : vector<8x128xf32>, i32 -> vector<8x128xf32>
    %1091 = arith.addf %1089, %1090 : vector<8x128xf32>
    %c2_i32_326 = arith.constant 2 : i32
    %1092 = tpu.dynamic_rotate %1091 by %c2_i32_326 dim 0 : vector<8x128xf32>, i32 -> vector<8x128xf32>
    %1093 = arith.addf %1091, %1092 : vector<8x128xf32>
    %c1_i32_327 = arith.constant 1 : i32
    %1094 = tpu.dynamic_rotate %1093 by %c1_i32_327 dim 0 : vector<8x128xf32>, i32 -> vector<8x128xf32>
    %1095 = arith.addf %1093, %1094 : vector<8x128xf32>
    %1096 = arith.mulf %102, %69 : vector<8x128xf32>
    %c4_i32_328 = arith.constant 4 : i32
    %1097 = tpu.dynamic_rotate %1096 by %c4_i32_328 dim 0 : vector<8x128xf32>, i32 -> vector<8x128xf32>
    %1098 = arith.addf %1096, %1097 : vector<8x128xf32>
    %c2_i32_329 = arith.constant 2 : i32
    %1099 = tpu.dynamic_rotate %1098 by %c2_i32_329 dim 0 : vector<8x128xf32>, i32 -> vector<8x128xf32>
    %1100 = arith.addf %1098, %1099 : vector<8x128xf32>
    %c1_i32_330 = arith.constant 1 : i32
    %1101 = tpu.dynamic_rotate %1100 by %c1_i32_330 dim 0 : vector<8x128xf32>, i32 -> vector<8x128xf32>
    %1102 = arith.addf %1100, %1101 : vector<8x128xf32>
    %1103 = arith.mulf %102, %81 : vector<8x128xf32>
    %c4_i32_331 = arith.constant 4 : i32
    %1104 = tpu.dynamic_rotate %1103 by %c4_i32_331 dim 0 : vector<8x128xf32>, i32 -> vector<8x128xf32>
    %1105 = arith.addf %1103, %1104 : vector<8x128xf32>
    %c2_i32_332 = arith.constant 2 : i32
    %1106 = tpu.dynamic_rotate %1105 by %c2_i32_332 dim 0 : vector<8x128xf32>, i32 -> vector<8x128xf32>
    %1107 = arith.addf %1105, %1106 : vector<8x128xf32>
    %c1_i32_333 = arith.constant 1 : i32
    %1108 = tpu.dynamic_rotate %1107 by %c1_i32_333 dim 0 : vector<8x128xf32>, i32 -> vector<8x128xf32>
    %1109 = arith.addf %1107, %1108 : vector<8x128xf32>
    %1110 = arith.mulf %102, %93 : vector<8x128xf32>
    %c4_i32_334 = arith.constant 4 : i32
    %1111 = tpu.dynamic_rotate %1110 by %c4_i32_334 dim 0 : vector<8x128xf32>, i32 -> vector<8x128xf32>
    %1112 = arith.addf %1110, %1111 : vector<8x128xf32>
    %c2_i32_335 = arith.constant 2 : i32
    %1113 = tpu.dynamic_rotate %1112 by %c2_i32_335 dim 0 : vector<8x128xf32>, i32 -> vector<8x128xf32>
    %1114 = arith.addf %1112, %1113 : vector<8x128xf32>
    %c1_i32_336 = arith.constant 1 : i32
    %1115 = tpu.dynamic_rotate %1114 by %c1_i32_336 dim 0 : vector<8x128xf32>, i32 -> vector<8x128xf32>
    %1116 = arith.addf %1114, %1115 : vector<8x128xf32>
    %1117 = arith.mulf %102, %105 : vector<8x128xf32>
    %c4_i32_337 = arith.constant 4 : i32
    %1118 = tpu.dynamic_rotate %1117 by %c4_i32_337 dim 0 : vector<8x128xf32>, i32 -> vector<8x128xf32>
    %1119 = arith.addf %1117, %1118 : vector<8x128xf32>
    %c2_i32_338 = arith.constant 2 : i32
    %1120 = tpu.dynamic_rotate %1119 by %c2_i32_338 dim 0 : vector<8x128xf32>, i32 -> vector<8x128xf32>
    %1121 = arith.addf %1119, %1120 : vector<8x128xf32>
    %c1_i32_339 = arith.constant 1 : i32
    %1122 = tpu.dynamic_rotate %1121 by %c1_i32_339 dim 0 : vector<8x128xf32>, i32 -> vector<8x128xf32>
    %1123 = arith.addf %1121, %1122 : vector<8x128xf32>
    %1124 = arith.maximumf %1067, %1074 : vector<8x128xf32>
    %1125 = arith.maximumf %1124, %1081 : vector<8x128xf32>
    %1126 = arith.maximumf %1125, %1088 : vector<8x128xf32>
    %1127 = arith.maximumf %1126, %1095 : vector<8x128xf32>
    %1128 = arith.maximumf %1127, %1102 : vector<8x128xf32>
    %1129 = arith.maximumf %1128, %1109 : vector<8x128xf32>
    %1130 = arith.maximumf %1129, %1116 : vector<8x128xf32>
    %1131 = arith.maximumf %1130, %1123 : vector<8x128xf32>
    %1132 = arith.subf %1067, %1131 : vector<8x128xf32>
    %1133 = math.exp %1132 : vector<8x128xf32>
    %1134 = arith.mulf %1133, %12 : vector<8x128xf32>
    %1135 = arith.subf %1074, %1131 : vector<8x128xf32>
    %1136 = math.exp %1135 : vector<8x128xf32>
    %1137 = arith.addf %1133, %1136 : vector<8x128xf32>
    %1138 = arith.mulf %1136, %24 : vector<8x128xf32>
    %1139 = arith.addf %1134, %1138 : vector<8x128xf32>
    %1140 = arith.subf %1081, %1131 : vector<8x128xf32>
    %1141 = math.exp %1140 : vector<8x128xf32>
    %1142 = arith.addf %1137, %1141 : vector<8x128xf32>
    %1143 = arith.mulf %1141, %36 : vector<8x128xf32>
    %1144 = arith.addf %1139, %1143 : vector<8x128xf32>
    %1145 = arith.subf %1088, %1131 : vector<8x128xf32>
    %1146 = math.exp %1145 : vector<8x128xf32>
    %1147 = arith.addf %1142, %1146 : vector<8x128xf32>
    %1148 = arith.mulf %1146, %48 : vector<8x128xf32>
    %1149 = arith.addf %1144, %1148 : vector<8x128xf32>
    %1150 = arith.subf %1095, %1131 : vector<8x128xf32>
    %1151 = math.exp %1150 : vector<8x128xf32>
    %1152 = arith.addf %1147, %1151 : vector<8x128xf32>
    %1153 = arith.mulf %1151, %60 : vector<8x128xf32>
    %1154 = arith.addf %1149, %1153 : vector<8x128xf32>
    %1155 = arith.subf %1102, %1131 : vector<8x128xf32>
    %1156 = math.exp %1155 : vector<8x128xf32>
    %1157 = arith.addf %1152, %1156 : vector<8x128xf32>
    %1158 = arith.mulf %1156, %72 : vector<8x128xf32>
    %1159 = arith.addf %1154, %1158 : vector<8x128xf32>
    %1160 = arith.subf %1109, %1131 : vector<8x128xf32>
    %1161 = math.exp %1160 : vector<8x128xf32>
    %1162 = arith.addf %1157, %1161 : vector<8x128xf32>
    %1163 = arith.mulf %1161, %84 : vector<8x128xf32>
    %1164 = arith.addf %1159, %1163 : vector<8x128xf32>
    %1165 = arith.subf %1116, %1131 : vector<8x128xf32>
    %1166 = math.exp %1165 : vector<8x128xf32>
    %1167 = arith.addf %1162, %1166 : vector<8x128xf32>
    %1168 = arith.mulf %1166, %96 : vector<8x128xf32>
    %1169 = arith.addf %1164, %1168 : vector<8x128xf32>
    %1170 = arith.subf %1123, %1131 : vector<8x128xf32>
    %1171 = math.exp %1170 : vector<8x128xf32>
    %1172 = arith.addf %1167, %1171 : vector<8x128xf32>
    %1173 = arith.mulf %1171, %108 : vector<8x128xf32>
    %1174 = arith.addf %1169, %1173 : vector<8x128xf32>
    %1175 = tpu.reciprocal %1172 : vector<8x128xf32> -> vector<8x128xf32>
    %1176 = arith.mulf %1174, %1175 : vector<8x128xf32>
    %c0_340 = arith.constant 0 : index
    %c0_341 = arith.constant 0 : index
    %c2048_342 = arith.constant 2048 : index
    %1177 = vector.load %arg4[%c0_340, %c0_341, %c2048_342] : memref<1x8x2304xf32, #tpu.memory_space<vmem>>, vector<1x8x128xf32>
    %1178 = vector.shape_cast %1177 : vector<1x8x128xf32> to vector<8x128xf32>
    %1179 = vector.shape_cast %1176 : vector<8x128xf32> to vector<1x8x128xf32>
    tpu.vector_store %arg4[%c0_340, %c0_341, %c2048_342], %1179 {strides = array<i32>} : memref<1x8x2304xf32, #tpu.memory_space<vmem>>, vector<1x8x128xf32>,
    %c0_343 = arith.constant 0 : index
    %c0_344 = arith.constant 0 : index
    %c128_345 = arith.constant 128 : index
    %1180 = vector.load %arg1[%c0_343, %c0_344, %c128_345] : memref<1x8x2304xbf16, #tpu.memory_space<vmem>>, vector<1x8x128xbf16>
    %1181 = vector.shape_cast %1180 : vector<1x8x128xbf16> to vector<8x128xbf16>
    %cst_346 = arith.constant dense<0.000000e+00> : vector<24x128xf32>
    %1182 = tpu.matmul %0, %1181, %cst_346 {dimension_numbers = #tpu.dot_dimension_numbers<[1], [0], [0], [1], [0, 0, 1, 1], [], []>} : vector<24x8xbf16>, vector<8x128xbf16>, vector<24x128xf32> -> vector<24x128xf32>
    %1183 = vector.extract_strided_slice %1182 {offsets = [0, 0], sizes = [8, 128], strides = [1, 1]} : vector<24x128xf32> to vector<8x128xf32>
    %c0_347 = arith.constant 0 : index
    %c0_348 = arith.constant 0 : index
    %1184 = vector.load %arg3[%c0_347, %c0_348] : memref<24x1152xf32, #tpu.memory_space<vmem>>, vector<8x128xf32>
    %1185 = arith.addf %1183, %1184 : vector<8x128xf32>
    %1186 = vector.extract_strided_slice %1182 {offsets = [8, 0], sizes = [8, 128], strides = [1, 1]} : vector<24x128xf32> to vector<8x128xf32>
    %c8_349 = arith.constant 8 : index
    %c0_350 = arith.constant 0 : index
    %1187 = vector.load %arg3[%c8_349, %c0_350] : memref<24x1152xf32, #tpu.memory_space<vmem>>, vector<8x128xf32>
    %1188 = arith.addf %1186, %1187 : vector<8x128xf32>
    %1189 = vector.extract_strided_slice %1182 {offsets = [16, 0], sizes = [8, 128], strides = [1, 1]} : vector<24x128xf32> to vector<8x128xf32>
    %c16_351 = arith.constant 16 : index
    %c0_352 = arith.constant 0 : index
    %1190 = vector.load %arg3[%c16_351, %c0_352] : memref<24x1152xf32, #tpu.memory_space<vmem>>, vector<8x128xf32>
    %1191 = arith.addf %1189, %1190 : vector<8x128xf32>
    %c0_353 = arith.constant 0 : index
    %c0_354 = arith.constant 0 : index
    %c384_355 = arith.constant 384 : index
    %1192 = vector.load %arg1[%c0_353, %c0_354, %c384_355] : memref<1x8x2304xbf16, #tpu.memory_space<vmem>>, vector<1x8x128xbf16>
    %1193 = vector.shape_cast %1192 : vector<1x8x128xbf16> to vector<8x128xbf16>
    %cst_356 = arith.constant dense<0.000000e+00> : vector<24x128xf32>
    %1194 = tpu.matmul %0, %1193, %cst_356 {dimension_numbers = #tpu.dot_dimension_numbers<[1], [0], [0], [1], [0, 0, 1, 1], [], []>} : vector<24x8xbf16>, vector<8x128xbf16>, vector<24x128xf32> -> vector<24x128xf32>
    %1195 = vector.extract_strided_slice %1194 {offsets = [0, 0], sizes = [8, 128], strides = [1, 1]} : vector<24x128xf32> to vector<8x128xf32>
    %c0_357 = arith.constant 0 : index
    %c128_358 = arith.constant 128 : index
    %1196 = vector.load %arg3[%c0_357, %c128_358] : memref<24x1152xf32, #tpu.memory_space<vmem>>, vector<8x128xf32>
    %1197 = arith.addf %1195, %1196 : vector<8x128xf32>
    %1198 = vector.extract_strided_slice %1194 {offsets = [8, 0], sizes = [8, 128], strides = [1, 1]} : vector<24x128xf32> to vector<8x128xf32>
    %c8_359 = arith.constant 8 : index
    %c128_360 = arith.constant 128 : index
    %1199 = vector.load %arg3[%c8_359, %c128_360] : memref<24x1152xf32, #tpu.memory_space<vmem>>, vector<8x128xf32>
    %1200 = arith.addf %1198, %1199 : vector<8x128xf32>
    %1201 = vector.extract_strided_slice %1194 {offsets = [16, 0], sizes = [8, 128], strides = [1, 1]} : vector<24x128xf32> to vector<8x128xf32>
    %c16_361 = arith.constant 16 : index
    %c128_362 = arith.constant 128 : index
    %1202 = vector.load %arg3[%c16_361, %c128_362] : memref<24x1152xf32, #tpu.memory_space<vmem>>, vector<8x128xf32>
    %1203 = arith.addf %1201, %1202 : vector<8x128xf32>
    %c0_363 = arith.constant 0 : index
    %c0_364 = arith.constant 0 : index
    %c640_365 = arith.constant 640 : index
    %1204 = vector.load %arg1[%c0_363, %c0_364, %c640_365] : memref<1x8x2304xbf16, #tpu.memory_space<vmem>>, vector<1x8x128xbf16>
    %1205 = vector.shape_cast %1204 : vector<1x8x128xbf16> to vector<8x128xbf16>
    %cst_366 = arith.constant dense<0.000000e+00> : vector<24x128xf32>
    %1206 = tpu.matmul %0, %1205, %cst_366 {dimension_numbers = #tpu.dot_dimension_numbers<[1], [0], [0], [1], [0, 0, 1, 1], [], []>} : vector<24x8xbf16>, vector<8x128xbf16>, vector<24x128xf32> -> vector<24x128xf32>
    %1207 = vector.extract_strided_slice %1206 {offsets = [0, 0], sizes = [8, 128], strides = [1, 1]} : vector<24x128xf32> to vector<8x128xf32>
    %c0_367 = arith.constant 0 : index
    %c256_368 = arith.constant 256 : index
    %1208 = vector.load %arg3[%c0_367, %c256_368] : memref<24x1152xf32, #tpu.memory_space<vmem>>, vector<8x128xf32>
    %1209 = arith.addf %1207, %1208 : vector<8x128xf32>
    %1210 = vector.extract_strided_slice %1206 {offsets = [8, 0], sizes = [8, 128], strides = [1, 1]} : vector<24x128xf32> to vector<8x128xf32>
    %c8_369 = arith.constant 8 : index
    %c256_370 = arith.constant 256 : index
    %1211 = vector.load %arg3[%c8_369, %c256_370] : memref<24x1152xf32, #tpu.memory_space<vmem>>, vector<8x128xf32>
    %1212 = arith.addf %1210, %1211 : vector<8x128xf32>
    %1213 = vector.extract_strided_slice %1206 {offsets = [16, 0], sizes = [8, 128], strides = [1, 1]} : vector<24x128xf32> to vector<8x128xf32>
    %c16_371 = arith.constant 16 : index
    %c256_372 = arith.constant 256 : index
    %1214 = vector.load %arg3[%c16_371, %c256_372] : memref<24x1152xf32, #tpu.memory_space<vmem>>, vector<8x128xf32>
    %1215 = arith.addf %1213, %1214 : vector<8x128xf32>
    %c0_373 = arith.constant 0 : index
    %c0_374 = arith.constant 0 : index
    %c896_375 = arith.constant 896 : index
    %1216 = vector.load %arg1[%c0_373, %c0_374, %c896_375] : memref<1x8x2304xbf16, #tpu.memory_space<vmem>>, vector<1x8x128xbf16>
    %1217 = vector.shape_cast %1216 : vector<1x8x128xbf16> to vector<8x128xbf16>
    %cst_376 = arith.constant dense<0.000000e+00> : vector<24x128xf32>
    %1218 = tpu.matmul %0, %1217, %cst_376 {dimension_numbers = #tpu.dot_dimension_numbers<[1], [0], [0], [1], [0, 0, 1, 1], [], []>} : vector<24x8xbf16>, vector<8x128xbf16>, vector<24x128xf32> -> vector<24x128xf32>
    %1219 = vector.extract_strided_slice %1218 {offsets = [0, 0], sizes = [8, 128], strides = [1, 1]} : vector<24x128xf32> to vector<8x128xf32>
    %c0_377 = arith.constant 0 : index
    %c384_378 = arith.constant 384 : index
    %1220 = vector.load %arg3[%c0_377, %c384_378] : memref<24x1152xf32, #tpu.memory_space<vmem>>, vector<8x128xf32>
    %1221 = arith.addf %1219, %1220 : vector<8x128xf32>
    %1222 = vector.extract_strided_slice %1218 {offsets = [8, 0], sizes = [8, 128], strides = [1, 1]} : vector<24x128xf32> to vector<8x128xf32>
    %c8_379 = arith.constant 8 : index
    %c384_380 = arith.constant 384 : index
    %1223 = vector.load %arg3[%c8_379, %c384_380] : memref<24x1152xf32, #tpu.memory_space<vmem>>, vector<8x128xf32>
    %1224 = arith.addf %1222, %1223 : vector<8x128xf32>
    %1225 = vector.extract_strided_slice %1218 {offsets = [16, 0], sizes = [8, 128], strides = [1, 1]} : vector<24x128xf32> to vector<8x128xf32>
    %c16_381 = arith.constant 16 : index
    %c384_382 = arith.constant 384 : index
    %1226 = vector.load %arg3[%c16_381, %c384_382] : memref<24x1152xf32, #tpu.memory_space<vmem>>, vector<8x128xf32>
    %1227 = arith.addf %1225, %1226 : vector<8x128xf32>
    %c0_383 = arith.constant 0 : index
    %c0_384 = arith.constant 0 : index
    %c1152 = arith.constant 1152 : index
    %1228 = vector.load %arg1[%c0_383, %c0_384, %c1152] : memref<1x8x2304xbf16, #tpu.memory_space<vmem>>, vector<1x8x128xbf16>
    %1229 = vector.shape_cast %1228 : vector<1x8x128xbf16> to vector<8x128xbf16>
    %cst_385 = arith.constant dense<0.000000e+00> : vector<24x128xf32>
    %1230 = tpu.matmul %0, %1229, %cst_385 {dimension_numbers = #tpu.dot_dimension_numbers<[1], [0], [0], [1], [0, 0, 1, 1], [], []>} : vector<24x8xbf16>, vector<8x128xbf16>, vector<24x128xf32> -> vector<24x128xf32>
    %1231 = vector.extract_strided_slice %1230 {offsets = [0, 0], sizes = [8, 128], strides = [1, 1]} : vector<24x128xf32> to vector<8x128xf32>
    %c0_386 = arith.constant 0 : index
    %c512_387 = arith.constant 512 : index
    %1232 = vector.load %arg3[%c0_386, %c512_387] : memref<24x1152xf32, #tpu.memory_space<vmem>>, vector<8x128xf32>
    %1233 = arith.addf %1231, %1232 : vector<8x128xf32>
    %1234 = vector.extract_strided_slice %1230 {offsets = [8, 0], sizes = [8, 128], strides = [1, 1]} : vector<24x128xf32> to vector<8x128xf32>
    %c8_388 = arith.constant 8 : index
    %c512_389 = arith.constant 512 : index
    %1235 = vector.load %arg3[%c8_388, %c512_389] : memref<24x1152xf32, #tpu.memory_space<vmem>>, vector<8x128xf32>
    %1236 = arith.addf %1234, %1235 : vector<8x128xf32>
    %1237 = vector.extract_strided_slice %1230 {offsets = [16, 0], sizes = [8, 128], strides = [1, 1]} : vector<24x128xf32> to vector<8x128xf32>
    %c16_390 = arith.constant 16 : index
    %c512_391 = arith.constant 512 : index
    %1238 = vector.load %arg3[%c16_390, %c512_391] : memref<24x1152xf32, #tpu.memory_space<vmem>>, vector<8x128xf32>
    %1239 = arith.addf %1237, %1238 : vector<8x128xf32>
    %c0_392 = arith.constant 0 : index
    %c0_393 = arith.constant 0 : index
    %c1408 = arith.constant 1408 : index
    %1240 = vector.load %arg1[%c0_392, %c0_393, %c1408] : memref<1x8x2304xbf16, #tpu.memory_space<vmem>>, vector<1x8x128xbf16>
    %1241 = vector.shape_cast %1240 : vector<1x8x128xbf16> to vector<8x128xbf16>
    %cst_394 = arith.constant dense<0.000000e+00> : vector<24x128xf32>
    %1242 = tpu.matmul %0, %1241, %cst_394 {dimension_numbers = #tpu.dot_dimension_numbers<[1], [0], [0], [1], [0, 0, 1, 1], [], []>} : vector<24x8xbf16>, vector<8x128xbf16>, vector<24x128xf32> -> vector<24x128xf32>
    %1243 = vector.extract_strided_slice %1242 {offsets = [0, 0], sizes = [8, 128], strides = [1, 1]} : vector<24x128xf32> to vector<8x128xf32>
    %c0_395 = arith.constant 0 : index
    %c640_396 = arith.constant 640 : index
    %1244 = vector.load %arg3[%c0_395, %c640_396] : memref<24x1152xf32, #tpu.memory_space<vmem>>, vector<8x128xf32>
    %1245 = arith.addf %1243, %1244 : vector<8x128xf32>
    %1246 = vector.extract_strided_slice %1242 {offsets = [8, 0], sizes = [8, 128], strides = [1, 1]} : vector<24x128xf32> to vector<8x128xf32>
    %c8_397 = arith.constant 8 : index
    %c640_398 = arith.constant 640 : index
    %1247 = vector.load %arg3[%c8_397, %c640_398] : memref<24x1152xf32, #tpu.memory_space<vmem>>, vector<8x128xf32>
    %1248 = arith.addf %1246, %1247 : vector<8x128xf32>
    %1249 = vector.extract_strided_slice %1242 {offsets = [16, 0], sizes = [8, 128], strides = [1, 1]} : vector<24x128xf32> to vector<8x128xf32>
    %c16_399 = arith.constant 16 : index
    %c640_400 = arith.constant 640 : index
    %1250 = vector.load %arg3[%c16_399, %c640_400] : memref<24x1152xf32, #tpu.memory_space<vmem>>, vector<8x128xf32>
    %1251 = arith.addf %1249, %1250 : vector<8x128xf32>
    %c0_401 = arith.constant 0 : index
    %c0_402 = arith.constant 0 : index
    %c1664 = arith.constant 1664 : index
    %1252 = vector.load %arg1[%c0_401, %c0_402, %c1664] : memref<1x8x2304xbf16, #tpu.memory_space<vmem>>, vector<1x8x128xbf16>
    %1253 = vector.shape_cast %1252 : vector<1x8x128xbf16> to vector<8x128xbf16>
    %cst_403 = arith.constant dense<0.000000e+00> : vector<24x128xf32>
    %1254 = tpu.matmul %0, %1253, %cst_403 {dimension_numbers = #tpu.dot_dimension_numbers<[1], [0], [0], [1], [0, 0, 1, 1], [], []>} : vector<24x8xbf16>, vector<8x128xbf16>, vector<24x128xf32> -> vector<24x128xf32>
    %1255 = vector.extract_strided_slice %1254 {offsets = [0, 0], sizes = [8, 128], strides = [1, 1]} : vector<24x128xf32> to vector<8x128xf32>
    %c0_404 = arith.constant 0 : index
    %c768_405 = arith.constant 768 : index
    %1256 = vector.load %arg3[%c0_404, %c768_405] : memref<24x1152xf32, #tpu.memory_space<vmem>>, vector<8x128xf32>
    %1257 = arith.addf %1255, %1256 : vector<8x128xf32>
    %1258 = vector.extract_strided_slice %1254 {offsets = [8, 0], sizes = [8, 128], strides = [1, 1]} : vector<24x128xf32> to vector<8x128xf32>
    %c8_406 = arith.constant 8 : index
    %c768_407 = arith.constant 768 : index
    %1259 = vector.load %arg3[%c8_406, %c768_407] : memref<24x1152xf32, #tpu.memory_space<vmem>>, vector<8x128xf32>
    %1260 = arith.addf %1258, %1259 : vector<8x128xf32>
    %1261 = vector.extract_strided_slice %1254 {offsets = [16, 0], sizes = [8, 128], strides = [1, 1]} : vector<24x128xf32> to vector<8x128xf32>
    %c16_408 = arith.constant 16 : index
    %c768_409 = arith.constant 768 : index
    %1262 = vector.load %arg3[%c16_408, %c768_409] : memref<24x1152xf32, #tpu.memory_space<vmem>>, vector<8x128xf32>
    %1263 = arith.addf %1261, %1262 : vector<8x128xf32>
    %c0_410 = arith.constant 0 : index
    %c0_411 = arith.constant 0 : index
    %c1920 = arith.constant 1920 : index
    %1264 = vector.load %arg1[%c0_410, %c0_411, %c1920] : memref<1x8x2304xbf16, #tpu.memory_space<vmem>>, vector<1x8x128xbf16>
    %1265 = vector.shape_cast %1264 : vector<1x8x128xbf16> to vector<8x128xbf16>
    %cst_412 = arith.constant dense<0.000000e+00> : vector<24x128xf32>
    %1266 = tpu.matmul %0, %1265, %cst_412 {dimension_numbers = #tpu.dot_dimension_numbers<[1], [0], [0], [1], [0, 0, 1, 1], [], []>} : vector<24x8xbf16>, vector<8x128xbf16>, vector<24x128xf32> -> vector<24x128xf32>
    %1267 = vector.extract_strided_slice %1266 {offsets = [0, 0], sizes = [8, 128], strides = [1, 1]} : vector<24x128xf32> to vector<8x128xf32>
    %c0_413 = arith.constant 0 : index
    %c896_414 = arith.constant 896 : index
    %1268 = vector.load %arg3[%c0_413, %c896_414] : memref<24x1152xf32, #tpu.memory_space<vmem>>, vector<8x128xf32>
    %1269 = arith.addf %1267, %1268 : vector<8x128xf32>
    %1270 = vector.extract_strided_slice %1266 {offsets = [8, 0], sizes = [8, 128], strides = [1, 1]} : vector<24x128xf32> to vector<8x128xf32>
    %c8_415 = arith.constant 8 : index
    %c896_416 = arith.constant 896 : index
    %1271 = vector.load %arg3[%c8_415, %c896_416] : memref<24x1152xf32, #tpu.memory_space<vmem>>, vector<8x128xf32>
    %1272 = arith.addf %1270, %1271 : vector<8x128xf32>
    %1273 = vector.extract_strided_slice %1266 {offsets = [16, 0], sizes = [8, 128], strides = [1, 1]} : vector<24x128xf32> to vector<8x128xf32>
    %c16_417 = arith.constant 16 : index
    %c896_418 = arith.constant 896 : index
    %1274 = vector.load %arg3[%c16_417, %c896_418] : memref<24x1152xf32, #tpu.memory_space<vmem>>, vector<8x128xf32>
    %1275 = arith.addf %1273, %1274 : vector<8x128xf32>
    %c0_419 = arith.constant 0 : index
    %c0_420 = arith.constant 0 : index
    %c2176 = arith.constant 2176 : index
    %1276 = vector.load %arg1[%c0_419, %c0_420, %c2176] : memref<1x8x2304xbf16, #tpu.memory_space<vmem>>, vector<1x8x128xbf16>
    %1277 = vector.shape_cast %1276 : vector<1x8x128xbf16> to vector<8x128xbf16>
    %cst_421 = arith.constant dense<0.000000e+00> : vector<24x128xf32>
    %1278 = tpu.matmul %0, %1277, %cst_421 {dimension_numbers = #tpu.dot_dimension_numbers<[1], [0], [0], [1], [0, 0, 1, 1], [], []>} : vector<24x8xbf16>, vector<8x128xbf16>, vector<24x128xf32> -> vector<24x128xf32>
    %1279 = vector.extract_strided_slice %1278 {offsets = [0, 0], sizes = [8, 128], strides = [1, 1]} : vector<24x128xf32> to vector<8x128xf32>
    %c0_422 = arith.constant 0 : index
    %c1024_423 = arith.constant 1024 : index
    %1280 = vector.load %arg3[%c0_422, %c1024_423] : memref<24x1152xf32, #tpu.memory_space<vmem>>, vector<8x128xf32>
    %1281 = arith.addf %1279, %1280 : vector<8x128xf32>
    %1282 = vector.extract_strided_slice %1278 {offsets = [8, 0], sizes = [8, 128], strides = [1, 1]} : vector<24x128xf32> to vector<8x128xf32>
    %c8_424 = arith.constant 8 : index
    %c1024_425 = arith.constant 1024 : index
    %1283 = vector.load %arg3[%c8_424, %c1024_425] : memref<24x1152xf32, #tpu.memory_space<vmem>>, vector<8x128xf32>
    %1284 = arith.addf %1282, %1283 : vector<8x128xf32>
    %1285 = vector.extract_strided_slice %1278 {offsets = [16, 0], sizes = [8, 128], strides = [1, 1]} : vector<24x128xf32> to vector<8x128xf32>
    %c16_426 = arith.constant 16 : index
    %c1024_427 = arith.constant 1024 : index
    %1286 = vector.load %arg3[%c16_426, %c1024_427] : memref<24x1152xf32, #tpu.memory_space<vmem>>, vector<8x128xf32>
    %1287 = arith.addf %1285, %1286 : vector<8x128xf32>
    %1288 = arith.mulf %1185, %1188 : vector<8x128xf32>
    %c4_i32_428 = arith.constant 4 : i32
    %1289 = tpu.dynamic_rotate %1288 by %c4_i32_428 dim 0 : vector<8x128xf32>, i32 -> vector<8x128xf32>
    %1290 = arith.addf %1288, %1289 : vector<8x128xf32>
    %c2_i32_429 = arith.constant 2 : i32
    %1291 = tpu.dynamic_rotate %1290 by %c2_i32_429 dim 0 : vector<8x128xf32>, i32 -> vector<8x128xf32>
    %1292 = arith.addf %1290, %1291 : vector<8x128xf32>
    %c1_i32_430 = arith.constant 1 : i32
    %1293 = tpu.dynamic_rotate %1292 by %c1_i32_430 dim 0 : vector<8x128xf32>, i32 -> vector<8x128xf32>
    %1294 = arith.addf %1292, %1293 : vector<8x128xf32>
    %1295 = arith.mulf %1185, %1200 : vector<8x128xf32>
    %c4_i32_431 = arith.constant 4 : i32
    %1296 = tpu.dynamic_rotate %1295 by %c4_i32_431 dim 0 : vector<8x128xf32>, i32 -> vector<8x128xf32>
    %1297 = arith.addf %1295, %1296 : vector<8x128xf32>
    %c2_i32_432 = arith.constant 2 : i32
    %1298 = tpu.dynamic_rotate %1297 by %c2_i32_432 dim 0 : vector<8x128xf32>, i32 -> vector<8x128xf32>
    %1299 = arith.addf %1297, %1298 : vector<8x128xf32>
    %c1_i32_433 = arith.constant 1 : i32
    %1300 = tpu.dynamic_rotate %1299 by %c1_i32_433 dim 0 : vector<8x128xf32>, i32 -> vector<8x128xf32>
    %1301 = arith.addf %1299, %1300 : vector<8x128xf32>
    %1302 = arith.mulf %1185, %1212 : vector<8x128xf32>
    %c4_i32_434 = arith.constant 4 : i32
    %1303 = tpu.dynamic_rotate %1302 by %c4_i32_434 dim 0 : vector<8x128xf32>, i32 -> vector<8x128xf32>
    %1304 = arith.addf %1302, %1303 : vector<8x128xf32>
    %c2_i32_435 = arith.constant 2 : i32
    %1305 = tpu.dynamic_rotate %1304 by %c2_i32_435 dim 0 : vector<8x128xf32>, i32 -> vector<8x128xf32>
    %1306 = arith.addf %1304, %1305 : vector<8x128xf32>
    %c1_i32_436 = arith.constant 1 : i32
    %1307 = tpu.dynamic_rotate %1306 by %c1_i32_436 dim 0 : vector<8x128xf32>, i32 -> vector<8x128xf32>
    %1308 = arith.addf %1306, %1307 : vector<8x128xf32>
    %1309 = arith.mulf %1185, %1224 : vector<8x128xf32>
    %c4_i32_437 = arith.constant 4 : i32
    %1310 = tpu.dynamic_rotate %1309 by %c4_i32_437 dim 0 : vector<8x128xf32>, i32 -> vector<8x128xf32>
    %1311 = arith.addf %1309, %1310 : vector<8x128xf32>
    %c2_i32_438 = arith.constant 2 : i32
    %1312 = tpu.dynamic_rotate %1311 by %c2_i32_438 dim 0 : vector<8x128xf32>, i32 -> vector<8x128xf32>
    %1313 = arith.addf %1311, %1312 : vector<8x128xf32>
    %c1_i32_439 = arith.constant 1 : i32
    %1314 = tpu.dynamic_rotate %1313 by %c1_i32_439 dim 0 : vector<8x128xf32>, i32 -> vector<8x128xf32>
    %1315 = arith.addf %1313, %1314 : vector<8x128xf32>
    %1316 = arith.mulf %1185, %1236 : vector<8x128xf32>
    %c4_i32_440 = arith.constant 4 : i32
    %1317 = tpu.dynamic_rotate %1316 by %c4_i32_440 dim 0 : vector<8x128xf32>, i32 -> vector<8x128xf32>
    %1318 = arith.addf %1316, %1317 : vector<8x128xf32>
    %c2_i32_441 = arith.constant 2 : i32
    %1319 = tpu.dynamic_rotate %1318 by %c2_i32_441 dim 0 : vector<8x128xf32>, i32 -> vector<8x128xf32>
    %1320 = arith.addf %1318, %1319 : vector<8x128xf32>
    %c1_i32_442 = arith.constant 1 : i32
    %1321 = tpu.dynamic_rotate %1320 by %c1_i32_442 dim 0 : vector<8x128xf32>, i32 -> vector<8x128xf32>
    %1322 = arith.addf %1320, %1321 : vector<8x128xf32>
    %1323 = arith.mulf %1185, %1248 : vector<8x128xf32>
    %c4_i32_443 = arith.constant 4 : i32
    %1324 = tpu.dynamic_rotate %1323 by %c4_i32_443 dim 0 : vector<8x128xf32>, i32 -> vector<8x128xf32>
    %1325 = arith.addf %1323, %1324 : vector<8x128xf32>
    %c2_i32_444 = arith.constant 2 : i32
    %1326 = tpu.dynamic_rotate %1325 by %c2_i32_444 dim 0 : vector<8x128xf32>, i32 -> vector<8x128xf32>
    %1327 = arith.addf %1325, %1326 : vector<8x128xf32>
    %c1_i32_445 = arith.constant 1 : i32
    %1328 = tpu.dynamic_rotate %1327 by %c1_i32_445 dim 0 : vector<8x128xf32>, i32 -> vector<8x128xf32>
    %1329 = arith.addf %1327, %1328 : vector<8x128xf32>
    %1330 = arith.mulf %1185, %1260 : vector<8x128xf32>
    %c4_i32_446 = arith.constant 4 : i32
    %1331 = tpu.dynamic_rotate %1330 by %c4_i32_446 dim 0 : vector<8x128xf32>, i32 -> vector<8x128xf32>
    %1332 = arith.addf %1330, %1331 : vector<8x128xf32>
    %c2_i32_447 = arith.constant 2 : i32
    %1333 = tpu.dynamic_rotate %1332 by %c2_i32_447 dim 0 : vector<8x128xf32>, i32 -> vector<8x128xf32>
    %1334 = arith.addf %1332, %1333 : vector<8x128xf32>
    %c1_i32_448 = arith.constant 1 : i32
    %1335 = tpu.dynamic_rotate %1334 by %c1_i32_448 dim 0 : vector<8x128xf32>, i32 -> vector<8x128xf32>
    %1336 = arith.addf %1334, %1335 : vector<8x128xf32>
    %1337 = arith.mulf %1185, %1272 : vector<8x128xf32>
    %c4_i32_449 = arith.constant 4 : i32
    %1338 = tpu.dynamic_rotate %1337 by %c4_i32_449 dim 0 : vector<8x128xf32>, i32 -> vector<8x128xf32>
    %1339 = arith.addf %1337, %1338 : vector<8x128xf32>
    %c2_i32_450 = arith.constant 2 : i32
    %1340 = tpu.dynamic_rotate %1339 by %c2_i32_450 dim 0 : vector<8x128xf32>, i32 -> vector<8x128xf32>
    %1341 = arith.addf %1339, %1340 : vector<8x128xf32>
    %c1_i32_451 = arith.constant 1 : i32
    %1342 = tpu.dynamic_rotate %1341 by %c1_i32_451 dim 0 : vector<8x128xf32>, i32 -> vector<8x128xf32>
    %1343 = arith.addf %1341, %1342 : vector<8x128xf32>
    %1344 = arith.mulf %1185, %1284 : vector<8x128xf32>
    %c4_i32_452 = arith.constant 4 : i32
    %1345 = tpu.dynamic_rotate %1344 by %c4_i32_452 dim 0 : vector<8x128xf32>, i32 -> vector<8x128xf32>
    %1346 = arith.addf %1344, %1345 : vector<8x128xf32>
    %c2_i32_453 = arith.constant 2 : i32
    %1347 = tpu.dynamic_rotate %1346 by %c2_i32_453 dim 0 : vector<8x128xf32>, i32 -> vector<8x128xf32>
    %1348 = arith.addf %1346, %1347 : vector<8x128xf32>
    %c1_i32_454 = arith.constant 1 : i32
    %1349 = tpu.dynamic_rotate %1348 by %c1_i32_454 dim 0 : vector<8x128xf32>, i32 -> vector<8x128xf32>
    %1350 = arith.addf %1348, %1349 : vector<8x128xf32>
    %1351 = arith.maximumf %1294, %1301 : vector<8x128xf32>
    %1352 = arith.maximumf %1351, %1308 : vector<8x128xf32>
    %1353 = arith.maximumf %1352, %1315 : vector<8x128xf32>
    %1354 = arith.maximumf %1353, %1322 : vector<8x128xf32>
    %1355 = arith.maximumf %1354, %1329 : vector<8x128xf32>
    %1356 = arith.maximumf %1355, %1336 : vector<8x128xf32>
    %1357 = arith.maximumf %1356, %1343 : vector<8x128xf32>
    %1358 = arith.maximumf %1357, %1350 : vector<8x128xf32>
    %1359 = arith.subf %1294, %1358 : vector<8x128xf32>
    %1360 = math.exp %1359 : vector<8x128xf32>
    %1361 = arith.mulf %1360, %1191 : vector<8x128xf32>
    %1362 = arith.subf %1301, %1358 : vector<8x128xf32>
    %1363 = math.exp %1362 : vector<8x128xf32>
    %1364 = arith.addf %1360, %1363 : vector<8x128xf32>
    %1365 = arith.mulf %1363, %1203 : vector<8x128xf32>
    %1366 = arith.addf %1361, %1365 : vector<8x128xf32>
    %1367 = arith.subf %1308, %1358 : vector<8x128xf32>
    %1368 = math.exp %1367 : vector<8x128xf32>
    %1369 = arith.addf %1364, %1368 : vector<8x128xf32>
    %1370 = arith.mulf %1368, %1215 : vector<8x128xf32>
    %1371 = arith.addf %1366, %1370 : vector<8x128xf32>
    %1372 = arith.subf %1315, %1358 : vector<8x128xf32>
    %1373 = math.exp %1372 : vector<8x128xf32>
    %1374 = arith.addf %1369, %1373 : vector<8x128xf32>
    %1375 = arith.mulf %1373, %1227 : vector<8x128xf32>
    %1376 = arith.addf %1371, %1375 : vector<8x128xf32>
    %1377 = arith.subf %1322, %1358 : vector<8x128xf32>
    %1378 = math.exp %1377 : vector<8x128xf32>
    %1379 = arith.addf %1374, %1378 : vector<8x128xf32>
    %1380 = arith.mulf %1378, %1239 : vector<8x128xf32>
    %1381 = arith.addf %1376, %1380 : vector<8x128xf32>
    %1382 = arith.subf %1329, %1358 : vector<8x128xf32>
    %1383 = math.exp %1382 : vector<8x128xf32>
    %1384 = arith.addf %1379, %1383 : vector<8x128xf32>
    %1385 = arith.mulf %1383, %1251 : vector<8x128xf32>
    %1386 = arith.addf %1381, %1385 : vector<8x128xf32>
    %1387 = arith.subf %1336, %1358 : vector<8x128xf32>
    %1388 = math.exp %1387 : vector<8x128xf32>
    %1389 = arith.addf %1384, %1388 : vector<8x128xf32>
    %1390 = arith.mulf %1388, %1263 : vector<8x128xf32>
    %1391 = arith.addf %1386, %1390 : vector<8x128xf32>
    %1392 = arith.subf %1343, %1358 : vector<8x128xf32>
    %1393 = math.exp %1392 : vector<8x128xf32>
    %1394 = arith.addf %1389, %1393 : vector<8x128xf32>
    %1395 = arith.mulf %1393, %1275 : vector<8x128xf32>
    %1396 = arith.addf %1391, %1395 : vector<8x128xf32>
    %1397 = arith.subf %1350, %1358 : vector<8x128xf32>
    %1398 = math.exp %1397 : vector<8x128xf32>
    %1399 = arith.addf %1394, %1398 : vector<8x128xf32>
    %1400 = arith.mulf %1398, %1287 : vector<8x128xf32>
    %1401 = arith.addf %1396, %1400 : vector<8x128xf32>
    %1402 = tpu.reciprocal %1399 : vector<8x128xf32> -> vector<8x128xf32>
    %1403 = arith.mulf %1401, %1402 : vector<8x128xf32>
    %c0_455 = arith.constant 0 : index
    %c0_456 = arith.constant 0 : index
    %c128_457 = arith.constant 128 : index
    %1404 = vector.load %arg4[%c0_455, %c0_456, %c128_457] : memref<1x8x2304xf32, #tpu.memory_space<vmem>>, vector<1x8x128xf32>
    %1405 = vector.shape_cast %1404 : vector<1x8x128xf32> to vector<8x128xf32>
    %1406 = vector.shape_cast %1403 : vector<8x128xf32> to vector<1x8x128xf32>
    tpu.vector_store %arg4[%c0_455, %c0_456, %c128_457], %1406 {strides = array<i32>} : memref<1x8x2304xf32, #tpu.memory_space<vmem>>, vector<1x8x128xf32>,
    %1407 = arith.mulf %1197, %1188 : vector<8x128xf32>
    %c4_i32_458 = arith.constant 4 : i32
    %1408 = tpu.dynamic_rotate %1407 by %c4_i32_458 dim 0 : vector<8x128xf32>, i32 -> vector<8x128xf32>
    %1409 = arith.addf %1407, %1408 : vector<8x128xf32>
    %c2_i32_459 = arith.constant 2 : i32
    %1410 = tpu.dynamic_rotate %1409 by %c2_i32_459 dim 0 : vector<8x128xf32>, i32 -> vector<8x128xf32>
    %1411 = arith.addf %1409, %1410 : vector<8x128xf32>
    %c1_i32_460 = arith.constant 1 : i32
    %1412 = tpu.dynamic_rotate %1411 by %c1_i32_460 dim 0 : vector<8x128xf32>, i32 -> vector<8x128xf32>
    %1413 = arith.addf %1411, %1412 : vector<8x128xf32>
    %1414 = arith.mulf %1197, %1200 : vector<8x128xf32>
    %c4_i32_461 = arith.constant 4 : i32
    %1415 = tpu.dynamic_rotate %1414 by %c4_i32_461 dim 0 : vector<8x128xf32>, i32 -> vector<8x128xf32>
    %1416 = arith.addf %1414, %1415 : vector<8x128xf32>
    %c2_i32_462 = arith.constant 2 : i32
    %1417 = tpu.dynamic_rotate %1416 by %c2_i32_462 dim 0 : vector<8x128xf32>, i32 -> vector<8x128xf32>
    %1418 = arith.addf %1416, %1417 : vector<8x128xf32>
    %c1_i32_463 = arith.constant 1 : i32
    %1419 = tpu.dynamic_rotate %1418 by %c1_i32_463 dim 0 : vector<8x128xf32>, i32 -> vector<8x128xf32>
    %1420 = arith.addf %1418, %1419 : vector<8x128xf32>
    %1421 = arith.mulf %1197, %1212 : vector<8x128xf32>
    %c4_i32_464 = arith.constant 4 : i32
    %1422 = tpu.dynamic_rotate %1421 by %c4_i32_464 dim 0 : vector<8x128xf32>, i32 -> vector<8x128xf32>
    %1423 = arith.addf %1421, %1422 : vector<8x128xf32>
    %c2_i32_465 = arith.constant 2 : i32
    %1424 = tpu.dynamic_rotate %1423 by %c2_i32_465 dim 0 : vector<8x128xf32>, i32 -> vector<8x128xf32>
    %1425 = arith.addf %1423, %1424 : vector<8x128xf32>
    %c1_i32_466 = arith.constant 1 : i32
    %1426 = tpu.dynamic_rotate %1425 by %c1_i32_466 dim 0 : vector<8x128xf32>, i32 -> vector<8x128xf32>
    %1427 = arith.addf %1425, %1426 : vector<8x128xf32>
    %1428 = arith.mulf %1197, %1224 : vector<8x128xf32>
    %c4_i32_467 = arith.constant 4 : i32
    %1429 = tpu.dynamic_rotate %1428 by %c4_i32_467 dim 0 : vector<8x128xf32>, i32 -> vector<8x128xf32>
    %1430 = arith.addf %1428, %1429 : vector<8x128xf32>
    %c2_i32_468 = arith.constant 2 : i32
    %1431 = tpu.dynamic_rotate %1430 by %c2_i32_468 dim 0 : vector<8x128xf32>, i32 -> vector<8x128xf32>
    %1432 = arith.addf %1430, %1431 : vector<8x128xf32>
    %c1_i32_469 = arith.constant 1 : i32
    %1433 = tpu.dynamic_rotate %1432 by %c1_i32_469 dim 0 : vector<8x128xf32>, i32 -> vector<8x128xf32>
    %1434 = arith.addf %1432, %1433 : vector<8x128xf32>
    %1435 = arith.mulf %1197, %1236 : vector<8x128xf32>
    %c4_i32_470 = arith.constant 4 : i32
    %1436 = tpu.dynamic_rotate %1435 by %c4_i32_470 dim 0 : vector<8x128xf32>, i32 -> vector<8x128xf32>
    %1437 = arith.addf %1435, %1436 : vector<8x128xf32>
    %c2_i32_471 = arith.constant 2 : i32
    %1438 = tpu.dynamic_rotate %1437 by %c2_i32_471 dim 0 : vector<8x128xf32>, i32 -> vector<8x128xf32>
    %1439 = arith.addf %1437, %1438 : vector<8x128xf32>
    %c1_i32_472 = arith.constant 1 : i32
    %1440 = tpu.dynamic_rotate %1439 by %c1_i32_472 dim 0 : vector<8x128xf32>, i32 -> vector<8x128xf32>
    %1441 = arith.addf %1439, %1440 : vector<8x128xf32>
    %1442 = arith.mulf %1197, %1248 : vector<8x128xf32>
    %c4_i32_473 = arith.constant 4 : i32
    %1443 = tpu.dynamic_rotate %1442 by %c4_i32_473 dim 0 : vector<8x128xf32>, i32 -> vector<8x128xf32>
    %1444 = arith.addf %1442, %1443 : vector<8x128xf32>
    %c2_i32_474 = arith.constant 2 : i32
    %1445 = tpu.dynamic_rotate %1444 by %c2_i32_474 dim 0 : vector<8x128xf32>, i32 -> vector<8x128xf32>
    %1446 = arith.addf %1444, %1445 : vector<8x128xf32>
    %c1_i32_475 = arith.constant 1 : i32
    %1447 = tpu.dynamic_rotate %1446 by %c1_i32_475 dim 0 : vector<8x128xf32>, i32 -> vector<8x128xf32>
    %1448 = arith.addf %1446, %1447 : vector<8x128xf32>
    %1449 = arith.mulf %1197, %1260 : vector<8x128xf32>
    %c4_i32_476 = arith.constant 4 : i32
    %1450 = tpu.dynamic_rotate %1449 by %c4_i32_476 dim 0 : vector<8x128xf32>, i32 -> vector<8x128xf32>
    %1451 = arith.addf %1449, %1450 : vector<8x128xf32>
    %c2_i32_477 = arith.constant 2 : i32
    %1452 = tpu.dynamic_rotate %1451 by %c2_i32_477 dim 0 : vector<8x128xf32>, i32 -> vector<8x128xf32>
    %1453 = arith.addf %1451, %1452 : vector<8x128xf32>
    %c1_i32_478 = arith.constant 1 : i32
    %1454 = tpu.dynamic_rotate %1453 by %c1_i32_478 dim 0 : vector<8x128xf32>, i32 -> vector<8x128xf32>
    %1455 = arith.addf %1453, %1454 : vector<8x128xf32>
    %1456 = arith.mulf %1197, %1272 : vector<8x128xf32>
    %c4_i32_479 = arith.constant 4 : i32
    %1457 = tpu.dynamic_rotate %1456 by %c4_i32_479 dim 0 : vector<8x128xf32>, i32 -> vector<8x128xf32>
    %1458 = arith.addf %1456, %1457 : vector<8x128xf32>
    %c2_i32_480 = arith.constant 2 : i32
    %1459 = tpu.dynamic_rotate %1458 by %c2_i32_480 dim 0 : vector<8x128xf32>, i32 -> vector<8x128xf32>
    %1460 = arith.addf %1458, %1459 : vector<8x128xf32>
    %c1_i32_481 = arith.constant 1 : i32
    %1461 = tpu.dynamic_rotate %1460 by %c1_i32_481 dim 0 : vector<8x128xf32>, i32 -> vector<8x128xf32>
    %1462 = arith.addf %1460, %1461 : vector<8x128xf32>
    %1463 = arith.mulf %1197, %1284 : vector<8x128xf32>
    %c4_i32_482 = arith.constant 4 : i32
    %1464 = tpu.dynamic_rotate %1463 by %c4_i32_482 dim 0 : vector<8x128xf32>, i32 -> vector<8x128xf32>
    %1465 = arith.addf %1463, %1464 : vector<8x128xf32>
    %c2_i32_483 = arith.constant 2 : i32
    %1466 = tpu.dynamic_rotate %1465 by %c2_i32_483 dim 0 : vector<8x128xf32>, i32 -> vector<8x128xf32>
    %1467 = arith.addf %1465, %1466 : vector<8x128xf32>
    %c1_i32_484 = arith.constant 1 : i32
    %1468 = tpu.dynamic_rotate %1467 by %c1_i32_484 dim 0 : vector<8x128xf32>, i32 -> vector<8x128xf32>
    %1469 = arith.addf %1467, %1468 : vector<8x128xf32>
    %1470 = arith.maximumf %1413, %1420 : vector<8x128xf32>
    %1471 = arith.maximumf %1470, %1427 : vector<8x128xf32>
    %1472 = arith.maximumf %1471, %1434 : vector<8x128xf32>
    %1473 = arith.maximumf %1472, %1441 : vector<8x128xf32>
    %1474 = arith.maximumf %1473, %1448 : vector<8x128xf32>
    %1475 = arith.maximumf %1474, %1455 : vector<8x128xf32>
    %1476 = arith.maximumf %1475, %1462 : vector<8x128xf32>
    %1477 = arith.maximumf %1476, %1469 : vector<8x128xf32>
    %1478 = arith.subf %1413, %1477 : vector<8x128xf32>
    %1479 = math.exp %1478 : vector<8x128xf32>
    %1480 = arith.mulf %1479, %1191 : vector<8x128xf32>
    %1481 = arith.subf %1420, %1477 : vector<8x128xf32>
    %1482 = math.exp %1481 : vector<8x128xf32>
    %1483 = arith.addf %1479, %1482 : vector<8x128xf32>
    %1484 = arith.mulf %1482, %1203 : vector<8x128xf32>
    %1485 = arith.addf %1480, %1484 : vector<8x128xf32>
    %1486 = arith.subf %1427, %1477 : vector<8x128xf32>
    %1487 = math.exp %1486 : vector<8x128xf32>
    %1488 = arith.addf %1483, %1487 : vector<8x128xf32>
    %1489 = arith.mulf %1487, %1215 : vector<8x128xf32>
    %1490 = arith.addf %1485, %1489 : vector<8x128xf32>
    %1491 = arith.subf %1434, %1477 : vector<8x128xf32>
    %1492 = math.exp %1491 : vector<8x128xf32>
    %1493 = arith.addf %1488, %1492 : vector<8x128xf32>
    %1494 = arith.mulf %1492, %1227 : vector<8x128xf32>
    %1495 = arith.addf %1490, %1494 : vector<8x128xf32>
    %1496 = arith.subf %1441, %1477 : vector<8x128xf32>
    %1497 = math.exp %1496 : vector<8x128xf32>
    %1498 = arith.addf %1493, %1497 : vector<8x128xf32>
    %1499 = arith.mulf %1497, %1239 : vector<8x128xf32>
    %1500 = arith.addf %1495, %1499 : vector<8x128xf32>
    %1501 = arith.subf %1448, %1477 : vector<8x128xf32>
    %1502 = math.exp %1501 : vector<8x128xf32>
    %1503 = arith.addf %1498, %1502 : vector<8x128xf32>
    %1504 = arith.mulf %1502, %1251 : vector<8x128xf32>
    %1505 = arith.addf %1500, %1504 : vector<8x128xf32>
    %1506 = arith.subf %1455, %1477 : vector<8x128xf32>
    %1507 = math.exp %1506 : vector<8x128xf32>
    %1508 = arith.addf %1503, %1507 : vector<8x128xf32>
    %1509 = arith.mulf %1507, %1263 : vector<8x128xf32>
    %1510 = arith.addf %1505, %1509 : vector<8x128xf32>
    %1511 = arith.subf %1462, %1477 : vector<8x128xf32>
    %1512 = math.exp %1511 : vector<8x128xf32>
    %1513 = arith.addf %1508, %1512 : vector<8x128xf32>
    %1514 = arith.mulf %1512, %1275 : vector<8x128xf32>
    %1515 = arith.addf %1510, %1514 : vector<8x128xf32>
    %1516 = arith.subf %1469, %1477 : vector<8x128xf32>
    %1517 = math.exp %1516 : vector<8x128xf32>
    %1518 = arith.addf %1513, %1517 : vector<8x128xf32>
    %1519 = arith.mulf %1517, %1287 : vector<8x128xf32>
    %1520 = arith.addf %1515, %1519 : vector<8x128xf32>
    %1521 = tpu.reciprocal %1518 : vector<8x128xf32> -> vector<8x128xf32>
    %1522 = arith.mulf %1520, %1521 : vector<8x128xf32>
    %c0_485 = arith.constant 0 : index
    %c0_486 = arith.constant 0 : index
    %c384_487 = arith.constant 384 : index
    %1523 = vector.load %arg4[%c0_485, %c0_486, %c384_487] : memref<1x8x2304xf32, #tpu.memory_space<vmem>>, vector<1x8x128xf32>
    %1524 = vector.shape_cast %1523 : vector<1x8x128xf32> to vector<8x128xf32>
    %1525 = vector.shape_cast %1522 : vector<8x128xf32> to vector<1x8x128xf32>
    tpu.vector_store %arg4[%c0_485, %c0_486, %c384_487], %1525 {strides = array<i32>} : memref<1x8x2304xf32, #tpu.memory_space<vmem>>, vector<1x8x128xf32>,
    %1526 = arith.mulf %1209, %1188 : vector<8x128xf32>
    %c4_i32_488 = arith.constant 4 : i32
    %1527 = tpu.dynamic_rotate %1526 by %c4_i32_488 dim 0 : vector<8x128xf32>, i32 -> vector<8x128xf32>
    %1528 = arith.addf %1526, %1527 : vector<8x128xf32>
    %c2_i32_489 = arith.constant 2 : i32
    %1529 = tpu.dynamic_rotate %1528 by %c2_i32_489 dim 0 : vector<8x128xf32>, i32 -> vector<8x128xf32>
    %1530 = arith.addf %1528, %1529 : vector<8x128xf32>
    %c1_i32_490 = arith.constant 1 : i32
    %1531 = tpu.dynamic_rotate %1530 by %c1_i32_490 dim 0 : vector<8x128xf32>, i32 -> vector<8x128xf32>
    %1532 = arith.addf %1530, %1531 : vector<8x128xf32>
    %1533 = arith.mulf %1209, %1200 : vector<8x128xf32>
    %c4_i32_491 = arith.constant 4 : i32
    %1534 = tpu.dynamic_rotate %1533 by %c4_i32_491 dim 0 : vector<8x128xf32>, i32 -> vector<8x128xf32>
    %1535 = arith.addf %1533, %1534 : vector<8x128xf32>
    %c2_i32_492 = arith.constant 2 : i32
    %1536 = tpu.dynamic_rotate %1535 by %c2_i32_492 dim 0 : vector<8x128xf32>, i32 -> vector<8x128xf32>
    %1537 = arith.addf %1535, %1536 : vector<8x128xf32>
    %c1_i32_493 = arith.constant 1 : i32
    %1538 = tpu.dynamic_rotate %1537 by %c1_i32_493 dim 0 : vector<8x128xf32>, i32 -> vector<8x128xf32>
    %1539 = arith.addf %1537, %1538 : vector<8x128xf32>
    %1540 = arith.mulf %1209, %1212 : vector<8x128xf32>
    %c4_i32_494 = arith.constant 4 : i32
    %1541 = tpu.dynamic_rotate %1540 by %c4_i32_494 dim 0 : vector<8x128xf32>, i32 -> vector<8x128xf32>
    %1542 = arith.addf %1540, %1541 : vector<8x128xf32>
    %c2_i32_495 = arith.constant 2 : i32
    %1543 = tpu.dynamic_rotate %1542 by %c2_i32_495 dim 0 : vector<8x128xf32>, i32 -> vector<8x128xf32>
    %1544 = arith.addf %1542, %1543 : vector<8x128xf32>
    %c1_i32_496 = arith.constant 1 : i32
    %1545 = tpu.dynamic_rotate %1544 by %c1_i32_496 dim 0 : vector<8x128xf32>, i32 -> vector<8x128xf32>
    %1546 = arith.addf %1544, %1545 : vector<8x128xf32>
    %1547 = arith.mulf %1209, %1224 : vector<8x128xf32>
    %c4_i32_497 = arith.constant 4 : i32
    %1548 = tpu.dynamic_rotate %1547 by %c4_i32_497 dim 0 : vector<8x128xf32>, i32 -> vector<8x128xf32>
    %1549 = arith.addf %1547, %1548 : vector<8x128xf32>
    %c2_i32_498 = arith.constant 2 : i32
    %1550 = tpu.dynamic_rotate %1549 by %c2_i32_498 dim 0 : vector<8x128xf32>, i32 -> vector<8x128xf32>
    %1551 = arith.addf %1549, %1550 : vector<8x128xf32>
    %c1_i32_499 = arith.constant 1 : i32
    %1552 = tpu.dynamic_rotate %1551 by %c1_i32_499 dim 0 : vector<8x128xf32>, i32 -> vector<8x128xf32>
    %1553 = arith.addf %1551, %1552 : vector<8x128xf32>
    %1554 = arith.mulf %1209, %1236 : vector<8x128xf32>
    %c4_i32_500 = arith.constant 4 : i32
    %1555 = tpu.dynamic_rotate %1554 by %c4_i32_500 dim 0 : vector<8x128xf32>, i32 -> vector<8x128xf32>
    %1556 = arith.addf %1554, %1555 : vector<8x128xf32>
    %c2_i32_501 = arith.constant 2 : i32
    %1557 = tpu.dynamic_rotate %1556 by %c2_i32_501 dim 0 : vector<8x128xf32>, i32 -> vector<8x128xf32>
    %1558 = arith.addf %1556, %1557 : vector<8x128xf32>
    %c1_i32_502 = arith.constant 1 : i32
    %1559 = tpu.dynamic_rotate %1558 by %c1_i32_502 dim 0 : vector<8x128xf32>, i32 -> vector<8x128xf32>
    %1560 = arith.addf %1558, %1559 : vector<8x128xf32>
    %1561 = arith.mulf %1209, %1248 : vector<8x128xf32>
    %c4_i32_503 = arith.constant 4 : i32
    %1562 = tpu.dynamic_rotate %1561 by %c4_i32_503 dim 0 : vector<8x128xf32>, i32 -> vector<8x128xf32>
    %1563 = arith.addf %1561, %1562 : vector<8x128xf32>
    %c2_i32_504 = arith.constant 2 : i32
    %1564 = tpu.dynamic_rotate %1563 by %c2_i32_504 dim 0 : vector<8x128xf32>, i32 -> vector<8x128xf32>
    %1565 = arith.addf %1563, %1564 : vector<8x128xf32>
    %c1_i32_505 = arith.constant 1 : i32
    %1566 = tpu.dynamic_rotate %1565 by %c1_i32_505 dim 0 : vector<8x128xf32>, i32 -> vector<8x128xf32>
    %1567 = arith.addf %1565, %1566 : vector<8x128xf32>
    %1568 = arith.mulf %1209, %1260 : vector<8x128xf32>
    %c4_i32_506 = arith.constant 4 : i32
    %1569 = tpu.dynamic_rotate %1568 by %c4_i32_506 dim 0 : vector<8x128xf32>, i32 -> vector<8x128xf32>
    %1570 = arith.addf %1568, %1569 : vector<8x128xf32>
    %c2_i32_507 = arith.constant 2 : i32
    %1571 = tpu.dynamic_rotate %1570 by %c2_i32_507 dim 0 : vector<8x128xf32>, i32 -> vector<8x128xf32>
    %1572 = arith.addf %1570, %1571 : vector<8x128xf32>
    %c1_i32_508 = arith.constant 1 : i32
    %1573 = tpu.dynamic_rotate %1572 by %c1_i32_508 dim 0 : vector<8x128xf32>, i32 -> vector<8x128xf32>
    %1574 = arith.addf %1572, %1573 : vector<8x128xf32>
    %1575 = arith.mulf %1209, %1272 : vector<8x128xf32>
    %c4_i32_509 = arith.constant 4 : i32
    %1576 = tpu.dynamic_rotate %1575 by %c4_i32_509 dim 0 : vector<8x128xf32>, i32 -> vector<8x128xf32>
    %1577 = arith.addf %1575, %1576 : vector<8x128xf32>
    %c2_i32_510 = arith.constant 2 : i32
    %1578 = tpu.dynamic_rotate %1577 by %c2_i32_510 dim 0 : vector<8x128xf32>, i32 -> vector<8x128xf32>
    %1579 = arith.addf %1577, %1578 : vector<8x128xf32>
    %c1_i32_511 = arith.constant 1 : i32
    %1580 = tpu.dynamic_rotate %1579 by %c1_i32_511 dim 0 : vector<8x128xf32>, i32 -> vector<8x128xf32>
    %1581 = arith.addf %1579, %1580 : vector<8x128xf32>
    %1582 = arith.mulf %1209, %1284 : vector<8x128xf32>
    %c4_i32_512 = arith.constant 4 : i32
    %1583 = tpu.dynamic_rotate %1582 by %c4_i32_512 dim 0 : vector<8x128xf32>, i32 -> vector<8x128xf32>
    %1584 = arith.addf %1582, %1583 : vector<8x128xf32>
    %c2_i32_513 = arith.constant 2 : i32
    %1585 = tpu.dynamic_rotate %1584 by %c2_i32_513 dim 0 : vector<8x128xf32>, i32 -> vector<8x128xf32>
    %1586 = arith.addf %1584, %1585 : vector<8x128xf32>
    %c1_i32_514 = arith.constant 1 : i32
    %1587 = tpu.dynamic_rotate %1586 by %c1_i32_514 dim 0 : vector<8x128xf32>, i32 -> vector<8x128xf32>
    %1588 = arith.addf %1586, %1587 : vector<8x128xf32>
    %1589 = arith.maximumf %1532, %1539 : vector<8x128xf32>
    %1590 = arith.maximumf %1589, %1546 : vector<8x128xf32>
    %1591 = arith.maximumf %1590, %1553 : vector<8x128xf32>
    %1592 = arith.maximumf %1591, %1560 : vector<8x128xf32>
    %1593 = arith.maximumf %1592, %1567 : vector<8x128xf32>
    %1594 = arith.maximumf %1593, %1574 : vector<8x128xf32>
    %1595 = arith.maximumf %1594, %1581 : vector<8x128xf32>
    %1596 = arith.maximumf %1595, %1588 : vector<8x128xf32>
    %1597 = arith.subf %1532, %1596 : vector<8x128xf32>
    %1598 = math.exp %1597 : vector<8x128xf32>
    %1599 = arith.mulf %1598, %1191 : vector<8x128xf32>
    %1600 = arith.subf %1539, %1596 : vector<8x128xf32>
    %1601 = math.exp %1600 : vector<8x128xf32>
    %1602 = arith.addf %1598, %1601 : vector<8x128xf32>
    %1603 = arith.mulf %1601, %1203 : vector<8x128xf32>
    %1604 = arith.addf %1599, %1603 : vector<8x128xf32>
    %1605 = arith.subf %1546, %1596 : vector<8x128xf32>
    %1606 = math.exp %1605 : vector<8x128xf32>
    %1607 = arith.addf %1602, %1606 : vector<8x128xf32>
    %1608 = arith.mulf %1606, %1215 : vector<8x128xf32>
    %1609 = arith.addf %1604, %1608 : vector<8x128xf32>
    %1610 = arith.subf %1553, %1596 : vector<8x128xf32>
    %1611 = math.exp %1610 : vector<8x128xf32>
    %1612 = arith.addf %1607, %1611 : vector<8x128xf32>
    %1613 = arith.mulf %1611, %1227 : vector<8x128xf32>
    %1614 = arith.addf %1609, %1613 : vector<8x128xf32>
    %1615 = arith.subf %1560, %1596 : vector<8x128xf32>
    %1616 = math.exp %1615 : vector<8x128xf32>
    %1617 = arith.addf %1612, %1616 : vector<8x128xf32>
    %1618 = arith.mulf %1616, %1239 : vector<8x128xf32>
    %1619 = arith.addf %1614, %1618 : vector<8x128xf32>
    %1620 = arith.subf %1567, %1596 : vector<8x128xf32>
    %1621 = math.exp %1620 : vector<8x128xf32>
    %1622 = arith.addf %1617, %1621 : vector<8x128xf32>
    %1623 = arith.mulf %1621, %1251 : vector<8x128xf32>
    %1624 = arith.addf %1619, %1623 : vector<8x128xf32>
    %1625 = arith.subf %1574, %1596 : vector<8x128xf32>
    %1626 = math.exp %1625 : vector<8x128xf32>
    %1627 = arith.addf %1622, %1626 : vector<8x128xf32>
    %1628 = arith.mulf %1626, %1263 : vector<8x128xf32>
    %1629 = arith.addf %1624, %1628 : vector<8x128xf32>
    %1630 = arith.subf %1581, %1596 : vector<8x128xf32>
    %1631 = math.exp %1630 : vector<8x128xf32>
    %1632 = arith.addf %1627, %1631 : vector<8x128xf32>
    %1633 = arith.mulf %1631, %1275 : vector<8x128xf32>
    %1634 = arith.addf %1629, %1633 : vector<8x128xf32>
    %1635 = arith.subf %1588, %1596 : vector<8x128xf32>
    %1636 = math.exp %1635 : vector<8x128xf32>
    %1637 = arith.addf %1632, %1636 : vector<8x128xf32>
    %1638 = arith.mulf %1636, %1287 : vector<8x128xf32>
    %1639 = arith.addf %1634, %1638 : vector<8x128xf32>
    %1640 = tpu.reciprocal %1637 : vector<8x128xf32> -> vector<8x128xf32>
    %1641 = arith.mulf %1639, %1640 : vector<8x128xf32>
    %c0_515 = arith.constant 0 : index
    %c0_516 = arith.constant 0 : index
    %c640_517 = arith.constant 640 : index
    %1642 = vector.load %arg4[%c0_515, %c0_516, %c640_517] : memref<1x8x2304xf32, #tpu.memory_space<vmem>>, vector<1x8x128xf32>
    %1643 = vector.shape_cast %1642 : vector<1x8x128xf32> to vector<8x128xf32>
    %1644 = vector.shape_cast %1641 : vector<8x128xf32> to vector<1x8x128xf32>
    tpu.vector_store %arg4[%c0_515, %c0_516, %c640_517], %1644 {strides = array<i32>} : memref<1x8x2304xf32, #tpu.memory_space<vmem>>, vector<1x8x128xf32>,
    %1645 = arith.mulf %1221, %1188 : vector<8x128xf32>
    %c4_i32_518 = arith.constant 4 : i32
    %1646 = tpu.dynamic_rotate %1645 by %c4_i32_518 dim 0 : vector<8x128xf32>, i32 -> vector<8x128xf32>
    %1647 = arith.addf %1645, %1646 : vector<8x128xf32>
    %c2_i32_519 = arith.constant 2 : i32
    %1648 = tpu.dynamic_rotate %1647 by %c2_i32_519 dim 0 : vector<8x128xf32>, i32 -> vector<8x128xf32>
    %1649 = arith.addf %1647, %1648 : vector<8x128xf32>
    %c1_i32_520 = arith.constant 1 : i32
    %1650 = tpu.dynamic_rotate %1649 by %c1_i32_520 dim 0 : vector<8x128xf32>, i32 -> vector<8x128xf32>
    %1651 = arith.addf %1649, %1650 : vector<8x128xf32>
    %1652 = arith.mulf %1221, %1200 : vector<8x128xf32>
    %c4_i32_521 = arith.constant 4 : i32
    %1653 = tpu.dynamic_rotate %1652 by %c4_i32_521 dim 0 : vector<8x128xf32>, i32 -> vector<8x128xf32>
    %1654 = arith.addf %1652, %1653 : vector<8x128xf32>
    %c2_i32_522 = arith.constant 2 : i32
    %1655 = tpu.dynamic_rotate %1654 by %c2_i32_522 dim 0 : vector<8x128xf32>, i32 -> vector<8x128xf32>
    %1656 = arith.addf %1654, %1655 : vector<8x128xf32>
    %c1_i32_523 = arith.constant 1 : i32
    %1657 = tpu.dynamic_rotate %1656 by %c1_i32_523 dim 0 : vector<8x128xf32>, i32 -> vector<8x128xf32>
    %1658 = arith.addf %1656, %1657 : vector<8x128xf32>
    %1659 = arith.mulf %1221, %1212 : vector<8x128xf32>
    %c4_i32_524 = arith.constant 4 : i32
    %1660 = tpu.dynamic_rotate %1659 by %c4_i32_524 dim 0 : vector<8x128xf32>, i32 -> vector<8x128xf32>
    %1661 = arith.addf %1659, %1660 : vector<8x128xf32>
    %c2_i32_525 = arith.constant 2 : i32
    %1662 = tpu.dynamic_rotate %1661 by %c2_i32_525 dim 0 : vector<8x128xf32>, i32 -> vector<8x128xf32>
    %1663 = arith.addf %1661, %1662 : vector<8x128xf32>
    %c1_i32_526 = arith.constant 1 : i32
    %1664 = tpu.dynamic_rotate %1663 by %c1_i32_526 dim 0 : vector<8x128xf32>, i32 -> vector<8x128xf32>
    %1665 = arith.addf %1663, %1664 : vector<8x128xf32>
    %1666 = arith.mulf %1221, %1224 : vector<8x128xf32>
    %c4_i32_527 = arith.constant 4 : i32
    %1667 = tpu.dynamic_rotate %1666 by %c4_i32_527 dim 0 : vector<8x128xf32>, i32 -> vector<8x128xf32>
    %1668 = arith.addf %1666, %1667 : vector<8x128xf32>
    %c2_i32_528 = arith.constant 2 : i32
    %1669 = tpu.dynamic_rotate %1668 by %c2_i32_528 dim 0 : vector<8x128xf32>, i32 -> vector<8x128xf32>
    %1670 = arith.addf %1668, %1669 : vector<8x128xf32>
    %c1_i32_529 = arith.constant 1 : i32
    %1671 = tpu.dynamic_rotate %1670 by %c1_i32_529 dim 0 : vector<8x128xf32>, i32 -> vector<8x128xf32>
    %1672 = arith.addf %1670, %1671 : vector<8x128xf32>
    %1673 = arith.mulf %1221, %1236 : vector<8x128xf32>
    %c4_i32_530 = arith.constant 4 : i32
    %1674 = tpu.dynamic_rotate %1673 by %c4_i32_530 dim 0 : vector<8x128xf32>, i32 -> vector<8x128xf32>
    %1675 = arith.addf %1673, %1674 : vector<8x128xf32>
    %c2_i32_531 = arith.constant 2 : i32
    %1676 = tpu.dynamic_rotate %1675 by %c2_i32_531 dim 0 : vector<8x128xf32>, i32 -> vector<8x128xf32>
    %1677 = arith.addf %1675, %1676 : vector<8x128xf32>
    %c1_i32_532 = arith.constant 1 : i32
    %1678 = tpu.dynamic_rotate %1677 by %c1_i32_532 dim 0 : vector<8x128xf32>, i32 -> vector<8x128xf32>
    %1679 = arith.addf %1677, %1678 : vector<8x128xf32>
    %1680 = arith.mulf %1221, %1248 : vector<8x128xf32>
    %c4_i32_533 = arith.constant 4 : i32
    %1681 = tpu.dynamic_rotate %1680 by %c4_i32_533 dim 0 : vector<8x128xf32>, i32 -> vector<8x128xf32>
    %1682 = arith.addf %1680, %1681 : vector<8x128xf32>
    %c2_i32_534 = arith.constant 2 : i32
    %1683 = tpu.dynamic_rotate %1682 by %c2_i32_534 dim 0 : vector<8x128xf32>, i32 -> vector<8x128xf32>
    %1684 = arith.addf %1682, %1683 : vector<8x128xf32>
    %c1_i32_535 = arith.constant 1 : i32
    %1685 = tpu.dynamic_rotate %1684 by %c1_i32_535 dim 0 : vector<8x128xf32>, i32 -> vector<8x128xf32>
    %1686 = arith.addf %1684, %1685 : vector<8x128xf32>
    %1687 = arith.mulf %1221, %1260 : vector<8x128xf32>
    %c4_i32_536 = arith.constant 4 : i32
    %1688 = tpu.dynamic_rotate %1687 by %c4_i32_536 dim 0 : vector<8x128xf32>, i32 -> vector<8x128xf32>
    %1689 = arith.addf %1687, %1688 : vector<8x128xf32>
    %c2_i32_537 = arith.constant 2 : i32
    %1690 = tpu.dynamic_rotate %1689 by %c2_i32_537 dim 0 : vector<8x128xf32>, i32 -> vector<8x128xf32>
    %1691 = arith.addf %1689, %1690 : vector<8x128xf32>
    %c1_i32_538 = arith.constant 1 : i32
    %1692 = tpu.dynamic_rotate %1691 by %c1_i32_538 dim 0 : vector<8x128xf32>, i32 -> vector<8x128xf32>
    %1693 = arith.addf %1691, %1692 : vector<8x128xf32>
    %1694 = arith.mulf %1221, %1272 : vector<8x128xf32>
    %c4_i32_539 = arith.constant 4 : i32
    %1695 = tpu.dynamic_rotate %1694 by %c4_i32_539 dim 0 : vector<8x128xf32>, i32 -> vector<8x128xf32>
    %1696 = arith.addf %1694, %1695 : vector<8x128xf32>
    %c2_i32_540 = arith.constant 2 : i32
    %1697 = tpu.dynamic_rotate %1696 by %c2_i32_540 dim 0 : vector<8x128xf32>, i32 -> vector<8x128xf32>
    %1698 = arith.addf %1696, %1697 : vector<8x128xf32>
    %c1_i32_541 = arith.constant 1 : i32
    %1699 = tpu.dynamic_rotate %1698 by %c1_i32_541 dim 0 : vector<8x128xf32>, i32 -> vector<8x128xf32>
    %1700 = arith.addf %1698, %1699 : vector<8x128xf32>
    %1701 = arith.mulf %1221, %1284 : vector<8x128xf32>
    %c4_i32_542 = arith.constant 4 : i32
    %1702 = tpu.dynamic_rotate %1701 by %c4_i32_542 dim 0 : vector<8x128xf32>, i32 -> vector<8x128xf32>
    %1703 = arith.addf %1701, %1702 : vector<8x128xf32>
    %c2_i32_543 = arith.constant 2 : i32
    %1704 = tpu.dynamic_rotate %1703 by %c2_i32_543 dim 0 : vector<8x128xf32>, i32 -> vector<8x128xf32>
    %1705 = arith.addf %1703, %1704 : vector<8x128xf32>
    %c1_i32_544 = arith.constant 1 : i32
    %1706 = tpu.dynamic_rotate %1705 by %c1_i32_544 dim 0 : vector<8x128xf32>, i32 -> vector<8x128xf32>
    %1707 = arith.addf %1705, %1706 : vector<8x128xf32>
    %1708 = arith.maximumf %1651, %1658 : vector<8x128xf32>
    %1709 = arith.maximumf %1708, %1665 : vector<8x128xf32>
    %1710 = arith.maximumf %1709, %1672 : vector<8x128xf32>
    %1711 = arith.maximumf %1710, %1679 : vector<8x128xf32>
    %1712 = arith.maximumf %1711, %1686 : vector<8x128xf32>
    %1713 = arith.maximumf %1712, %1693 : vector<8x128xf32>
    %1714 = arith.maximumf %1713, %1700 : vector<8x128xf32>
    %1715 = arith.maximumf %1714, %1707 : vector<8x128xf32>
    %1716 = arith.subf %1651, %1715 : vector<8x128xf32>
    %1717 = math.exp %1716 : vector<8x128xf32>
    %1718 = arith.mulf %1717, %1191 : vector<8x128xf32>
    %1719 = arith.subf %1658, %1715 : vector<8x128xf32>
    %1720 = math.exp %1719 : vector<8x128xf32>
    %1721 = arith.addf %1717, %1720 : vector<8x128xf32>
    %1722 = arith.mulf %1720, %1203 : vector<8x128xf32>
    %1723 = arith.addf %1718, %1722 : vector<8x128xf32>
    %1724 = arith.subf %1665, %1715 : vector<8x128xf32>
    %1725 = math.exp %1724 : vector<8x128xf32>
    %1726 = arith.addf %1721, %1725 : vector<8x128xf32>
    %1727 = arith.mulf %1725, %1215 : vector<8x128xf32>
    %1728 = arith.addf %1723, %1727 : vector<8x128xf32>
    %1729 = arith.subf %1672, %1715 : vector<8x128xf32>
    %1730 = math.exp %1729 : vector<8x128xf32>
    %1731 = arith.addf %1726, %1730 : vector<8x128xf32>
    %1732 = arith.mulf %1730, %1227 : vector<8x128xf32>
    %1733 = arith.addf %1728, %1732 : vector<8x128xf32>
    %1734 = arith.subf %1679, %1715 : vector<8x128xf32>
    %1735 = math.exp %1734 : vector<8x128xf32>
    %1736 = arith.addf %1731, %1735 : vector<8x128xf32>
    %1737 = arith.mulf %1735, %1239 : vector<8x128xf32>
    %1738 = arith.addf %1733, %1737 : vector<8x128xf32>
    %1739 = arith.subf %1686, %1715 : vector<8x128xf32>
    %1740 = math.exp %1739 : vector<8x128xf32>
    %1741 = arith.addf %1736, %1740 : vector<8x128xf32>
    %1742 = arith.mulf %1740, %1251 : vector<8x128xf32>
    %1743 = arith.addf %1738, %1742 : vector<8x128xf32>
    %1744 = arith.subf %1693, %1715 : vector<8x128xf32>
    %1745 = math.exp %1744 : vector<8x128xf32>
    %1746 = arith.addf %1741, %1745 : vector<8x128xf32>
    %1747 = arith.mulf %1745, %1263 : vector<8x128xf32>
    %1748 = arith.addf %1743, %1747 : vector<8x128xf32>
    %1749 = arith.subf %1700, %1715 : vector<8x128xf32>
    %1750 = math.exp %1749 : vector<8x128xf32>
    %1751 = arith.addf %1746, %1750 : vector<8x128xf32>
    %1752 = arith.mulf %1750, %1275 : vector<8x128xf32>
    %1753 = arith.addf %1748, %1752 : vector<8x128xf32>
    %1754 = arith.subf %1707, %1715 : vector<8x128xf32>
    %1755 = math.exp %1754 : vector<8x128xf32>
    %1756 = arith.addf %1751, %1755 : vector<8x128xf32>
    %1757 = arith.mulf %1755, %1287 : vector<8x128xf32>
    %1758 = arith.addf %1753, %1757 : vector<8x128xf32>
    %1759 = tpu.reciprocal %1756 : vector<8x128xf32> -> vector<8x128xf32>
    %1760 = arith.mulf %1758, %1759 : vector<8x128xf32>
    %c0_545 = arith.constant 0 : index
    %c0_546 = arith.constant 0 : index
    %c896_547 = arith.constant 896 : index
    %1761 = vector.load %arg4[%c0_545, %c0_546, %c896_547] : memref<1x8x2304xf32, #tpu.memory_space<vmem>>, vector<1x8x128xf32>
    %1762 = vector.shape_cast %1761 : vector<1x8x128xf32> to vector<8x128xf32>
    %1763 = vector.shape_cast %1760 : vector<8x128xf32> to vector<1x8x128xf32>
    tpu.vector_store %arg4[%c0_545, %c0_546, %c896_547], %1763 {strides = array<i32>} : memref<1x8x2304xf32, #tpu.memory_space<vmem>>, vector<1x8x128xf32>,
    %1764 = arith.mulf %1233, %1188 : vector<8x128xf32>
    %c4_i32_548 = arith.constant 4 : i32
    %1765 = tpu.dynamic_rotate %1764 by %c4_i32_548 dim 0 : vector<8x128xf32>, i32 -> vector<8x128xf32>
    %1766 = arith.addf %1764, %1765 : vector<8x128xf32>
    %c2_i32_549 = arith.constant 2 : i32
    %1767 = tpu.dynamic_rotate %1766 by %c2_i32_549 dim 0 : vector<8x128xf32>, i32 -> vector<8x128xf32>
    %1768 = arith.addf %1766, %1767 : vector<8x128xf32>
    %c1_i32_550 = arith.constant 1 : i32
    %1769 = tpu.dynamic_rotate %1768 by %c1_i32_550 dim 0 : vector<8x128xf32>, i32 -> vector<8x128xf32>
    %1770 = arith.addf %1768, %1769 : vector<8x128xf32>
    %1771 = arith.mulf %1233, %1200 : vector<8x128xf32>
    %c4_i32_551 = arith.constant 4 : i32
    %1772 = tpu.dynamic_rotate %1771 by %c4_i32_551 dim 0 : vector<8x128xf32>, i32 -> vector<8x128xf32>
    %1773 = arith.addf %1771, %1772 : vector<8x128xf32>
    %c2_i32_552 = arith.constant 2 : i32
    %1774 = tpu.dynamic_rotate %1773 by %c2_i32_552 dim 0 : vector<8x128xf32>, i32 -> vector<8x128xf32>
    %1775 = arith.addf %1773, %1774 : vector<8x128xf32>
    %c1_i32_553 = arith.constant 1 : i32
    %1776 = tpu.dynamic_rotate %1775 by %c1_i32_553 dim 0 : vector<8x128xf32>, i32 -> vector<8x128xf32>
    %1777 = arith.addf %1775, %1776 : vector<8x128xf32>
    %1778 = arith.mulf %1233, %1212 : vector<8x128xf32>
    %c4_i32_554 = arith.constant 4 : i32
    %1779 = tpu.dynamic_rotate %1778 by %c4_i32_554 dim 0 : vector<8x128xf32>, i32 -> vector<8x128xf32>
    %1780 = arith.addf %1778, %1779 : vector<8x128xf32>
    %c2_i32_555 = arith.constant 2 : i32
    %1781 = tpu.dynamic_rotate %1780 by %c2_i32_555 dim 0 : vector<8x128xf32>, i32 -> vector<8x128xf32>
    %1782 = arith.addf %1780, %1781 : vector<8x128xf32>
    %c1_i32_556 = arith.constant 1 : i32
    %1783 = tpu.dynamic_rotate %1782 by %c1_i32_556 dim 0 : vector<8x128xf32>, i32 -> vector<8x128xf32>
    %1784 = arith.addf %1782, %1783 : vector<8x128xf32>
    %1785 = arith.mulf %1233, %1224 : vector<8x128xf32>
    %c4_i32_557 = arith.constant 4 : i32
    %1786 = tpu.dynamic_rotate %1785 by %c4_i32_557 dim 0 : vector<8x128xf32>, i32 -> vector<8x128xf32>
    %1787 = arith.addf %1785, %1786 : vector<8x128xf32>
    %c2_i32_558 = arith.constant 2 : i32
    %1788 = tpu.dynamic_rotate %1787 by %c2_i32_558 dim 0 : vector<8x128xf32>, i32 -> vector<8x128xf32>
    %1789 = arith.addf %1787, %1788 : vector<8x128xf32>
    %c1_i32_559 = arith.constant 1 : i32
    %1790 = tpu.dynamic_rotate %1789 by %c1_i32_559 dim 0 : vector<8x128xf32>, i32 -> vector<8x128xf32>
    %1791 = arith.addf %1789, %1790 : vector<8x128xf32>
    %1792 = arith.mulf %1233, %1236 : vector<8x128xf32>
    %c4_i32_560 = arith.constant 4 : i32
    %1793 = tpu.dynamic_rotate %1792 by %c4_i32_560 dim 0 : vector<8x128xf32>, i32 -> vector<8x128xf32>
    %1794 = arith.addf %1792, %1793 : vector<8x128xf32>
    %c2_i32_561 = arith.constant 2 : i32
    %1795 = tpu.dynamic_rotate %1794 by %c2_i32_561 dim 0 : vector<8x128xf32>, i32 -> vector<8x128xf32>
    %1796 = arith.addf %1794, %1795 : vector<8x128xf32>
    %c1_i32_562 = arith.constant 1 : i32
    %1797 = tpu.dynamic_rotate %1796 by %c1_i32_562 dim 0 : vector<8x128xf32>, i32 -> vector<8x128xf32>
    %1798 = arith.addf %1796, %1797 : vector<8x128xf32>
    %1799 = arith.mulf %1233, %1248 : vector<8x128xf32>
    %c4_i32_563 = arith.constant 4 : i32
    %1800 = tpu.dynamic_rotate %1799 by %c4_i32_563 dim 0 : vector<8x128xf32>, i32 -> vector<8x128xf32>
    %1801 = arith.addf %1799, %1800 : vector<8x128xf32>
    %c2_i32_564 = arith.constant 2 : i32
    %1802 = tpu.dynamic_rotate %1801 by %c2_i32_564 dim 0 : vector<8x128xf32>, i32 -> vector<8x128xf32>
    %1803 = arith.addf %1801, %1802 : vector<8x128xf32>
    %c1_i32_565 = arith.constant 1 : i32
    %1804 = tpu.dynamic_rotate %1803 by %c1_i32_565 dim 0 : vector<8x128xf32>, i32 -> vector<8x128xf32>
    %1805 = arith.addf %1803, %1804 : vector<8x128xf32>
    %1806 = arith.mulf %1233, %1260 : vector<8x128xf32>
    %c4_i32_566 = arith.constant 4 : i32
    %1807 = tpu.dynamic_rotate %1806 by %c4_i32_566 dim 0 : vector<8x128xf32>, i32 -> vector<8x128xf32>
    %1808 = arith.addf %1806, %1807 : vector<8x128xf32>
    %c2_i32_567 = arith.constant 2 : i32
    %1809 = tpu.dynamic_rotate %1808 by %c2_i32_567 dim 0 : vector<8x128xf32>, i32 -> vector<8x128xf32>
    %1810 = arith.addf %1808, %1809 : vector<8x128xf32>
    %c1_i32_568 = arith.constant 1 : i32
    %1811 = tpu.dynamic_rotate %1810 by %c1_i32_568 dim 0 : vector<8x128xf32>, i32 -> vector<8x128xf32>
    %1812 = arith.addf %1810, %1811 : vector<8x128xf32>
    %1813 = arith.mulf %1233, %1272 : vector<8x128xf32>
    %c4_i32_569 = arith.constant 4 : i32
    %1814 = tpu.dynamic_rotate %1813 by %c4_i32_569 dim 0 : vector<8x128xf32>, i32 -> vector<8x128xf32>
    %1815 = arith.addf %1813, %1814 : vector<8x128xf32>
    %c2_i32_570 = arith.constant 2 : i32
    %1816 = tpu.dynamic_rotate %1815 by %c2_i32_570 dim 0 : vector<8x128xf32>, i32 -> vector<8x128xf32>
    %1817 = arith.addf %1815, %1816 : vector<8x128xf32>
    %c1_i32_571 = arith.constant 1 : i32
    %1818 = tpu.dynamic_rotate %1817 by %c1_i32_571 dim 0 : vector<8x128xf32>, i32 -> vector<8x128xf32>
    %1819 = arith.addf %1817, %1818 : vector<8x128xf32>
    %1820 = arith.mulf %1233, %1284 : vector<8x128xf32>
    %c4_i32_572 = arith.constant 4 : i32
    %1821 = tpu.dynamic_rotate %1820 by %c4_i32_572 dim 0 : vector<8x128xf32>, i32 -> vector<8x128xf32>
    %1822 = arith.addf %1820, %1821 : vector<8x128xf32>
    %c2_i32_573 = arith.constant 2 : i32
    %1823 = tpu.dynamic_rotate %1822 by %c2_i32_573 dim 0 : vector<8x128xf32>, i32 -> vector<8x128xf32>
    %1824 = arith.addf %1822, %1823 : vector<8x128xf32>
    %c1_i32_574 = arith.constant 1 : i32
    %1825 = tpu.dynamic_rotate %1824 by %c1_i32_574 dim 0 : vector<8x128xf32>, i32 -> vector<8x128xf32>
    %1826 = arith.addf %1824, %1825 : vector<8x128xf32>
    %1827 = arith.maximumf %1770, %1777 : vector<8x128xf32>
    %1828 = arith.maximumf %1827, %1784 : vector<8x128xf32>
    %1829 = arith.maximumf %1828, %1791 : vector<8x128xf32>
    %1830 = arith.maximumf %1829, %1798 : vector<8x128xf32>
    %1831 = arith.maximumf %1830, %1805 : vector<8x128xf32>
    %1832 = arith.maximumf %1831, %1812 : vector<8x128xf32>
    %1833 = arith.maximumf %1832, %1819 : vector<8x128xf32>
    %1834 = arith.maximumf %1833, %1826 : vector<8x128xf32>
    %1835 = arith.subf %1770, %1834 : vector<8x128xf32>
    %1836 = math.exp %1835 : vector<8x128xf32>
    %1837 = arith.mulf %1836, %1191 : vector<8x128xf32>
    %1838 = arith.subf %1777, %1834 : vector<8x128xf32>
    %1839 = math.exp %1838 : vector<8x128xf32>
    %1840 = arith.addf %1836, %1839 : vector<8x128xf32>
    %1841 = arith.mulf %1839, %1203 : vector<8x128xf32>
    %1842 = arith.addf %1837, %1841 : vector<8x128xf32>
    %1843 = arith.subf %1784, %1834 : vector<8x128xf32>
    %1844 = math.exp %1843 : vector<8x128xf32>
    %1845 = arith.addf %1840, %1844 : vector<8x128xf32>
    %1846 = arith.mulf %1844, %1215 : vector<8x128xf32>
    %1847 = arith.addf %1842, %1846 : vector<8x128xf32>
    %1848 = arith.subf %1791, %1834 : vector<8x128xf32>
    %1849 = math.exp %1848 : vector<8x128xf32>
    %1850 = arith.addf %1845, %1849 : vector<8x128xf32>
    %1851 = arith.mulf %1849, %1227 : vector<8x128xf32>
    %1852 = arith.addf %1847, %1851 : vector<8x128xf32>
    %1853 = arith.subf %1798, %1834 : vector<8x128xf32>
    %1854 = math.exp %1853 : vector<8x128xf32>
    %1855 = arith.addf %1850, %1854 : vector<8x128xf32>
    %1856 = arith.mulf %1854, %1239 : vector<8x128xf32>
    %1857 = arith.addf %1852, %1856 : vector<8x128xf32>
    %1858 = arith.subf %1805, %1834 : vector<8x128xf32>
    %1859 = math.exp %1858 : vector<8x128xf32>
    %1860 = arith.addf %1855, %1859 : vector<8x128xf32>
    %1861 = arith.mulf %1859, %1251 : vector<8x128xf32>
    %1862 = arith.addf %1857, %1861 : vector<8x128xf32>
    %1863 = arith.subf %1812, %1834 : vector<8x128xf32>
    %1864 = math.exp %1863 : vector<8x128xf32>
    %1865 = arith.addf %1860, %1864 : vector<8x128xf32>
    %1866 = arith.mulf %1864, %1263 : vector<8x128xf32>
    %1867 = arith.addf %1862, %1866 : vector<8x128xf32>
    %1868 = arith.subf %1819, %1834 : vector<8x128xf32>
    %1869 = math.exp %1868 : vector<8x128xf32>
    %1870 = arith.addf %1865, %1869 : vector<8x128xf32>
    %1871 = arith.mulf %1869, %1275 : vector<8x128xf32>
    %1872 = arith.addf %1867, %1871 : vector<8x128xf32>
    %1873 = arith.subf %1826, %1834 : vector<8x128xf32>
    %1874 = math.exp %1873 : vector<8x128xf32>
    %1875 = arith.addf %1870, %1874 : vector<8x128xf32>
    %1876 = arith.mulf %1874, %1287 : vector<8x128xf32>
    %1877 = arith.addf %1872, %1876 : vector<8x128xf32>
    %1878 = tpu.reciprocal %1875 : vector<8x128xf32> -> vector<8x128xf32>
    %1879 = arith.mulf %1877, %1878 : vector<8x128xf32>
    %c0_575 = arith.constant 0 : index
    %c0_576 = arith.constant 0 : index
    %c1152_577 = arith.constant 1152 : index
    %1880 = vector.load %arg4[%c0_575, %c0_576, %c1152_577] : memref<1x8x2304xf32, #tpu.memory_space<vmem>>, vector<1x8x128xf32>
    %1881 = vector.shape_cast %1880 : vector<1x8x128xf32> to vector<8x128xf32>
    %1882 = vector.shape_cast %1879 : vector<8x128xf32> to vector<1x8x128xf32>
    tpu.vector_store %arg4[%c0_575, %c0_576, %c1152_577], %1882 {strides = array<i32>} : memref<1x8x2304xf32, #tpu.memory_space<vmem>>, vector<1x8x128xf32>,
    %1883 = arith.mulf %1245, %1188 : vector<8x128xf32>
    %c4_i32_578 = arith.constant 4 : i32
    %1884 = tpu.dynamic_rotate %1883 by %c4_i32_578 dim 0 : vector<8x128xf32>, i32 -> vector<8x128xf32>
    %1885 = arith.addf %1883, %1884 : vector<8x128xf32>
    %c2_i32_579 = arith.constant 2 : i32
    %1886 = tpu.dynamic_rotate %1885 by %c2_i32_579 dim 0 : vector<8x128xf32>, i32 -> vector<8x128xf32>
    %1887 = arith.addf %1885, %1886 : vector<8x128xf32>
    %c1_i32_580 = arith.constant 1 : i32
    %1888 = tpu.dynamic_rotate %1887 by %c1_i32_580 dim 0 : vector<8x128xf32>, i32 -> vector<8x128xf32>
    %1889 = arith.addf %1887, %1888 : vector<8x128xf32>
    %1890 = arith.mulf %1245, %1200 : vector<8x128xf32>
    %c4_i32_581 = arith.constant 4 : i32
    %1891 = tpu.dynamic_rotate %1890 by %c4_i32_581 dim 0 : vector<8x128xf32>, i32 -> vector<8x128xf32>
    %1892 = arith.addf %1890, %1891 : vector<8x128xf32>
    %c2_i32_582 = arith.constant 2 : i32
    %1893 = tpu.dynamic_rotate %1892 by %c2_i32_582 dim 0 : vector<8x128xf32>, i32 -> vector<8x128xf32>
    %1894 = arith.addf %1892, %1893 : vector<8x128xf32>
    %c1_i32_583 = arith.constant 1 : i32
    %1895 = tpu.dynamic_rotate %1894 by %c1_i32_583 dim 0 : vector<8x128xf32>, i32 -> vector<8x128xf32>
    %1896 = arith.addf %1894, %1895 : vector<8x128xf32>
    %1897 = arith.mulf %1245, %1212 : vector<8x128xf32>
    %c4_i32_584 = arith.constant 4 : i32
    %1898 = tpu.dynamic_rotate %1897 by %c4_i32_584 dim 0 : vector<8x128xf32>, i32 -> vector<8x128xf32>
    %1899 = arith.addf %1897, %1898 : vector<8x128xf32>
    %c2_i32_585 = arith.constant 2 : i32
    %1900 = tpu.dynamic_rotate %1899 by %c2_i32_585 dim 0 : vector<8x128xf32>, i32 -> vector<8x128xf32>
    %1901 = arith.addf %1899, %1900 : vector<8x128xf32>
    %c1_i32_586 = arith.constant 1 : i32
    %1902 = tpu.dynamic_rotate %1901 by %c1_i32_586 dim 0 : vector<8x128xf32>, i32 -> vector<8x128xf32>
    %1903 = arith.addf %1901, %1902 : vector<8x128xf32>
    %1904 = arith.mulf %1245, %1224 : vector<8x128xf32>
    %c4_i32_587 = arith.constant 4 : i32
    %1905 = tpu.dynamic_rotate %1904 by %c4_i32_587 dim 0 : vector<8x128xf32>, i32 -> vector<8x128xf32>
    %1906 = arith.addf %1904, %1905 : vector<8x128xf32>
    %c2_i32_588 = arith.constant 2 : i32
    %1907 = tpu.dynamic_rotate %1906 by %c2_i32_588 dim 0 : vector<8x128xf32>, i32 -> vector<8x128xf32>
    %1908 = arith.addf %1906, %1907 : vector<8x128xf32>
    %c1_i32_589 = arith.constant 1 : i32
    %1909 = tpu.dynamic_rotate %1908 by %c1_i32_589 dim 0 : vector<8x128xf32>, i32 -> vector<8x128xf32>
    %1910 = arith.addf %1908, %1909 : vector<8x128xf32>
    %1911 = arith.mulf %1245, %1236 : vector<8x128xf32>
    %c4_i32_590 = arith.constant 4 : i32
    %1912 = tpu.dynamic_rotate %1911 by %c4_i32_590 dim 0 : vector<8x128xf32>, i32 -> vector<8x128xf32>
    %1913 = arith.addf %1911, %1912 : vector<8x128xf32>
    %c2_i32_591 = arith.constant 2 : i32
    %1914 = tpu.dynamic_rotate %1913 by %c2_i32_591 dim 0 : vector<8x128xf32>, i32 -> vector<8x128xf32>
    %1915 = arith.addf %1913, %1914 : vector<8x128xf32>
    %c1_i32_592 = arith.constant 1 : i32
    %1916 = tpu.dynamic_rotate %1915 by %c1_i32_592 dim 0 : vector<8x128xf32>, i32 -> vector<8x128xf32>
    %1917 = arith.addf %1915, %1916 : vector<8x128xf32>
    %1918 = arith.mulf %1245, %1248 : vector<8x128xf32>
    %c4_i32_593 = arith.constant 4 : i32
    %1919 = tpu.dynamic_rotate %1918 by %c4_i32_593 dim 0 : vector<8x128xf32>, i32 -> vector<8x128xf32>
    %1920 = arith.addf %1918, %1919 : vector<8x128xf32>
    %c2_i32_594 = arith.constant 2 : i32
    %1921 = tpu.dynamic_rotate %1920 by %c2_i32_594 dim 0 : vector<8x128xf32>, i32 -> vector<8x128xf32>
    %1922 = arith.addf %1920, %1921 : vector<8x128xf32>
    %c1_i32_595 = arith.constant 1 : i32
    %1923 = tpu.dynamic_rotate %1922 by %c1_i32_595 dim 0 : vector<8x128xf32>, i32 -> vector<8x128xf32>
    %1924 = arith.addf %1922, %1923 : vector<8x128xf32>
    %1925 = arith.mulf %1245, %1260 : vector<8x128xf32>
    %c4_i32_596 = arith.constant 4 : i32
    %1926 = tpu.dynamic_rotate %1925 by %c4_i32_596 dim 0 : vector<8x128xf32>, i32 -> vector<8x128xf32>
    %1927 = arith.addf %1925, %1926 : vector<8x128xf32>
    %c2_i32_597 = arith.constant 2 : i32
    %1928 = tpu.dynamic_rotate %1927 by %c2_i32_597 dim 0 : vector<8x128xf32>, i32 -> vector<8x128xf32>
    %1929 = arith.addf %1927, %1928 : vector<8x128xf32>
    %c1_i32_598 = arith.constant 1 : i32
    %1930 = tpu.dynamic_rotate %1929 by %c1_i32_598 dim 0 : vector<8x128xf32>, i32 -> vector<8x128xf32>
    %1931 = arith.addf %1929, %1930 : vector<8x128xf32>
    %1932 = arith.mulf %1245, %1272 : vector<8x128xf32>
    %c4_i32_599 = arith.constant 4 : i32
    %1933 = tpu.dynamic_rotate %1932 by %c4_i32_599 dim 0 : vector<8x128xf32>, i32 -> vector<8x128xf32>
    %1934 = arith.addf %1932, %1933 : vector<8x128xf32>
    %c2_i32_600 = arith.constant 2 : i32
    %1935 = tpu.dynamic_rotate %1934 by %c2_i32_600 dim 0 : vector<8x128xf32>, i32 -> vector<8x128xf32>
    %1936 = arith.addf %1934, %1935 : vector<8x128xf32>
    %c1_i32_601 = arith.constant 1 : i32
    %1937 = tpu.dynamic_rotate %1936 by %c1_i32_601 dim 0 : vector<8x128xf32>, i32 -> vector<8x128xf32>
    %1938 = arith.addf %1936, %1937 : vector<8x128xf32>
    %1939 = arith.mulf %1245, %1284 : vector<8x128xf32>
    %c4_i32_602 = arith.constant 4 : i32
    %1940 = tpu.dynamic_rotate %1939 by %c4_i32_602 dim 0 : vector<8x128xf32>, i32 -> vector<8x128xf32>
    %1941 = arith.addf %1939, %1940 : vector<8x128xf32>
    %c2_i32_603 = arith.constant 2 : i32
    %1942 = tpu.dynamic_rotate %1941 by %c2_i32_603 dim 0 : vector<8x128xf32>, i32 -> vector<8x128xf32>
    %1943 = arith.addf %1941, %1942 : vector<8x128xf32>
    %c1_i32_604 = arith.constant 1 : i32
    %1944 = tpu.dynamic_rotate %1943 by %c1_i32_604 dim 0 : vector<8x128xf32>, i32 -> vector<8x128xf32>
    %1945 = arith.addf %1943, %1944 : vector<8x128xf32>
    %1946 = arith.maximumf %1889, %1896 : vector<8x128xf32>
    %1947 = arith.maximumf %1946, %1903 : vector<8x128xf32>
    %1948 = arith.maximumf %1947, %1910 : vector<8x128xf32>
    %1949 = arith.maximumf %1948, %1917 : vector<8x128xf32>
    %1950 = arith.maximumf %1949, %1924 : vector<8x128xf32>
    %1951 = arith.maximumf %1950, %1931 : vector<8x128xf32>
    %1952 = arith.maximumf %1951, %1938 : vector<8x128xf32>
    %1953 = arith.maximumf %1952, %1945 : vector<8x128xf32>
    %1954 = arith.subf %1889, %1953 : vector<8x128xf32>
    %1955 = math.exp %1954 : vector<8x128xf32>
    %1956 = arith.mulf %1955, %1191 : vector<8x128xf32>
    %1957 = arith.subf %1896, %1953 : vector<8x128xf32>
    %1958 = math.exp %1957 : vector<8x128xf32>
    %1959 = arith.addf %1955, %1958 : vector<8x128xf32>
    %1960 = arith.mulf %1958, %1203 : vector<8x128xf32>
    %1961 = arith.addf %1956, %1960 : vector<8x128xf32>
    %1962 = arith.subf %1903, %1953 : vector<8x128xf32>
    %1963 = math.exp %1962 : vector<8x128xf32>
    %1964 = arith.addf %1959, %1963 : vector<8x128xf32>
    %1965 = arith.mulf %1963, %1215 : vector<8x128xf32>
    %1966 = arith.addf %1961, %1965 : vector<8x128xf32>
    %1967 = arith.subf %1910, %1953 : vector<8x128xf32>
    %1968 = math.exp %1967 : vector<8x128xf32>
    %1969 = arith.addf %1964, %1968 : vector<8x128xf32>
    %1970 = arith.mulf %1968, %1227 : vector<8x128xf32>
    %1971 = arith.addf %1966, %1970 : vector<8x128xf32>
    %1972 = arith.subf %1917, %1953 : vector<8x128xf32>
    %1973 = math.exp %1972 : vector<8x128xf32>
    %1974 = arith.addf %1969, %1973 : vector<8x128xf32>
    %1975 = arith.mulf %1973, %1239 : vector<8x128xf32>
    %1976 = arith.addf %1971, %1975 : vector<8x128xf32>
    %1977 = arith.subf %1924, %1953 : vector<8x128xf32>
    %1978 = math.exp %1977 : vector<8x128xf32>
    %1979 = arith.addf %1974, %1978 : vector<8x128xf32>
    %1980 = arith.mulf %1978, %1251 : vector<8x128xf32>
    %1981 = arith.addf %1976, %1980 : vector<8x128xf32>
    %1982 = arith.subf %1931, %1953 : vector<8x128xf32>
    %1983 = math.exp %1982 : vector<8x128xf32>
    %1984 = arith.addf %1979, %1983 : vector<8x128xf32>
    %1985 = arith.mulf %1983, %1263 : vector<8x128xf32>
    %1986 = arith.addf %1981, %1985 : vector<8x128xf32>
    %1987 = arith.subf %1938, %1953 : vector<8x128xf32>
    %1988 = math.exp %1987 : vector<8x128xf32>
    %1989 = arith.addf %1984, %1988 : vector<8x128xf32>
    %1990 = arith.mulf %1988, %1275 : vector<8x128xf32>
    %1991 = arith.addf %1986, %1990 : vector<8x128xf32>
    %1992 = arith.subf %1945, %1953 : vector<8x128xf32>
    %1993 = math.exp %1992 : vector<8x128xf32>
    %1994 = arith.addf %1989, %1993 : vector<8x128xf32>
    %1995 = arith.mulf %1993, %1287 : vector<8x128xf32>
    %1996 = arith.addf %1991, %1995 : vector<8x128xf32>
    %1997 = tpu.reciprocal %1994 : vector<8x128xf32> -> vector<8x128xf32>
    %1998 = arith.mulf %1996, %1997 : vector<8x128xf32>
    %c0_605 = arith.constant 0 : index
    %c0_606 = arith.constant 0 : index
    %c1408_607 = arith.constant 1408 : index
    %1999 = vector.load %arg4[%c0_605, %c0_606, %c1408_607] : memref<1x8x2304xf32, #tpu.memory_space<vmem>>, vector<1x8x128xf32>
    %2000 = vector.shape_cast %1999 : vector<1x8x128xf32> to vector<8x128xf32>
    %2001 = vector.shape_cast %1998 : vector<8x128xf32> to vector<1x8x128xf32>
    tpu.vector_store %arg4[%c0_605, %c0_606, %c1408_607], %2001 {strides = array<i32>} : memref<1x8x2304xf32, #tpu.memory_space<vmem>>, vector<1x8x128xf32>,
    %2002 = arith.mulf %1257, %1188 : vector<8x128xf32>
    %c4_i32_608 = arith.constant 4 : i32
    %2003 = tpu.dynamic_rotate %2002 by %c4_i32_608 dim 0 : vector<8x128xf32>, i32 -> vector<8x128xf32>
    %2004 = arith.addf %2002, %2003 : vector<8x128xf32>
    %c2_i32_609 = arith.constant 2 : i32
    %2005 = tpu.dynamic_rotate %2004 by %c2_i32_609 dim 0 : vector<8x128xf32>, i32 -> vector<8x128xf32>
    %2006 = arith.addf %2004, %2005 : vector<8x128xf32>
    %c1_i32_610 = arith.constant 1 : i32
    %2007 = tpu.dynamic_rotate %2006 by %c1_i32_610 dim 0 : vector<8x128xf32>, i32 -> vector<8x128xf32>
    %2008 = arith.addf %2006, %2007 : vector<8x128xf32>
    %2009 = arith.mulf %1257, %1200 : vector<8x128xf32>
    %c4_i32_611 = arith.constant 4 : i32
    %2010 = tpu.dynamic_rotate %2009 by %c4_i32_611 dim 0 : vector<8x128xf32>, i32 -> vector<8x128xf32>
    %2011 = arith.addf %2009, %2010 : vector<8x128xf32>
    %c2_i32_612 = arith.constant 2 : i32
    %2012 = tpu.dynamic_rotate %2011 by %c2_i32_612 dim 0 : vector<8x128xf32>, i32 -> vector<8x128xf32>
    %2013 = arith.addf %2011, %2012 : vector<8x128xf32>
    %c1_i32_613 = arith.constant 1 : i32
    %2014 = tpu.dynamic_rotate %2013 by %c1_i32_613 dim 0 : vector<8x128xf32>, i32 -> vector<8x128xf32>
    %2015 = arith.addf %2013, %2014 : vector<8x128xf32>
    %2016 = arith.mulf %1257, %1212 : vector<8x128xf32>
    %c4_i32_614 = arith.constant 4 : i32
    %2017 = tpu.dynamic_rotate %2016 by %c4_i32_614 dim 0 : vector<8x128xf32>, i32 -> vector<8x128xf32>
    %2018 = arith.addf %2016, %2017 : vector<8x128xf32>
    %c2_i32_615 = arith.constant 2 : i32
    %2019 = tpu.dynamic_rotate %2018 by %c2_i32_615 dim 0 : vector<8x128xf32>, i32 -> vector<8x128xf32>
    %2020 = arith.addf %2018, %2019 : vector<8x128xf32>
    %c1_i32_616 = arith.constant 1 : i32
    %2021 = tpu.dynamic_rotate %2020 by %c1_i32_616 dim 0 : vector<8x128xf32>, i32 -> vector<8x128xf32>
    %2022 = arith.addf %2020, %2021 : vector<8x128xf32>
    %2023 = arith.mulf %1257, %1224 : vector<8x128xf32>
    %c4_i32_617 = arith.constant 4 : i32
    %2024 = tpu.dynamic_rotate %2023 by %c4_i32_617 dim 0 : vector<8x128xf32>, i32 -> vector<8x128xf32>
    %2025 = arith.addf %2023, %2024 : vector<8x128xf32>
    %c2_i32_618 = arith.constant 2 : i32
    %2026 = tpu.dynamic_rotate %2025 by %c2_i32_618 dim 0 : vector<8x128xf32>, i32 -> vector<8x128xf32>
    %2027 = arith.addf %2025, %2026 : vector<8x128xf32>
    %c1_i32_619 = arith.constant 1 : i32
    %2028 = tpu.dynamic_rotate %2027 by %c1_i32_619 dim 0 : vector<8x128xf32>, i32 -> vector<8x128xf32>
    %2029 = arith.addf %2027, %2028 : vector<8x128xf32>
    %2030 = arith.mulf %1257, %1236 : vector<8x128xf32>
    %c4_i32_620 = arith.constant 4 : i32
    %2031 = tpu.dynamic_rotate %2030 by %c4_i32_620 dim 0 : vector<8x128xf32>, i32 -> vector<8x128xf32>
    %2032 = arith.addf %2030, %2031 : vector<8x128xf32>
    %c2_i32_621 = arith.constant 2 : i32
    %2033 = tpu.dynamic_rotate %2032 by %c2_i32_621 dim 0 : vector<8x128xf32>, i32 -> vector<8x128xf32>
    %2034 = arith.addf %2032, %2033 : vector<8x128xf32>
    %c1_i32_622 = arith.constant 1 : i32
    %2035 = tpu.dynamic_rotate %2034 by %c1_i32_622 dim 0 : vector<8x128xf32>, i32 -> vector<8x128xf32>
    %2036 = arith.addf %2034, %2035 : vector<8x128xf32>
    %2037 = arith.mulf %1257, %1248 : vector<8x128xf32>
    %c4_i32_623 = arith.constant 4 : i32
    %2038 = tpu.dynamic_rotate %2037 by %c4_i32_623 dim 0 : vector<8x128xf32>, i32 -> vector<8x128xf32>
    %2039 = arith.addf %2037, %2038 : vector<8x128xf32>
    %c2_i32_624 = arith.constant 2 : i32
    %2040 = tpu.dynamic_rotate %2039 by %c2_i32_624 dim 0 : vector<8x128xf32>, i32 -> vector<8x128xf32>
    %2041 = arith.addf %2039, %2040 : vector<8x128xf32>
    %c1_i32_625 = arith.constant 1 : i32
    %2042 = tpu.dynamic_rotate %2041 by %c1_i32_625 dim 0 : vector<8x128xf32>, i32 -> vector<8x128xf32>
    %2043 = arith.addf %2041, %2042 : vector<8x128xf32>
    %2044 = arith.mulf %1257, %1260 : vector<8x128xf32>
    %c4_i32_626 = arith.constant 4 : i32
    %2045 = tpu.dynamic_rotate %2044 by %c4_i32_626 dim 0 : vector<8x128xf32>, i32 -> vector<8x128xf32>
    %2046 = arith.addf %2044, %2045 : vector<8x128xf32>
    %c2_i32_627 = arith.constant 2 : i32
    %2047 = tpu.dynamic_rotate %2046 by %c2_i32_627 dim 0 : vector<8x128xf32>, i32 -> vector<8x128xf32>
    %2048 = arith.addf %2046, %2047 : vector<8x128xf32>
    %c1_i32_628 = arith.constant 1 : i32
    %2049 = tpu.dynamic_rotate %2048 by %c1_i32_628 dim 0 : vector<8x128xf32>, i32 -> vector<8x128xf32>
    %2050 = arith.addf %2048, %2049 : vector<8x128xf32>
    %2051 = arith.mulf %1257, %1272 : vector<8x128xf32>
    %c4_i32_629 = arith.constant 4 : i32
    %2052 = tpu.dynamic_rotate %2051 by %c4_i32_629 dim 0 : vector<8x128xf32>, i32 -> vector<8x128xf32>
    %2053 = arith.addf %2051, %2052 : vector<8x128xf32>
    %c2_i32_630 = arith.constant 2 : i32
    %2054 = tpu.dynamic_rotate %2053 by %c2_i32_630 dim 0 : vector<8x128xf32>, i32 -> vector<8x128xf32>
    %2055 = arith.addf %2053, %2054 : vector<8x128xf32>
    %c1_i32_631 = arith.constant 1 : i32
    %2056 = tpu.dynamic_rotate %2055 by %c1_i32_631 dim 0 : vector<8x128xf32>, i32 -> vector<8x128xf32>
    %2057 = arith.addf %2055, %2056 : vector<8x128xf32>
    %2058 = arith.mulf %1257, %1284 : vector<8x128xf32>
    %c4_i32_632 = arith.constant 4 : i32
    %2059 = tpu.dynamic_rotate %2058 by %c4_i32_632 dim 0 : vector<8x128xf32>, i32 -> vector<8x128xf32>
    %2060 = arith.addf %2058, %2059 : vector<8x128xf32>
    %c2_i32_633 = arith.constant 2 : i32
    %2061 = tpu.dynamic_rotate %2060 by %c2_i32_633 dim 0 : vector<8x128xf32>, i32 -> vector<8x128xf32>
    %2062 = arith.addf %2060, %2061 : vector<8x128xf32>
    %c1_i32_634 = arith.constant 1 : i32
    %2063 = tpu.dynamic_rotate %2062 by %c1_i32_634 dim 0 : vector<8x128xf32>, i32 -> vector<8x128xf32>
    %2064 = arith.addf %2062, %2063 : vector<8x128xf32>
    %2065 = arith.maximumf %2008, %2015 : vector<8x128xf32>
    %2066 = arith.maximumf %2065, %2022 : vector<8x128xf32>
    %2067 = arith.maximumf %2066, %2029 : vector<8x128xf32>
    %2068 = arith.maximumf %2067, %2036 : vector<8x128xf32>
    %2069 = arith.maximumf %2068, %2043 : vector<8x128xf32>
    %2070 = arith.maximumf %2069, %2050 : vector<8x128xf32>
    %2071 = arith.maximumf %2070, %2057 : vector<8x128xf32>
    %2072 = arith.maximumf %2071, %2064 : vector<8x128xf32>
    %2073 = arith.subf %2008, %2072 : vector<8x128xf32>
    %2074 = math.exp %2073 : vector<8x128xf32>
    %2075 = arith.mulf %2074, %1191 : vector<8x128xf32>
    %2076 = arith.subf %2015, %2072 : vector<8x128xf32>
    %2077 = math.exp %2076 : vector<8x128xf32>
    %2078 = arith.addf %2074, %2077 : vector<8x128xf32>
    %2079 = arith.mulf %2077, %1203 : vector<8x128xf32>
    %2080 = arith.addf %2075, %2079 : vector<8x128xf32>
    %2081 = arith.subf %2022, %2072 : vector<8x128xf32>
    %2082 = math.exp %2081 : vector<8x128xf32>
    %2083 = arith.addf %2078, %2082 : vector<8x128xf32>
    %2084 = arith.mulf %2082, %1215 : vector<8x128xf32>
    %2085 = arith.addf %2080, %2084 : vector<8x128xf32>
    %2086 = arith.subf %2029, %2072 : vector<8x128xf32>
    %2087 = math.exp %2086 : vector<8x128xf32>
    %2088 = arith.addf %2083, %2087 : vector<8x128xf32>
    %2089 = arith.mulf %2087, %1227 : vector<8x128xf32>
    %2090 = arith.addf %2085, %2089 : vector<8x128xf32>
    %2091 = arith.subf %2036, %2072 : vector<8x128xf32>
    %2092 = math.exp %2091 : vector<8x128xf32>
    %2093 = arith.addf %2088, %2092 : vector<8x128xf32>
    %2094 = arith.mulf %2092, %1239 : vector<8x128xf32>
    %2095 = arith.addf %2090, %2094 : vector<8x128xf32>
    %2096 = arith.subf %2043, %2072 : vector<8x128xf32>
    %2097 = math.exp %2096 : vector<8x128xf32>
    %2098 = arith.addf %2093, %2097 : vector<8x128xf32>
    %2099 = arith.mulf %2097, %1251 : vector<8x128xf32>
    %2100 = arith.addf %2095, %2099 : vector<8x128xf32>
    %2101 = arith.subf %2050, %2072 : vector<8x128xf32>
    %2102 = math.exp %2101 : vector<8x128xf32>
    %2103 = arith.addf %2098, %2102 : vector<8x128xf32>
    %2104 = arith.mulf %2102, %1263 : vector<8x128xf32>
    %2105 = arith.addf %2100, %2104 : vector<8x128xf32>
    %2106 = arith.subf %2057, %2072 : vector<8x128xf32>
    %2107 = math.exp %2106 : vector<8x128xf32>
    %2108 = arith.addf %2103, %2107 : vector<8x128xf32>
    %2109 = arith.mulf %2107, %1275 : vector<8x128xf32>
    %2110 = arith.addf %2105, %2109 : vector<8x128xf32>
    %2111 = arith.subf %2064, %2072 : vector<8x128xf32>
    %2112 = math.exp %2111 : vector<8x128xf32>
    %2113 = arith.addf %2108, %2112 : vector<8x128xf32>
    %2114 = arith.mulf %2112, %1287 : vector<8x128xf32>
    %2115 = arith.addf %2110, %2114 : vector<8x128xf32>
    %2116 = tpu.reciprocal %2113 : vector<8x128xf32> -> vector<8x128xf32>
    %2117 = arith.mulf %2115, %2116 : vector<8x128xf32>
    %c0_635 = arith.constant 0 : index
    %c0_636 = arith.constant 0 : index
    %c1664_637 = arith.constant 1664 : index
    %2118 = vector.load %arg4[%c0_635, %c0_636, %c1664_637] : memref<1x8x2304xf32, #tpu.memory_space<vmem>>, vector<1x8x128xf32>
    %2119 = vector.shape_cast %2118 : vector<1x8x128xf32> to vector<8x128xf32>
    %2120 = vector.shape_cast %2117 : vector<8x128xf32> to vector<1x8x128xf32>
    tpu.vector_store %arg4[%c0_635, %c0_636, %c1664_637], %2120 {strides = array<i32>} : memref<1x8x2304xf32, #tpu.memory_space<vmem>>, vector<1x8x128xf32>,
    %2121 = arith.mulf %1269, %1188 : vector<8x128xf32>
    %c4_i32_638 = arith.constant 4 : i32
    %2122 = tpu.dynamic_rotate %2121 by %c4_i32_638 dim 0 : vector<8x128xf32>, i32 -> vector<8x128xf32>
    %2123 = arith.addf %2121, %2122 : vector<8x128xf32>
    %c2_i32_639 = arith.constant 2 : i32
    %2124 = tpu.dynamic_rotate %2123 by %c2_i32_639 dim 0 : vector<8x128xf32>, i32 -> vector<8x128xf32>
    %2125 = arith.addf %2123, %2124 : vector<8x128xf32>
    %c1_i32_640 = arith.constant 1 : i32
    %2126 = tpu.dynamic_rotate %2125 by %c1_i32_640 dim 0 : vector<8x128xf32>, i32 -> vector<8x128xf32>
    %2127 = arith.addf %2125, %2126 : vector<8x128xf32>
    %2128 = arith.mulf %1269, %1200 : vector<8x128xf32>
    %c4_i32_641 = arith.constant 4 : i32
    %2129 = tpu.dynamic_rotate %2128 by %c4_i32_641 dim 0 : vector<8x128xf32>, i32 -> vector<8x128xf32>
    %2130 = arith.addf %2128, %2129 : vector<8x128xf32>
    %c2_i32_642 = arith.constant 2 : i32
    %2131 = tpu.dynamic_rotate %2130 by %c2_i32_642 dim 0 : vector<8x128xf32>, i32 -> vector<8x128xf32>
    %2132 = arith.addf %2130, %2131 : vector<8x128xf32>
    %c1_i32_643 = arith.constant 1 : i32
    %2133 = tpu.dynamic_rotate %2132 by %c1_i32_643 dim 0 : vector<8x128xf32>, i32 -> vector<8x128xf32>
    %2134 = arith.addf %2132, %2133 : vector<8x128xf32>
    %2135 = arith.mulf %1269, %1212 : vector<8x128xf32>
    %c4_i32_644 = arith.constant 4 : i32
    %2136 = tpu.dynamic_rotate %2135 by %c4_i32_644 dim 0 : vector<8x128xf32>, i32 -> vector<8x128xf32>
    %2137 = arith.addf %2135, %2136 : vector<8x128xf32>
    %c2_i32_645 = arith.constant 2 : i32
    %2138 = tpu.dynamic_rotate %2137 by %c2_i32_645 dim 0 : vector<8x128xf32>, i32 -> vector<8x128xf32>
    %2139 = arith.addf %2137, %2138 : vector<8x128xf32>
    %c1_i32_646 = arith.constant 1 : i32
    %2140 = tpu.dynamic_rotate %2139 by %c1_i32_646 dim 0 : vector<8x128xf32>, i32 -> vector<8x128xf32>
    %2141 = arith.addf %2139, %2140 : vector<8x128xf32>
    %2142 = arith.mulf %1269, %1224 : vector<8x128xf32>
    %c4_i32_647 = arith.constant 4 : i32
    %2143 = tpu.dynamic_rotate %2142 by %c4_i32_647 dim 0 : vector<8x128xf32>, i32 -> vector<8x128xf32>
    %2144 = arith.addf %2142, %2143 : vector<8x128xf32>
    %c2_i32_648 = arith.constant 2 : i32
    %2145 = tpu.dynamic_rotate %2144 by %c2_i32_648 dim 0 : vector<8x128xf32>, i32 -> vector<8x128xf32>
    %2146 = arith.addf %2144, %2145 : vector<8x128xf32>
    %c1_i32_649 = arith.constant 1 : i32
    %2147 = tpu.dynamic_rotate %2146 by %c1_i32_649 dim 0 : vector<8x128xf32>, i32 -> vector<8x128xf32>
    %2148 = arith.addf %2146, %2147 : vector<8x128xf32>
    %2149 = arith.mulf %1269, %1236 : vector<8x128xf32>
    %c4_i32_650 = arith.constant 4 : i32
    %2150 = tpu.dynamic_rotate %2149 by %c4_i32_650 dim 0 : vector<8x128xf32>, i32 -> vector<8x128xf32>
    %2151 = arith.addf %2149, %2150 : vector<8x128xf32>
    %c2_i32_651 = arith.constant 2 : i32
    %2152 = tpu.dynamic_rotate %2151 by %c2_i32_651 dim 0 : vector<8x128xf32>, i32 -> vector<8x128xf32>
    %2153 = arith.addf %2151, %2152 : vector<8x128xf32>
    %c1_i32_652 = arith.constant 1 : i32
    %2154 = tpu.dynamic_rotate %2153 by %c1_i32_652 dim 0 : vector<8x128xf32>, i32 -> vector<8x128xf32>
    %2155 = arith.addf %2153, %2154 : vector<8x128xf32>
    %2156 = arith.mulf %1269, %1248 : vector<8x128xf32>
    %c4_i32_653 = arith.constant 4 : i32
    %2157 = tpu.dynamic_rotate %2156 by %c4_i32_653 dim 0 : vector<8x128xf32>, i32 -> vector<8x128xf32>
    %2158 = arith.addf %2156, %2157 : vector<8x128xf32>
    %c2_i32_654 = arith.constant 2 : i32
    %2159 = tpu.dynamic_rotate %2158 by %c2_i32_654 dim 0 : vector<8x128xf32>, i32 -> vector<8x128xf32>
    %2160 = arith.addf %2158, %2159 : vector<8x128xf32>
    %c1_i32_655 = arith.constant 1 : i32
    %2161 = tpu.dynamic_rotate %2160 by %c1_i32_655 dim 0 : vector<8x128xf32>, i32 -> vector<8x128xf32>
    %2162 = arith.addf %2160, %2161 : vector<8x128xf32>
    %2163 = arith.mulf %1269, %1260 : vector<8x128xf32>
    %c4_i32_656 = arith.constant 4 : i32
    %2164 = tpu.dynamic_rotate %2163 by %c4_i32_656 dim 0 : vector<8x128xf32>, i32 -> vector<8x128xf32>
    %2165 = arith.addf %2163, %2164 : vector<8x128xf32>
    %c2_i32_657 = arith.constant 2 : i32
    %2166 = tpu.dynamic_rotate %2165 by %c2_i32_657 dim 0 : vector<8x128xf32>, i32 -> vector<8x128xf32>
    %2167 = arith.addf %2165, %2166 : vector<8x128xf32>
    %c1_i32_658 = arith.constant 1 : i32
    %2168 = tpu.dynamic_rotate %2167 by %c1_i32_658 dim 0 : vector<8x128xf32>, i32 -> vector<8x128xf32>
    %2169 = arith.addf %2167, %2168 : vector<8x128xf32>
    %2170 = arith.mulf %1269, %1272 : vector<8x128xf32>
    %c4_i32_659 = arith.constant 4 : i32
    %2171 = tpu.dynamic_rotate %2170 by %c4_i32_659 dim 0 : vector<8x128xf32>, i32 -> vector<8x128xf32>
    %2172 = arith.addf %2170, %2171 : vector<8x128xf32>
    %c2_i32_660 = arith.constant 2 : i32
    %2173 = tpu.dynamic_rotate %2172 by %c2_i32_660 dim 0 : vector<8x128xf32>, i32 -> vector<8x128xf32>
    %2174 = arith.addf %2172, %2173 : vector<8x128xf32>
    %c1_i32_661 = arith.constant 1 : i32
    %2175 = tpu.dynamic_rotate %2174 by %c1_i32_661 dim 0 : vector<8x128xf32>, i32 -> vector<8x128xf32>
    %2176 = arith.addf %2174, %2175 : vector<8x128xf32>
    %2177 = arith.mulf %1269, %1284 : vector<8x128xf32>
    %c4_i32_662 = arith.constant 4 : i32
    %2178 = tpu.dynamic_rotate %2177 by %c4_i32_662 dim 0 : vector<8x128xf32>, i32 -> vector<8x128xf32>
    %2179 = arith.addf %2177, %2178 : vector<8x128xf32>
    %c2_i32_663 = arith.constant 2 : i32
    %2180 = tpu.dynamic_rotate %2179 by %c2_i32_663 dim 0 : vector<8x128xf32>, i32 -> vector<8x128xf32>
    %2181 = arith.addf %2179, %2180 : vector<8x128xf32>
    %c1_i32_664 = arith.constant 1 : i32
    %2182 = tpu.dynamic_rotate %2181 by %c1_i32_664 dim 0 : vector<8x128xf32>, i32 -> vector<8x128xf32>
    %2183 = arith.addf %2181, %2182 : vector<8x128xf32>
    %2184 = arith.maximumf %2127, %2134 : vector<8x128xf32>
    %2185 = arith.maximumf %2184, %2141 : vector<8x128xf32>
    %2186 = arith.maximumf %2185, %2148 : vector<8x128xf32>
    %2187 = arith.maximumf %2186, %2155 : vector<8x128xf32>
    %2188 = arith.maximumf %2187, %2162 : vector<8x128xf32>
    %2189 = arith.maximumf %2188, %2169 : vector<8x128xf32>
    %2190 = arith.maximumf %2189, %2176 : vector<8x128xf32>
    %2191 = arith.maximumf %2190, %2183 : vector<8x128xf32>
    %2192 = arith.subf %2127, %2191 : vector<8x128xf32>
    %2193 = math.exp %2192 : vector<8x128xf32>
    %2194 = arith.mulf %2193, %1191 : vector<8x128xf32>
    %2195 = arith.subf %2134, %2191 : vector<8x128xf32>
    %2196 = math.exp %2195 : vector<8x128xf32>
    %2197 = arith.addf %2193, %2196 : vector<8x128xf32>
    %2198 = arith.mulf %2196, %1203 : vector<8x128xf32>
    %2199 = arith.addf %2194, %2198 : vector<8x128xf32>
    %2200 = arith.subf %2141, %2191 : vector<8x128xf32>
    %2201 = math.exp %2200 : vector<8x128xf32>
    %2202 = arith.addf %2197, %2201 : vector<8x128xf32>
    %2203 = arith.mulf %2201, %1215 : vector<8x128xf32>
    %2204 = arith.addf %2199, %2203 : vector<8x128xf32>
    %2205 = arith.subf %2148, %2191 : vector<8x128xf32>
    %2206 = math.exp %2205 : vector<8x128xf32>
    %2207 = arith.addf %2202, %2206 : vector<8x128xf32>
    %2208 = arith.mulf %2206, %1227 : vector<8x128xf32>
    %2209 = arith.addf %2204, %2208 : vector<8x128xf32>
    %2210 = arith.subf %2155, %2191 : vector<8x128xf32>
    %2211 = math.exp %2210 : vector<8x128xf32>
    %2212 = arith.addf %2207, %2211 : vector<8x128xf32>
    %2213 = arith.mulf %2211, %1239 : vector<8x128xf32>
    %2214 = arith.addf %2209, %2213 : vector<8x128xf32>
    %2215 = arith.subf %2162, %2191 : vector<8x128xf32>
    %2216 = math.exp %2215 : vector<8x128xf32>
    %2217 = arith.addf %2212, %2216 : vector<8x128xf32>
    %2218 = arith.mulf %2216, %1251 : vector<8x128xf32>
    %2219 = arith.addf %2214, %2218 : vector<8x128xf32>
    %2220 = arith.subf %2169, %2191 : vector<8x128xf32>
    %2221 = math.exp %2220 : vector<8x128xf32>
    %2222 = arith.addf %2217, %2221 : vector<8x128xf32>
    %2223 = arith.mulf %2221, %1263 : vector<8x128xf32>
    %2224 = arith.addf %2219, %2223 : vector<8x128xf32>
    %2225 = arith.subf %2176, %2191 : vector<8x128xf32>
    %2226 = math.exp %2225 : vector<8x128xf32>
    %2227 = arith.addf %2222, %2226 : vector<8x128xf32>
    %2228 = arith.mulf %2226, %1275 : vector<8x128xf32>
    %2229 = arith.addf %2224, %2228 : vector<8x128xf32>
    %2230 = arith.subf %2183, %2191 : vector<8x128xf32>
    %2231 = math.exp %2230 : vector<8x128xf32>
    %2232 = arith.addf %2227, %2231 : vector<8x128xf32>
    %2233 = arith.mulf %2231, %1287 : vector<8x128xf32>
    %2234 = arith.addf %2229, %2233 : vector<8x128xf32>
    %2235 = tpu.reciprocal %2232 : vector<8x128xf32> -> vector<8x128xf32>
    %2236 = arith.mulf %2234, %2235 : vector<8x128xf32>
    %c0_665 = arith.constant 0 : index
    %c0_666 = arith.constant 0 : index
    %c1920_667 = arith.constant 1920 : index
    %2237 = vector.load %arg4[%c0_665, %c0_666, %c1920_667] : memref<1x8x2304xf32, #tpu.memory_space<vmem>>, vector<1x8x128xf32>
    %2238 = vector.shape_cast %2237 : vector<1x8x128xf32> to vector<8x128xf32>
    %2239 = vector.shape_cast %2236 : vector<8x128xf32> to vector<1x8x128xf32>
    tpu.vector_store %arg4[%c0_665, %c0_666, %c1920_667], %2239 {strides = array<i32>} : memref<1x8x2304xf32, #tpu.memory_space<vmem>>, vector<1x8x128xf32>,
    %2240 = arith.mulf %1281, %1188 : vector<8x128xf32>
    %c4_i32_668 = arith.constant 4 : i32
    %2241 = tpu.dynamic_rotate %2240 by %c4_i32_668 dim 0 : vector<8x128xf32>, i32 -> vector<8x128xf32>
    %2242 = arith.addf %2240, %2241 : vector<8x128xf32>
    %c2_i32_669 = arith.constant 2 : i32
    %2243 = tpu.dynamic_rotate %2242 by %c2_i32_669 dim 0 : vector<8x128xf32>, i32 -> vector<8x128xf32>
    %2244 = arith.addf %2242, %2243 : vector<8x128xf32>
    %c1_i32_670 = arith.constant 1 : i32
    %2245 = tpu.dynamic_rotate %2244 by %c1_i32_670 dim 0 : vector<8x128xf32>, i32 -> vector<8x128xf32>
    %2246 = arith.addf %2244, %2245 : vector<8x128xf32>
    %2247 = arith.mulf %1281, %1200 : vector<8x128xf32>
    %c4_i32_671 = arith.constant 4 : i32
    %2248 = tpu.dynamic_rotate %2247 by %c4_i32_671 dim 0 : vector<8x128xf32>, i32 -> vector<8x128xf32>
    %2249 = arith.addf %2247, %2248 : vector<8x128xf32>
    %c2_i32_672 = arith.constant 2 : i32
    %2250 = tpu.dynamic_rotate %2249 by %c2_i32_672 dim 0 : vector<8x128xf32>, i32 -> vector<8x128xf32>
    %2251 = arith.addf %2249, %2250 : vector<8x128xf32>
    %c1_i32_673 = arith.constant 1 : i32
    %2252 = tpu.dynamic_rotate %2251 by %c1_i32_673 dim 0 : vector<8x128xf32>, i32 -> vector<8x128xf32>
    %2253 = arith.addf %2251, %2252 : vector<8x128xf32>
    %2254 = arith.mulf %1281, %1212 : vector<8x128xf32>
    %c4_i32_674 = arith.constant 4 : i32
    %2255 = tpu.dynamic_rotate %2254 by %c4_i32_674 dim 0 : vector<8x128xf32>, i32 -> vector<8x128xf32>
    %2256 = arith.addf %2254, %2255 : vector<8x128xf32>
    %c2_i32_675 = arith.constant 2 : i32
    %2257 = tpu.dynamic_rotate %2256 by %c2_i32_675 dim 0 : vector<8x128xf32>, i32 -> vector<8x128xf32>
    %2258 = arith.addf %2256, %2257 : vector<8x128xf32>
    %c1_i32_676 = arith.constant 1 : i32
    %2259 = tpu.dynamic_rotate %2258 by %c1_i32_676 dim 0 : vector<8x128xf32>, i32 -> vector<8x128xf32>
    %2260 = arith.addf %2258, %2259 : vector<8x128xf32>
    %2261 = arith.mulf %1281, %1224 : vector<8x128xf32>
    %c4_i32_677 = arith.constant 4 : i32
    %2262 = tpu.dynamic_rotate %2261 by %c4_i32_677 dim 0 : vector<8x128xf32>, i32 -> vector<8x128xf32>
    %2263 = arith.addf %2261, %2262 : vector<8x128xf32>
    %c2_i32_678 = arith.constant 2 : i32
    %2264 = tpu.dynamic_rotate %2263 by %c2_i32_678 dim 0 : vector<8x128xf32>, i32 -> vector<8x128xf32>
    %2265 = arith.addf %2263, %2264 : vector<8x128xf32>
    %c1_i32_679 = arith.constant 1 : i32
    %2266 = tpu.dynamic_rotate %2265 by %c1_i32_679 dim 0 : vector<8x128xf32>, i32 -> vector<8x128xf32>
    %2267 = arith.addf %2265, %2266 : vector<8x128xf32>
    %2268 = arith.mulf %1281, %1236 : vector<8x128xf32>
    %c4_i32_680 = arith.constant 4 : i32
    %2269 = tpu.dynamic_rotate %2268 by %c4_i32_680 dim 0 : vector<8x128xf32>, i32 -> vector<8x128xf32>
    %2270 = arith.addf %2268, %2269 : vector<8x128xf32>
    %c2_i32_681 = arith.constant 2 : i32
    %2271 = tpu.dynamic_rotate %2270 by %c2_i32_681 dim 0 : vector<8x128xf32>, i32 -> vector<8x128xf32>
    %2272 = arith.addf %2270, %2271 : vector<8x128xf32>
    %c1_i32_682 = arith.constant 1 : i32
    %2273 = tpu.dynamic_rotate %2272 by %c1_i32_682 dim 0 : vector<8x128xf32>, i32 -> vector<8x128xf32>
    %2274 = arith.addf %2272, %2273 : vector<8x128xf32>
    %2275 = arith.mulf %1281, %1248 : vector<8x128xf32>
    %c4_i32_683 = arith.constant 4 : i32
    %2276 = tpu.dynamic_rotate %2275 by %c4_i32_683 dim 0 : vector<8x128xf32>, i32 -> vector<8x128xf32>
    %2277 = arith.addf %2275, %2276 : vector<8x128xf32>
    %c2_i32_684 = arith.constant 2 : i32
    %2278 = tpu.dynamic_rotate %2277 by %c2_i32_684 dim 0 : vector<8x128xf32>, i32 -> vector<8x128xf32>
    %2279 = arith.addf %2277, %2278 : vector<8x128xf32>
    %c1_i32_685 = arith.constant 1 : i32
    %2280 = tpu.dynamic_rotate %2279 by %c1_i32_685 dim 0 : vector<8x128xf32>, i32 -> vector<8x128xf32>
    %2281 = arith.addf %2279, %2280 : vector<8x128xf32>
    %2282 = arith.mulf %1281, %1260 : vector<8x128xf32>
    %c4_i32_686 = arith.constant 4 : i32
    %2283 = tpu.dynamic_rotate %2282 by %c4_i32_686 dim 0 : vector<8x128xf32>, i32 -> vector<8x128xf32>
    %2284 = arith.addf %2282, %2283 : vector<8x128xf32>
    %c2_i32_687 = arith.constant 2 : i32
    %2285 = tpu.dynamic_rotate %2284 by %c2_i32_687 dim 0 : vector<8x128xf32>, i32 -> vector<8x128xf32>
    %2286 = arith.addf %2284, %2285 : vector<8x128xf32>
    %c1_i32_688 = arith.constant 1 : i32
    %2287 = tpu.dynamic_rotate %2286 by %c1_i32_688 dim 0 : vector<8x128xf32>, i32 -> vector<8x128xf32>
    %2288 = arith.addf %2286, %2287 : vector<8x128xf32>
    %2289 = arith.mulf %1281, %1272 : vector<8x128xf32>
    %c4_i32_689 = arith.constant 4 : i32
    %2290 = tpu.dynamic_rotate %2289 by %c4_i32_689 dim 0 : vector<8x128xf32>, i32 -> vector<8x128xf32>
    %2291 = arith.addf %2289, %2290 : vector<8x128xf32>
    %c2_i32_690 = arith.constant 2 : i32
    %2292 = tpu.dynamic_rotate %2291 by %c2_i32_690 dim 0 : vector<8x128xf32>, i32 -> vector<8x128xf32>
    %2293 = arith.addf %2291, %2292 : vector<8x128xf32>
    %c1_i32_691 = arith.constant 1 : i32
    %2294 = tpu.dynamic_rotate %2293 by %c1_i32_691 dim 0 : vector<8x128xf32>, i32 -> vector<8x128xf32>
    %2295 = arith.addf %2293, %2294 : vector<8x128xf32>
    %2296 = arith.mulf %1281, %1284 : vector<8x128xf32>
    %c4_i32_692 = arith.constant 4 : i32
    %2297 = tpu.dynamic_rotate %2296 by %c4_i32_692 dim 0 : vector<8x128xf32>, i32 -> vector<8x128xf32>
    %2298 = arith.addf %2296, %2297 : vector<8x128xf32>
    %c2_i32_693 = arith.constant 2 : i32
    %2299 = tpu.dynamic_rotate %2298 by %c2_i32_693 dim 0 : vector<8x128xf32>, i32 -> vector<8x128xf32>
    %2300 = arith.addf %2298, %2299 : vector<8x128xf32>
    %c1_i32_694 = arith.constant 1 : i32
    %2301 = tpu.dynamic_rotate %2300 by %c1_i32_694 dim 0 : vector<8x128xf32>, i32 -> vector<8x128xf32>
    %2302 = arith.addf %2300, %2301 : vector<8x128xf32>
    %2303 = arith.maximumf %2246, %2253 : vector<8x128xf32>
    %2304 = arith.maximumf %2303, %2260 : vector<8x128xf32>
    %2305 = arith.maximumf %2304, %2267 : vector<8x128xf32>
    %2306 = arith.maximumf %2305, %2274 : vector<8x128xf32>
    %2307 = arith.maximumf %2306, %2281 : vector<8x128xf32>
    %2308 = arith.maximumf %2307, %2288 : vector<8x128xf32>
    %2309 = arith.maximumf %2308, %2295 : vector<8x128xf32>
    %2310 = arith.maximumf %2309, %2302 : vector<8x128xf32>
    %2311 = arith.subf %2246, %2310 : vector<8x128xf32>
    %2312 = math.exp %2311 : vector<8x128xf32>
    %2313 = arith.mulf %2312, %1191 : vector<8x128xf32>
    %2314 = arith.subf %2253, %2310 : vector<8x128xf32>
    %2315 = math.exp %2314 : vector<8x128xf32>
    %2316 = arith.addf %2312, %2315 : vector<8x128xf32>
    %2317 = arith.mulf %2315, %1203 : vector<8x128xf32>
    %2318 = arith.addf %2313, %2317 : vector<8x128xf32>
    %2319 = arith.subf %2260, %2310 : vector<8x128xf32>
    %2320 = math.exp %2319 : vector<8x128xf32>
    %2321 = arith.addf %2316, %2320 : vector<8x128xf32>
    %2322 = arith.mulf %2320, %1215 : vector<8x128xf32>
    %2323 = arith.addf %2318, %2322 : vector<8x128xf32>
    %2324 = arith.subf %2267, %2310 : vector<8x128xf32>
    %2325 = math.exp %2324 : vector<8x128xf32>
    %2326 = arith.addf %2321, %2325 : vector<8x128xf32>
    %2327 = arith.mulf %2325, %1227 : vector<8x128xf32>
    %2328 = arith.addf %2323, %2327 : vector<8x128xf32>
    %2329 = arith.subf %2274, %2310 : vector<8x128xf32>
    %2330 = math.exp %2329 : vector<8x128xf32>
    %2331 = arith.addf %2326, %2330 : vector<8x128xf32>
    %2332 = arith.mulf %2330, %1239 : vector<8x128xf32>
    %2333 = arith.addf %2328, %2332 : vector<8x128xf32>
    %2334 = arith.subf %2281, %2310 : vector<8x128xf32>
    %2335 = math.exp %2334 : vector<8x128xf32>
    %2336 = arith.addf %2331, %2335 : vector<8x128xf32>
    %2337 = arith.mulf %2335, %1251 : vector<8x128xf32>
    %2338 = arith.addf %2333, %2337 : vector<8x128xf32>
    %2339 = arith.subf %2288, %2310 : vector<8x128xf32>
    %2340 = math.exp %2339 : vector<8x128xf32>
    %2341 = arith.addf %2336, %2340 : vector<8x128xf32>
    %2342 = arith.mulf %2340, %1263 : vector<8x128xf32>
    %2343 = arith.addf %2338, %2342 : vector<8x128xf32>
    %2344 = arith.subf %2295, %2310 : vector<8x128xf32>
    %2345 = math.exp %2344 : vector<8x128xf32>
    %2346 = arith.addf %2341, %2345 : vector<8x128xf32>
    %2347 = arith.mulf %2345, %1275 : vector<8x128xf32>
    %2348 = arith.addf %2343, %2347 : vector<8x128xf32>
    %2349 = arith.subf %2302, %2310 : vector<8x128xf32>
    %2350 = math.exp %2349 : vector<8x128xf32>
    %2351 = arith.addf %2346, %2350 : vector<8x128xf32>
    %2352 = arith.mulf %2350, %1287 : vector<8x128xf32>
    %2353 = arith.addf %2348, %2352 : vector<8x128xf32>
    %2354 = tpu.reciprocal %2351 : vector<8x128xf32> -> vector<8x128xf32>
    %2355 = arith.mulf %2353, %2354 : vector<8x128xf32>
    %c0_695 = arith.constant 0 : index
    %c0_696 = arith.constant 0 : index
    %c2176_697 = arith.constant 2176 : index
    %2356 = vector.load %arg4[%c0_695, %c0_696, %c2176_697] : memref<1x8x2304xf32, #tpu.memory_space<vmem>>, vector<1x8x128xf32>
    %2357 = vector.shape_cast %2356 : vector<1x8x128xf32> to vector<8x128xf32>
    %2358 = vector.shape_cast %2355 : vector<8x128xf32> to vector<1x8x128xf32>
    tpu.vector_store %arg4[%c0_695, %c0_696, %c2176_697], %2358 {strides = array<i32>} : memref<1x8x2304xf32, #tpu.memory_space<vmem>>, vector<1x8x128xf32>,
    return
  }
  func.func @transform_0(%arg0: i32) -> (i32, i32, i32) {
    %c0_i32 = arith.constant 0 : i32
    %c0_i32_0 = arith.constant 0 : i32
    %c0_i32_1 = arith.constant 0 : i32
    return %arg0, %c0_i32, %c0_i32_0 : i32, i32, i32
  }
  func.func @transform_1(%arg0: i32) -> (i32, i32) {
    %c0_i32 = arith.constant 0 : i32
    %c0_i32_0 = arith.constant 0 : i32
    %c0_i32_1 = arith.constant 0 : i32
    return %c0_i32, %c0_i32_0 : i32, i32
  }
  func.func @transform_2(%arg0: i32) -> (i32, i32) {
    %c0_i32 = arith.constant 0 : i32
    %c0_i32_0 = arith.constant 0 : i32
    %c0_i32_1 = arith.constant 0 : i32
    return %c0_i32, %c0_i32_0 : i32, i32
  }
  func.func @transform_3(%arg0: i32) -> (i32, i32, i32) {
    %c0_i32 = arith.constant 0 : i32
    %c0_i32_0 = arith.constant 0 : i32
    %c0_i32_1 = arith.constant 0 : i32
    return %arg0, %c0_i32, %c0_i32_0 : i32, i32, i32
  }
}

</mosaic_0001>

<llo_original>
// kernel: pillar_cross_attention_forward.1
$region0: #{pillar_cross_attention_forward.1}
  #allocation0 [shape = 'u32[]', space=smem, size = 0x4, offset = 0x4, fixed_abs, tag = 'smem constant byte address 0x4 - core index']
  #allocation1 [shape = 'u32[144,128]{1,0:T(1,128)}', space=vmem, size = 0x12000, scoped, tag = 'internal scratch']
  %s0 = inlined_call_operand.vmem [shape: bf16[2,8,2304], index: 0, kind: input, shape index: {}]
  %s1 = inlined_call_operand.vmem [shape: bf16[24,8], index: 1, kind: input, shape index: {}]
  %s2 = inlined_call_operand.vmem [shape: f32[24,1152], index: 2, kind: input, shape index: {}]
  %s3 = inlined_call_operand.vmem [shape: f32[2,8,2304], index: 3, kind: output, shape index: {}]
  %s4 = sld [smem:[#allocation0]]
  $region45: #{pillar_cross_attention_forward.1} parent=0
    _
  %s6 = ssub.s32 1, %s4
  %s7 = scalar_select 0, %s6, %s4
  loop: start=0, step=1, limit=4
  $region2: #{pillar_cross_attention_forward.1} parent=0 // loop_pre_header
    _
  $region3: #{pillar_cross_attention_forward.1} parent=0 // loop_header
    %s9 = sphi 0, %s13
    %p10 = scmp.ge.s32.totalorder %s9, 4
    %s19 = sphi 0, %s21
    %s22 = sphi 0, %s19
    %s23 = sphi 0, %s22
    %s39 = sphi 0, %s23
    %s43 = sphi 0, %s43
    %s45 = sphi 0, %s43
    %s46 = sphi 0, %s45
    %s60 = sphi 0, %s46
    %s64 = sphi 0, %s64
    %s66 = sphi 0, %s64
    %s67 = sphi 0, %s66
    %s81 = sphi 0, %s67
    %s87 = sphi 0, %s89
    %s90 = sphi 0, %s87
    %s91 = sphi 0, %s90
    %s107 = sphi 0, %s91
  $region4: #{pillar_cross_attention_forward.1} parent=0 // loop_header_branch
    %12 = sbr.rel (%p10) target = $region8
  $region5: #{pillar_cross_attention_forward.1} parent=0 // loop_body
    %s14 = ssub.s32 %s9, 1
    %s15 = ssub.s32 %s9, 2
    %s16 = sadd.s32 %s9, 1
    %s17 = ssub.s32 %s9, %s16
    %p18 = scmp.eq.s32.totalorder %s17, 0
    %s20 = sadd.s32 %s19, 1
    %s21 = scalar_select %p18, %s19, %s20
    %p24 = pneg %p18
    %p25 = scmp.eq.s32.totalorder %s9, 1
    %p26 = por %p24, %p25
    %p27 = scmp.ne.s32.totalorder %s19, %s22
    %p28 = scmp.eq.s32.totalorder %s9, 0
    %p29 = por %p27, %p28
    %p30 = scmp.ne.s32.totalorder %s19, %s22
    %p31 = scmp.eq.s32.totalorder %s14, 1
    %p32 = por %p30, %p31
    %p33 = scmp.ne.s32.totalorder %s22, %s23
    %p34 = scmp.eq.s32.totalorder %s14, 0
    %p35 = por %p33, %p34
    %p36 = scmp.ne.s32.totalorder %s22, %s23
    %p37 = scmp.eq.s32.totalorder %s15, 1
    %p38 = por %p36, %p37
    %p40 = scmp.ne.s32.totalorder %s23, %s39
    %p41 = scmp.eq.s32.totalorder %s15, 0
    %p42 = por %p40, %p41
    %s44 = sadd.s32 %s43, 1
    %p47 = scmp.eq.s32.totalorder %s9, 1
    %p48 = scmp.ne.s32.totalorder %s43, %s45
    %p49 = scmp.eq.s32.totalorder %s9, 0
    %p50 = por %p48, %p49
    %p51 = scmp.ne.s32.totalorder %s43, %s45
    %p52 = scmp.eq.s32.totalorder %s14, 1
    %p53 = por %p51, %p52
    %p54 = scmp.ne.s32.totalorder %s45, %s46
    %p55 = scmp.eq.s32.totalorder %s14, 0
    %p56 = por %p54, %p55
    %p57 = scmp.ne.s32.totalorder %s45, %s46
    %p58 = scmp.eq.s32.totalorder %s15, 1
    %p59 = por %p57, %p58
    %p61 = scmp.ne.s32.totalorder %s46, %s60
    %p62 = scmp.eq.s32.totalorder %s15, 0
    %p63 = por %p61, %p62
    %s65 = sadd.s32 %s64, 1
    %p68 = scmp.eq.s32.totalorder %s9, 1
    %p69 = scmp.ne.s32.totalorder %s64, %s66
    %p70 = scmp.eq.s32.totalorder %s9, 0
    %p71 = por %p69, %p70
    %p72 = scmp.ne.s32.totalorder %s64, %s66
    %p73 = scmp.eq.s32.totalorder %s14, 1
    %p74 = por %p72, %p73
    %p75 = scmp.ne.s32.totalorder %s66, %s67
    %p76 = scmp.eq.s32.totalorder %s14, 0
    %p77 = por %p75, %p76
    %p78 = scmp.ne.s32.totalorder %s66, %s67
    %p79 = scmp.eq.s32.totalorder %s15, 1
    %p80 = por %p78, %p79
    %p82 = scmp.ne.s32.totalorder %s67, %s81
    %p83 = scmp.eq.s32.totalorder %s15, 0
    %p84 = por %p82, %p83
    %s85 = ssub.s32 %s9, %s16
    %p86 = scmp.eq.s32.totalorder %s85, 0
    %s88 = sadd.s32 %s87, 1
    %s89 = scalar_select %p86, %s87, %s88
    %p92 = pneg %p86
    %p93 = scmp.eq.s32.totalorder %s9, 1
    %p94 = por %p92, %p93
    %p95 = scmp.ne.s32.totalorder %s87, %s90
    %p96 = scmp.eq.s32.totalorder %s9, 0
    %p97 = por %p95, %p96
    %p98 = scmp.ne.s32.totalorder %s87, %s90
    %p99 = scmp.eq.s32.totalorder %s14, 1
    %p100 = por %p98, %p99
    %p101 = scmp.ne.s32.totalorder %s90, %s91
    %p102 = scmp.eq.s32.totalorder %s14, 0
    %p103 = por %p101, %p102
    %p104 = scmp.ne.s32.totalorder %s90, %s91
    %p105 = scmp.eq.s32.totalorder %s15, 1
    %p106 = por %p104, %p105
    %p108 = scmp.ne.s32.totalorder %s91, %s107
    %p109 = scmp.eq.s32.totalorder %s15, 0
    %p110 = por %p108, %p109
    %p111 = scmp.le.s32.totalorder 1, %s9
    %p112 = scmp.lt.s32.totalorder %s9, 3
    %p113 = pnand %p111, %p112
    %p114 = pneg %p113
    // Predicated region
    $region9: #{pillar_cross_attention_forward.1} parent=5 // pred_check
      _
    $region10: #{pillar_cross_attention_forward.1} parent=5 // pred_check_branch
      %116 = sbr.rel (%p113) target = $region12
    $region11: #{pillar_cross_attention_forward.1} parent=5 // pred_region
      %s117 = ssub.s32 %s9, 1
      // Predicated region
      $region13: #{pillar_cross_attention_forward.1} parent=11 // pred_check
        %p118 = pneg %p56
      $region14: #{pillar_cross_attention_forward.1} parent=11 // pred_check_branch
        %120 = sbr.rel (%p118) target = $region16
      $region15: #{pillar_cross_attention_forward.1} parent=11 // pred_region
        _
      $region16: #{pillar_cross_attention_forward.1} parent=11 // pred_fallthru
        _
      // Predicated region
      $region17: #{pillar_cross_attention_forward.1} parent=11 // pred_check
        %p121 = pneg %p77
      $region18: #{pillar_cross_attention_forward.1} parent=11 // pred_check_branch
        %123 = sbr.rel (%p121) target = $region20
      $region19: #{pillar_cross_attention_forward.1} parent=11 // pred_region
        _
      $region20: #{pillar_cross_attention_forward.1} parent=11 // pred_fallthru
        _
    $region12: #{pillar_cross_attention_forward.1} parent=5 // pred_fallthru
      _
    %p124 = scmp.lt.s32.totalorder %s9, 2
    // Predicated region
    $region21: #{pillar_cross_attention_forward.1} parent=5 // pred_check
      %p125 = pneg %p124
    $region22: #{pillar_cross_attention_forward.1} parent=5 // pred_check_branch
      %127 = sbr.rel (%p125) target = $region24
    $region23: #{pillar_cross_attention_forward.1} parent=5 // pred_region
      // Predicated region
      $region25: #{pillar_cross_attention_forward.1} parent=23 // pred_check
        %p128 = pneg %p29
      $region26: #{pillar_cross_attention_forward.1} parent=23 // pred_check_branch
        %130 = sbr.rel (%p128) target = $region28
      $region27: #{pillar_cross_attention_forward.1} parent=23 // pred_region
        %p131 = scmp.lt.s32.totalorder %s9, 1
        %s132 = scalar_select %p131, %s9, 1
        %s133 = smul.addr %s132, 18
        %s134 = smul.addr %s133, 4
        %s135 = scalar_lea.vmem %s0, %s134
      $region28: #{pillar_cross_attention_forward.1} parent=23 // pred_fallthru
        _
    $region24: #{pillar_cross_attention_forward.1} parent=5 // pred_fallthru
      _
    %p136 = scmp.le.s32.totalorder 1, %s9
    %p137 = scmp.lt.s32.totalorder %s9, 3
    %p138 = pnand %p136, %p137
    %p139 = pneg %p138
    // Predicated region
    $region29: #{pillar_cross_attention_forward.1} parent=5 // pred_check
      _
    $region30: #{pillar_cross_attention_forward.1} parent=5 // pred_check_branch
      %141 = sbr.rel (%p138) target = $region32
    $region31: #{pillar_cross_attention_forward.1} parent=5 // pred_region
      %s142 = ssub.s32 %s9, 1
      %p143 = scmp.lt.s32.totalorder %s14, 1
      %s144 = scalar_select %p143, %s14, 1
      %s145 = smul.addr %s144, 18
      %s146 = smul.addr %s145, 4
      %s147 = scalar_lea.vmem %s0, %s146
      %p148 = pneg %p35
      %p149 = pneg %p32
      %p150 = pneg %p56
      %p151 = pneg %p53
      %p152 = pneg %p77
      %p153 = pneg %p74
      %p154 = pneg %p103
      %p155 = pneg %p100
      %p156 = scmp.lt.s32.totalorder %s14, 1
      %s157 = scalar_select %p156, %s14, 1
      %s158 = smul.addr %s157, 18
      %s159 = smul.addr %s158, 8
      %s160 = scalar_lea.vmem %s3, %s159
      %p161 = scmp.lt.s32.totalorder %s14, 1
      %s162 = scalar_select %p161, %s14, 1
      %s163 = smul.addr %s162, 18
      %s164 = smul.addr %s163, 4
      %s165 = scalar_lea.vmem %s0, %s164
      %p166 = scmp.lt.s32.totalorder %s14, 1
      %s167 = scalar_select %p166, %s14, 1
      %s168 = smul.addr %s167, 18
      %s169 = smul.addr %s168, 8
      %s170 = scalar_lea.vmem %s3, %s169
      %v172 = vld [vmem:[%s1] sm:$0xf]
      %v173 = vld [vmem:[%s1 + $0x4] sm:$0xf]
      %v174 = vld [vmem:[%s1 + $0x8] sm:$0xf]
      %v175 = vld [vmem:[%s165] sm:$0xf]
      %v179 = vunpack.c.l.b16 %v172
      %v180 = vunpack.c.l.b16 %v173
      %v181 = vunpack.c.l.b16 %v174
      %v182 = vpack.c.b16 %v180, %v179
      %v183 = vpack.c.b16 %v181, %v181
      %vm184 = vcmask 64512
      %v186 = vsel %vm184, %v182, 0
      %v189 = vsel %vm184, %v183, 0
      %vm191 = vcmask 1043456
      %v193 = vsel %vm191, %v175, 0
      %195 = vmatprep.subr.bf16.mxu0 0
      %196 = vmatpush1.bf16.msra.mxu0 %v193
      %197 = vmatprep.subr.bf16.mxu0 0
      %198 = vmatpush1.bf16.msra.mxu0 0
      %199 = vmatprep.subr.bf16.mxu0 0
      %200 = vmatpush1.bf16.msra.mxu0 0
      %201 = vmatprep.subr.bf16.mxu0 0
      %202 = vmatpush1.bf16.msra.mxu0 0
      %203 = vmatprep.subr.bf16.mxu0 0
      %204 = vmatpush1.bf16.msra.mxu0 0
      %205 = vmatprep.subr.bf16.mxu0 0
      %206 = vmatpush1.bf16.msra.mxu0 0
      %207 = vmatprep.subr.bf16.mxu0 0
      %208 = vmatpush1.bf16.msra.mxu0 0
      %209 = vmatprep.subr.bf16.mxu0 0
      %210 = vmatpush1.bf16.msra.mxu0 0
      %211 = vmatprep.subr.bf16.mxu0 0
      %212 = vmatpush1.bf16.msra.mxu0 0
      %213 = vmatprep.subr.bf16.mxu0 0
      %214 = vmatpush1.bf16.msra.mxu0 0
      %215 = vmatprep.subr.bf16.mxu0 0
      %216 = vmatpush1.bf16.msra.mxu0 0
      %217 = vmatprep.subr.bf16.mxu0 0
      %218 = vmatpush1.bf16.msra.mxu0 0
      %219 = vmatprep.subr.bf16.mxu0 0
      %220 = vmatpush1.bf16.msra.mxu0 0
      %221 = vmatprep.subr.bf16.mxu0 0
      %222 = vmatpush1.bf16.msra.mxu0 0
      %223 = vmatprep.subr.bf16.mxu0 0
      %224 = vmatpush1.bf16.msra.mxu0 0
      %225 = vmatprep.subr.bf16.mxu0 0
      %226 = vmatpush1.bf16.msra.mxu0 0
      %227 = vmatprep.mubr.bf16.mxu0 0
      %228 = vmatmul.mubr.bf16.gmra.mrb[0].mxu0 %v186
      %v229 = vpop.f32.mrb[0].mxu0
      %v230 = vadd.f32 0.0, %v229
      %v231 = vpop.f32.mrb[0].mxu0
      %v232 = vpop.f32.mrb[0].mxu0
      %v233 = vadd.f32 0.0, %v232
      %v234 = vpop.f32.mrb[0].mxu0
      %235 = vmatprep.mubr.bf16.mxu0 0
      %236 = vmatmul.mubr.bf16.gmra.mrb[0].mxu0 %v189
      %v237 = vpop.f32.mrb[0].mxu0
      %v238 = vadd.f32 0.0, %v237
      %v239 = vpop.f32.mrb[0].mxu0
      %v240 = vpop.f32.mrb[0].mxu0
      %v241 = vpop.f32.mrb[0].mxu0
      %242 = vdwg.mxu0
      %v243 = vld [vmem:[%s2] sm:$0xff]
      %v244 = vadd.f32 %v230, %v243
      %v245 = vld [vmem:[%s2 + $0x48] sm:$0xff]
      %v246 = vadd.f32 %v233, %v245
      %v247 = vld [vmem:[%s2 + $0x90] sm:$0xff]
      %v248 = vadd.f32 %v238, %v247
      %v249 = vld [vmem:[%s165 + $0x8] sm:$0xf]
      %v251 = vsel %vm191, %v249, 0
      %253 = vmatprep.subr.bf16.mxu0 0
      %254 = vmatpush1.bf16.msra.mxu0 %v251
      %255 = vmatprep.subr.bf16.mxu0 0
      %256 = vmatpush1.bf16.msra.mxu0 0
      %257 = vmatprep.subr.bf16.mxu0 0
      %258 = vmatpush1.bf16.msra.mxu0 0
      %259 = vmatprep.subr.bf16.mxu0 0
      %260 = vmatpush1.bf16.msra.mxu0 0
      %261 = vmatprep.subr.bf16.mxu0 0
      %262 = vmatpush1.bf16.msra.mxu0 0
      %263 = vmatprep.subr.bf16.mxu0 0
      %264 = vmatpush1.bf16.msra.mxu0 0
      %265 = vmatprep.subr.bf16.mxu0 0
      %266 = vmatpush1.bf16.msra.mxu0 0
      %267 = vmatprep.subr.bf16.mxu0 0
      %268 = vmatpush1.bf16.msra.mxu0 0
      %269 = vmatprep.subr.bf16.mxu0 0
      %270 = vmatpush1.bf16.msra.mxu0 0
      %271 = vmatprep.subr.bf16.mxu0 0
      %272 = vmatpush1.bf16.msra.mxu0 0
      %273 = vmatprep.subr.bf16.mxu0 0
      %274 = vmatpush1.bf16.msra.mxu0 0
      %275 = vmatprep.subr.bf16.mxu0 0
      %276 = vmatpush1.bf16.msra.mxu0 0
      %277 = vmatprep.subr.bf16.mxu0 0
      %278 = vmatpush1.bf16.msra.mxu0 0
      %279 = vmatprep.subr.bf16.mxu0 0
      %280 = vmatpush1.bf16.msra.mxu0 0
      %281 = vmatprep.subr.bf16.mxu0 0
      %282 = vmatpush1.bf16.msra.mxu0 0
      %283 = vmatprep.subr.bf16.mxu0 0
      %284 = vmatpush1.bf16.msra.mxu0 0
      %285 = vmatprep.mubr.bf16.mxu0 0
      %286 = vmatmul.mubr.bf16.gmra.mrb[0].mxu0 %v186
      %v287 = vpop.f32.mrb[0].mxu0
      %v288 = vadd.f32 0.0, %v287
      %v289 = vpop.f32.mrb[0].mxu0
      %v290 = vpop.f32.mrb[0].mxu0
      %v291 = vadd.f32 0.0, %v290
      %v292 = vpop.f32.mrb[0].mxu0
      %293 = vmatprep.mubr.bf16.mxu0 0
      %294 = vmatmul.mubr.bf16.gmra.mrb[0].mxu0 %v189
      %v295 = vpop.f32.mrb[0].mxu0
      %v296 = vadd.f32 0.0, %v295
      %v297 = vpop.f32.mrb[0].mxu0
      %v298 = vpop.f32.mrb[0].mxu0
      %v299 = vpop.f32.mrb[0].mxu0
      %300 = vdwg.mxu0
      %v301 = vld [vmem:[%s2 + $0x8] sm:$0xff]
      %v302 = vadd.f32 %v288, %v301
      %v303 = vld [vmem:[%s2 + $0x50] sm:$0xff]
      %v304 = vadd.f32 %v291, %v303
      %v305 = vld [vmem:[%s2 + $0x98] sm:$0xff]
      %v306 = vadd.f32 %v296, %v305
      %v307 = vld [vmem:[%s165 + $0x10] sm:$0xf]
      %v309 = vsel %vm191, %v307, 0
      %311 = vmatprep.subr.bf16.mxu0 0
      %312 = vmatpush1.bf16.msra.mxu0 %v309
      %313 = vmatprep.subr.bf16.mxu0 0
      %314 = vmatpush1.bf16.msra.mxu0 0
      %315 = vmatprep.subr.bf16.mxu0 0
      %316 = vmatpush1.bf16.msra.mxu0 0
      %317 = vmatprep.subr.bf16.mxu0 0
      %318 = vmatpush1.bf16.msra.mxu0 0
      %319 = vmatprep.subr.bf16.mxu0 0
      %320 = vmatpush1.bf16.msra.mxu0 0
      %321 = vmatprep.subr.bf16.mxu0 0
      %322 = vmatpush1.bf16.msra.mxu0 0
      %323 = vmatprep.subr.bf16.mxu0 0
      %324 = vmatpush1.bf16.msra.mxu0 0
      %325 = vmatprep.subr.bf16.mxu0 0
      %326 = vmatpush1.bf16.msra.mxu0 0
      %327 = vmatprep.subr.bf16.mxu0 0
      %328 = vmatpush1.bf16.msra.mxu0 0
      %329 = vmatprep.subr.bf16.mxu0 0
      %330 = vmatpush1.bf16.msra.mxu0 0
      %331 = vmatprep.subr.bf16.mxu0 0
      %332 = vmatpush1.bf16.msra.mxu0 0
      %333 = vmatprep.subr.bf16.mxu0 0
      %334 = vmatpush1.bf16.msra.mxu0 0
      %335 = vmatprep.subr.bf16.mxu0 0
      %336 = vmatpush1.bf16.msra.mxu0 0
      %337 = vmatprep.subr.bf16.mxu0 0
      %338 = vmatpush1.bf16.msra.mxu0 0
      %339 = vmatprep.subr.bf16.mxu0 0
      %340 = vmatpush1.bf16.msra.mxu0 0
      %341 = vmatprep.subr.bf16.mxu0 0
      %342 = vmatpush1.bf16.msra.mxu0 0
      %343 = vmatprep.mubr.bf16.mxu0 0
      %344 = vmatmul.mubr.bf16.gmra.mrb[0].mxu0 %v186
      %v345 = vpop.f32.mrb[0].mxu0
      %v346 = vadd.f32 0.0, %v345
      %v347 = vpop.f32.mrb[0].mxu0
      %v348 = vpop.f32.mrb[0].mxu0
      %v349 = vadd.f32 0.0, %v348
      %v350 = vpop.f32.mrb[0].mxu0
      %351 = vmatprep.mubr.bf16.mxu0 0
      %352 = vmatmul.mubr.bf16.gmra.mrb[0].mxu0 %v189
      %v353 = vpop.f32.mrb[0].mxu0
      %v354 = vadd.f32 0.0, %v353
      %v355 = vpop.f32.mrb[0].mxu0
      %v356 = vpop.f32.mrb[0].mxu0
      %v357 = vpop.f32.mrb[0].mxu0
      %358 = vdwg.mxu0
      %v359 = vld [vmem:[%s2 + $0x10] sm:$0xff]
      %v360 = vadd.f32 %v346, %v359
      %v361 = vld [vmem:[%s2 + $0x58] sm:$0xff]
      %v362 = vadd.f32 %v349, %v361
      %v363 = vld [vmem:[%s2 + $0xa0] sm:$0xff]
      %v364 = vadd.f32 %v354, %v363
      %v365 = vld [vmem:[%s165 + $0x18] sm:$0xf]
      %v367 = vsel %vm191, %v365, 0
      %369 = vmatprep.subr.bf16.mxu0 0
      %370 = vmatpush1.bf16.msra.mxu0 %v367
      %371 = vmatprep.subr.bf16.mxu0 0
      %372 = vmatpush1.bf16.msra.mxu0 0
      %373 = vmatprep.subr.bf16.mxu0 0
      %374 = vmatpush1.bf16.msra.mxu0 0
      %375 = vmatprep.subr.bf16.mxu0 0
      %376 = vmatpush1.bf16.msra.mxu0 0
      %377 = vmatprep.subr.bf16.mxu0 0
      %378 = vmatpush1.bf16.msra.mxu0 0
      %379 = vmatprep.subr.bf16.mxu0 0
      %380 = vmatpush1.bf16.msra.mxu0 0
      %381 = vmatprep.subr.bf16.mxu0 0
      %382 = vmatpush1.bf16.msra.mxu0 0
      %383 = vmatprep.subr.bf16.mxu0 0
      %384 = vmatpush1.bf16.msra.mxu0 0
      %385 = vmatprep.subr.bf16.mxu0 0
      %386 = vmatpush1.bf16.msra.mxu0 0
      %387 = vmatprep.subr.bf16.mxu0 0
      %388 = vmatpush1.bf16.msra.mxu0 0
      %389 = vmatprep.subr.bf16.mxu0 0
      %390 = vmatpush1.bf16.msra.mxu0 0
      %391 = vmatprep.subr.bf16.mxu0 0
      %392 = vmatpush1.bf16.msra.mxu0 0
      %393 = vmatprep.subr.bf16.mxu0 0
      %394 = vmatpush1.bf16.msra.mxu0 0
      %395 = vmatprep.subr.bf16.mxu0 0
      %396 = vmatpush1.bf16.msra.mxu0 0
      %397 = vmatprep.subr.bf16.mxu0 0
      %398 = vmatpush1.bf16.msra.mxu0 0
      %399 = vmatprep.subr.bf16.mxu0 0
      %400 = vmatpush1.bf16.msra.mxu0 0
      %401 = vmatprep.mubr.bf16.mxu0 0
      %402 = vmatmul.mubr.bf16.gmra.mrb[0].mxu0 %v186
      %v403 = vpop.f32.mrb[0].mxu0
      %v404 = vadd.f32 0.0, %v403
      %v405 = vpop.f32.mrb[0].mxu0
      %v406 = vpop.f32.mrb[0].mxu0
      %v407 = vadd.f32 0.0, %v406
      %v408 = vpop.f32.mrb[0].mxu0
      %409 = vmatprep.mubr.bf16.mxu0 0
      %410 = vmatmul.mubr.bf16.gmra.mrb[0].mxu0 %v189
      %v411 = vpop.f32.mrb[0].mxu0
      %v412 = vadd.f32 0.0, %v411
      %v413 = vpop.f32.mrb[0].mxu0
      %v414 = vpop.f32.mrb[0].mxu0
      %v415 = vpop.f32.mrb[0].mxu0
      %416 = vdwg.mxu0
      %v417 = vld [vmem:[%s2 + $0x18] sm:$0xff]
      %v418 = vadd.f32 %v404, %v417
      %v419 = vld [vmem:[%s2 + $0x60] sm:$0xff]
      %v420 = vadd.f32 %v407, %v419
      %v421 = vld [vmem:[%s2 + $0xa8] sm:$0xff]
      %v422 = vadd.f32 %v412, %v421
      %v423 = vld [vmem:[%s165 + $0x20] sm:$0xf]
      %v425 = vsel %vm191, %v423, 0
      %427 = vmatprep.subr.bf16.mxu0 0
      %428 = vmatpush1.bf16.msra.mxu0 %v425
      %429 = vmatprep.subr.bf16.mxu0 0
      %430 = vmatpush1.bf16.msra.mxu0 0
      %431 = vmatprep.subr.bf16.mxu0 0
      %432 = vmatpush1.bf16.msra.mxu0 0
      %433 = vmatprep.subr.bf16.mxu0 0
      %434 = vmatpush1.bf16.msra.mxu0 0
      %435 = vmatprep.subr.bf16.mxu0 0
      %436 = vmatpush1.bf16.msra.mxu0 0
      %437 = vmatprep.subr.bf16.mxu0 0
      %438 = vmatpush1.bf16.msra.mxu0 0
      %439 = vmatprep.subr.bf16.mxu0 0
      %440 = vmatpush1.bf16.msra.mxu0 0
      %441 = vmatprep.subr.bf16.mxu0 0
      %442 = vmatpush1.bf16.msra.mxu0 0
      %443 = vmatprep.subr.bf16.mxu0 0
      %444 = vmatpush1.bf16.msra.mxu0 0
      %445 = vmatprep.subr.bf16.mxu0 0
      %446 = vmatpush1.bf16.msra.mxu0 0
      %447 = vmatprep.subr.bf16.mxu0 0
      %448 = vmatpush1.bf16.msra.mxu0 0
      %449 = vmatprep.subr.bf16.mxu0 0
      %450 = vmatpush1.bf16.msra.mxu0 0
      %451 = vmatprep.subr.bf16.mxu0 0
      %452 = vmatpush1.bf16.msra.mxu0 0
      %453 = vmatprep.subr.bf16.mxu0 0
      %454 = vmatpush1.bf16.msra.mxu0 0
      %455 = vmatprep.subr.bf16.mxu0 0
      %456 = vmatpush1.bf16.msra.mxu0 0
      %457 = vmatprep.subr.bf16.mxu0 0
      %458 = vmatpush1.bf16.msra.mxu0 0
      %459 = vmatprep.mubr.bf16.mxu0 0
      %460 = vmatmul.mubr.bf16.gmra.mrb[0].mxu0 %v186
      %v461 = vpop.f32.mrb[0].mxu0
      %v462 = vadd.f32 0.0, %v461
      %v463 = vpop.f32.mrb[0].mxu0
      %v464 = vpop.f32.mrb[0].mxu0
      %v465 = vadd.f32 0.0, %v464
      %v466 = vpop.f32.mrb[0].mxu0
      %467 = vmatprep.mubr.bf16.mxu0 0
      %468 = vmatmul.mubr.bf16.gmra.mrb[0].mxu0 %v189
      %v469 = vpop.f32.mrb[0].mxu0
      %v470 = vadd.f32 0.0, %v469
      %v471 = vpop.f32.mrb[0].mxu0
      %v472 = vpop.f32.mrb[0].mxu0
      %v473 = vpop.f32.mrb[0].mxu0
      %474 = vdwg.mxu0
      %v475 = vld [vmem:[%s2 + $0x20] sm:$0xff]
      %v476 = vadd.f32 %v462, %v475
      %v477 = vld [vmem:[%s2 + $0x68] sm:$0xff]
      %v478 = vadd.f32 %v465, %v477
      %v479 = vld [vmem:[%s2 + $0xb0] sm:$0xff]
      %v480 = vadd.f32 %v470, %v479
      %v481 = vld [vmem:[%s165 + $0x28] sm:$0xf]
      %v483 = vsel %vm191, %v481, 0
      %485 = vmatprep.subr.bf16.mxu0 0
      %486 = vmatpush1.bf16.msra.mxu0 %v483
      %487 = vmatprep.subr.bf16.mxu0 0
      %488 = vmatpush1.bf16.msra.mxu0 0
      %489 = vmatprep.subr.bf16.mxu0 0
      %490 = vmatpush1.bf16.msra.mxu0 0
      %491 = vmatprep.subr.bf16.mxu0 0
      %492 = vmatpush1.bf16.msra.mxu0 0
      %493 = vmatprep.subr.bf16.mxu0 0
      %494 = vmatpush1.bf16.msra.mxu0 0
      %495 = vmatprep.subr.bf16.mxu0 0
      %496 = vmatpush1.bf16.msra.mxu0 0
      %497 = vmatprep.subr.bf16.mxu0 0
      %498 = vmatpush1.bf16.msra.mxu0 0
      %499 = vmatprep.subr.bf16.mxu0 0
      %500 = vmatpush1.bf16.msra.mxu0 0
      %501 = vmatprep.subr.bf16.mxu0 0
      %502 = vmatpush1.bf16.msra.mxu0 0
      %503 = vmatprep.subr.bf16.mxu0 0
      %504 = vmatpush1.bf16.msra.mxu0 0
      %505 = vmatprep.subr.bf16.mxu0 0
      %506 = vmatpush1.bf16.msra.mxu0 0
      %507 = vmatprep.subr.bf16.mxu0 0
      %508 = vmatpush1.bf16.msra.mxu0 0
      %509 = vmatprep.subr.bf16.mxu0 0
      %510 = vmatpush1.bf16.msra.mxu0 0
      %511 = vmatprep.subr.bf16.mxu0 0
      %512 = vmatpush1.bf16.msra.mxu0 0
      %513 = vmatprep.subr.bf16.mxu0 0
      %514 = vmatpush1.bf16.msra.mxu0 0
      %515 = vmatprep.subr.bf16.mxu0 0
      %516 = vmatpush1.bf16.msra.mxu0 0
      %517 = vmatprep.mubr.bf16.mxu0 0
      %518 = vmatmul.mubr.bf16.gmra.mrb[0].mxu0 %v186
      %v519 = vpop.f32.mrb[0].mxu0
      %v520 = vadd.f32 0.0, %v519
      %v521 = vpop.f32.mrb[0].mxu0
      %v522 = vpop.f32.mrb[0].mxu0
      %v523 = vadd.f32 0.0, %v522
      %v524 = vpop.f32.mrb[0].mxu0
      %525 = vmatprep.mubr.bf16.mxu0 0
      %526 = vmatmul.mubr.bf16.gmra.mrb[0].mxu0 %v189
      %v527 = vpop.f32.mrb[0].mxu0
      %v528 = vadd.f32 0.0, %v527
      %v529 = vpop.f32.mrb[0].mxu0
      %v530 = vpop.f32.mrb[0].mxu0
      %v531 = vpop.f32.mrb[0].mxu0
      %532 = vdwg.mxu0
      %v533 = vld [vmem:[%s2 + $0x28] sm:$0xff]
      %v534 = vadd.f32 %v520, %v533
      %v535 = vld [vmem:[%s2 + $0x70] sm:$0xff]
      %v536 = vadd.f32 %v523, %v535
      %v537 = vld [vmem:[%s2 + $0xb8] sm:$0xff]
      %v538 = vadd.f32 %v528, %v537
      %v539 = vld [vmem:[%s165 + $0x30] sm:$0xf]
      %v541 = vsel %vm191, %v539, 0
      %543 = vmatprep.subr.bf16.mxu0 0
      %544 = vmatpush1.bf16.msra.mxu0 %v541
      %545 = vmatprep.subr.bf16.mxu0 0
      %546 = vmatpush1.bf16.msra.mxu0 0
      %547 = vmatprep.subr.bf16.mxu0 0
      %548 = vmatpush1.bf16.msra.mxu0 0
      %549 = vmatprep.subr.bf16.mxu0 0
      %550 = vmatpush1.bf16.msra.mxu0 0
      %551 = vmatprep.subr.bf16.mxu0 0
      %552 = vmatpush1.bf16.msra.mxu0 0
      %553 = vmatprep.subr.bf16.mxu0 0
      %554 = vmatpush1.bf16.msra.mxu0 0
      %555 = vmatprep.subr.bf16.mxu0 0
      %556 = vmatpush1.bf16.msra.mxu0 0
      %557 = vmatprep.subr.bf16.mxu0 0
      %558 = vmatpush1.bf16.msra.mxu0 0
      %559 = vmatprep.subr.bf16.mxu0 0
      %560 = vmatpush1.bf16.msra.mxu0 0
      %561 = vmatprep.subr.bf16.mxu0 0
      %562 = vmatpush1.bf16.msra.mxu0 0
      %563 = vmatprep.subr.bf16.mxu0 0
      %564 = vmatpush1.bf16.msra.mxu0 0
      %565 = vmatprep.subr.bf16.mxu0 0
      %566 = vmatpush1.bf16.msra.mxu0 0
      %567 = vmatprep.subr.bf16.mxu0 0
      %568 = vmatpush1.bf16.msra.mxu0 0
      %569 = vmatprep.subr.bf16.mxu0 0
      %570 = vmatpush1.bf16.msra.mxu0 0
      %571 = vmatprep.subr.bf16.mxu0 0
      %572 = vmatpush1.bf16.msra.mxu0 0
      %573 = vmatprep.subr.bf16.mxu0 0
      %574 = vmatpush1.bf16.msra.mxu0 0
      %575 = vmatprep.mubr.bf16.mxu0 0
      %576 = vmatmul.mubr.bf16.gmra.mrb[0].mxu0 %v186
      %v577 = vpop.f32.mrb[0].mxu0
      %v578 = vadd.f32 0.0, %v577
      %v579 = vpop.f32.mrb[0].mxu0
      %v580 = vpop.f32.mrb[0].mxu0
      %v581 = vadd.f32 0.0, %v580
      %v582 = vpop.f32.mrb[0].mxu0
      %583 = vmatprep.mubr.bf16.mxu0 0
      %584 = vmatmul.mubr.bf16.gmra.mrb[0].mxu0 %v189
      %v585 = vpop.f32.mrb[0].mxu0
      %v586 = vadd.f32 0.0, %v585
      %v587 = vpop.f32.mrb[0].mxu0
      %v588 = vpop.f32.mrb[0].mxu0
      %v589 = vpop.f32.mrb[0].mxu0
      %590 = vdwg.mxu0
      %v591 = vld [vmem:[%s2 + $0x30] sm:$0xff]
      %v592 = vadd.f32 %v578, %v591
      %v593 = vld [vmem:[%s2 + $0x78] sm:$0xff]
      %v594 = vadd.f32 %v581, %v593
      %v595 = vld [vmem:[%s2 + $0xc0] sm:$0xff]
      %v596 = vadd.f32 %v586, %v595
      %v597 = vld [vmem:[%s165 + $0x38] sm:$0xf]
      %v599 = vsel %vm191, %v597, 0
      %601 = vmatprep.subr.bf16.mxu0 0
      %602 = vmatpush1.bf16.msra.mxu0 %v599
      %603 = vmatprep.subr.bf16.mxu0 0
      %604 = vmatpush1.bf16.msra.mxu0 0
      %605 = vmatprep.subr.bf16.mxu0 0
      %606 = vmatpush1.bf16.msra.mxu0 0
      %607 = vmatprep.subr.bf16.mxu0 0
      %608 = vmatpush1.bf16.msra.mxu0 0
      %609 = vmatprep.subr.bf16.mxu0 0
      %610 = vmatpush1.bf16.msra.mxu0 0
      %611 = vmatprep.subr.bf16.mxu0 0
      %612 = vmatpush1.bf16.msra.mxu0 0
      %613 = vmatprep.subr.bf16.mxu0 0
      %614 = vmatpush1.bf16.msra.mxu0 0
      %615 = vmatprep.subr.bf16.mxu0 0
      %616 = vmatpush1.bf16.msra.mxu0 0
      %617 = vmatprep.subr.bf16.mxu0 0
      %618 = vmatpush1.bf16.msra.mxu0 0
      %619 = vmatprep.subr.bf16.mxu0 0
      %620 = vmatpush1.bf16.msra.mxu0 0
      %621 = vmatprep.subr.bf16.mxu0 0
      %622 = vmatpush1.bf16.msra.mxu0 0
      %623 = vmatprep.subr.bf16.mxu0 0
      %624 = vmatpush1.bf16.msra.mxu0 0
      %625 = vmatprep.subr.bf16.mxu0 0
      %626 = vmatpush1.bf16.msra.mxu0 0
      %627 = vmatprep.subr.bf16.mxu0 0
      %628 = vmatpush1.bf16.msra.mxu0 0
      %629 = vmatprep.subr.bf16.mxu0 0
      %630 = vmatpush1.bf16.msra.mxu0 0
      %631 = vmatprep.subr.bf16.mxu0 0
      %632 = vmatpush1.bf16.msra.mxu0 0
      %633 = vmatprep.mubr.bf16.mxu0 0
      %634 = vmatmul.mubr.bf16.gmra.mrb[0].mxu0 %v186
      %v635 = vpop.f32.mrb[0].mxu0
      %v636 = vadd.f32 0.0, %v635
      %v637 = vpop.f32.mrb[0].mxu0
      %v638 = vpop.f32.mrb[0].mxu0
      %v639 = vadd.f32 0.0, %v638
      %v640 = vpop.f32.mrb[0].mxu0
      %641 = vmatprep.mubr.bf16.mxu0 0
      %642 = vmatmul.mubr.bf16.gmra.mrb[0].mxu0 %v189
      %v643 = vpop.f32.mrb[0].mxu0
      %v644 = vadd.f32 0.0, %v643
      %v645 = vpop.f32.mrb[0].mxu0
      %v646 = vpop.f32.mrb[0].mxu0
      %v647 = vpop.f32.mrb[0].mxu0
      %648 = vdwg.mxu0
      %v649 = vld [vmem:[%s2 + $0x38] sm:$0xff]
      %v650 = vadd.f32 %v636, %v649
      %v651 = vld [vmem:[%s2 + $0x80] sm:$0xff]
      %v652 = vadd.f32 %v639, %v651
      %v653 = vld [vmem:[%s2 + $0xc8] sm:$0xff]
      %v654 = vadd.f32 %v644, %v653
      %v655 = vld [vmem:[%s165 + $0x40] sm:$0xf]
      %v657 = vsel %vm191, %v655, 0
      %659 = vmatprep.subr.bf16.mxu0 0
      %660 = vmatpush1.bf16.msra.mxu0 %v657
      %661 = vmatprep.subr.bf16.mxu0 0
      %662 = vmatpush1.bf16.msra.mxu0 0
      %663 = vmatprep.subr.bf16.mxu0 0
      %664 = vmatpush1.bf16.msra.mxu0 0
      %665 = vmatprep.subr.bf16.mxu0 0
      %666 = vmatpush1.bf16.msra.mxu0 0
      %667 = vmatprep.subr.bf16.mxu0 0
      %668 = vmatpush1.bf16.msra.mxu0 0
      %669 = vmatprep.subr.bf16.mxu0 0
      %670 = vmatpush1.bf16.msra.mxu0 0
      %671 = vmatprep.subr.bf16.mxu0 0
      %672 = vmatpush1.bf16.msra.mxu0 0
      %673 = vmatprep.subr.bf16.mxu0 0
      %674 = vmatpush1.bf16.msra.mxu0 0
      %675 = vmatprep.subr.bf16.mxu0 0
      %676 = vmatpush1.bf16.msra.mxu0 0
      %677 = vmatprep.subr.bf16.mxu0 0
      %678 = vmatpush1.bf16.msra.mxu0 0
      %679 = vmatprep.subr.bf16.mxu0 0
      %680 = vmatpush1.bf16.msra.mxu0 0
      %681 = vmatprep.subr.bf16.mxu0 0
      %682 = vmatpush1.bf16.msra.mxu0 0
      %683 = vmatprep.subr.bf16.mxu0 0
      %684 = vmatpush1.bf16.msra.mxu0 0
      %685 = vmatprep.subr.bf16.mxu0 0
      %686 = vmatpush1.bf16.msra.mxu0 0
      %687 = vmatprep.subr.bf16.mxu0 0
      %688 = vmatpush1.bf16.msra.mxu0 0
      %689 = vmatprep.subr.bf16.mxu0 0
      %690 = vmatpush1.bf16.msra.mxu0 0
      %691 = vmatprep.mubr.bf16.mxu0 0
      %692 = vmatmul.mubr.bf16.gmra.mrb[0].mxu0 %v186
      %v693 = vpop.f32.mrb[0].mxu0
      %v694 = vadd.f32 0.0, %v693
      %v695 = vpop.f32.mrb[0].mxu0
      %v696 = vpop.f32.mrb[0].mxu0
      %v697 = vadd.f32 0.0, %v696
      %v698 = vpop.f32.mrb[0].mxu0
      %699 = vmatprep.mubr.bf16.mxu0 0
      %700 = vmatmul.mubr.bf16.gmra.mrb[0].mxu0 %v189
      %v701 = vpop.f32.mrb[0].mxu0
      %v702 = vadd.f32 0.0, %v701
      %v703 = vpop.f32.mrb[0].mxu0
      %v704 = vpop.f32.mrb[0].mxu0
      %v705 = vpop.f32.mrb[0].mxu0
      %706 = vdwg.mxu0
      %v707 = vld [vmem:[%s2 + $0x40] sm:$0xff]
      %v708 = vadd.f32 %v694, %v707
      %v709 = vld [vmem:[%s2 + $0x88] sm:$0xff]
      %v710 = vadd.f32 %v697, %v709
      %v711 = vld [vmem:[%s2 + $0xd0] sm:$0xff]
      %v712 = vadd.f32 %v702, %v711
      %v713 = vmul.f32 %v244, %v246
      %v714 = vrot.slane %v713, 4
      %v715 = vadd.f32 %v713, %v714
      %v716 = vrot.slane %v715, 6
      %v717 = vadd.f32 %v715, %v716
      %v718 = vrot.slane %v717, 7
      %v719 = vadd.f32 %v717, %v718
      %v720 = vmul.f32 %v244, %v304
      %v721 = vrot.slane %v720, 4
      %v722 = vadd.f32 %v720, %v721
      %v723 = vrot.slane %v722, 6
      %v724 = vadd.f32 %v722, %v723
      %v725 = vrot.slane %v724, 7
      %v726 = vadd.f32 %v724, %v725
      %v727 = vmul.f32 %v244, %v362
      %v728 = vrot.slane %v727, 4
      %v729 = vadd.f32 %v727, %v728
      %v730 = vrot.slane %v729, 6
      %v731 = vadd.f32 %v729, %v730
      %v732 = vrot.slane %v731, 7
      %v733 = vadd.f32 %v731, %v732
      %v734 = vmul.f32 %v244, %v420
      %v735 = vrot.slane %v734, 4
      %v736 = vadd.f32 %v734, %v735
      %v737 = vrot.slane %v736, 6
      %v738 = vadd.f32 %v736, %v737
      %v739 = vrot.slane %v738, 7
      %v740 = vadd.f32 %v738, %v739
      %v741 = vmul.f32 %v244, %v478
      %v742 = vrot.slane %v741, 4
      %v743 = vadd.f32 %v741, %v742
      %v744 = vrot.slane %v743, 6
      %v745 = vadd.f32 %v743, %v744
      %v746 = vrot.slane %v745, 7
      %v747 = vadd.f32 %v745, %v746
      %v748 = vmul.f32 %v244, %v536
      %v749 = vrot.slane %v748, 4
      %v750 = vadd.f32 %v748, %v749
      %v751 = vrot.slane %v750, 6
      %v752 = vadd.f32 %v750, %v751
      %v753 = vrot.slane %v752, 7
      %v754 = vadd.f32 %v752, %v753
      %v755 = vmul.f32 %v244, %v594
      %v756 = vrot.slane %v755, 4
      %v757 = vadd.f32 %v755, %v756
      %v758 = vrot.slane %v757, 6
      %v759 = vadd.f32 %v757, %v758
      %v760 = vrot.slane %v759, 7
      %v761 = vadd.f32 %v759, %v760
      %v762 = vmul.f32 %v244, %v652
      %v763 = vrot.slane %v762, 4
      %v764 = vadd.f32 %v762, %v763
      %v765 = vrot.slane %v764, 6
      %v766 = vadd.f32 %v764, %v765
      %v767 = vrot.slane %v766, 7
      %v768 = vadd.f32 %v766, %v767
      %v769 = vmul.f32 %v244, %v710
      %v770 = vrot.slane %v769, 4
      %v771 = vadd.f32 %v769, %v770
      %v772 = vrot.slane %v771, 6
      %v773 = vadd.f32 %v771, %v772
      %v774 = vrot.slane %v773, 7
      %v775 = vadd.f32 %v773, %v774
      %v776 = vmax.f32 %v719, %v726
      %v777 = vmax.f32 %v776, %v733
      %v778 = vmax.f32 %v777, %v740
      %v779 = vmax.f32 %v778, %v747
      %v780 = vmax.f32 %v779, %v754
      %v781 = vmax.f32 %v780, %v761
      %v782 = vmax.f32 %v781, %v768
      %v783 = vmax.f32 %v782, %v775
      %v784 = vsub.f32 %v719, %v783
      %v785 = vmul.f32 %v784, 1.442695
      %v786 = vpow.pop %v785
      %v787 = vmul.f32 %v786, %v248
      %v788 = vsub.f32 %v726, %v783
      %v789 = vmul.f32 %v788, 1.442695
      %v790 = vpow.pop %v789
      %v791 = vadd.f32 %v786, %v790
      %v792 = vmul.f32 %v790, %v306
      %v793 = vadd.f32 %v787, %v792
      %v794 = vsub.f32 %v733, %v783
      %v795 = vmul.f32 %v794, 1.442695
      %v796 = vpow.pop %v795
      %v797 = vadd.f32 %v791, %v796
      %v798 = vmul.f32 %v796, %v364
      %v799 = vadd.f32 %v793, %v798
      %v800 = vsub.f32 %v740, %v783
      %v801 = vmul.f32 %v800, 1.442695
      %v802 = vpow.pop %v801
      %v803 = vadd.f32 %v797, %v802
      %v804 = vmul.f32 %v802, %v422
      %v805 = vadd.f32 %v799, %v804
      %v806 = vsub.f32 %v747, %v783
      %v807 = vmul.f32 %v806, 1.442695
      %v808 = vpow.pop %v807
      %v809 = vadd.f32 %v803, %v808
      %v810 = vmul.f32 %v808, %v480
      %v811 = vadd.f32 %v805, %v810
      %v812 = vsub.f32 %v754, %v783
      %v813 = vmul.f32 %v812, 1.442695
      %v814 = vpow.pop %v813
      %v815 = vadd.f32 %v809, %v814
      %v816 = vmul.f32 %v814, %v538
      %v817 = vadd.f32 %v811, %v816
      %v818 = vsub.f32 %v761, %v783
      %v819 = vmul.f32 %v818, 1.442695
      %v820 = vpow.pop %v819
      %v821 = vadd.f32 %v815, %v820
      %v822 = vmul.f32 %v820, %v596
      %v823 = vadd.f32 %v817, %v822
      %v824 = vsub.f32 %v768, %v783
      %v825 = vmul.f32 %v824, 1.442695
      %v826 = vpow.pop %v825
      %v827 = vadd.f32 %v821, %v826
      %v828 = vmul.f32 %v826, %v654
      %v829 = vadd.f32 %v823, %v828
      %v830 = vsub.f32 %v775, %v783
      %v831 = vmul.f32 %v830, 1.442695
      %v832 = vpow.pop %v831
      %v833 = vadd.f32 %v827, %v832
      %v834 = vmul.f32 %v832, %v712
      %v835 = vadd.f32 %v829, %v834
      %v836 = vrcp.pop %v833
      %v837 = vmul.f32 %v835, %v836
      %838 = vst [vmem:[%s170] sm:$0xff] %v837
      %v839 = vmul.f32 %v302, %v246
      %v840 = vrot.slane %v839, 4
      %v841 = vadd.f32 %v839, %v840
      %v842 = vrot.slane %v841, 6
      %v843 = vadd.f32 %v841, %v842
      %v844 = vrot.slane %v843, 7
      %v845 = vadd.f32 %v843, %v844
      %v846 = vmul.f32 %v302, %v304
      %v847 = vrot.slane %v846, 4
      %v848 = vadd.f32 %v846, %v847
      %v849 = vrot.slane %v848, 6
      %v850 = vadd.f32 %v848, %v849
      %v851 = vrot.slane %v850, 7
      %v852 = vadd.f32 %v850, %v851
      %v853 = vmul.f32 %v302, %v362
      %v854 = vrot.slane %v853, 4
      %v855 = vadd.f32 %v853, %v854
      %v856 = vrot.slane %v855, 6
      %v857 = vadd.f32 %v855, %v856
      %v858 = vrot.slane %v857, 7
      %v859 = vadd.f32 %v857, %v858
      %v860 = vmul.f32 %v302, %v420
      %v861 = vrot.slane %v860, 4
      %v862 = vadd.f32 %v860, %v861
      %v863 = vrot.slane %v862, 6
      %v864 = vadd.f32 %v862, %v863
      %v865 = vrot.slane %v864, 7
      %v866 = vadd.f32 %v864, %v865
      %v867 = vmul.f32 %v302, %v478
      %v868 = vrot.slane %v867, 4
      %v869 = vadd.f32 %v867, %v868
      %v870 = vrot.slane %v869, 6
      %v871 = vadd.f32 %v869, %v870
      %v872 = vrot.slane %v871, 7
      %v873 = vadd.f32 %v871, %v872
      %v874 = vmul.f32 %v302, %v536
      %v875 = vrot.slane %v874, 4
      %v876 = vadd.f32 %v874, %v875
      %v877 = vrot.slane %v876, 6
      %v878 = vadd.f32 %v876, %v877
      %v879 = vrot.slane %v878, 7
      %v880 = vadd.f32 %v878, %v879
      %v881 = vmul.f32 %v302, %v594
      %v882 = vrot.slane %v881, 4
      %v883 = vadd.f32 %v881, %v882
      %v884 = vrot.slane %v883, 6
      %v885 = vadd.f32 %v883, %v884
      %v886 = vrot.slane %v885, 7
      %v887 = vadd.f32 %v885, %v886
      %v888 = vmul.f32 %v302, %v652
      %v889 = vrot.slane %v888, 4
      %v890 = vadd.f32 %v888, %v889
      %v891 = vrot.slane %v890, 6
      %v892 = vadd.f32 %v890, %v891
      %v893 = vrot.slane %v892, 7
      %v894 = vadd.f32 %v892, %v893
      %v895 = vmul.f32 %v302, %v710
      %v896 = vrot.slane %v895, 4
      %v897 = vadd.f32 %v895, %v896
      %v898 = vrot.slane %v897, 6
      %v899 = vadd.f32 %v897, %v898
      %v900 = vrot.slane %v899, 7
      %v901 = vadd.f32 %v899, %v900
      %v902 = vmax.f32 %v845, %v852
      %v903 = vmax.f32 %v902, %v859
      %v904 = vmax.f32 %v903, %v866
      %v905 = vmax.f32 %v904, %v873
      %v906 = vmax.f32 %v905, %v880
      %v907 = vmax.f32 %v906, %v887
      %v908 = vmax.f32 %v907, %v894
      %v909 = vmax.f32 %v908, %v901
      %v910 = vsub.f32 %v845, %v909
      %v911 = vmul.f32 %v910, 1.442695
      %v912 = vpow.pop %v911
      %v913 = vmul.f32 %v912, %v248
      %v914 = vsub.f32 %v852, %v909
      %v915 = vmul.f32 %v914, 1.442695
      %v916 = vpow.pop %v915
      %v917 = vadd.f32 %v912, %v916
      %v918 = vmul.f32 %v916, %v306
      %v919 = vadd.f32 %v913, %v918
      %v920 = vsub.f32 %v859, %v909
      %v921 = vmul.f32 %v920, 1.442695
      %v922 = vpow.pop %v921
      %v923 = vadd.f32 %v917, %v922
      %v924 = vmul.f32 %v922, %v364
      %v925 = vadd.f32 %v919, %v924
      %v926 = vsub.f32 %v866, %v909
      %v927 = vmul.f32 %v926, 1.442695
      %v928 = vpow.pop %v927
      %v929 = vadd.f32 %v923, %v928
      %v930 = vmul.f32 %v928, %v422
      %v931 = vadd.f32 %v925, %v930
      %v932 = vsub.f32 %v873, %v909
      %v933 = vmul.f32 %v932, 1.442695
      %v934 = vpow.pop %v933
      %v935 = vadd.f32 %v929, %v934
      %v936 = vmul.f32 %v934, %v480
      %v937 = vadd.f32 %v931, %v936
      %v938 = vsub.f32 %v880, %v909
      %v939 = vmul.f32 %v938, 1.442695
      %v940 = vpow.pop %v939
      %v941 = vadd.f32 %v935, %v940
      %v942 = vmul.f32 %v940, %v538
      %v943 = vadd.f32 %v937, %v942
      %v944 = vsub.f32 %v887, %v909
      %v945 = vmul.f32 %v944, 1.442695
      %v946 = vpow.pop %v945
      %v947 = vadd.f32 %v941, %v946
      %v948 = vmul.f32 %v946, %v596
      %v949 = vadd.f32 %v943, %v948
      %v950 = vsub.f32 %v894, %v909
      %v951 = vmul.f32 %v950, 1.442695
      %v952 = vpow.pop %v951
      %v953 = vadd.f32 %v947, %v952
      %v954 = vmul.f32 %v952, %v654
      %v955 = vadd.f32 %v949, %v954
      %v956 = vsub.f32 %v901, %v909
      %v957 = vmul.f32 %v956, 1.442695
      %v958 = vpow.pop %v957
      %v959 = vadd.f32 %v953, %v958
      %v960 = vmul.f32 %v958, %v712
      %v961 = vadd.f32 %v955, %v960
      %v962 = vrcp.pop %v959
      %v963 = vmul.f32 %v961, %v962
      %964 = vst [vmem:[%s170 + $0x10] sm:$0xff] %v963
      %v965 = vmul.f32 %v360, %v246
      %v966 = vrot.slane %v965, 4
      %v967 = vadd.f32 %v965, %v966
      %v968 = vrot.slane %v967, 6
      %v969 = vadd.f32 %v967, %v968
      %v970 = vrot.slane %v969, 7
      %v971 = vadd.f32 %v969, %v970
      %v972 = vmul.f32 %v360, %v304
      %v973 = vrot.slane %v972, 4
      %v974 = vadd.f32 %v972, %v973
      %v975 = vrot.slane %v974, 6
      %v976 = vadd.f32 %v974, %v975
      %v977 = vrot.slane %v976, 7
      %v978 = vadd.f32 %v976, %v977
      %v979 = vmul.f32 %v360, %v362
      %v980 = vrot.slane %v979, 4
      %v981 = vadd.f32 %v979, %v980
      %v982 = vrot.slane %v981, 6
      %v983 = vadd.f32 %v981, %v982
      %v984 = vrot.slane %v983, 7
      %v985 = vadd.f32 %v983, %v984
      %v986 = vmul.f32 %v360, %v420
      %v987 = vrot.slane %v986, 4
      %v988 = vadd.f32 %v986, %v987
      %v989 = vrot.slane %v988, 6
      %v990 = vadd.f32 %v988, %v989
      %v991 = vrot.slane %v990, 7
      %v992 = vadd.f32 %v990, %v991
      %v993 = vmul.f32 %v360, %v478
      %v994 = vrot.slane %v993, 4
      %v995 = vadd.f32 %v993, %v994
      %v996 = vrot.slane %v995, 6
      %v997 = vadd.f32 %v995, %v996
      %v998 = vrot.slane %v997, 7
      %v999 = vadd.f32 %v997, %v998
      %v1000 = vmul.f32 %v360, %v536
      %v1001 = vrot.slane %v1000, 4
      %v1002 = vadd.f32 %v1000, %v1001
      %v1003 = vrot.slane %v1002, 6
      %v1004 = vadd.f32 %v1002, %v1003
      %v1005 = vrot.slane %v1004, 7
      %v1006 = vadd.f32 %v1004, %v1005
      %v1007 = vmul.f32 %v360, %v594
      %v1008 = vrot.slane %v1007, 4
      %v1009 = vadd.f32 %v1007, %v1008
      %v1010 = vrot.slane %v1009, 6
      %v1011 = vadd.f32 %v1009, %v1010
      %v1012 = vrot.slane %v1011, 7
      %v1013 = vadd.f32 %v1011, %v1012
      %v1014 = vmul.f32 %v360, %v652
      %v1015 = vrot.slane %v1014, 4
      %v1016 = vadd.f32 %v1014, %v1015
      %v1017 = vrot.slane %v1016, 6
      %v1018 = vadd.f32 %v1016, %v1017
      %v1019 = vrot.slane %v1018, 7
      %v1020 = vadd.f32 %v1018, %v1019
      %v1021 = vmul.f32 %v360, %v710
      %v1022 = vrot.slane %v1021, 4
      %v1023 = vadd.f32 %v1021, %v1022
      %v1024 = vrot.slane %v1023, 6
      %v1025 = vadd.f32 %v1023, %v1024
      %v1026 = vrot.slane %v1025, 7
      %v1027 = vadd.f32 %v1025, %v1026
      %v1028 = vmax.f32 %v971, %v978
      %v1029 = vmax.f32 %v1028, %v985
      %v1030 = vmax.f32 %v1029, %v992
      %v1031 = vmax.f32 %v1030, %v999
      %v1032 = vmax.f32 %v1031, %v1006
      %v1033 = vmax.f32 %v1032, %v1013
      %v1034 = vmax.f32 %v1033, %v1020
      %v1035 = vmax.f32 %v1034, %v1027
      %v1036 = vsub.f32 %v971, %v1035
      %v1037 = vmul.f32 %v1036, 1.442695
      %v1038 = vpow.pop %v1037
      %v1039 = vmul.f32 %v1038, %v248
      %v1040 = vsub.f32 %v978, %v1035
      %v1041 = vmul.f32 %v1040, 1.442695
      %v1042 = vpow.pop %v1041
      %v1043 = vadd.f32 %v1038, %v1042
      %v1044 = vmul.f32 %v1042, %v306
      %v1045 = vadd.f32 %v1039, %v1044
      %v1046 = vsub.f32 %v985, %v1035
      %v1047 = vmul.f32 %v1046, 1.442695
      %v1048 = vpow.pop %v1047
      %v1049 = vadd.f32 %v1043, %v1048
      %v1050 = vmul.f32 %v1048, %v364
      %v1051 = vadd.f32 %v1045, %v1050
      %v1052 = vsub.f32 %v992, %v1035
      %v1053 = vmul.f32 %v1052, 1.442695
      %v1054 = vpow.pop %v1053
      %v1055 = vadd.f32 %v1049, %v1054
      %v1056 = vmul.f32 %v1054, %v422
      %v1057 = vadd.f32 %v1051, %v1056
      %v1058 = vsub.f32 %v999, %v1035
      %v1059 = vmul.f32 %v1058, 1.442695
      %v1060 = vpow.pop %v1059
      %v1061 = vadd.f32 %v1055, %v1060
      %v1062 = vmul.f32 %v1060, %v480
      %v1063 = vadd.f32 %v1057, %v1062
      %v1064 = vsub.f32 %v1006, %v1035
      %v1065 = vmul.f32 %v1064, 1.442695
      %v1066 = vpow.pop %v1065
      %v1067 = vadd.f32 %v1061, %v1066
      %v1068 = vmul.f32 %v1066, %v538
      %v1069 = vadd.f32 %v1063, %v1068
      %v1070 = vsub.f32 %v1013, %v1035
      %v1071 = vmul.f32 %v1070, 1.442695
      %v1072 = vpow.pop %v1071
      %v1073 = vadd.f32 %v1067, %v1072
      %v1074 = vmul.f32 %v1072, %v596
      %v1075 = vadd.f32 %v1069, %v1074
      %v1076 = vsub.f32 %v1020, %v1035
      %v1077 = vmul.f32 %v1076, 1.442695
      %v1078 = vpow.pop %v1077
      %v1079 = vadd.f32 %v1073, %v1078
      %v1080 = vmul.f32 %v1078, %v654
      %v1081 = vadd.f32 %v1075, %v1080
      %v1082 = vsub.f32 %v1027, %v1035
      %v1083 = vmul.f32 %v1082, 1.442695
      %v1084 = vpow.pop %v1083
      %v1085 = vadd.f32 %v1079, %v1084
      %v1086 = vmul.f32 %v1084, %v712
      %v1087 = vadd.f32 %v1081, %v1086
      %v1088 = vrcp.pop %v1085
      %v1089 = vmul.f32 %v1087, %v1088
      %1090 = vst [vmem:[%s170 + $0x20] sm:$0xff] %v1089
      %v1091 = vmul.f32 %v418, %v246
      %v1092 = vrot.slane %v1091, 4
      %v1093 = vadd.f32 %v1091, %v1092
      %v1094 = vrot.slane %v1093, 6
      %v1095 = vadd.f32 %v1093, %v1094
      %v1096 = vrot.slane %v1095, 7
      %v1097 = vadd.f32 %v1095, %v1096
      %v1098 = vmul.f32 %v418, %v304
      %v1099 = vrot.slane %v1098, 4
      %v1100 = vadd.f32 %v1098, %v1099
      %v1101 = vrot.slane %v1100, 6
      %v1102 = vadd.f32 %v1100, %v1101
      %v1103 = vrot.slane %v1102, 7
      %v1104 = vadd.f32 %v1102, %v1103
      %v1105 = vmul.f32 %v418, %v362
      %v1106 = vrot.slane %v1105, 4
      %v1107 = vadd.f32 %v1105, %v1106
      %v1108 = vrot.slane %v1107, 6
      %v1109 = vadd.f32 %v1107, %v1108
      %v1110 = vrot.slane %v1109, 7
      %v1111 = vadd.f32 %v1109, %v1110
      %v1112 = vmul.f32 %v418, %v420
      %v1113 = vrot.slane %v1112, 4
      %v1114 = vadd.f32 %v1112, %v1113
      %v1115 = vrot.slane %v1114, 6
      %v1116 = vadd.f32 %v1114, %v1115
      %v1117 = vrot.slane %v1116, 7
      %v1118 = vadd.f32 %v1116, %v1117
      %v1119 = vmul.f32 %v418, %v478
      %v1120 = vrot.slane %v1119, 4
      %v1121 = vadd.f32 %v1119, %v1120
      %v1122 = vrot.slane %v1121, 6
      %v1123 = vadd.f32 %v1121, %v1122
      %v1124 = vrot.slane %v1123, 7
      %v1125 = vadd.f32 %v1123, %v1124
      %v1126 = vmul.f32 %v418, %v536
      %v1127 = vrot.slane %v1126, 4
      %v1128 = vadd.f32 %v1126, %v1127
      %v1129 = vrot.slane %v1128, 6
      %v1130 = vadd.f32 %v1128, %v1129
      %v1131 = vrot.slane %v1130, 7
      %v1132 = vadd.f32 %v1130, %v1131
      %v1133 = vmul.f32 %v418, %v594
      %v1134 = vrot.slane %v1133, 4
      %v1135 = vadd.f32 %v1133, %v1134
      %v1136 = vrot.slane %v1135, 6
      %v1137 = vadd.f32 %v1135, %v1136
      %v1138 = vrot.slane %v1137, 7
      %v1139 = vadd.f32 %v1137, %v1138
      %v1140 = vmul.f32 %v418, %v652
      %v1141 = vrot.slane %v1140, 4
      %v1142 = vadd.f32 %v1140, %v1141
      %v1143 = vrot.slane %v1142, 6
      %v1144 = vadd.f32 %v1142, %v1143
      %v1145 = vrot.slane %v1144, 7
      %v1146 = vadd.f32 %v1144, %v1145
      %v1147 = vmul.f32 %v418, %v710
      %v1148 = vrot.slane %v1147, 4
      %v1149 = vadd.f32 %v1147, %v1148
      %v1150 = vrot.slane %v1149, 6
      %v1151 = vadd.f32 %v1149, %v1150
      %v1152 = vrot.slane %v1151, 7
      %v1153 = vadd.f32 %v1151, %v1152
      %v1154 = vmax.f32 %v1097, %v1104
      %v1155 = vmax.f32 %v1154, %v1111
      %v1156 = vmax.f32 %v1155, %v1118
      %v1157 = vmax.f32 %v1156, %v1125
      %v1158 = vmax.f32 %v1157, %v1132
      %v1159 = vmax.f32 %v1158, %v1139
      %v1160 = vmax.f32 %v1159, %v1146
      %v1161 = vmax.f32 %v1160, %v1153
      %v1162 = vsub.f32 %v1097, %v1161
      %v1163 = vmul.f32 %v1162, 1.442695
      %v1164 = vpow.pop %v1163
      %v1165 = vmul.f32 %v1164, %v248
      %v1166 = vsub.f32 %v1104, %v1161
      %v1167 = vmul.f32 %v1166, 1.442695
      %v1168 = vpow.pop %v1167
      %v1169 = vadd.f32 %v1164, %v1168
      %v1170 = vmul.f32 %v1168, %v306
      %v1171 = vadd.f32 %v1165, %v1170
      %v1172 = vsub.f32 %v1111, %v1161
      %v1173 = vmul.f32 %v1172, 1.442695
      %v1174 = vpow.pop %v1173
      %v1175 = vadd.f32 %v1169, %v1174
      %v1176 = vmul.f32 %v1174, %v364
      %v1177 = vadd.f32 %v1171, %v1176
      %v1178 = vsub.f32 %v1118, %v1161
      %v1179 = vmul.f32 %v1178, 1.442695
      %v1180 = vpow.pop %v1179
      %v1181 = vadd.f32 %v1175, %v1180
      %v1182 = vmul.f32 %v1180, %v422
      %v1183 = vadd.f32 %v1177, %v1182
      %v1184 = vsub.f32 %v1125, %v1161
      %v1185 = vmul.f32 %v1184, 1.442695
      %v1186 = vpow.pop %v1185
      %v1187 = vadd.f32 %v1181, %v1186
      %v1188 = vmul.f32 %v1186, %v480
      %v1189 = vadd.f32 %v1183, %v1188
      %v1190 = vsub.f32 %v1132, %v1161
      %v1191 = vmul.f32 %v1190, 1.442695
      %v1192 = vpow.pop %v1191
      %v1193 = vadd.f32 %v1187, %v1192
      %v1194 = vmul.f32 %v1192, %v538
      %v1195 = vadd.f32 %v1189, %v1194
      %v1196 = vsub.f32 %v1139, %v1161
      %v1197 = vmul.f32 %v1196, 1.442695
      %v1198 = vpow.pop %v1197
      %v1199 = vadd.f32 %v1193, %v1198
      %v1200 = vmul.f32 %v1198, %v596
      %v1201 = vadd.f32 %v1195, %v1200
      %v1202 = vsub.f32 %v1146, %v1161
      %v1203 = vmul.f32 %v1202, 1.442695
      %v1204 = vpow.pop %v1203
      %v1205 = vadd.f32 %v1199, %v1204
      %v1206 = vmul.f32 %v1204, %v654
      %v1207 = vadd.f32 %v1201, %v1206
      %v1208 = vsub.f32 %v1153, %v1161
      %v1209 = vmul.f32 %v1208, 1.442695
      %v1210 = vpow.pop %v1209
      %v1211 = vadd.f32 %v1205, %v1210
      %v1212 = vmul.f32 %v1210, %v712
      %v1213 = vadd.f32 %v1207, %v1212
      %v1214 = vrcp.pop %v1211
      %v1215 = vmul.f32 %v1213, %v1214
      %1216 = vst [vmem:[%s170 + $0x30] sm:$0xff] %v1215
      %v1217 = vmul.f32 %v476, %v246
      %v1218 = vrot.slane %v1217, 4
      %v1219 = vadd.f32 %v1217, %v1218
      %v1220 = vrot.slane %v1219, 6
      %v1221 = vadd.f32 %v1219, %v1220
      %v1222 = vrot.slane %v1221, 7
      %v1223 = vadd.f32 %v1221, %v1222
      %v1224 = vmul.f32 %v476, %v304
      %v1225 = vrot.slane %v1224, 4
      %v1226 = vadd.f32 %v1224, %v1225
      %v1227 = vrot.slane %v1226, 6
      %v1228 = vadd.f32 %v1226, %v1227
      %v1229 = vrot.slane %v1228, 7
      %v1230 = vadd.f32 %v1228, %v1229
      %v1231 = vmul.f32 %v476, %v362
      %v1232 = vrot.slane %v1231, 4
      %v1233 = vadd.f32 %v1231, %v1232
      %v1234 = vrot.slane %v1233, 6
      %v1235 = vadd.f32 %v1233, %v1234
      %v1236 = vrot.slane %v1235, 7
      %v1237 = vadd.f32 %v1235, %v1236
      %v1238 = vmul.f32 %v476, %v420
      %v1239 = vrot.slane %v1238, 4
      %v1240 = vadd.f32 %v1238, %v1239
      %v1241 = vrot.slane %v1240, 6
      %v1242 = vadd.f32 %v1240, %v1241
      %v1243 = vrot.slane %v1242, 7
      %v1244 = vadd.f32 %v1242, %v1243
      %v1245 = vmul.f32 %v476, %v478
      %v1246 = vrot.slane %v1245, 4
      %v1247 = vadd.f32 %v1245, %v1246
      %v1248 = vrot.slane %v1247, 6
      %v1249 = vadd.f32 %v1247, %v1248
      %v1250 = vrot.slane %v1249, 7
      %v1251 = vadd.f32 %v1249, %v1250
      %v1252 = vmul.f32 %v476, %v536
      %v1253 = vrot.slane %v1252, 4
      %v1254 = vadd.f32 %v1252, %v1253
      %v1255 = vrot.slane %v1254, 6
      %v1256 = vadd.f32 %v1254, %v1255
      %v1257 = vrot.slane %v1256, 7
      %v1258 = vadd.f32 %v1256, %v1257
      %v1259 = vmul.f32 %v476, %v594
      %v1260 = vrot.slane %v1259, 4
      %v1261 = vadd.f32 %v1259, %v1260
      %v1262 = vrot.slane %v1261, 6
      %v1263 = vadd.f32 %v1261, %v1262
      %v1264 = vrot.slane %v1263, 7
      %v1265 = vadd.f32 %v1263, %v1264
      %v1266 = vmul.f32 %v476, %v652
      %v1267 = vrot.slane %v1266, 4
      %v1268 = vadd.f32 %v1266, %v1267
      %v1269 = vrot.slane %v1268, 6
      %v1270 = vadd.f32 %v1268, %v1269
      %v1271 = vrot.slane %v1270, 7
      %v1272 = vadd.f32 %v1270, %v1271
      %v1273 = vmul.f32 %v476, %v710
      %v1274 = vrot.slane %v1273, 4
      %v1275 = vadd.f32 %v1273, %v1274
      %v1276 = vrot.slane %v1275, 6
      %v1277 = vadd.f32 %v1275, %v1276
      %v1278 = vrot.slane %v1277, 7
      %v1279 = vadd.f32 %v1277, %v1278
      %v1280 = vmax.f32 %v1223, %v1230
      %v1281 = vmax.f32 %v1280, %v1237
      %v1282 = vmax.f32 %v1281, %v1244
      %v1283 = vmax.f32 %v1282, %v1251
      %v1284 = vmax.f32 %v1283, %v1258
      %v1285 = vmax.f32 %v1284, %v1265
      %v1286 = vmax.f32 %v1285, %v1272
      %v1287 = vmax.f32 %v1286, %v1279
      %v1288 = vsub.f32 %v1223, %v1287
      %v1289 = vmul.f32 %v1288, 1.442695
      %v1290 = vpow.pop %v1289
      %v1291 = vmul.f32 %v1290, %v248
      %v1292 = vsub.f32 %v1230, %v1287
      %v1293 = vmul.f32 %v1292, 1.442695
      %v1294 = vpow.pop %v1293
      %v1295 = vadd.f32 %v1290, %v1294
      %v1296 = vmul.f32 %v1294, %v306
      %v1297 = vadd.f32 %v1291, %v1296
      %v1298 = vsub.f32 %v1237, %v1287
      %v1299 = vmul.f32 %v1298, 1.442695
      %v1300 = vpow.pop %v1299
      %v1301 = vadd.f32 %v1295, %v1300
      %v1302 = vmul.f32 %v1300, %v364
      %v1303 = vadd.f32 %v1297, %v1302
      %v1304 = vsub.f32 %v1244, %v1287
      %v1305 = vmul.f32 %v1304, 1.442695
      %v1306 = vpow.pop %v1305
      %v1307 = vadd.f32 %v1301, %v1306
      %v1308 = vmul.f32 %v1306, %v422
      %v1309 = vadd.f32 %v1303, %v1308
      %v1310 = vsub.f32 %v1251, %v1287
      %v1311 = vmul.f32 %v1310, 1.442695
      %v1312 = vpow.pop %v1311
      %v1313 = vadd.f32 %v1307, %v1312
      %v1314 = vmul.f32 %v1312, %v480
      %v1315 = vadd.f32 %v1309, %v1314
      %v1316 = vsub.f32 %v1258, %v1287
      %v1317 = vmul.f32 %v1316, 1.442695
      %v1318 = vpow.pop %v1317
      %v1319 = vadd.f32 %v1313, %v1318
      %v1320 = vmul.f32 %v1318, %v538
      %v1321 = vadd.f32 %v1315, %v1320
      %v1322 = vsub.f32 %v1265, %v1287
      %v1323 = vmul.f32 %v1322, 1.442695
      %v1324 = vpow.pop %v1323
      %v1325 = vadd.f32 %v1319, %v1324
      %v1326 = vmul.f32 %v1324, %v596
      %v1327 = vadd.f32 %v1321, %v1326
      %v1328 = vsub.f32 %v1272, %v1287
      %v1329 = vmul.f32 %v1328, 1.442695
      %v1330 = vpow.pop %v1329
      %v1331 = vadd.f32 %v1325, %v1330
      %v1332 = vmul.f32 %v1330, %v654
      %v1333 = vadd.f32 %v1327, %v1332
      %v1334 = vsub.f32 %v1279, %v1287
      %v1335 = vmul.f32 %v1334, 1.442695
      %v1336 = vpow.pop %v1335
      %v1337 = vadd.f32 %v1331, %v1336
      %v1338 = vmul.f32 %v1336, %v712
      %v1339 = vadd.f32 %v1333, %v1338
      %v1340 = vrcp.pop %v1337
      %v1341 = vmul.f32 %v1339, %v1340
      %1342 = vst [vmem:[%s170 + $0x40] sm:$0xff] %v1341
      %v1343 = vmul.f32 %v534, %v246
      %v1344 = vrot.slane %v1343, 4
      %v1345 = vadd.f32 %v1343, %v1344
      %v1346 = vrot.slane %v1345, 6
      %v1347 = vadd.f32 %v1345, %v1346
      %v1348 = vrot.slane %v1347, 7
      %v1349 = vadd.f32 %v1347, %v1348
      %v1350 = vmul.f32 %v534, %v304
      %v1351 = vrot.slane %v1350, 4
      %v1352 = vadd.f32 %v1350, %v1351
      %v1353 = vrot.slane %v1352, 6
      %v1354 = vadd.f32 %v1352, %v1353
      %v1355 = vrot.slane %v1354, 7
      %v1356 = vadd.f32 %v1354, %v1355
      %v1357 = vmul.f32 %v534, %v362
      %v1358 = vrot.slane %v1357, 4
      %v1359 = vadd.f32 %v1357, %v1358
      %v1360 = vrot.slane %v1359, 6
      %v1361 = vadd.f32 %v1359, %v1360
      %v1362 = vrot.slane %v1361, 7
      %v1363 = vadd.f32 %v1361, %v1362
      %v1364 = vmul.f32 %v534, %v420
      %v1365 = vrot.slane %v1364, 4
      %v1366 = vadd.f32 %v1364, %v1365
      %v1367 = vrot.slane %v1366, 6
      %v1368 = vadd.f32 %v1366, %v1367
      %v1369 = vrot.slane %v1368, 7
      %v1370 = vadd.f32 %v1368, %v1369
      %v1371 = vmul.f32 %v534, %v478
      %v1372 = vrot.slane %v1371, 4
      %v1373 = vadd.f32 %v1371, %v1372
      %v1374 = vrot.slane %v1373, 6
      %v1375 = vadd.f32 %v1373, %v1374
      %v1376 = vrot.slane %v1375, 7
      %v1377 = vadd.f32 %v1375, %v1376
      %v1378 = vmul.f32 %v534, %v536
      %v1379 = vrot.slane %v1378, 4
      %v1380 = vadd.f32 %v1378, %v1379
      %v1381 = vrot.slane %v1380, 6
      %v1382 = vadd.f32 %v1380, %v1381
      %v1383 = vrot.slane %v1382, 7
      %v1384 = vadd.f32 %v1382, %v1383
      %v1385 = vmul.f32 %v534, %v594
      %v1386 = vrot.slane %v1385, 4
      %v1387 = vadd.f32 %v1385, %v1386
      %v1388 = vrot.slane %v1387, 6
      %v1389 = vadd.f32 %v1387, %v1388
      %v1390 = vrot.slane %v1389, 7
      %v1391 = vadd.f32 %v1389, %v1390
      %v1392 = vmul.f32 %v534, %v652
      %v1393 = vrot.slane %v1392, 4
      %v1394 = vadd.f32 %v1392, %v1393
      %v1395 = vrot.slane %v1394, 6
      %v1396 = vadd.f32 %v1394, %v1395
      %v1397 = vrot.slane %v1396, 7
      %v1398 = vadd.f32 %v1396, %v1397
      %v1399 = vmul.f32 %v534, %v710
      %v1400 = vrot.slane %v1399, 4
      %v1401 = vadd.f32 %v1399, %v1400
      %v1402 = vrot.slane %v1401, 6
      %v1403 = vadd.f32 %v1401, %v1402
      %v1404 = vrot.slane %v1403, 7
      %v1405 = vadd.f32 %v1403, %v1404
      %v1406 = vmax.f32 %v1349, %v1356
      %v1407 = vmax.f32 %v1406, %v1363
      %v1408 = vmax.f32 %v1407, %v1370
      %v1409 = vmax.f32 %v1408, %v1377
      %v1410 = vmax.f32 %v1409, %v1384
      %v1411 = vmax.f32 %v1410, %v1391
      %v1412 = vmax.f32 %v1411, %v1398
      %v1413 = vmax.f32 %v1412, %v1405
      %v1414 = vsub.f32 %v1349, %v1413
      %v1415 = vmul.f32 %v1414, 1.442695
      %v1416 = vpow.pop %v1415
      %v1417 = vmul.f32 %v1416, %v248
      %v1418 = vsub.f32 %v1356, %v1413
      %v1419 = vmul.f32 %v1418, 1.442695
      %v1420 = vpow.pop %v1419
      %v1421 = vadd.f32 %v1416, %v1420
      %v1422 = vmul.f32 %v1420, %v306
      %v1423 = vadd.f32 %v1417, %v1422
      %v1424 = vsub.f32 %v1363, %v1413
      %v1425 = vmul.f32 %v1424, 1.442695
      %v1426 = vpow.pop %v1425
      %v1427 = vadd.f32 %v1421, %v1426
      %v1428 = vmul.f32 %v1426, %v364
      %v1429 = vadd.f32 %v1423, %v1428
      %v1430 = vsub.f32 %v1370, %v1413
      %v1431 = vmul.f32 %v1430, 1.442695
      %v1432 = vpow.pop %v1431
      %v1433 = vadd.f32 %v1427, %v1432
      %v1434 = vmul.f32 %v1432, %v422
      %v1435 = vadd.f32 %v1429, %v1434
      %v1436 = vsub.f32 %v1377, %v1413
      %v1437 = vmul.f32 %v1436, 1.442695
      %v1438 = vpow.pop %v1437
      %v1439 = vadd.f32 %v1433, %v1438
      %v1440 = vmul.f32 %v1438, %v480
      %v1441 = vadd.f32 %v1435, %v1440
      %v1442 = vsub.f32 %v1384, %v1413
      %v1443 = vmul.f32 %v1442, 1.442695
      %v1444 = vpow.pop %v1443
      %v1445 = vadd.f32 %v1439, %v1444
      %v1446 = vmul.f32 %v1444, %v538
      %v1447 = vadd.f32 %v1441, %v1446
      %v1448 = vsub.f32 %v1391, %v1413
      %v1449 = vmul.f32 %v1448, 1.442695
      %v1450 = vpow.pop %v1449
      %v1451 = vadd.f32 %v1445, %v1450
      %v1452 = vmul.f32 %v1450, %v596
      %v1453 = vadd.f32 %v1447, %v1452
      %v1454 = vsub.f32 %v1398, %v1413
      %v1455 = vmul.f32 %v1454, 1.442695
      %v1456 = vpow.pop %v1455
      %v1457 = vadd.f32 %v1451, %v1456
      %v1458 = vmul.f32 %v1456, %v654
      %v1459 = vadd.f32 %v1453, %v1458
      %v1460 = vsub.f32 %v1405, %v1413
      %v1461 = vmul.f32 %v1460, 1.442695
      %v1462 = vpow.pop %v1461
      %v1463 = vadd.f32 %v1457, %v1462
      %v1464 = vmul.f32 %v1462, %v712
      %v1465 = vadd.f32 %v1459, %v1464
      %v1466 = vrcp.pop %v1463
      %v1467 = vmul.f32 %v1465, %v1466
      %1468 = vst [vmem:[%s170 + $0x50] sm:$0xff] %v1467
      %v1469 = vmul.f32 %v592, %v246
      %v1470 = vrot.slane %v1469, 4
      %v1471 = vadd.f32 %v1469, %v1470
      %v1472 = vrot.slane %v1471, 6
      %v1473 = vadd.f32 %v1471, %v1472
      %v1474 = vrot.slane %v1473, 7
      %v1475 = vadd.f32 %v1473, %v1474
      %v1476 = vmul.f32 %v592, %v304
      %v1477 = vrot.slane %v1476, 4
      %v1478 = vadd.f32 %v1476, %v1477
      %v1479 = vrot.slane %v1478, 6
      %v1480 = vadd.f32 %v1478, %v1479
      %v1481 = vrot.slane %v1480, 7
      %v1482 = vadd.f32 %v1480, %v1481
      %v1483 = vmul.f32 %v592, %v362
      %v1484 = vrot.slane %v1483, 4
      %v1485 = vadd.f32 %v1483, %v1484
      %v1486 = vrot.slane %v1485, 6
      %v1487 = vadd.f32 %v1485, %v1486
      %v1488 = vrot.slane %v1487, 7
      %v1489 = vadd.f32 %v1487, %v1488
      %v1490 = vmul.f32 %v592, %v420
      %v1491 = vrot.slane %v1490, 4
      %v1492 = vadd.f32 %v1490, %v1491
      %v1493 = vrot.slane %v1492, 6
      %v1494 = vadd.f32 %v1492, %v1493
      %v1495 = vrot.slane %v1494, 7
      %v1496 = vadd.f32 %v1494, %v1495
      %v1497 = vmul.f32 %v592, %v478
      %v1498 = vrot.slane %v1497, 4
      %v1499 = vadd.f32 %v1497, %v1498
      %v1500 = vrot.slane %v1499, 6
      %v1501 = vadd.f32 %v1499, %v1500
      %v1502 = vrot.slane %v1501, 7
      %v1503 = vadd.f32 %v1501, %v1502
      %v1504 = vmul.f32 %v592, %v536
      %v1505 = vrot.slane %v1504, 4
      %v1506 = vadd.f32 %v1504, %v1505
      %v1507 = vrot.slane %v1506, 6
      %v1508 = vadd.f32 %v1506, %v1507
      %v1509 = vrot.slane %v1508, 7
      %v1510 = vadd.f32 %v1508, %v1509
      %v1511 = vmul.f32 %v592, %v594
      %v1512 = vrot.slane %v1511, 4
      %v1513 = vadd.f32 %v1511, %v1512
      %v1514 = vrot.slane %v1513, 6
      %v1515 = vadd.f32 %v1513, %v1514
      %v1516 = vrot.slane %v1515, 7
      %v1517 = vadd.f32 %v1515, %v1516
      %v1518 = vmul.f32 %v592, %v652
      %v1519 = vrot.slane %v1518, 4
      %v1520 = vadd.f32 %v1518, %v1519
      %v1521 = vrot.slane %v1520, 6
      %v1522 = vadd.f32 %v1520, %v1521
      %v1523 = vrot.slane %v1522, 7
      %v1524 = vadd.f32 %v1522, %v1523
      %v1525 = vmul.f32 %v592, %v710
      %v1526 = vrot.slane %v1525, 4
      %v1527 = vadd.f32 %v1525, %v1526
      %v1528 = vrot.slane %v1527, 6
      %v1529 = vadd.f32 %v1527, %v1528
      %v1530 = vrot.slane %v1529, 7
      %v1531 = vadd.f32 %v1529, %v1530
      %v1532 = vmax.f32 %v1475, %v1482
      %v1533 = vmax.f32 %v1532, %v1489
      %v1534 = vmax.f32 %v1533, %v1496
      %v1535 = vmax.f32 %v1534, %v1503
      %v1536 = vmax.f32 %v1535, %v1510
      %v1537 = vmax.f32 %v1536, %v1517
      %v1538 = vmax.f32 %v1537, %v1524
      %v1539 = vmax.f32 %v1538, %v1531
      %v1540 = vsub.f32 %v1475, %v1539
      %v1541 = vmul.f32 %v1540, 1.442695
      %v1542 = vpow.pop %v1541
      %v1543 = vmul.f32 %v1542, %v248
      %v1544 = vsub.f32 %v1482, %v1539
      %v1545 = vmul.f32 %v1544, 1.442695
      %v1546 = vpow.pop %v1545
      %v1547 = vadd.f32 %v1542, %v1546
      %v1548 = vmul.f32 %v1546, %v306
      %v1549 = vadd.f32 %v1543, %v1548
      %v1550 = vsub.f32 %v1489, %v1539
      %v1551 = vmul.f32 %v1550, 1.442695
      %v1552 = vpow.pop %v1551
      %v1553 = vadd.f32 %v1547, %v1552
      %v1554 = vmul.f32 %v1552, %v364
      %v1555 = vadd.f32 %v1549, %v1554
      %v1556 = vsub.f32 %v1496, %v1539
      %v1557 = vmul.f32 %v1556, 1.442695
      %v1558 = vpow.pop %v1557
      %v1559 = vadd.f32 %v1553, %v1558
      %v1560 = vmul.f32 %v1558, %v422
      %v1561 = vadd.f32 %v1555, %v1560
      %v1562 = vsub.f32 %v1503, %v1539
      %v1563 = vmul.f32 %v1562, 1.442695
      %v1564 = vpow.pop %v1563
      %v1565 = vadd.f32 %v1559, %v1564
      %v1566 = vmul.f32 %v1564, %v480
      %v1567 = vadd.f32 %v1561, %v1566
      %v1568 = vsub.f32 %v1510, %v1539
      %v1569 = vmul.f32 %v1568, 1.442695
      %v1570 = vpow.pop %v1569
      %v1571 = vadd.f32 %v1565, %v1570
      %v1572 = vmul.f32 %v1570, %v538
      %v1573 = vadd.f32 %v1567, %v1572
      %v1574 = vsub.f32 %v1517, %v1539
      %v1575 = vmul.f32 %v1574, 1.442695
      %v1576 = vpow.pop %v1575
      %v1577 = vadd.f32 %v1571, %v1576
      %v1578 = vmul.f32 %v1576, %v596
      %v1579 = vadd.f32 %v1573, %v1578
      %v1580 = vsub.f32 %v1524, %v1539
      %v1581 = vmul.f32 %v1580, 1.442695
      %v1582 = vpow.pop %v1581
      %v1583 = vadd.f32 %v1577, %v1582
      %v1584 = vmul.f32 %v1582, %v654
      %v1585 = vadd.f32 %v1579, %v1584
      %v1586 = vsub.f32 %v1531, %v1539
      %v1587 = vmul.f32 %v1586, 1.442695
      %v1588 = vpow.pop %v1587
      %v1589 = vadd.f32 %v1583, %v1588
      %v1590 = vmul.f32 %v1588, %v712
      %v1591 = vadd.f32 %v1585, %v1590
      %v1592 = vrcp.pop %v1589
      %v1593 = vmul.f32 %v1591, %v1592
      %1594 = vst [vmem:[%s170 + $0x60] sm:$0xff] %v1593
      %v1595 = vmul.f32 %v650, %v246
      %v1596 = vrot.slane %v1595, 4
      %v1597 = vadd.f32 %v1595, %v1596
      %v1598 = vrot.slane %v1597, 6
      %v1599 = vadd.f32 %v1597, %v1598
      %v1600 = vrot.slane %v1599, 7
      %v1601 = vadd.f32 %v1599, %v1600
      %v1602 = vmul.f32 %v650, %v304
      %v1603 = vrot.slane %v1602, 4
      %v1604 = vadd.f32 %v1602, %v1603
      %v1605 = vrot.slane %v1604, 6
      %v1606 = vadd.f32 %v1604, %v1605
      %v1607 = vrot.slane %v1606, 7
      %v1608 = vadd.f32 %v1606, %v1607
      %v1609 = vmul.f32 %v650, %v362
      %v1610 = vrot.slane %v1609, 4
      %v1611 = vadd.f32 %v1609, %v1610
      %v1612 = vrot.slane %v1611, 6
      %v1613 = vadd.f32 %v1611, %v1612
      %v1614 = vrot.slane %v1613, 7
      %v1615 = vadd.f32 %v1613, %v1614
      %v1616 = vmul.f32 %v650, %v420
      %v1617 = vrot.slane %v1616, 4
      %v1618 = vadd.f32 %v1616, %v1617
      %v1619 = vrot.slane %v1618, 6
      %v1620 = vadd.f32 %v1618, %v1619
      %v1621 = vrot.slane %v1620, 7
      %v1622 = vadd.f32 %v1620, %v1621
      %v1623 = vmul.f32 %v650, %v478
      %v1624 = vrot.slane %v1623, 4
      %v1625 = vadd.f32 %v1623, %v1624
      %v1626 = vrot.slane %v1625, 6
      %v1627 = vadd.f32 %v1625, %v1626
      %v1628 = vrot.slane %v1627, 7
      %v1629 = vadd.f32 %v1627, %v1628
      %v1630 = vmul.f32 %v650, %v536
      %v1631 = vrot.slane %v1630, 4
      %v1632 = vadd.f32 %v1630, %v1631
      %v1633 = vrot.slane %v1632, 6
      %v1634 = vadd.f32 %v1632, %v1633
      %v1635 = vrot.slane %v1634, 7
      %v1636 = vadd.f32 %v1634, %v1635
      %v1637 = vmul.f32 %v650, %v594
      %v1638 = vrot.slane %v1637, 4
      %v1639 = vadd.f32 %v1637, %v1638
      %v1640 = vrot.slane %v1639, 6
      %v1641 = vadd.f32 %v1639, %v1640
      %v1642 = vrot.slane %v1641, 7
      %v1643 = vadd.f32 %v1641, %v1642
      %v1644 = vmul.f32 %v650, %v652
      %v1645 = vrot.slane %v1644, 4
      %v1646 = vadd.f32 %v1644, %v1645
      %v1647 = vrot.slane %v1646, 6
      %v1648 = vadd.f32 %v1646, %v1647
      %v1649 = vrot.slane %v1648, 7
      %v1650 = vadd.f32 %v1648, %v1649
      %v1651 = vmul.f32 %v650, %v710
      %v1652 = vrot.slane %v1651, 4
      %v1653 = vadd.f32 %v1651, %v1652
      %v1654 = vrot.slane %v1653, 6
      %v1655 = vadd.f32 %v1653, %v1654
      %v1656 = vrot.slane %v1655, 7
      %v1657 = vadd.f32 %v1655, %v1656
      %v1658 = vmax.f32 %v1601, %v1608
      %v1659 = vmax.f32 %v1658, %v1615
      %v1660 = vmax.f32 %v1659, %v1622
      %v1661 = vmax.f32 %v1660, %v1629
      %v1662 = vmax.f32 %v1661, %v1636
      %v1663 = vmax.f32 %v1662, %v1643
      %v1664 = vmax.f32 %v1663, %v1650
      %v1665 = vmax.f32 %v1664, %v1657
      %v1666 = vsub.f32 %v1601, %v1665
      %v1667 = vmul.f32 %v1666, 1.442695
      %v1668 = vpow.pop %v1667
      %v1669 = vmul.f32 %v1668, %v248
      %v1670 = vsub.f32 %v1608, %v1665
      %v1671 = vmul.f32 %v1670, 1.442695
      %v1672 = vpow.pop %v1671
      %v1673 = vadd.f32 %v1668, %v1672
      %v1674 = vmul.f32 %v1672, %v306
      %v1675 = vadd.f32 %v1669, %v1674
      %v1676 = vsub.f32 %v1615, %v1665
      %v1677 = vmul.f32 %v1676, 1.442695
      %v1678 = vpow.pop %v1677
      %v1679 = vadd.f32 %v1673, %v1678
      %v1680 = vmul.f32 %v1678, %v364
      %v1681 = vadd.f32 %v1675, %v1680
      %v1682 = vsub.f32 %v1622, %v1665
      %v1683 = vmul.f32 %v1682, 1.442695
      %v1684 = vpow.pop %v1683
      %v1685 = vadd.f32 %v1679, %v1684
      %v1686 = vmul.f32 %v1684, %v422
      %v1687 = vadd.f32 %v1681, %v1686
      %v1688 = vsub.f32 %v1629, %v1665
      %v1689 = vmul.f32 %v1688, 1.442695
      %v1690 = vpow.pop %v1689
      %v1691 = vadd.f32 %v1685, %v1690
      %v1692 = vmul.f32 %v1690, %v480
      %v1693 = vadd.f32 %v1687, %v1692
      %v1694 = vsub.f32 %v1636, %v1665
      %v1695 = vmul.f32 %v1694, 1.442695
      %v1696 = vpow.pop %v1695
      %v1697 = vadd.f32 %v1691, %v1696
      %v1698 = vmul.f32 %v1696, %v538
      %v1699 = vadd.f32 %v1693, %v1698
      %v1700 = vsub.f32 %v1643, %v1665
      %v1701 = vmul.f32 %v1700, 1.442695
      %v1702 = vpow.pop %v1701
      %v1703 = vadd.f32 %v1697, %v1702
      %v1704 = vmul.f32 %v1702, %v596
      %v1705 = vadd.f32 %v1699, %v1704
      %v1706 = vsub.f32 %v1650, %v1665
      %v1707 = vmul.f32 %v1706, 1.442695
      %v1708 = vpow.pop %v1707
      %v1709 = vadd.f32 %v1703, %v1708
      %v1710 = vmul.f32 %v1708, %v654
      %v1711 = vadd.f32 %v1705, %v1710
      %v1712 = vsub.f32 %v1657, %v1665
      %v1713 = vmul.f32 %v1712, 1.442695
      %v1714 = vpow.pop %v1713
      %v1715 = vadd.f32 %v1709, %v1714
      %v1716 = vmul.f32 %v1714, %v712
      %v1717 = vadd.f32 %v1711, %v1716
      %v1718 = vrcp.pop %v1715
      %v1719 = vmul.f32 %v1717, %v1718
      %1720 = vst [vmem:[%s170 + $0x70] sm:$0xff] %v1719
      %v1721 = vmul.f32 %v708, %v246
      %v1722 = vrot.slane %v1721, 4
      %v1723 = vadd.f32 %v1721, %v1722
      %v1724 = vrot.slane %v1723, 6
      %v1725 = vadd.f32 %v1723, %v1724
      %v1726 = vrot.slane %v1725, 7
      %v1727 = vadd.f32 %v1725, %v1726
      %v1728 = vmul.f32 %v708, %v304
      %v1729 = vrot.slane %v1728, 4
      %v1730 = vadd.f32 %v1728, %v1729
      %v1731 = vrot.slane %v1730, 6
      %v1732 = vadd.f32 %v1730, %v1731
      %v1733 = vrot.slane %v1732, 7
      %v1734 = vadd.f32 %v1732, %v1733
      %v1735 = vmul.f32 %v708, %v362
      %v1736 = vrot.slane %v1735, 4
      %v1737 = vadd.f32 %v1735, %v1736
      %v1738 = vrot.slane %v1737, 6
      %v1739 = vadd.f32 %v1737, %v1738
      %v1740 = vrot.slane %v1739, 7
      %v1741 = vadd.f32 %v1739, %v1740
      %v1742 = vmul.f32 %v708, %v420
      %v1743 = vrot.slane %v1742, 4
      %v1744 = vadd.f32 %v1742, %v1743
      %v1745 = vrot.slane %v1744, 6
      %v1746 = vadd.f32 %v1744, %v1745
      %v1747 = vrot.slane %v1746, 7
      %v1748 = vadd.f32 %v1746, %v1747
      %v1749 = vmul.f32 %v708, %v478
      %v1750 = vrot.slane %v1749, 4
      %v1751 = vadd.f32 %v1749, %v1750
      %v1752 = vrot.slane %v1751, 6
      %v1753 = vadd.f32 %v1751, %v1752
      %v1754 = vrot.slane %v1753, 7
      %v1755 = vadd.f32 %v1753, %v1754
      %v1756 = vmul.f32 %v708, %v536
      %v1757 = vrot.slane %v1756, 4
      %v1758 = vadd.f32 %v1756, %v1757
      %v1759 = vrot.slane %v1758, 6
      %v1760 = vadd.f32 %v1758, %v1759
      %v1761 = vrot.slane %v1760, 7
      %v1762 = vadd.f32 %v1760, %v1761
      %v1763 = vmul.f32 %v708, %v594
      %v1764 = vrot.slane %v1763, 4
      %v1765 = vadd.f32 %v1763, %v1764
      %v1766 = vrot.slane %v1765, 6
      %v1767 = vadd.f32 %v1765, %v1766
      %v1768 = vrot.slane %v1767, 7
      %v1769 = vadd.f32 %v1767, %v1768
      %v1770 = vmul.f32 %v708, %v652
      %v1771 = vrot.slane %v1770, 4
      %v1772 = vadd.f32 %v1770, %v1771
      %v1773 = vrot.slane %v1772, 6
      %v1774 = vadd.f32 %v1772, %v1773
      %v1775 = vrot.slane %v1774, 7
      %v1776 = vadd.f32 %v1774, %v1775
      %v1777 = vmul.f32 %v708, %v710
      %v1778 = vrot.slane %v1777, 4
      %v1779 = vadd.f32 %v1777, %v1778
      %v1780 = vrot.slane %v1779, 6
      %v1781 = vadd.f32 %v1779, %v1780
      %v1782 = vrot.slane %v1781, 7
      %v1783 = vadd.f32 %v1781, %v1782
      %v1784 = vmax.f32 %v1727, %v1734
      %v1785 = vmax.f32 %v1784, %v1741
      %v1786 = vmax.f32 %v1785, %v1748
      %v1787 = vmax.f32 %v1786, %v1755
      %v1788 = vmax.f32 %v1787, %v1762
      %v1789 = vmax.f32 %v1788, %v1769
      %v1790 = vmax.f32 %v1789, %v1776
      %v1791 = vmax.f32 %v1790, %v1783
      %v1792 = vsub.f32 %v1727, %v1791
      %v1793 = vmul.f32 %v1792, 1.442695
      %v1794 = vpow.pop %v1793
      %v1795 = vmul.f32 %v1794, %v248
      %v1796 = vsub.f32 %v1734, %v1791
      %v1797 = vmul.f32 %v1796, 1.442695
      %v1798 = vpow.pop %v1797
      %v1799 = vadd.f32 %v1794, %v1798
      %v1800 = vmul.f32 %v1798, %v306
      %v1801 = vadd.f32 %v1795, %v1800
      %v1802 = vsub.f32 %v1741, %v1791
      %v1803 = vmul.f32 %v1802, 1.442695
      %v1804 = vpow.pop %v1803
      %v1805 = vadd.f32 %v1799, %v1804
      %v1806 = vmul.f32 %v1804, %v364
      %v1807 = vadd.f32 %v1801, %v1806
      %v1808 = vsub.f32 %v1748, %v1791
      %v1809 = vmul.f32 %v1808, 1.442695
      %v1810 = vpow.pop %v1809
      %v1811 = vadd.f32 %v1805, %v1810
      %v1812 = vmul.f32 %v1810, %v422
      %v1813 = vadd.f32 %v1807, %v1812
      %v1814 = vsub.f32 %v1755, %v1791
      %v1815 = vmul.f32 %v1814, 1.442695
      %v1816 = vpow.pop %v1815
      %v1817 = vadd.f32 %v1811, %v1816
      %v1818 = vmul.f32 %v1816, %v480
      %v1819 = vadd.f32 %v1813, %v1818
      %v1820 = vsub.f32 %v1762, %v1791
      %v1821 = vmul.f32 %v1820, 1.442695
      %v1822 = vpow.pop %v1821
      %v1823 = vadd.f32 %v1817, %v1822
      %v1824 = vmul.f32 %v1822, %v538
      %v1825 = vadd.f32 %v1819, %v1824
      %v1826 = vsub.f32 %v1769, %v1791
      %v1827 = vmul.f32 %v1826, 1.442695
      %v1828 = vpow.pop %v1827
      %v1829 = vadd.f32 %v1823, %v1828
      %v1830 = vmul.f32 %v1828, %v596
      %v1831 = vadd.f32 %v1825, %v1830
      %v1832 = vsub.f32 %v1776, %v1791
      %v1833 = vmul.f32 %v1832, 1.442695
      %v1834 = vpow.pop %v1833
      %v1835 = vadd.f32 %v1829, %v1834
      %v1836 = vmul.f32 %v1834, %v654
      %v1837 = vadd.f32 %v1831, %v1836
      %v1838 = vsub.f32 %v1783, %v1791
      %v1839 = vmul.f32 %v1838, 1.442695
      %v1840 = vpow.pop %v1839
      %v1841 = vadd.f32 %v1835, %v1840
      %v1842 = vmul.f32 %v1840, %v712
      %v1843 = vadd.f32 %v1837, %v1842
      %v1844 = vrcp.pop %v1841
      %v1845 = vmul.f32 %v1843, %v1844
      %1846 = vst [vmem:[%s170 + $0x80] sm:$0xff] %v1845
      %v1847 = vld [vmem:[%s165 + $0x4] sm:$0xf]
      %v1849 = vsel %vm191, %v1847, 0
      %1851 = vmatprep.subr.bf16.mxu0 0
      %1852 = vmatpush1.bf16.msra.mxu0 %v1849
      %1853 = vmatprep.subr.bf16.mxu0 0
      %1854 = vmatpush1.bf16.msra.mxu0 0
      %1855 = vmatprep.subr.bf16.mxu0 0
      %1856 = vmatpush1.bf16.msra.mxu0 0
      %1857 = vmatprep.subr.bf16.mxu0 0
      %1858 = vmatpush1.bf16.msra.mxu0 0
      %1859 = vmatprep.subr.bf16.mxu0 0
      %1860 = vmatpush1.bf16.msra.mxu0 0
      %1861 = vmatprep.subr.bf16.mxu0 0
      %1862 = vmatpush1.bf16.msra.mxu0 0
      %1863 = vmatprep.subr.bf16.mxu0 0
      %1864 = vmatpush1.bf16.msra.mxu0 0
      %1865 = vmatprep.subr.bf16.mxu0 0
      %1866 = vmatpush1.bf16.msra.mxu0 0
      %1867 = vmatprep.subr.bf16.mxu0 0
      %1868 = vmatpush1.bf16.msra.mxu0 0
      %1869 = vmatprep.subr.bf16.mxu0 0
      %1870 = vmatpush1.bf16.msra.mxu0 0
      %1871 = vmatprep.subr.bf16.mxu0 0
      %1872 = vmatpush1.bf16.msra.mxu0 0
      %1873 = vmatprep.subr.bf16.mxu0 0
      %1874 = vmatpush1.bf16.msra.mxu0 0
      %1875 = vmatprep.subr.bf16.mxu0 0
      %1876 = vmatpush1.bf16.msra.mxu0 0
      %1877 = vmatprep.subr.bf16.mxu0 0
      %1878 = vmatpush1.bf16.msra.mxu0 0
      %1879 = vmatprep.subr.bf16.mxu0 0
      %1880 = vmatpush1.bf16.msra.mxu0 0
      %1881 = vmatprep.subr.bf16.mxu0 0
      %1882 = vmatpush1.bf16.msra.mxu0 0
      %1883 = vmatprep.mubr.bf16.mxu0 0
      %1884 = vmatmul.mubr.bf16.gmra.mrb[0].mxu0 %v186
      %v1885 = vpop.f32.mrb[0].mxu0
      %v1886 = vadd.f32 0.0, %v1885
      %v1887 = vpop.f32.mrb[0].mxu0
      %v1888 = vpop.f32.mrb[0].mxu0
      %v1889 = vadd.f32 0.0, %v1888
      %v1890 = vpop.f32.mrb[0].mxu0
      %1891 = vmatprep.mubr.bf16.mxu0 0
      %1892 = vmatmul.mubr.bf16.gmra.mrb[0].mxu0 %v189
      %v1893 = vpop.f32.mrb[0].mxu0
      %v1894 = vadd.f32 0.0, %v1893
      %v1895 = vpop.f32.mrb[0].mxu0
      %v1896 = vpop.f32.mrb[0].mxu0
      %v1897 = vpop.f32.mrb[0].mxu0
      %1898 = vdwg.mxu0
      %v1899 = vld [vmem:[%s2] sm:$0xff]
      %v1900 = vadd.f32 %v1886, %v1899
      %v1901 = vld [vmem:[%s2 + $0x48] sm:$0xff]
      %v1902 = vadd.f32 %v1889, %v1901
      %v1903 = vld [vmem:[%s2 + $0x90] sm:$0xff]
      %v1904 = vadd.f32 %v1894, %v1903
      %v1905 = vld [vmem:[%s165 + $0xc] sm:$0xf]
      %v1907 = vsel %vm191, %v1905, 0
      %1909 = vmatprep.subr.bf16.mxu0 0
      %1910 = vmatpush1.bf16.msra.mxu0 %v1907
      %1911 = vmatprep.subr.bf16.mxu0 0
      %1912 = vmatpush1.bf16.msra.mxu0 0
      %1913 = vmatprep.subr.bf16.mxu0 0
      %1914 = vmatpush1.bf16.msra.mxu0 0
      %1915 = vmatprep.subr.bf16.mxu0 0
      %1916 = vmatpush1.bf16.msra.mxu0 0
      %1917 = vmatprep.subr.bf16.mxu0 0
      %1918 = vmatpush1.bf16.msra.mxu0 0
      %1919 = vmatprep.subr.bf16.mxu0 0
      %1920 = vmatpush1.bf16.msra.mxu0 0
      %1921 = vmatprep.subr.bf16.mxu0 0
      %1922 = vmatpush1.bf16.msra.mxu0 0
      %1923 = vmatprep.subr.bf16.mxu0 0
      %1924 = vmatpush1.bf16.msra.mxu0 0
      %1925 = vmatprep.subr.bf16.mxu0 0
      %1926 = vmatpush1.bf16.msra.mxu0 0
      %1927 = vmatprep.subr.bf16.mxu0 0
      %1928 = vmatpush1.bf16.msra.mxu0 0
      %1929 = vmatprep.subr.bf16.mxu0 0
      %1930 = vmatpush1.bf16.msra.mxu0 0
      %1931 = vmatprep.subr.bf16.mxu0 0
      %1932 = vmatpush1.bf16.msra.mxu0 0
      %1933 = vmatprep.subr.bf16.mxu0 0
      %1934 = vmatpush1.bf16.msra.mxu0 0
      %1935 = vmatprep.subr.bf16.mxu0 0
      %1936 = vmatpush1.bf16.msra.mxu0 0
      %1937 = vmatprep.subr.bf16.mxu0 0
      %1938 = vmatpush1.bf16.msra.mxu0 0
      %1939 = vmatprep.subr.bf16.mxu0 0
      %1940 = vmatpush1.bf16.msra.mxu0 0
      %1941 = vmatprep.mubr.bf16.mxu0 0
      %1942 = vmatmul.mubr.bf16.gmra.mrb[0].mxu0 %v186
      %v1943 = vpop.f32.mrb[0].mxu0
      %v1944 = vadd.f32 0.0, %v1943
      %v1945 = vpop.f32.mrb[0].mxu0
      %v1946 = vpop.f32.mrb[0].mxu0
      %v1947 = vadd.f32 0.0, %v1946
      %v1948 = vpop.f32.mrb[0].mxu0
      %1949 = vmatprep.mubr.bf16.mxu0 0
      %1950 = vmatmul.mubr.bf16.gmra.mrb[0].mxu0 %v189
      %v1951 = vpop.f32.mrb[0].mxu0
      %v1952 = vadd.f32 0.0, %v1951
      %v1953 = vpop.f32.mrb[0].mxu0
      %v1954 = vpop.f32.mrb[0].mxu0
      %v1955 = vpop.f32.mrb[0].mxu0
      %1956 = vdwg.mxu0
      %v1957 = vld [vmem:[%s2 + $0x8] sm:$0xff]
      %v1958 = vadd.f32 %v1944, %v1957
      %v1959 = vld [vmem:[%s2 + $0x50] sm:$0xff]
      %v1960 = vadd.f32 %v1947, %v1959
      %v1961 = vld [vmem:[%s2 + $0x98] sm:$0xff]
      %v1962 = vadd.f32 %v1952, %v1961
      %v1963 = vld [vmem:[%s165 + $0x14] sm:$0xf]
      %v1965 = vsel %vm191, %v1963, 0
      %1967 = vmatprep.subr.bf16.mxu0 0
      %1968 = vmatpush1.bf16.msra.mxu0 %v1965
      %1969 = vmatprep.subr.bf16.mxu0 0
      %1970 = vmatpush1.bf16.msra.mxu0 0
      %1971 = vmatprep.subr.bf16.mxu0 0
      %1972 = vmatpush1.bf16.msra.mxu0 0
      %1973 = vmatprep.subr.bf16.mxu0 0
      %1974 = vmatpush1.bf16.msra.mxu0 0
      %1975 = vmatprep.subr.bf16.mxu0 0
      %1976 = vmatpush1.bf16.msra.mxu0 0
      %1977 = vmatprep.subr.bf16.mxu0 0
      %1978 = vmatpush1.bf16.msra.mxu0 0
      %1979 = vmatprep.subr.bf16.mxu0 0
      %1980 = vmatpush1.bf16.msra.mxu0 0
      %1981 = vmatprep.subr.bf16.mxu0 0
      %1982 = vmatpush1.bf16.msra.mxu0 0
      %1983 = vmatprep.subr.bf16.mxu0 0
      %1984 = vmatpush1.bf16.msra.mxu0 0
      %1985 = vmatprep.subr.bf16.mxu0 0
      %1986 = vmatpush1.bf16.msra.mxu0 0
      %1987 = vmatprep.subr.bf16.mxu0 0
      %1988 = vmatpush1.bf16.msra.mxu0 0
      %1989 = vmatprep.subr.bf16.mxu0 0
      %1990 = vmatpush1.bf16.msra.mxu0 0
      %1991 = vmatprep.subr.bf16.mxu0 0
      %1992 = vmatpush1.bf16.msra.mxu0 0
      %1993 = vmatprep.subr.bf16.mxu0 0
      %1994 = vmatpush1.bf16.msra.mxu0 0
      %1995 = vmatprep.subr.bf16.mxu0 0
      %1996 = vmatpush1.bf16.msra.mxu0 0
      %1997 = vmatprep.subr.bf16.mxu0 0
      %1998 = vmatpush1.bf16.msra.mxu0 0
      %1999 = vmatprep.mubr.bf16.mxu0 0
      %2000 = vmatmul.mubr.bf16.gmra.mrb[0].mxu0 %v186
      %v2001 = vpop.f32.mrb[0].mxu0
      %v2002 = vadd.f32 0.0, %v2001
      %v2003 = vpop.f32.mrb[0].mxu0
      %v2004 = vpop.f32.mrb[0].mxu0
      %v2005 = vadd.f32 0.0, %v2004
      %v2006 = vpop.f32.mrb[0].mxu0
      %2007 = vmatprep.mubr.bf16.mxu0 0
      %2008 = vmatmul.mubr.bf16.gmra.mrb[0].mxu0 %v189
      %v2009 = vpop.f32.mrb[0].mxu0
      %v2010 = vadd.f32 0.0, %v2009
      %v2011 = vpop.f32.mrb[0].mxu0
      %v2012 = vpop.f32.mrb[0].mxu0
      %v2013 = vpop.f32.mrb[0].mxu0
      %2014 = vdwg.mxu0
      %v2015 = vld [vmem:[%s2 + $0x10] sm:$0xff]
      %v2016 = vadd.f32 %v2002, %v2015
      %v2017 = vld [vmem:[%s2 + $0x58] sm:$0xff]
      %v2018 = vadd.f32 %v2005, %v2017
      %v2019 = vld [vmem:[%s2 + $0xa0] sm:$0xff]
      %v2020 = vadd.f32 %v2010, %v2019
      %v2021 = vld [vmem:[%s165 + $0x1c] sm:$0xf]
      %v2023 = vsel %vm191, %v2021, 0
      %2025 = vmatprep.subr.bf16.mxu0 0
      %2026 = vmatpush1.bf16.msra.mxu0 %v2023
      %2027 = vmatprep.subr.bf16.mxu0 0
      %2028 = vmatpush1.bf16.msra.mxu0 0
      %2029 = vmatprep.subr.bf16.mxu0 0
      %2030 = vmatpush1.bf16.msra.mxu0 0
      %2031 = vmatprep.subr.bf16.mxu0 0
      %2032 = vmatpush1.bf16.msra.mxu0 0
      %2033 = vmatprep.subr.bf16.mxu0 0
      %2034 = vmatpush1.bf16.msra.mxu0 0
      %2035 = vmatprep.subr.bf16.mxu0 0
      %2036 = vmatpush1.bf16.msra.mxu0 0
      %2037 = vmatprep.subr.bf16.mxu0 0
      %2038 = vmatpush1.bf16.msra.mxu0 0
      %2039 = vmatprep.subr.bf16.mxu0 0
      %2040 = vmatpush1.bf16.msra.mxu0 0
      %2041 = vmatprep.subr.bf16.mxu0 0
      %2042 = vmatpush1.bf16.msra.mxu0 0
      %2043 = vmatprep.subr.bf16.mxu0 0
      %2044 = vmatpush1.bf16.msra.mxu0 0
      %2045 = vmatprep.subr.bf16.mxu0 0
      %2046 = vmatpush1.bf16.msra.mxu0 0
      %2047 = vmatprep.subr.bf16.mxu0 0
      %2048 = vmatpush1.bf16.msra.mxu0 0
      %2049 = vmatprep.subr.bf16.mxu0 0
      %2050 = vmatpush1.bf16.msra.mxu0 0
      %2051 = vmatprep.subr.bf16.mxu0 0
      %2052 = vmatpush1.bf16.msra.mxu0 0
      %2053 = vmatprep.subr.bf16.mxu0 0
      %2054 = vmatpush1.bf16.msra.mxu0 0
      %2055 = vmatprep.subr.bf16.mxu0 0
      %2056 = vmatpush1.bf16.msra.mxu0 0
      %2057 = vmatprep.mubr.bf16.mxu0 0
      %2058 = vmatmul.mubr.bf16.gmra.mrb[0].mxu0 %v186
      %v2059 = vpop.f32.mrb[0].mxu0
      %v2060 = vadd.f32 0.0, %v2059
      %v2061 = vpop.f32.mrb[0].mxu0
      %v2062 = vpop.f32.mrb[0].mxu0
      %v2063 = vadd.f32 0.0, %v2062
      %v2064 = vpop.f32.mrb[0].mxu0
      %2065 = vmatprep.mubr.bf16.mxu0 0
      %2066 = vmatmul.mubr.bf16.gmra.mrb[0].mxu0 %v189
      %v2067 = vpop.f32.mrb[0].mxu0
      %v2068 = vadd.f32 0.0, %v2067
      %v2069 = vpop.f32.mrb[0].mxu0
      %v2070 = vpop.f32.mrb[0].mxu0
      %v2071 = vpop.f32.mrb[0].mxu0
      %2072 = vdwg.mxu0
      %v2073 = vld [vmem:[%s2 + $0x18] sm:$0xff]
      %v2074 = vadd.f32 %v2060, %v2073
      %v2075 = vld [vmem:[%s2 + $0x60] sm:$0xff]
      %v2076 = vadd.f32 %v2063, %v2075
      %v2077 = vld [vmem:[%s2 + $0xa8] sm:$0xff]
      %v2078 = vadd.f32 %v2068, %v2077
      %v2079 = vld [vmem:[%s165 + $0x24] sm:$0xf]
      %v2081 = vsel %vm191, %v2079, 0
      %2083 = vmatprep.subr.bf16.mxu0 0
      %2084 = vmatpush1.bf16.msra.mxu0 %v2081
      %2085 = vmatprep.subr.bf16.mxu0 0
      %2086 = vmatpush1.bf16.msra.mxu0 0
      %2087 = vmatprep.subr.bf16.mxu0 0
      %2088 = vmatpush1.bf16.msra.mxu0 0
      %2089 = vmatprep.subr.bf16.mxu0 0
      %2090 = vmatpush1.bf16.msra.mxu0 0
      %2091 = vmatprep.subr.bf16.mxu0 0
      %2092 = vmatpush1.bf16.msra.mxu0 0
      %2093 = vmatprep.subr.bf16.mxu0 0
      %2094 = vmatpush1.bf16.msra.mxu0 0
      %2095 = vmatprep.subr.bf16.mxu0 0
      %2096 = vmatpush1.bf16.msra.mxu0 0
      %2097 = vmatprep.subr.bf16.mxu0 0
      %2098 = vmatpush1.bf16.msra.mxu0 0
      %2099 = vmatprep.subr.bf16.mxu0 0
      %2100 = vmatpush1.bf16.msra.mxu0 0
      %2101 = vmatprep.subr.bf16.mxu0 0
      %2102 = vmatpush1.bf16.msra.mxu0 0
      %2103 = vmatprep.subr.bf16.mxu0 0
      %2104 = vmatpush1.bf16.msra.mxu0 0
      %2105 = vmatprep.subr.bf16.mxu0 0
      %2106 = vmatpush1.bf16.msra.mxu0 0
      %2107 = vmatprep.subr.bf16.mxu0 0
      %2108 = vmatpush1.bf16.msra.mxu0 0
      %2109 = vmatprep.subr.bf16.mxu0 0
      %2110 = vmatpush1.bf16.msra.mxu0 0
      %2111 = vmatprep.subr.bf16.mxu0 0
      %2112 = vmatpush1.bf16.msra.mxu0 0
      %2113 = vmatprep.subr.bf16.mxu0 0
      %2114 = vmatpush1.bf16.msra.mxu0 0
      %2115 = vmatprep.mubr.bf16.mxu0 0
      %2116 = vmatmul.mubr.bf16.gmra.mrb[0].mxu0 %v186
      %v2117 = vpop.f32.mrb[0].mxu0
      %v2118 = vadd.f32 0.0, %v2117
      %v2119 = vpop.f32.mrb[0].mxu0
      %v2120 = vpop.f32.mrb[0].mxu0
      %v2121 = vadd.f32 0.0, %v2120
      %v2122 = vpop.f32.mrb[0].mxu0
      %2123 = vmatprep.mubr.bf16.mxu0 0
      %2124 = vmatmul.mubr.bf16.gmra.mrb[0].mxu0 %v189
      %v2125 = vpop.f32.mrb[0].mxu0
      %v2126 = vadd.f32 0.0, %v2125
      %v2127 = vpop.f32.mrb[0].mxu0
      %v2128 = vpop.f32.mrb[0].mxu0
      %v2129 = vpop.f32.mrb[0].mxu0
      %2130 = vdwg.mxu0
      %v2131 = vld [vmem:[%s2 + $0x20] sm:$0xff]
      %v2132 = vadd.f32 %v2118, %v2131
      %v2133 = vld [vmem:[%s2 + $0x68] sm:$0xff]
      %v2134 = vadd.f32 %v2121, %v2133
      %v2135 = vld [vmem:[%s2 + $0xb0] sm:$0xff]
      %v2136 = vadd.f32 %v2126, %v2135
      %v2137 = vld [vmem:[%s165 + $0x2c] sm:$0xf]
      %v2139 = vsel %vm191, %v2137, 0
      %2141 = vmatprep.subr.bf16.mxu0 0
      %2142 = vmatpush1.bf16.msra.mxu0 %v2139
      %2143 = vmatprep.subr.bf16.mxu0 0
      %2144 = vmatpush1.bf16.msra.mxu0 0
      %2145 = vmatprep.subr.bf16.mxu0 0
      %2146 = vmatpush1.bf16.msra.mxu0 0
      %2147 = vmatprep.subr.bf16.mxu0 0
      %2148 = vmatpush1.bf16.msra.mxu0 0
      %2149 = vmatprep.subr.bf16.mxu0 0
      %2150 = vmatpush1.bf16.msra.mxu0 0
      %2151 = vmatprep.subr.bf16.mxu0 0
      %2152 = vmatpush1.bf16.msra.mxu0 0
      %2153 = vmatprep.subr.bf16.mxu0 0
      %2154 = vmatpush1.bf16.msra.mxu0 0
      %2155 = vmatprep.subr.bf16.mxu0 0
      %2156 = vmatpush1.bf16.msra.mxu0 0
      %2157 = vmatprep.subr.bf16.mxu0 0
      %2158 = vmatpush1.bf16.msra.mxu0 0
      %2159 = vmatprep.subr.bf16.mxu0 0
      %2160 = vmatpush1.bf16.msra.mxu0 0
      %2161 = vmatprep.subr.bf16.mxu0 0
      %2162 = vmatpush1.bf16.msra.mxu0 0
      %2163 = vmatprep.subr.bf16.mxu0 0
      %2164 = vmatpush1.bf16.msra.mxu0 0
      %2165 = vmatprep.subr.bf16.mxu0 0
      %2166 = vmatpush1.bf16.msra.mxu0 0
      %2167 = vmatprep.subr.bf16.mxu0 0
      %2168 = vmatpush1.bf16.msra.mxu0 0
      %2169 = vmatprep.subr.bf16.mxu0 0
      %2170 = vmatpush1.bf16.msra.mxu0 0
      %2171 = vmatprep.subr.bf16.mxu0 0
      %2172 = vmatpush1.bf16.msra.mxu0 0
      %2173 = vmatprep.mubr.bf16.mxu0 0
      %2174 = vmatmul.mubr.bf16.gmra.mrb[0].mxu0 %v186
      %v2175 = vpop.f32.mrb[0].mxu0
      %v2176 = vadd.f32 0.0, %v2175
      %v2177 = vpop.f32.mrb[0].mxu0
      %v2178 = vpop.f32.mrb[0].mxu0
      %v2179 = vadd.f32 0.0, %v2178
      %v2180 = vpop.f32.mrb[0].mxu0
      %2181 = vmatprep.mubr.bf16.mxu0 0
      %2182 = vmatmul.mubr.bf16.gmra.mrb[0].mxu0 %v189
      %v2183 = vpop.f32.mrb[0].mxu0
      %v2184 = vadd.f32 0.0, %v2183
      %v2185 = vpop.f32.mrb[0].mxu0
      %v2186 = vpop.f32.mrb[0].mxu0
      %v2187 = vpop.f32.mrb[0].mxu0
      %2188 = vdwg.mxu0
      %v2189 = vld [vmem:[%s2 + $0x28] sm:$0xff]
      %v2190 = vadd.f32 %v2176, %v2189
      %v2191 = vld [vmem:[%s2 + $0x70] sm:$0xff]
      %v2192 = vadd.f32 %v2179, %v2191
      %v2193 = vld [vmem:[%s2 + $0xb8] sm:$0xff]
      %v2194 = vadd.f32 %v2184, %v2193
      %v2195 = vld [vmem:[%s165 + $0x34] sm:$0xf]
      %v2197 = vsel %vm191, %v2195, 0
      %2199 = vmatprep.subr.bf16.mxu0 0
      %2200 = vmatpush1.bf16.msra.mxu0 %v2197
      %2201 = vmatprep.subr.bf16.mxu0 0
      %2202 = vmatpush1.bf16.msra.mxu0 0
      %2203 = vmatprep.subr.bf16.mxu0 0
      %2204 = vmatpush1.bf16.msra.mxu0 0
      %2205 = vmatprep.subr.bf16.mxu0 0
      %2206 = vmatpush1.bf16.msra.mxu0 0
      %2207 = vmatprep.subr.bf16.mxu0 0
      %2208 = vmatpush1.bf16.msra.mxu0 0
      %2209 = vmatprep.subr.bf16.mxu0 0
      %2210 = vmatpush1.bf16.msra.mxu0 0
      %2211 = vmatprep.subr.bf16.mxu0 0
      %2212 = vmatpush1.bf16.msra.mxu0 0
      %2213 = vmatprep.subr.bf16.mxu0 0
      %2214 = vmatpush1.bf16.msra.mxu0 0
      %2215 = vmatprep.subr.bf16.mxu0 0
      %2216 = vmatpush1.bf16.msra.mxu0 0
      %2217 = vmatprep.subr.bf16.mxu0 0
      %2218 = vmatpush1.bf16.msra.mxu0 0
      %2219 = vmatprep.subr.bf16.mxu0 0
      %2220 = vmatpush1.bf16.msra.mxu0 0
      %2221 = vmatprep.subr.bf16.mxu0 0
      %2222 = vmatpush1.bf16.msra.mxu0 0
      %2223 = vmatprep.subr.bf16.mxu0 0
      %2224 = vmatpush1.bf16.msra.mxu0 0
      %2225 = vmatprep.subr.bf16.mxu0 0
      %2226 = vmatpush1.bf16.msra.mxu0 0
      %2227 = vmatprep.subr.bf16.mxu0 0
      %2228 = vmatpush1.bf16.msra.mxu0 0
      %2229 = vmatprep.subr.bf16.mxu0 0
      %2230 = vmatpush1.bf16.msra.mxu0 0
      %2231 = vmatprep.mubr.bf16.mxu0 0
      %2232 = vmatmul.mubr.bf16.gmra.mrb[0].mxu0 %v186
      %v2233 = vpop.f32.mrb[0].mxu0
      %v2234 = vadd.f32 0.0, %v2233
      %v2235 = vpop.f32.mrb[0].mxu0
      %v2236 = vpop.f32.mrb[0].mxu0
      %v2237 = vadd.f32 0.0, %v2236
      %v2238 = vpop.f32.mrb[0].mxu0
      %2239 = vmatprep.mubr.bf16.mxu0 0
      %2240 = vmatmul.mubr.bf16.gmra.mrb[0].mxu0 %v189
      %v2241 = vpop.f32.mrb[0].mxu0
      %v2242 = vadd.f32 0.0, %v2241
      %v2243 = vpop.f32.mrb[0].mxu0
      %v2244 = vpop.f32.mrb[0].mxu0
      %v2245 = vpop.f32.mrb[0].mxu0
      %2246 = vdwg.mxu0
      %v2247 = vld [vmem:[%s2 + $0x30] sm:$0xff]
      %v2248 = vadd.f32 %v2234, %v2247
      %v2249 = vld [vmem:[%s2 + $0x78] sm:$0xff]
      %v2250 = vadd.f32 %v2237, %v2249
      %v2251 = vld [vmem:[%s2 + $0xc0] sm:$0xff]
      %v2252 = vadd.f32 %v2242, %v2251
      %v2253 = vld [vmem:[%s165 + $0x3c] sm:$0xf]
      %v2255 = vsel %vm191, %v2253, 0
      %2257 = vmatprep.subr.bf16.mxu0 0
      %2258 = vmatpush1.bf16.msra.mxu0 %v2255
      %2259 = vmatprep.subr.bf16.mxu0 0
      %2260 = vmatpush1.bf16.msra.mxu0 0
      %2261 = vmatprep.subr.bf16.mxu0 0
      %2262 = vmatpush1.bf16.msra.mxu0 0
      %2263 = vmatprep.subr.bf16.mxu0 0
      %2264 = vmatpush1.bf16.msra.mxu0 0
      %2265 = vmatprep.subr.bf16.mxu0 0
      %2266 = vmatpush1.bf16.msra.mxu0 0
      %2267 = vmatprep.subr.bf16.mxu0 0
      %2268 = vmatpush1.bf16.msra.mxu0 0
      %2269 = vmatprep.subr.bf16.mxu0 0
      %2270 = vmatpush1.bf16.msra.mxu0 0
      %2271 = vmatprep.subr.bf16.mxu0 0
      %2272 = vmatpush1.bf16.msra.mxu0 0
      %2273 = vmatprep.subr.bf16.mxu0 0
      %2274 = vmatpush1.bf16.msra.mxu0 0
      %2275 = vmatprep.subr.bf16.mxu0 0
      %2276 = vmatpush1.bf16.msra.mxu0 0
      %2277 = vmatprep.subr.bf16.mxu0 0
      %2278 = vmatpush1.bf16.msra.mxu0 0
      %2279 = vmatprep.subr.bf16.mxu0 0
      %2280 = vmatpush1.bf16.msra.mxu0 0
      %2281 = vmatprep.subr.bf16.mxu0 0
      %2282 = vmatpush1.bf16.msra.mxu0 0
      %2283 = vmatprep.subr.bf16.mxu0 0
      %2284 = vmatpush1.bf16.msra.mxu0 0
      %2285 = vmatprep.subr.bf16.mxu0 0
      %2286 = vmatpush1.bf16.msra.mxu0 0
      %2287 = vmatprep.subr.bf16.mxu0 0
      %2288 = vmatpush1.bf16.msra.mxu0 0
      %2289 = vmatprep.mubr.bf16.mxu0 0
      %2290 = vmatmul.mubr.bf16.gmra.mrb[0].mxu0 %v186
      %v2291 = vpop.f32.mrb[0].mxu0
      %v2292 = vadd.f32 0.0, %v2291
      %v2293 = vpop.f32.mrb[0].mxu0
      %v2294 = vpop.f32.mrb[0].mxu0
      %v2295 = vadd.f32 0.0, %v2294
      %v2296 = vpop.f32.mrb[0].mxu0
      %2297 = vmatprep.mubr.bf16.mxu0 0
      %2298 = vmatmul.mubr.bf16.gmra.mrb[0].mxu0 %v189
      %v2299 = vpop.f32.mrb[0].mxu0
      %v2300 = vadd.f32 0.0, %v2299
      %v2301 = vpop.f32.mrb[0].mxu0
      %v2302 = vpop.f32.mrb[0].mxu0
      %v2303 = vpop.f32.mrb[0].mxu0
      %2304 = vdwg.mxu0
      %v2305 = vld [vmem:[%s2 + $0x38] sm:$0xff]
      %v2306 = vadd.f32 %v2292, %v2305
      %v2307 = vld [vmem:[%s2 + $0x80] sm:$0xff]
      %v2308 = vadd.f32 %v2295, %v2307
      %v2309 = vld [vmem:[%s2 + $0xc8] sm:$0xff]
      %v2310 = vadd.f32 %v2300, %v2309
      %v2311 = vld [vmem:[%s165 + $0x44] sm:$0xf]
      %v2313 = vsel %vm191, %v2311, 0
      %2315 = vmatprep.subr.bf16.mxu0 0
      %2316 = vmatpush1.bf16.msra.mxu0 %v2313
      %2317 = vmatprep.subr.bf16.mxu0 0
      %2318 = vmatpush1.bf16.msra.mxu0 0
      %2319 = vmatprep.subr.bf16.mxu0 0
      %2320 = vmatpush1.bf16.msra.mxu0 0
      %2321 = vmatprep.subr.bf16.mxu0 0
      %2322 = vmatpush1.bf16.msra.mxu0 0
      %2323 = vmatprep.subr.bf16.mxu0 0
      %2324 = vmatpush1.bf16.msra.mxu0 0
      %2325 = vmatprep.subr.bf16.mxu0 0
      %2326 = vmatpush1.bf16.msra.mxu0 0
      %2327 = vmatprep.subr.bf16.mxu0 0
      %2328 = vmatpush1.bf16.msra.mxu0 0
      %2329 = vmatprep.subr.bf16.mxu0 0
      %2330 = vmatpush1.bf16.msra.mxu0 0
      %2331 = vmatprep.subr.bf16.mxu0 0
      %2332 = vmatpush1.bf16.msra.mxu0 0
      %2333 = vmatprep.subr.bf16.mxu0 0
      %2334 = vmatpush1.bf16.msra.mxu0 0
      %2335 = vmatprep.subr.bf16.mxu0 0
      %2336 = vmatpush1.bf16.msra.mxu0 0
      %2337 = vmatprep.subr.bf16.mxu0 0
      %2338 = vmatpush1.bf16.msra.mxu0 0
      %2339 = vmatprep.subr.bf16.mxu0 0
      %2340 = vmatpush1.bf16.msra.mxu0 0
      %2341 = vmatprep.subr.bf16.mxu0 0
      %2342 = vmatpush1.bf16.msra.mxu0 0
      %2343 = vmatprep.subr.bf16.mxu0 0
      %2344 = vmatpush1.bf16.msra.mxu0 0
      %2345 = vmatprep.subr.bf16.mxu0 0
      %2346 = vmatpush1.bf16.msra.mxu0 0
      %2347 = vmatprep.mubr.bf16.mxu0 0
      %2348 = vmatmul.mubr.bf16.gmra.mrb[0].mxu0 %v186
      %v2349 = vpop.f32.mrb[0].mxu0
      %v2350 = vadd.f32 0.0, %v2349
      %v2351 = vpop.f32.mrb[0].mxu0
      %v2352 = vpop.f32.mrb[0].mxu0
      %v2353 = vadd.f32 0.0, %v2352
      %v2354 = vpop.f32.mrb[0].mxu0
      %2355 = vmatprep.mubr.bf16.mxu0 0
      %2356 = vmatmul.mubr.bf16.gmra.mrb[0].mxu0 %v189
      %v2357 = vpop.f32.mrb[0].mxu0
      %v2358 = vadd.f32 0.0, %v2357
      %v2359 = vpop.f32.mrb[0].mxu0
      %v2360 = vpop.f32.mrb[0].mxu0
      %v2361 = vpop.f32.mrb[0].mxu0
      %2362 = vdwg.mxu0
      %v2363 = vld [vmem:[%s2 + $0x40] sm:$0xff]
      %v2364 = vadd.f32 %v2350, %v2363
      %v2365 = vld [vmem:[%s2 + $0x88] sm:$0xff]
      %v2366 = vadd.f32 %v2353, %v2365
      %v2367 = vld [vmem:[%s2 + $0xd0] sm:$0xff]
      %v2368 = vadd.f32 %v2358, %v2367
      %v2369 = vmul.f32 %v1900, %v1902
      %v2370 = vrot.slane %v2369, 4
      %v2371 = vadd.f32 %v2369, %v2370
      %v2372 = vrot.slane %v2371, 6
      %v2373 = vadd.f32 %v2371, %v2372
      %v2374 = vrot.slane %v2373, 7
      %v2375 = vadd.f32 %v2373, %v2374
      %v2376 = vmul.f32 %v1900, %v1960
      %v2377 = vrot.slane %v2376, 4
      %v2378 = vadd.f32 %v2376, %v2377
      %v2379 = vrot.slane %v2378, 6
      %v2380 = vadd.f32 %v2378, %v2379
      %v2381 = vrot.slane %v2380, 7
      %v2382 = vadd.f32 %v2380, %v2381
      %v2383 = vmul.f32 %v1900, %v2018
      %v2384 = vrot.slane %v2383, 4
      %v2385 = vadd.f32 %v2383, %v2384
      %v2386 = vrot.slane %v2385, 6
      %v2387 = vadd.f32 %v2385, %v2386
      %v2388 = vrot.slane %v2387, 7
      %v2389 = vadd.f32 %v2387, %v2388
      %v2390 = vmul.f32 %v1900, %v2076
      %v2391 = vrot.slane %v2390, 4
      %v2392 = vadd.f32 %v2390, %v2391
      %v2393 = vrot.slane %v2392, 6
      %v2394 = vadd.f32 %v2392, %v2393
      %v2395 = vrot.slane %v2394, 7
      %v2396 = vadd.f32 %v2394, %v2395
      %v2397 = vmul.f32 %v1900, %v2134
      %v2398 = vrot.slane %v2397, 4
      %v2399 = vadd.f32 %v2397, %v2398
      %v2400 = vrot.slane %v2399, 6
      %v2401 = vadd.f32 %v2399, %v2400
      %v2402 = vrot.slane %v2401, 7
      %v2403 = vadd.f32 %v2401, %v2402
      %v2404 = vmul.f32 %v1900, %v2192
      %v2405 = vrot.slane %v2404, 4
      %v2406 = vadd.f32 %v2404, %v2405
      %v2407 = vrot.slane %v2406, 6
      %v2408 = vadd.f32 %v2406, %v2407
      %v2409 = vrot.slane %v2408, 7
      %v2410 = vadd.f32 %v2408, %v2409
      %v2411 = vmul.f32 %v1900, %v2250
      %v2412 = vrot.slane %v2411, 4
      %v2413 = vadd.f32 %v2411, %v2412
      %v2414 = vrot.slane %v2413, 6
      %v2415 = vadd.f32 %v2413, %v2414
      %v2416 = vrot.slane %v2415, 7
      %v2417 = vadd.f32 %v2415, %v2416
      %v2418 = vmul.f32 %v1900, %v2308
      %v2419 = vrot.slane %v2418, 4
      %v2420 = vadd.f32 %v2418, %v2419
      %v2421 = vrot.slane %v2420, 6
      %v2422 = vadd.f32 %v2420, %v2421
      %v2423 = vrot.slane %v2422, 7
      %v2424 = vadd.f32 %v2422, %v2423
      %v2425 = vmul.f32 %v1900, %v2366
      %v2426 = vrot.slane %v2425, 4
      %v2427 = vadd.f32 %v2425, %v2426
      %v2428 = vrot.slane %v2427, 6
      %v2429 = vadd.f32 %v2427, %v2428
      %v2430 = vrot.slane %v2429, 7
      %v2431 = vadd.f32 %v2429, %v2430
      %v2432 = vmax.f32 %v2375, %v2382
      %v2433 = vmax.f32 %v2432, %v2389
      %v2434 = vmax.f32 %v2433, %v2396
      %v2435 = vmax.f32 %v2434, %v2403
      %v2436 = vmax.f32 %v2435, %v2410
      %v2437 = vmax.f32 %v2436, %v2417
      %v2438 = vmax.f32 %v2437, %v2424
      %v2439 = vmax.f32 %v2438, %v2431
      %v2440 = vsub.f32 %v2375, %v2439
      %v2441 = vmul.f32 %v2440, 1.442695
      %v2442 = vpow.pop %v2441
      %v2443 = vmul.f32 %v2442, %v1904
      %v2444 = vsub.f32 %v2382, %v2439
      %v2445 = vmul.f32 %v2444, 1.442695
      %v2446 = vpow.pop %v2445
      %v2447 = vadd.f32 %v2442, %v2446
      %v2448 = vmul.f32 %v2446, %v1962
      %v2449 = vadd.f32 %v2443, %v2448
      %v2450 = vsub.f32 %v2389, %v2439
      %v2451 = vmul.f32 %v2450, 1.442695
      %v2452 = vpow.pop %v2451
      %v2453 = vadd.f32 %v2447, %v2452
      %v2454 = vmul.f32 %v2452, %v2020
      %v2455 = vadd.f32 %v2449, %v2454
      %v2456 = vsub.f32 %v2396, %v2439
      %v2457 = vmul.f32 %v2456, 1.442695
      %v2458 = vpow.pop %v2457
      %v2459 = vadd.f32 %v2453, %v2458
      %v2460 = vmul.f32 %v2458, %v2078
      %v2461 = vadd.f32 %v2455, %v2460
      %v2462 = vsub.f32 %v2403, %v2439
      %v2463 = vmul.f32 %v2462, 1.442695
      %v2464 = vpow.pop %v2463
      %v2465 = vadd.f32 %v2459, %v2464
      %v2466 = vmul.f32 %v2464, %v2136
      %v2467 = vadd.f32 %v2461, %v2466
      %v2468 = vsub.f32 %v2410, %v2439
      %v2469 = vmul.f32 %v2468, 1.442695
      %v2470 = vpow.pop %v2469
      %v2471 = vadd.f32 %v2465, %v2470
      %v2472 = vmul.f32 %v2470, %v2194
      %v2473 = vadd.f32 %v2467, %v2472
      %v2474 = vsub.f32 %v2417, %v2439
      %v2475 = vmul.f32 %v2474, 1.442695
      %v2476 = vpow.pop %v2475
      %v2477 = vadd.f32 %v2471, %v2476
      %v2478 = vmul.f32 %v2476, %v2252
      %v2479 = vadd.f32 %v2473, %v2478
      %v2480 = vsub.f32 %v2424, %v2439
      %v2481 = vmul.f32 %v2480, 1.442695
      %v2482 = vpow.pop %v2481
      %v2483 = vadd.f32 %v2477, %v2482
      %v2484 = vmul.f32 %v2482, %v2310
      %v2485 = vadd.f32 %v2479, %v2484
      %v2486 = vsub.f32 %v2431, %v2439
      %v2487 = vmul.f32 %v2486, 1.442695
      %v2488 = vpow.pop %v2487
      %v2489 = vadd.f32 %v2483, %v2488
      %v2490 = vmul.f32 %v2488, %v2368
      %v2491 = vadd.f32 %v2485, %v2490
      %v2492 = vrcp.pop %v2489
      %v2493 = vmul.f32 %v2491, %v2492
      %2494 = vst [vmem:[%s170 + $0x8] sm:$0xff] %v2493
      %v2495 = vmul.f32 %v1958, %v1902
      %v2496 = vrot.slane %v2495, 4
      %v2497 = vadd.f32 %v2495, %v2496
      %v2498 = vrot.slane %v2497, 6
      %v2499 = vadd.f32 %v2497, %v2498
      %v2500 = vrot.slane %v2499, 7
      %v2501 = vadd.f32 %v2499, %v2500
      %v2502 = vmul.f32 %v1958, %v1960
      %v2503 = vrot.slane %v2502, 4
      %v2504 = vadd.f32 %v2502, %v2503
      %v2505 = vrot.slane %v2504, 6
      %v2506 = vadd.f32 %v2504, %v2505
      %v2507 = vrot.slane %v2506, 7
      %v2508 = vadd.f32 %v2506, %v2507
      %v2509 = vmul.f32 %v1958, %v2018
      %v2510 = vrot.slane %v2509, 4
      %v2511 = vadd.f32 %v2509, %v2510
      %v2512 = vrot.slane %v2511, 6
      %v2513 = vadd.f32 %v2511, %v2512
      %v2514 = vrot.slane %v2513, 7
      %v2515 = vadd.f32 %v2513, %v2514
      %v2516 = vmul.f32 %v1958, %v2076
      %v2517 = vrot.slane %v2516, 4
      %v2518 = vadd.f32 %v2516, %v2517
      %v2519 = vrot.slane %v2518, 6
      %v2520 = vadd.f32 %v2518, %v2519
      %v2521 = vrot.slane %v2520, 7
      %v2522 = vadd.f32 %v2520, %v2521
      %v2523 = vmul.f32 %v1958, %v2134
      %v2524 = vrot.slane %v2523, 4
      %v2525 = vadd.f32 %v2523, %v2524
      %v2526 = vrot.slane %v2525, 6
      %v2527 = vadd.f32 %v2525, %v2526
      %v2528 = vrot.slane %v2527, 7
      %v2529 = vadd.f32 %v2527, %v2528
      %v2530 = vmul.f32 %v1958, %v2192
      %v2531 = vrot.slane %v2530, 4
      %v2532 = vadd.f32 %v2530, %v2531
      %v2533 = vrot.slane %v2532, 6
      %v2534 = vadd.f32 %v2532, %v2533
      %v2535 = vrot.slane %v2534, 7
      %v2536 = vadd.f32 %v2534, %v2535
      %v2537 = vmul.f32 %v1958, %v2250
      %v2538 = vrot.slane %v2537, 4
      %v2539 = vadd.f32 %v2537, %v2538
      %v2540 = vrot.slane %v2539, 6
      %v2541 = vadd.f32 %v2539, %v2540
      %v2542 = vrot.slane %v2541, 7
      %v2543 = vadd.f32 %v2541, %v2542
      %v2544 = vmul.f32 %v1958, %v2308
      %v2545 = vrot.slane %v2544, 4
      %v2546 = vadd.f32 %v2544, %v2545
      %v2547 = vrot.slane %v2546, 6
      %v2548 = vadd.f32 %v2546, %v2547
      %v2549 = vrot.slane %v2548, 7
      %v2550 = vadd.f32 %v2548, %v2549
      %v2551 = vmul.f32 %v1958, %v2366
      %v2552 = vrot.slane %v2551, 4
      %v2553 = vadd.f32 %v2551, %v2552
      %v2554 = vrot.slane %v2553, 6
      %v2555 = vadd.f32 %v2553, %v2554
      %v2556 = vrot.slane %v2555, 7
      %v2557 = vadd.f32 %v2555, %v2556
      %v2558 = vmax.f32 %v2501, %v2508
      %v2559 = vmax.f32 %v2558, %v2515
      %v2560 = vmax.f32 %v2559, %v2522
      %v2561 = vmax.f32 %v2560, %v2529
      %v2562 = vmax.f32 %v2561, %v2536
      %v2563 = vmax.f32 %v2562, %v2543
      %v2564 = vmax.f32 %v2563, %v2550
      %v2565 = vmax.f32 %v2564, %v2557
      %v2566 = vsub.f32 %v2501, %v2565
      %v2567 = vmul.f32 %v2566, 1.442695
      %v2568 = vpow.pop %v2567
      %v2569 = vmul.f32 %v2568, %v1904
      %v2570 = vsub.f32 %v2508, %v2565
      %v2571 = vmul.f32 %v2570, 1.442695
      %v2572 = vpow.pop %v2571
      %v2573 = vadd.f32 %v2568, %v2572
      %v2574 = vmul.f32 %v2572, %v1962
      %v2575 = vadd.f32 %v2569, %v2574
      %v2576 = vsub.f32 %v2515, %v2565
      %v2577 = vmul.f32 %v2576, 1.442695
      %v2578 = vpow.pop %v2577
      %v2579 = vadd.f32 %v2573, %v2578
      %v2580 = vmul.f32 %v2578, %v2020
      %v2581 = vadd.f32 %v2575, %v2580
      %v2582 = vsub.f32 %v2522, %v2565
      %v2583 = vmul.f32 %v2582, 1.442695
      %v2584 = vpow.pop %v2583
      %v2585 = vadd.f32 %v2579, %v2584
      %v2586 = vmul.f32 %v2584, %v2078
      %v2587 = vadd.f32 %v2581, %v2586
      %v2588 = vsub.f32 %v2529, %v2565
      %v2589 = vmul.f32 %v2588, 1.442695
      %v2590 = vpow.pop %v2589
      %v2591 = vadd.f32 %v2585, %v2590
      %v2592 = vmul.f32 %v2590, %v2136
      %v2593 = vadd.f32 %v2587, %v2592
      %v2594 = vsub.f32 %v2536, %v2565
      %v2595 = vmul.f32 %v2594, 1.442695
      %v2596 = vpow.pop %v2595
      %v2597 = vadd.f32 %v2591, %v2596
      %v2598 = vmul.f32 %v2596, %v2194
      %v2599 = vadd.f32 %v2593, %v2598
      %v2600 = vsub.f32 %v2543, %v2565
      %v2601 = vmul.f32 %v2600, 1.442695
      %v2602 = vpow.pop %v2601
      %v2603 = vadd.f32 %v2597, %v2602
      %v2604 = vmul.f32 %v2602, %v2252
      %v2605 = vadd.f32 %v2599, %v2604
      %v2606 = vsub.f32 %v2550, %v2565
      %v2607 = vmul.f32 %v2606, 1.442695
      %v2608 = vpow.pop %v2607
      %v2609 = vadd.f32 %v2603, %v2608
      %v2610 = vmul.f32 %v2608, %v2310
      %v2611 = vadd.f32 %v2605, %v2610
      %v2612 = vsub.f32 %v2557, %v2565
      %v2613 = vmul.f32 %v2612, 1.442695
      %v2614 = vpow.pop %v2613
      %v2615 = vadd.f32 %v2609, %v2614
      %v2616 = vmul.f32 %v2614, %v2368
      %v2617 = vadd.f32 %v2611, %v2616
      %v2618 = vrcp.pop %v2615
      %v2619 = vmul.f32 %v2617, %v2618
      %2620 = vst [vmem:[%s170 + $0x18] sm:$0xff] %v2619
      %v2621 = vmul.f32 %v2016, %v1902
      %v2622 = vrot.slane %v2621, 4
      %v2623 = vadd.f32 %v2621, %v2622
      %v2624 = vrot.slane %v2623, 6
      %v2625 = vadd.f32 %v2623, %v2624
      %v2626 = vrot.slane %v2625, 7
      %v2627 = vadd.f32 %v2625, %v2626
      %v2628 = vmul.f32 %v2016, %v1960
      %v2629 = vrot.slane %v2628, 4
      %v2630 = vadd.f32 %v2628, %v2629
      %v2631 = vrot.slane %v2630, 6
      %v2632 = vadd.f32 %v2630, %v2631
      %v2633 = vrot.slane %v2632, 7
      %v2634 = vadd.f32 %v2632, %v2633
      %v2635 = vmul.f32 %v2016, %v2018
      %v2636 = vrot.slane %v2635, 4
      %v2637 = vadd.f32 %v2635, %v2636
      %v2638 = vrot.slane %v2637, 6
      %v2639 = vadd.f32 %v2637, %v2638
      %v2640 = vrot.slane %v2639, 7
      %v2641 = vadd.f32 %v2639, %v2640
      %v2642 = vmul.f32 %v2016, %v2076
      %v2643 = vrot.slane %v2642, 4
      %v2644 = vadd.f32 %v2642, %v2643
      %v2645 = vrot.slane %v2644, 6
      %v2646 = vadd.f32 %v2644, %v2645
      %v2647 = vrot.slane %v2646, 7
      %v2648 = vadd.f32 %v2646, %v2647
      %v2649 = vmul.f32 %v2016, %v2134
      %v2650 = vrot.slane %v2649, 4
      %v2651 = vadd.f32 %v2649, %v2650
      %v2652 = vrot.slane %v2651, 6
      %v2653 = vadd.f32 %v2651, %v2652
      %v2654 = vrot.slane %v2653, 7
      %v2655 = vadd.f32 %v2653, %v2654
      %v2656 = vmul.f32 %v2016, %v2192
      %v2657 = vrot.slane %v2656, 4
      %v2658 = vadd.f32 %v2656, %v2657
      %v2659 = vrot.slane %v2658, 6
      %v2660 = vadd.f32 %v2658, %v2659
      %v2661 = vrot.slane %v2660, 7
      %v2662 = vadd.f32 %v2660, %v2661
      %v2663 = vmul.f32 %v2016, %v2250
      %v2664 = vrot.slane %v2663, 4
      %v2665 = vadd.f32 %v2663, %v2664
      %v2666 = vrot.slane %v2665, 6
      %v2667 = vadd.f32 %v2665, %v2666
      %v2668 = vrot.slane %v2667, 7
      %v2669 = vadd.f32 %v2667, %v2668
      %v2670 = vmul.f32 %v2016, %v2308
      %v2671 = vrot.slane %v2670, 4
      %v2672 = vadd.f32 %v2670, %v2671
      %v2673 = vrot.slane %v2672, 6
      %v2674 = vadd.f32 %v2672, %v2673
      %v2675 = vrot.slane %v2674, 7
      %v2676 = vadd.f32 %v2674, %v2675
      %v2677 = vmul.f32 %v2016, %v2366
      %v2678 = vrot.slane %v2677, 4
      %v2679 = vadd.f32 %v2677, %v2678
      %v2680 = vrot.slane %v2679, 6
      %v2681 = vadd.f32 %v2679, %v2680
      %v2682 = vrot.slane %v2681, 7
      %v2683 = vadd.f32 %v2681, %v2682
      %v2684 = vmax.f32 %v2627, %v2634
      %v2685 = vmax.f32 %v2684, %v2641
      %v2686 = vmax.f32 %v2685, %v2648
      %v2687 = vmax.f32 %v2686, %v2655
      %v2688 = vmax.f32 %v2687, %v2662
      %v2689 = vmax.f32 %v2688, %v2669
      %v2690 = vmax.f32 %v2689, %v2676
      %v2691 = vmax.f32 %v2690, %v2683
      %v2692 = vsub.f32 %v2627, %v2691
      %v2693 = vmul.f32 %v2692, 1.442695
      %v2694 = vpow.pop %v2693
      %v2695 = vmul.f32 %v2694, %v1904
      %v2696 = vsub.f32 %v2634, %v2691
      %v2697 = vmul.f32 %v2696, 1.442695
      %v2698 = vpow.pop %v2697
      %v2699 = vadd.f32 %v2694, %v2698
      %v2700 = vmul.f32 %v2698, %v1962
      %v2701 = vadd.f32 %v2695, %v2700
      %v2702 = vsub.f32 %v2641, %v2691
      %v2703 = vmul.f32 %v2702, 1.442695
      %v2704 = vpow.pop %v2703
      %v2705 = vadd.f32 %v2699, %v2704
      %v2706 = vmul.f32 %v2704, %v2020
      %v2707 = vadd.f32 %v2701, %v2706
      %v2708 = vsub.f32 %v2648, %v2691
      %v2709 = vmul.f32 %v2708, 1.442695
      %v2710 = vpow.pop %v2709
      %v2711 = vadd.f32 %v2705, %v2710
      %v2712 = vmul.f32 %v2710, %v2078
      %v2713 = vadd.f32 %v2707, %v2712
      %v2714 = vsub.f32 %v2655, %v2691
      %v2715 = vmul.f32 %v2714, 1.442695
      %v2716 = vpow.pop %v2715
      %v2717 = vadd.f32 %v2711, %v2716
      %v2718 = vmul.f32 %v2716, %v2136
      %v2719 = vadd.f32 %v2713, %v2718
      %v2720 = vsub.f32 %v2662, %v2691
      %v2721 = vmul.f32 %v2720, 1.442695
      %v2722 = vpow.pop %v2721
      %v2723 = vadd.f32 %v2717, %v2722
      %v2724 = vmul.f32 %v2722, %v2194
      %v2725 = vadd.f32 %v2719, %v2724
      %v2726 = vsub.f32 %v2669, %v2691
      %v2727 = vmul.f32 %v2726, 1.442695
      %v2728 = vpow.pop %v2727
      %v2729 = vadd.f32 %v2723, %v2728
      %v2730 = vmul.f32 %v2728, %v2252
      %v2731 = vadd.f32 %v2725, %v2730
      %v2732 = vsub.f32 %v2676, %v2691
      %v2733 = vmul.f32 %v2732, 1.442695
      %v2734 = vpow.pop %v2733
      %v2735 = vadd.f32 %v2729, %v2734
      %v2736 = vmul.f32 %v2734, %v2310
      %v2737 = vadd.f32 %v2731, %v2736
      %v2738 = vsub.f32 %v2683, %v2691
      %v2739 = vmul.f32 %v2738, 1.442695
      %v2740 = vpow.pop %v2739
      %v2741 = vadd.f32 %v2735, %v2740
      %v2742 = vmul.f32 %v2740, %v2368
      %v2743 = vadd.f32 %v2737, %v2742
      %v2744 = vrcp.pop %v2741
      %v2745 = vmul.f32 %v2743, %v2744
      %2746 = vst [vmem:[%s170 + $0x28] sm:$0xff] %v2745
      %v2747 = vmul.f32 %v2074, %v1902
      %v2748 = vrot.slane %v2747, 4
      %v2749 = vadd.f32 %v2747, %v2748
      %v2750 = vrot.slane %v2749, 6
      %v2751 = vadd.f32 %v2749, %v2750
      %v2752 = vrot.slane %v2751, 7
      %v2753 = vadd.f32 %v2751, %v2752
      %v2754 = vmul.f32 %v2074, %v1960
      %v2755 = vrot.slane %v2754, 4
      %v2756 = vadd.f32 %v2754, %v2755
      %v2757 = vrot.slane %v2756, 6
      %v2758 = vadd.f32 %v2756, %v2757
      %v2759 = vrot.slane %v2758, 7
      %v2760 = vadd.f32 %v2758, %v2759
      %v2761 = vmul.f32 %v2074, %v2018
      %v2762 = vrot.slane %v2761, 4
      %v2763 = vadd.f32 %v2761, %v2762
      %v2764 = vrot.slane %v2763, 6
      %v2765 = vadd.f32 %v2763, %v2764
      %v2766 = vrot.slane %v2765, 7
      %v2767 = vadd.f32 %v2765, %v2766
      %v2768 = vmul.f32 %v2074, %v2076
      %v2769 = vrot.slane %v2768, 4
      %v2770 = vadd.f32 %v2768, %v2769
      %v2771 = vrot.slane %v2770, 6
      %v2772 = vadd.f32 %v2770, %v2771
      %v2773 = vrot.slane %v2772, 7
      %v2774 = vadd.f32 %v2772, %v2773
      %v2775 = vmul.f32 %v2074, %v2134
      %v2776 = vrot.slane %v2775, 4
      %v2777 = vadd.f32 %v2775, %v2776
      %v2778 = vrot.slane %v2777, 6
      %v2779 = vadd.f32 %v2777, %v2778
      %v2780 = vrot.slane %v2779, 7
      %v2781 = vadd.f32 %v2779, %v2780
      %v2782 = vmul.f32 %v2074, %v2192
      %v2783 = vrot.slane %v2782, 4
      %v2784 = vadd.f32 %v2782, %v2783
      %v2785 = vrot.slane %v2784, 6
      %v2786 = vadd.f32 %v2784, %v2785
      %v2787 = vrot.slane %v2786, 7
      %v2788 = vadd.f32 %v2786, %v2787
      %v2789 = vmul.f32 %v2074, %v2250
      %v2790 = vrot.slane %v2789, 4
      %v2791 = vadd.f32 %v2789, %v2790
      %v2792 = vrot.slane %v2791, 6
      %v2793 = vadd.f32 %v2791, %v2792
      %v2794 = vrot.slane %v2793, 7
      %v2795 = vadd.f32 %v2793, %v2794
      %v2796 = vmul.f32 %v2074, %v2308
      %v2797 = vrot.slane %v2796, 4
      %v2798 = vadd.f32 %v2796, %v2797
      %v2799 = vrot.slane %v2798, 6
      %v2800 = vadd.f32 %v2798, %v2799
      %v2801 = vrot.slane %v2800, 7
      %v2802 = vadd.f32 %v2800, %v2801
      %v2803 = vmul.f32 %v2074, %v2366
      %v2804 = vrot.slane %v2803, 4
      %v2805 = vadd.f32 %v2803, %v2804
      %v2806 = vrot.slane %v2805, 6
      %v2807 = vadd.f32 %v2805, %v2806
      %v2808 = vrot.slane %v2807, 7
      %v2809 = vadd.f32 %v2807, %v2808
      %v2810 = vmax.f32 %v2753, %v2760
      %v2811 = vmax.f32 %v2810, %v2767
      %v2812 = vmax.f32 %v2811, %v2774
      %v2813 = vmax.f32 %v2812, %v2781
      %v2814 = vmax.f32 %v2813, %v2788
      %v2815 = vmax.f32 %v2814, %v2795
      %v2816 = vmax.f32 %v2815, %v2802
      %v2817 = vmax.f32 %v2816, %v2809
      %v2818 = vsub.f32 %v2753, %v2817
      %v2819 = vmul.f32 %v2818, 1.442695
      %v2820 = vpow.pop %v2819
      %v2821 = vmul.f32 %v2820, %v1904
      %v2822 = vsub.f32 %v2760, %v2817
      %v2823 = vmul.f32 %v2822, 1.442695
      %v2824 = vpow.pop %v2823
      %v2825 = vadd.f32 %v2820, %v2824
      %v2826 = vmul.f32 %v2824, %v1962
      %v2827 = vadd.f32 %v2821, %v2826
      %v2828 = vsub.f32 %v2767, %v2817
      %v2829 = vmul.f32 %v2828, 1.442695
      %v2830 = vpow.pop %v2829
      %v2831 = vadd.f32 %v2825, %v2830
      %v2832 = vmul.f32 %v2830, %v2020
      %v2833 = vadd.f32 %v2827, %v2832
      %v2834 = vsub.f32 %v2774, %v2817
      %v2835 = vmul.f32 %v2834, 1.442695
      %v2836 = vpow.pop %v2835
      %v2837 = vadd.f32 %v2831, %v2836
      %v2838 = vmul.f32 %v2836, %v2078
      %v2839 = vadd.f32 %v2833, %v2838
      %v2840 = vsub.f32 %v2781, %v2817
      %v2841 = vmul.f32 %v2840, 1.442695
      %v2842 = vpow.pop %v2841
      %v2843 = vadd.f32 %v2837, %v2842
      %v2844 = vmul.f32 %v2842, %v2136
      %v2845 = vadd.f32 %v2839, %v2844
      %v2846 = vsub.f32 %v2788, %v2817
      %v2847 = vmul.f32 %v2846, 1.442695
      %v2848 = vpow.pop %v2847
      %v2849 = vadd.f32 %v2843, %v2848
      %v2850 = vmul.f32 %v2848, %v2194
      %v2851 = vadd.f32 %v2845, %v2850
      %v2852 = vsub.f32 %v2795, %v2817
      %v2853 = vmul.f32 %v2852, 1.442695
      %v2854 = vpow.pop %v2853
      %v2855 = vadd.f32 %v2849, %v2854
      %v2856 = vmul.f32 %v2854, %v2252
      %v2857 = vadd.f32 %v2851, %v2856
      %v2858 = vsub.f32 %v2802, %v2817
      %v2859 = vmul.f32 %v2858, 1.442695
      %v2860 = vpow.pop %v2859
      %v2861 = vadd.f32 %v2855, %v2860
      %v2862 = vmul.f32 %v2860, %v2310
      %v2863 = vadd.f32 %v2857, %v2862
      %v2864 = vsub.f32 %v2809, %v2817
      %v2865 = vmul.f32 %v2864, 1.442695
      %v2866 = vpow.pop %v2865
      %v2867 = vadd.f32 %v2861, %v2866
      %v2868 = vmul.f32 %v2866, %v2368
      %v2869 = vadd.f32 %v2863, %v2868
      %v2870 = vrcp.pop %v2867
      %v2871 = vmul.f32 %v2869, %v2870
      %2872 = vst [vmem:[%s170 + $0x38] sm:$0xff] %v2871
      %v2873 = vmul.f32 %v2132, %v1902
      %v2874 = vrot.slane %v2873, 4
      %v2875 = vadd.f32 %v2873, %v2874
      %v2876 = vrot.slane %v2875, 6
      %v2877 = vadd.f32 %v2875, %v2876
      %v2878 = vrot.slane %v2877, 7
      %v2879 = vadd.f32 %v2877, %v2878
      %v2880 = vmul.f32 %v2132, %v1960
      %v2881 = vrot.slane %v2880, 4
      %v2882 = vadd.f32 %v2880, %v2881
      %v2883 = vrot.slane %v2882, 6
      %v2884 = vadd.f32 %v2882, %v2883
      %v2885 = vrot.slane %v2884, 7
      %v2886 = vadd.f32 %v2884, %v2885
      %v2887 = vmul.f32 %v2132, %v2018
      %v2888 = vrot.slane %v2887, 4
      %v2889 = vadd.f32 %v2887, %v2888
      %v2890 = vrot.slane %v2889, 6
      %v2891 = vadd.f32 %v2889, %v2890
      %v2892 = vrot.slane %v2891, 7
      %v2893 = vadd.f32 %v2891, %v2892
      %v2894 = vmul.f32 %v2132, %v2076
      %v2895 = vrot.slane %v2894, 4
      %v2896 = vadd.f32 %v2894, %v2895
      %v2897 = vrot.slane %v2896, 6
      %v2898 = vadd.f32 %v2896, %v2897
      %v2899 = vrot.slane %v2898, 7
      %v2900 = vadd.f32 %v2898, %v2899
      %v2901 = vmul.f32 %v2132, %v2134
      %v2902 = vrot.slane %v2901, 4
      %v2903 = vadd.f32 %v2901, %v2902
      %v2904 = vrot.slane %v2903, 6
      %v2905 = vadd.f32 %v2903, %v2904
      %v2906 = vrot.slane %v2905, 7
      %v2907 = vadd.f32 %v2905, %v2906
      %v2908 = vmul.f32 %v2132, %v2192
      %v2909 = vrot.slane %v2908, 4
      %v2910 = vadd.f32 %v2908, %v2909
      %v2911 = vrot.slane %v2910, 6
      %v2912 = vadd.f32 %v2910, %v2911
      %v2913 = vrot.slane %v2912, 7
      %v2914 = vadd.f32 %v2912, %v2913
      %v2915 = vmul.f32 %v2132, %v2250
      %v2916 = vrot.slane %v2915, 4
      %v2917 = vadd.f32 %v2915, %v2916
      %v2918 = vrot.slane %v2917, 6
      %v2919 = vadd.f32 %v2917, %v2918
      %v2920 = vrot.slane %v2919, 7
      %v2921 = vadd.f32 %v2919, %v2920
      %v2922 = vmul.f32 %v2132, %v2308
      %v2923 = vrot.slane %v2922, 4
      %v2924 = vadd.f32 %v2922, %v2923
      %v2925 = vrot.slane %v2924, 6
      %v2926 = vadd.f32 %v2924, %v2925
      %v2927 = vrot.slane %v2926, 7
      %v2928 = vadd.f32 %v2926, %v2927
      %v2929 = vmul.f32 %v2132, %v2366
      %v2930 = vrot.slane %v2929, 4
      %v2931 = vadd.f32 %v2929, %v2930
      %v2932 = vrot.slane %v2931, 6
      %v2933 = vadd.f32 %v2931, %v2932
      %v2934 = vrot.slane %v2933, 7
      %v2935 = vadd.f32 %v2933, %v2934
      %v2936 = vmax.f32 %v2879, %v2886
      %v2937 = vmax.f32 %v2936, %v2893
      %v2938 = vmax.f32 %v2937, %v2900
      %v2939 = vmax.f32 %v2938, %v2907
      %v2940 = vmax.f32 %v2939, %v2914
      %v2941 = vmax.f32 %v2940, %v2921
      %v2942 = vmax.f32 %v2941, %v2928
      %v2943 = vmax.f32 %v2942, %v2935
      %v2944 = vsub.f32 %v2879, %v2943
      %v2945 = vmul.f32 %v2944, 1.442695
      %v2946 = vpow.pop %v2945
      %v2947 = vmul.f32 %v2946, %v1904
      %v2948 = vsub.f32 %v2886, %v2943
      %v2949 = vmul.f32 %v2948, 1.442695
      %v2950 = vpow.pop %v2949
      %v2951 = vadd.f32 %v2946, %v2950
      %v2952 = vmul.f32 %v2950, %v1962
      %v2953 = vadd.f32 %v2947, %v2952
      %v2954 = vsub.f32 %v2893, %v2943
      %v2955 = vmul.f32 %v2954, 1.442695
      %v2956 = vpow.pop %v2955
      %v2957 = vadd.f32 %v2951, %v2956
      %v2958 = vmul.f32 %v2956, %v2020
      %v2959 = vadd.f32 %v2953, %v2958
      %v2960 = vsub.f32 %v2900, %v2943
      %v2961 = vmul.f32 %v2960, 1.442695
      %v2962 = vpow.pop %v2961
      %v2963 = vadd.f32 %v2957, %v2962
      %v2964 = vmul.f32 %v2962, %v2078
      %v2965 = vadd.f32 %v2959, %v2964
      %v2966 = vsub.f32 %v2907, %v2943
      %v2967 = vmul.f32 %v2966, 1.442695
      %v2968 = vpow.pop %v2967
      %v2969 = vadd.f32 %v2963, %v2968
      %v2970 = vmul.f32 %v2968, %v2136
      %v2971 = vadd.f32 %v2965, %v2970
      %v2972 = vsub.f32 %v2914, %v2943
      %v2973 = vmul.f32 %v2972, 1.442695
      %v2974 = vpow.pop %v2973
      %v2975 = vadd.f32 %v2969, %v2974
      %v2976 = vmul.f32 %v2974, %v2194
      %v2977 = vadd.f32 %v2971, %v2976
      %v2978 = vsub.f32 %v2921, %v2943
      %v2979 = vmul.f32 %v2978, 1.442695
      %v2980 = vpow.pop %v2979
      %v2981 = vadd.f32 %v2975, %v2980
      %v2982 = vmul.f32 %v2980, %v2252
      %v2983 = vadd.f32 %v2977, %v2982
      %v2984 = vsub.f32 %v2928, %v2943
      %v2985 = vmul.f32 %v2984, 1.442695
      %v2986 = vpow.pop %v2985
      %v2987 = vadd.f32 %v2981, %v2986
      %v2988 = vmul.f32 %v2986, %v2310
      %v2989 = vadd.f32 %v2983, %v2988
      %v2990 = vsub.f32 %v2935, %v2943
      %v2991 = vmul.f32 %v2990, 1.442695
      %v2992 = vpow.pop %v2991
      %v2993 = vadd.f32 %v2987, %v2992
      %v2994 = vmul.f32 %v2992, %v2368
      %v2995 = vadd.f32 %v2989, %v2994
      %v2996 = vrcp.pop %v2993
      %v2997 = vmul.f32 %v2995, %v2996
      %2998 = vst [vmem:[%s170 + $0x48] sm:$0xff] %v2997
      %v2999 = vmul.f32 %v2190, %v1902
      %v3000 = vrot.slane %v2999, 4
      %v3001 = vadd.f32 %v2999, %v3000
      %v3002 = vrot.slane %v3001, 6
      %v3003 = vadd.f32 %v3001, %v3002
      %v3004 = vrot.slane %v3003, 7
      %v3005 = vadd.f32 %v3003, %v3004
      %v3006 = vmul.f32 %v2190, %v1960
      %v3007 = vrot.slane %v3006, 4
      %v3008 = vadd.f32 %v3006, %v3007
      %v3009 = vrot.slane %v3008, 6
      %v3010 = vadd.f32 %v3008, %v3009
      %v3011 = vrot.slane %v3010, 7
      %v3012 = vadd.f32 %v3010, %v3011
      %v3013 = vmul.f32 %v2190, %v2018
      %v3014 = vrot.slane %v3013, 4
      %v3015 = vadd.f32 %v3013, %v3014
      %v3016 = vrot.slane %v3015, 6
      %v3017 = vadd.f32 %v3015, %v3016
      %v3018 = vrot.slane %v3017, 7
      %v3019 = vadd.f32 %v3017, %v3018
      %v3020 = vmul.f32 %v2190, %v2076
      %v3021 = vrot.slane %v3020, 4
      %v3022 = vadd.f32 %v3020, %v3021
      %v3023 = vrot.slane %v3022, 6
      %v3024 = vadd.f32 %v3022, %v3023
      %v3025 = vrot.slane %v3024, 7
      %v3026 = vadd.f32 %v3024, %v3025
      %v3027 = vmul.f32 %v2190, %v2134
      %v3028 = vrot.slane %v3027, 4
      %v3029 = vadd.f32 %v3027, %v3028
      %v3030 = vrot.slane %v3029, 6
      %v3031 = vadd.f32 %v3029, %v3030
      %v3032 = vrot.slane %v3031, 7
      %v3033 = vadd.f32 %v3031, %v3032
      %v3034 = vmul.f32 %v2190, %v2192
      %v3035 = vrot.slane %v3034, 4
      %v3036 = vadd.f32 %v3034, %v3035
      %v3037 = vrot.slane %v3036, 6
      %v3038 = vadd.f32 %v3036, %v3037
      %v3039 = vrot.slane %v3038, 7
      %v3040 = vadd.f32 %v3038, %v3039
      %v3041 = vmul.f32 %v2190, %v2250
      %v3042 = vrot.slane %v3041, 4
      %v3043 = vadd.f32 %v3041, %v3042
      %v3044 = vrot.slane %v3043, 6
      %v3045 = vadd.f32 %v3043, %v3044
      %v3046 = vrot.slane %v3045, 7
      %v3047 = vadd.f32 %v3045, %v3046
      %v3048 = vmul.f32 %v2190, %v2308
      %v3049 = vrot.slane %v3048, 4
      %v3050 = vadd.f32 %v3048, %v3049
      %v3051 = vrot.slane %v3050, 6
      %v3052 = vadd.f32 %v3050, %v3051
      %v3053 = vrot.slane %v3052, 7
      %v3054 = vadd.f32 %v3052, %v3053
      %v3055 = vmul.f32 %v2190, %v2366
      %v3056 = vrot.slane %v3055, 4
      %v3057 = vadd.f32 %v3055, %v3056
      %v3058 = vrot.slane %v3057, 6
      %v3059 = vadd.f32 %v3057, %v3058
      %v3060 = vrot.slane %v3059, 7
      %v3061 = vadd.f32 %v3059, %v3060
      %v3062 = vmax.f32 %v3005, %v3012
      %v3063 = vmax.f32 %v3062, %v3019
      %v3064 = vmax.f32 %v3063, %v3026
      %v3065 = vmax.f32 %v3064, %v3033
      %v3066 = vmax.f32 %v3065, %v3040
      %v3067 = vmax.f32 %v3066, %v3047
      %v3068 = vmax.f32 %v3067, %v3054
      %v3069 = vmax.f32 %v3068, %v3061
      %v3070 = vsub.f32 %v3005, %v3069
      %v3071 = vmul.f32 %v3070, 1.442695
      %v3072 = vpow.pop %v3071
      %v3073 = vmul.f32 %v3072, %v1904
      %v3074 = vsub.f32 %v3012, %v3069
      %v3075 = vmul.f32 %v3074, 1.442695
      %v3076 = vpow.pop %v3075
      %v3077 = vadd.f32 %v3072, %v3076
      %v3078 = vmul.f32 %v3076, %v1962
      %v3079 = vadd.f32 %v3073, %v3078
      %v3080 = vsub.f32 %v3019, %v3069
      %v3081 = vmul.f32 %v3080, 1.442695
      %v3082 = vpow.pop %v3081
      %v3083 = vadd.f32 %v3077, %v3082
      %v3084 = vmul.f32 %v3082, %v2020
      %v3085 = vadd.f32 %v3079, %v3084
      %v3086 = vsub.f32 %v3026, %v3069
      %v3087 = vmul.f32 %v3086, 1.442695
      %v3088 = vpow.pop %v3087
      %v3089 = vadd.f32 %v3083, %v3088
      %v3090 = vmul.f32 %v3088, %v2078
      %v3091 = vadd.f32 %v3085, %v3090
      %v3092 = vsub.f32 %v3033, %v3069
      %v3093 = vmul.f32 %v3092, 1.442695
      %v3094 = vpow.pop %v3093
      %v3095 = vadd.f32 %v3089, %v3094
      %v3096 = vmul.f32 %v3094, %v2136
      %v3097 = vadd.f32 %v3091, %v3096
      %v3098 = vsub.f32 %v3040, %v3069
      %v3099 = vmul.f32 %v3098, 1.442695
      %v3100 = vpow.pop %v3099
      %v3101 = vadd.f32 %v3095, %v3100
      %v3102 = vmul.f32 %v3100, %v2194
      %v3103 = vadd.f32 %v3097, %v3102
      %v3104 = vsub.f32 %v3047, %v3069
      %v3105 = vmul.f32 %v3104, 1.442695
      %v3106 = vpow.pop %v3105
      %v3107 = vadd.f32 %v3101, %v3106
      %v3108 = vmul.f32 %v3106, %v2252
      %v3109 = vadd.f32 %v3103, %v3108
      %v3110 = vsub.f32 %v3054, %v3069
      %v3111 = vmul.f32 %v3110, 1.442695
      %v3112 = vpow.pop %v3111
      %v3113 = vadd.f32 %v3107, %v3112
      %v3114 = vmul.f32 %v3112, %v2310
      %v3115 = vadd.f32 %v3109, %v3114
      %v3116 = vsub.f32 %v3061, %v3069
      %v3117 = vmul.f32 %v3116, 1.442695
      %v3118 = vpow.pop %v3117
      %v3119 = vadd.f32 %v3113, %v3118
      %v3120 = vmul.f32 %v3118, %v2368
      %v3121 = vadd.f32 %v3115, %v3120
      %v3122 = vrcp.pop %v3119
      %v3123 = vmul.f32 %v3121, %v3122
      %3124 = vst [vmem:[%s170 + $0x58] sm:$0xff] %v3123
      %v3125 = vmul.f32 %v2248, %v1902
      %v3126 = vrot.slane %v3125, 4
      %v3127 = vadd.f32 %v3125, %v3126
      %v3128 = vrot.slane %v3127, 6
      %v3129 = vadd.f32 %v3127, %v3128
      %v3130 = vrot.slane %v3129, 7
      %v3131 = vadd.f32 %v3129, %v3130
      %v3132 = vmul.f32 %v2248, %v1960
      %v3133 = vrot.slane %v3132, 4
      %v3134 = vadd.f32 %v3132, %v3133
      %v3135 = vrot.slane %v3134, 6
      %v3136 = vadd.f32 %v3134, %v3135
      %v3137 = vrot.slane %v3136, 7
      %v3138 = vadd.f32 %v3136, %v3137
      %v3139 = vmul.f32 %v2248, %v2018
      %v3140 = vrot.slane %v3139, 4
      %v3141 = vadd.f32 %v3139, %v3140
      %v3142 = vrot.slane %v3141, 6
      %v3143 = vadd.f32 %v3141, %v3142
      %v3144 = vrot.slane %v3143, 7
      %v3145 = vadd.f32 %v3143, %v3144
      %v3146 = vmul.f32 %v2248, %v2076
      %v3147 = vrot.slane %v3146, 4
      %v3148 = vadd.f32 %v3146, %v3147
      %v3149 = vrot.slane %v3148, 6
      %v3150 = vadd.f32 %v3148, %v3149
      %v3151 = vrot.slane %v3150, 7
      %v3152 = vadd.f32 %v3150, %v3151
      %v3153 = vmul.f32 %v2248, %v2134
      %v3154 = vrot.slane %v3153, 4
      %v3155 = vadd.f32 %v3153, %v3154
      %v3156 = vrot.slane %v3155, 6
      %v3157 = vadd.f32 %v3155, %v3156
      %v3158 = vrot.slane %v3157, 7
      %v3159 = vadd.f32 %v3157, %v3158
      %v3160 = vmul.f32 %v2248, %v2192
      %v3161 = vrot.slane %v3160, 4
      %v3162 = vadd.f32 %v3160, %v3161
      %v3163 = vrot.slane %v3162, 6
      %v3164 = vadd.f32 %v3162, %v3163
      %v3165 = vrot.slane %v3164, 7
      %v3166 = vadd.f32 %v3164, %v3165
      %v3167 = vmul.f32 %v2248, %v2250
      %v3168 = vrot.slane %v3167, 4
      %v3169 = vadd.f32 %v3167, %v3168
      %v3170 = vrot.slane %v3169, 6
      %v3171 = vadd.f32 %v3169, %v3170
      %v3172 = vrot.slane %v3171, 7
      %v3173 = vadd.f32 %v3171, %v3172
      %v3174 = vmul.f32 %v2248, %v2308
      %v3175 = vrot.slane %v3174, 4
      %v3176 = vadd.f32 %v3174, %v3175
      %v3177 = vrot.slane %v3176, 6
      %v3178 = vadd.f32 %v3176, %v3177
      %v3179 = vrot.slane %v3178, 7
      %v3180 = vadd.f32 %v3178, %v3179
      %v3181 = vmul.f32 %v2248, %v2366
      %v3182 = vrot.slane %v3181, 4
      %v3183 = vadd.f32 %v3181, %v3182
      %v3184 = vrot.slane %v3183, 6
      %v3185 = vadd.f32 %v3183, %v3184
      %v3186 = vrot.slane %v3185, 7
      %v3187 = vadd.f32 %v3185, %v3186
      %v3188 = vmax.f32 %v3131, %v3138
      %v3189 = vmax.f32 %v3188, %v3145
      %v3190 = vmax.f32 %v3189, %v3152
      %v3191 = vmax.f32 %v3190, %v3159
      %v3192 = vmax.f32 %v3191, %v3166
      %v3193 = vmax.f32 %v3192, %v3173
      %v3194 = vmax.f32 %v3193, %v3180
      %v3195 = vmax.f32 %v3194, %v3187
      %v3196 = vsub.f32 %v3131, %v3195
      %v3197 = vmul.f32 %v3196, 1.442695
      %v3198 = vpow.pop %v3197
      %v3199 = vmul.f32 %v3198, %v1904
      %v3200 = vsub.f32 %v3138, %v3195
      %v3201 = vmul.f32 %v3200, 1.442695
      %v3202 = vpow.pop %v3201
      %v3203 = vadd.f32 %v3198, %v3202
      %v3204 = vmul.f32 %v3202, %v1962
      %v3205 = vadd.f32 %v3199, %v3204
      %v3206 = vsub.f32 %v3145, %v3195
      %v3207 = vmul.f32 %v3206, 1.442695
      %v3208 = vpow.pop %v3207
      %v3209 = vadd.f32 %v3203, %v3208
      %v3210 = vmul.f32 %v3208, %v2020
      %v3211 = vadd.f32 %v3205, %v3210
      %v3212 = vsub.f32 %v3152, %v3195
      %v3213 = vmul.f32 %v3212, 1.442695
      %v3214 = vpow.pop %v3213
      %v3215 = vadd.f32 %v3209, %v3214
      %v3216 = vmul.f32 %v3214, %v2078
      %v3217 = vadd.f32 %v3211, %v3216
      %v3218 = vsub.f32 %v3159, %v3195
      %v3219 = vmul.f32 %v3218, 1.442695
      %v3220 = vpow.pop %v3219
      %v3221 = vadd.f32 %v3215, %v3220
      %v3222 = vmul.f32 %v3220, %v2136
      %v3223 = vadd.f32 %v3217, %v3222
      %v3224 = vsub.f32 %v3166, %v3195
      %v3225 = vmul.f32 %v3224, 1.442695
      %v3226 = vpow.pop %v3225
      %v3227 = vadd.f32 %v3221, %v3226
      %v3228 = vmul.f32 %v3226, %v2194
      %v3229 = vadd.f32 %v3223, %v3228
      %v3230 = vsub.f32 %v3173, %v3195
      %v3231 = vmul.f32 %v3230, 1.442695
      %v3232 = vpow.pop %v3231
      %v3233 = vadd.f32 %v3227, %v3232
      %v3234 = vmul.f32 %v3232, %v2252
      %v3235 = vadd.f32 %v3229, %v3234
      %v3236 = vsub.f32 %v3180, %v3195
      %v3237 = vmul.f32 %v3236, 1.442695
      %v3238 = vpow.pop %v3237
      %v3239 = vadd.f32 %v3233, %v3238
      %v3240 = vmul.f32 %v3238, %v2310
      %v3241 = vadd.f32 %v3235, %v3240
      %v3242 = vsub.f32 %v3187, %v3195
      %v3243 = vmul.f32 %v3242, 1.442695
      %v3244 = vpow.pop %v3243
      %v3245 = vadd.f32 %v3239, %v3244
      %v3246 = vmul.f32 %v3244, %v2368
      %v3247 = vadd.f32 %v3241, %v3246
      %v3248 = vrcp.pop %v3245
      %v3249 = vmul.f32 %v3247, %v3248
      %3250 = vst [vmem:[%s170 + $0x68] sm:$0xff] %v3249
      %v3251 = vmul.f32 %v2306, %v1902
      %v3252 = vrot.slane %v3251, 4
      %v3253 = vadd.f32 %v3251, %v3252
      %v3254 = vrot.slane %v3253, 6
      %v3255 = vadd.f32 %v3253, %v3254
      %v3256 = vrot.slane %v3255, 7
      %v3257 = vadd.f32 %v3255, %v3256
      %v3258 = vmul.f32 %v2306, %v1960
      %v3259 = vrot.slane %v3258, 4
      %v3260 = vadd.f32 %v3258, %v3259
      %v3261 = vrot.slane %v3260, 6
      %v3262 = vadd.f32 %v3260, %v3261
      %v3263 = vrot.slane %v3262, 7
      %v3264 = vadd.f32 %v3262, %v3263
      %v3265 = vmul.f32 %v2306, %v2018
      %v3266 = vrot.slane %v3265, 4
      %v3267 = vadd.f32 %v3265, %v3266
      %v3268 = vrot.slane %v3267, 6
      %v3269 = vadd.f32 %v3267, %v3268
      %v3270 = vrot.slane %v3269, 7
      %v3271 = vadd.f32 %v3269, %v3270
      %v3272 = vmul.f32 %v2306, %v2076
      %v3273 = vrot.slane %v3272, 4
      %v3274 = vadd.f32 %v3272, %v3273
      %v3275 = vrot.slane %v3274, 6
      %v3276 = vadd.f32 %v3274, %v3275
      %v3277 = vrot.slane %v3276, 7
      %v3278 = vadd.f32 %v3276, %v3277
      %v3279 = vmul.f32 %v2306, %v2134
      %v3280 = vrot.slane %v3279, 4
      %v3281 = vadd.f32 %v3279, %v3280
      %v3282 = vrot.slane %v3281, 6
      %v3283 = vadd.f32 %v3281, %v3282
      %v3284 = vrot.slane %v3283, 7
      %v3285 = vadd.f32 %v3283, %v3284
      %v3286 = vmul.f32 %v2306, %v2192
      %v3287 = vrot.slane %v3286, 4
      %v3288 = vadd.f32 %v3286, %v3287
      %v3289 = vrot.slane %v3288, 6
      %v3290 = vadd.f32 %v3288, %v3289
      %v3291 = vrot.slane %v3290, 7
      %v3292 = vadd.f32 %v3290, %v3291
      %v3293 = vmul.f32 %v2306, %v2250
      %v3294 = vrot.slane %v3293, 4
      %v3295 = vadd.f32 %v3293, %v3294
      %v3296 = vrot.slane %v3295, 6
      %v3297 = vadd.f32 %v3295, %v3296
      %v3298 = vrot.slane %v3297, 7
      %v3299 = vadd.f32 %v3297, %v3298
      %v3300 = vmul.f32 %v2306, %v2308
      %v3301 = vrot.slane %v3300, 4
      %v3302 = vadd.f32 %v3300, %v3301
      %v3303 = vrot.slane %v3302, 6
      %v3304 = vadd.f32 %v3302, %v3303
      %v3305 = vrot.slane %v3304, 7
      %v3306 = vadd.f32 %v3304, %v3305
      %v3307 = vmul.f32 %v2306, %v2366
      %v3308 = vrot.slane %v3307, 4
      %v3309 = vadd.f32 %v3307, %v3308
      %v3310 = vrot.slane %v3309, 6
      %v3311 = vadd.f32 %v3309, %v3310
      %v3312 = vrot.slane %v3311, 7
      %v3313 = vadd.f32 %v3311, %v3312
      %v3314 = vmax.f32 %v3257, %v3264
      %v3315 = vmax.f32 %v3314, %v3271
      %v3316 = vmax.f32 %v3315, %v3278
      %v3317 = vmax.f32 %v3316, %v3285
      %v3318 = vmax.f32 %v3317, %v3292
      %v3319 = vmax.f32 %v3318, %v3299
      %v3320 = vmax.f32 %v3319, %v3306
      %v3321 = vmax.f32 %v3320, %v3313
      %v3322 = vsub.f32 %v3257, %v3321
      %v3323 = vmul.f32 %v3322, 1.442695
      %v3324 = vpow.pop %v3323
      %v3325 = vmul.f32 %v3324, %v1904
      %v3326 = vsub.f32 %v3264, %v3321
      %v3327 = vmul.f32 %v3326, 1.442695
      %v3328 = vpow.pop %v3327
      %v3329 = vadd.f32 %v3324, %v3328
      %v3330 = vmul.f32 %v3328, %v1962
      %v3331 = vadd.f32 %v3325, %v3330
      %v3332 = vsub.f32 %v3271, %v3321
      %v3333 = vmul.f32 %v3332, 1.442695
      %v3334 = vpow.pop %v3333
      %v3335 = vadd.f32 %v3329, %v3334
      %v3336 = vmul.f32 %v3334, %v2020
      %v3337 = vadd.f32 %v3331, %v3336
      %v3338 = vsub.f32 %v3278, %v3321
      %v3339 = vmul.f32 %v3338, 1.442695
      %v3340 = vpow.pop %v3339
      %v3341 = vadd.f32 %v3335, %v3340
      %v3342 = vmul.f32 %v3340, %v2078
      %v3343 = vadd.f32 %v3337, %v3342
      %v3344 = vsub.f32 %v3285, %v3321
      %v3345 = vmul.f32 %v3344, 1.442695
      %v3346 = vpow.pop %v3345
      %v3347 = vadd.f32 %v3341, %v3346
      %v3348 = vmul.f32 %v3346, %v2136
      %v3349 = vadd.f32 %v3343, %v3348
      %v3350 = vsub.f32 %v3292, %v3321
      %v3351 = vmul.f32 %v3350, 1.442695
      %v3352 = vpow.pop %v3351
      %v3353 = vadd.f32 %v3347, %v3352
      %v3354 = vmul.f32 %v3352, %v2194
      %v3355 = vadd.f32 %v3349, %v3354
      %v3356 = vsub.f32 %v3299, %v3321
      %v3357 = vmul.f32 %v3356, 1.442695
      %v3358 = vpow.pop %v3357
      %v3359 = vadd.f32 %v3353, %v3358
      %v3360 = vmul.f32 %v3358, %v2252
      %v3361 = vadd.f32 %v3355, %v3360
      %v3362 = vsub.f32 %v3306, %v3321
      %v3363 = vmul.f32 %v3362, 1.442695
      %v3364 = vpow.pop %v3363
      %v3365 = vadd.f32 %v3359, %v3364
      %v3366 = vmul.f32 %v3364, %v2310
      %v3367 = vadd.f32 %v3361, %v3366
      %v3368 = vsub.f32 %v3313, %v3321
      %v3369 = vmul.f32 %v3368, 1.442695
      %v3370 = vpow.pop %v3369
      %v3371 = vadd.f32 %v3365, %v3370
      %v3372 = vmul.f32 %v3370, %v2368
      %v3373 = vadd.f32 %v3367, %v3372
      %v3374 = vrcp.pop %v3371
      %v3375 = vmul.f32 %v3373, %v3374
      %3376 = vst [vmem:[%s170 + $0x78] sm:$0xff] %v3375
      %v3377 = vmul.f32 %v2364, %v1902
      %v3378 = vrot.slane %v3377, 4
      %v3379 = vadd.f32 %v3377, %v3378
      %v3380 = vrot.slane %v3379, 6
      %v3381 = vadd.f32 %v3379, %v3380
      %v3382 = vrot.slane %v3381, 7
      %v3383 = vadd.f32 %v3381, %v3382
      %v3384 = vmul.f32 %v2364, %v1960
      %v3385 = vrot.slane %v3384, 4
      %v3386 = vadd.f32 %v3384, %v3385
      %v3387 = vrot.slane %v3386, 6
      %v3388 = vadd.f32 %v3386, %v3387
      %v3389 = vrot.slane %v3388, 7
      %v3390 = vadd.f32 %v3388, %v3389
      %v3391 = vmul.f32 %v2364, %v2018
      %v3392 = vrot.slane %v3391, 4
      %v3393 = vadd.f32 %v3391, %v3392
      %v3394 = vrot.slane %v3393, 6
      %v3395 = vadd.f32 %v3393, %v3394
      %v3396 = vrot.slane %v3395, 7
      %v3397 = vadd.f32 %v3395, %v3396
      %v3398 = vmul.f32 %v2364, %v2076
      %v3399 = vrot.slane %v3398, 4
      %v3400 = vadd.f32 %v3398, %v3399
      %v3401 = vrot.slane %v3400, 6
      %v3402 = vadd.f32 %v3400, %v3401
      %v3403 = vrot.slane %v3402, 7
      %v3404 = vadd.f32 %v3402, %v3403
      %v3405 = vmul.f32 %v2364, %v2134
      %v3406 = vrot.slane %v3405, 4
      %v3407 = vadd.f32 %v3405, %v3406
      %v3408 = vrot.slane %v3407, 6
      %v3409 = vadd.f32 %v3407, %v3408
      %v3410 = vrot.slane %v3409, 7
      %v3411 = vadd.f32 %v3409, %v3410
      %v3412 = vmul.f32 %v2364, %v2192
      %v3413 = vrot.slane %v3412, 4
      %v3414 = vadd.f32 %v3412, %v3413
      %v3415 = vrot.slane %v3414, 6
      %v3416 = vadd.f32 %v3414, %v3415
      %v3417 = vrot.slane %v3416, 7
      %v3418 = vadd.f32 %v3416, %v3417
      %v3419 = vmul.f32 %v2364, %v2250
      %v3420 = vrot.slane %v3419, 4
      %v3421 = vadd.f32 %v3419, %v3420
      %v3422 = vrot.slane %v3421, 6
      %v3423 = vadd.f32 %v3421, %v3422
      %v3424 = vrot.slane %v3423, 7
      %v3425 = vadd.f32 %v3423, %v3424
      %v3426 = vmul.f32 %v2364, %v2308
      %v3427 = vrot.slane %v3426, 4
      %v3428 = vadd.f32 %v3426, %v3427
      %v3429 = vrot.slane %v3428, 6
      %v3430 = vadd.f32 %v3428, %v3429
      %v3431 = vrot.slane %v3430, 7
      %v3432 = vadd.f32 %v3430, %v3431
      %v3433 = vmul.f32 %v2364, %v2366
      %v3434 = vrot.slane %v3433, 4
      %v3435 = vadd.f32 %v3433, %v3434
      %v3436 = vrot.slane %v3435, 6
      %v3437 = vadd.f32 %v3435, %v3436
      %v3438 = vrot.slane %v3437, 7
      %v3439 = vadd.f32 %v3437, %v3438
      %v3440 = vmax.f32 %v3383, %v3390
      %v3441 = vmax.f32 %v3440, %v3397
      %v3442 = vmax.f32 %v3441, %v3404
      %v3443 = vmax.f32 %v3442, %v3411
      %v3444 = vmax.f32 %v3443, %v3418
      %v3445 = vmax.f32 %v3444, %v3425
      %v3446 = vmax.f32 %v3445, %v3432
      %v3447 = vmax.f32 %v3446, %v3439
      %v3448 = vsub.f32 %v3383, %v3447
      %v3449 = vmul.f32 %v3448, 1.442695
      %v3450 = vpow.pop %v3449
      %v3451 = vmul.f32 %v3450, %v1904
      %v3452 = vsub.f32 %v3390, %v3447
      %v3453 = vmul.f32 %v3452, 1.442695
      %v3454 = vpow.pop %v3453
      %v3455 = vadd.f32 %v3450, %v3454
      %v3456 = vmul.f32 %v3454, %v1962
      %v3457 = vadd.f32 %v3451, %v3456
      %v3458 = vsub.f32 %v3397, %v3447
      %v3459 = vmul.f32 %v3458, 1.442695
      %v3460 = vpow.pop %v3459
      %v3461 = vadd.f32 %v3455, %v3460
      %v3462 = vmul.f32 %v3460, %v2020
      %v3463 = vadd.f32 %v3457, %v3462
      %v3464 = vsub.f32 %v3404, %v3447
      %v3465 = vmul.f32 %v3464, 1.442695
      %v3466 = vpow.pop %v3465
      %v3467 = vadd.f32 %v3461, %v3466
      %v3468 = vmul.f32 %v3466, %v2078
      %v3469 = vadd.f32 %v3463, %v3468
      %v3470 = vsub.f32 %v3411, %v3447
      %v3471 = vmul.f32 %v3470, 1.442695
      %v3472 = vpow.pop %v3471
      %v3473 = vadd.f32 %v3467, %v3472
      %v3474 = vmul.f32 %v3472, %v2136
      %v3475 = vadd.f32 %v3469, %v3474
      %v3476 = vsub.f32 %v3418, %v3447
      %v3477 = vmul.f32 %v3476, 1.442695
      %v3478 = vpow.pop %v3477
      %v3479 = vadd.f32 %v3473, %v3478
      %v3480 = vmul.f32 %v3478, %v2194
      %v3481 = vadd.f32 %v3475, %v3480
      %v3482 = vsub.f32 %v3425, %v3447
      %v3483 = vmul.f32 %v3482, 1.442695
      %v3484 = vpow.pop %v3483
      %v3485 = vadd.f32 %v3479, %v3484
      %v3486 = vmul.f32 %v3484, %v2252
      %v3487 = vadd.f32 %v3481, %v3486
      %v3488 = vsub.f32 %v3432, %v3447
      %v3489 = vmul.f32 %v3488, 1.442695
      %v3490 = vpow.pop %v3489
      %v3491 = vadd.f32 %v3485, %v3490
      %v3492 = vmul.f32 %v3490, %v2310
      %v3493 = vadd.f32 %v3487, %v3492
      %v3494 = vsub.f32 %v3439, %v3447
      %v3495 = vmul.f32 %v3494, 1.442695
      %v3496 = vpow.pop %v3495
      %v3497 = vadd.f32 %v3491, %v3496
      %v3498 = vmul.f32 %v3496, %v2368
      %v3499 = vadd.f32 %v3493, %v3498
      %v3500 = vrcp.pop %v3497
      %v3501 = vmul.f32 %v3499, %v3500
      %3502 = vst [vmem:[%s170 + $0x88] sm:$0xff] %v3501
      %p3503 = scmp.lt.s32.totalorder %s14, 1
      %s3504 = scalar_select %p3503, %s14, 1
      %s3505 = smul.addr %s3504, 18
      %s3506 = smul.addr %s3505, 8
      %s3507 = scalar_lea.vmem %s3, %s3506
      // Predicated region
      $region33: #{pillar_cross_attention_forward.1} parent=31 // pred_check
        %p3508 = pneg %p100
      $region34: #{pillar_cross_attention_forward.1} parent=31 // pred_check_branch
        %3510 = sbr.rel (%p3508) target = $region36
      $region35: #{pillar_cross_attention_forward.1} parent=31 // pred_region
        _
      $region36: #{pillar_cross_attention_forward.1} parent=31 // pred_fallthru
        _
    $region32: #{pillar_cross_attention_forward.1} parent=5 // pred_fallthru
      _
    %p3511 = scmp.le.s32.totalorder 2, %s9
    // Predicated region
    $region37: #{pillar_cross_attention_forward.1} parent=5 // pred_check
      %p3512 = pneg %p3511
    $region38: #{pillar_cross_attention_forward.1} parent=5 // pred_check_branch
      %3514 = sbr.rel (%p3512) target = $region40
    $region39: #{pillar_cross_attention_forward.1} parent=5 // pred_region
      %s3515 = ssub.s32 %s9, 2
      // Predicated region
      $region41: #{pillar_cross_attention_forward.1} parent=39 // pred_check
        %p3516 = pneg %p106
      $region42: #{pillar_cross_attention_forward.1} parent=39 // pred_check_branch
        %3518 = sbr.rel (%p3516) target = $region44
      $region43: #{pillar_cross_attention_forward.1} parent=39 // pred_region
        %p3519 = scmp.lt.s32.totalorder %s15, 1
        %s3520 = scalar_select %p3519, %s15, 1
        %s3521 = smul.addr %s3520, 18
        %s3522 = smul.addr %s3521, 8
        %s3523 = scalar_lea.vmem %s3, %s3522
      $region44: #{pillar_cross_attention_forward.1} parent=39 // pred_fallthru
        _
    $region40: #{pillar_cross_attention_forward.1} parent=5 // pred_fallthru
      _
  $region6: #{pillar_cross_attention_forward.1} parent=0 // loop_footer
    %s13 = sadd.s32 1, %s9
  $region7: #{pillar_cross_attention_forward.1} parent=0 // loop_footer_branch
    %8 = sbr.rel target = $region3
  $region8: #{pillar_cross_attention_forward.1} parent=0 // loop_exit
    _

</llo_original>
